<compile_context>
chip_gen: v7x
topology: tpu7x:2x2x1
jax: 0.10.0
libtpu: 0.0.40
codegen_flags: <defaults>
</compile_context>

<pallas_src>
import functools

import jax
import jax.numpy as jnp
from jax.experimental import pallas as pl
from jax.experimental.pallas import tpu as pltpu


WEIGHT_DTYPE = jnp.bfloat16          # weights streamed in bf16, f32 accumulation
_VMEM_LIMIT = 48 * 1024 * 1024       # > default scoped limit, < v7x 64 MiB physical


# ----------------------------------------------------------------------------
# small helpers
# ----------------------------------------------------------------------------
def _round_up(x, m):
    return ((x + m - 1) // m) * m


def _pick_divisor(n, candidates):
    for c in candidates:
        if c <= n and n % c == 0:
            return c
    return n


# ----------------------------------------------------------------------------
# Pallas kernels
# ----------------------------------------------------------------------------
def _matmul_bias_act_kernel(x_ref, w_ref, b_ref, o_ref, acc_ref, *, relu):
    """K-tiled fused matmul: grid = (M/tm, N/tn, K/tk), K innermost."""
    @pl.when(pl.program_id(2) == 0)
    def _():
        acc_ref[...] = jnp.zeros_like(acc_ref)

    acc_ref[...] += jnp.dot(
        x_ref[...].astype(w_ref.dtype), w_ref[...],
        preferred_element_type=jnp.float32)

    @pl.when(pl.program_id(2) == pl.num_programs(2) - 1)
    def _():
        y = acc_ref[...] + b_ref[...]
        if relu:
            y = jnp.maximum(y, 0.0)
        o_ref[...] = y.astype(o_ref.dtype)


def _conv3x3_kernel(x_hbm, w_ref, b_ref, o_ref, xwin_ref, sem_ref, *,
                    tm, cin, wp):
    """3x3 conv as 9 shifted matmuls over a manually-DMA'd row window.

    x_hbm    : (Mtot, cin) flattened zero-padded activation (halo rows added).
    w_ref    : (9*cin, cout) weight, rows ordered (kh, kw, cin).
    b_ref    : (1, cout) bias.
    o_ref    : (tm, cout) output rows (padded-coordinate rows are garbage and
               get sliced away by the wrapper).
    xwin_ref : (tm + 2*halo, cin) VMEM window scratch.
    """
    rows = xwin_ref.shape[0]
    start = pl.multiple_of(pl.program_id(0) * tm, 8)
    cp = pltpu.make_async_copy(x_hbm.at[pl.ds(start, rows), :], xwin_ref, sem_ref)
    cp.start()
    cp.wait()
    # (Further opt: double-buffer this window DMA across grid steps; the
    # weight / bias / output blocks are already pipelined by BlockSpec.)

    xw = xwin_ref[...].astype(w_ref.dtype)          # one f32 -> bf16 cast
    acc = jnp.zeros(o_ref.shape, jnp.float32)
    for kh in range(3):
        for kw in range(3):
            off = kh * wp + kw                      # window-relative row shift
            tap = kh * 3 + kw
            acc = acc + jnp.dot(
                xw[off:off + tm, :],
                w_ref[tap * cin:(tap + 1) * cin, :],
                preferred_element_type=jnp.float32)
    acc = acc + b_ref[...]
    o_ref[...] = jnp.maximum(acc, 0.0).astype(o_ref.dtype)


def _maxpool2x2_kernel(x_ref, o_ref, *, w, c):
    """2x2/2 max-pool; input rows hold two image rows, output is lane-dense."""
    x = x_ref[...]                                   # (tr, 2*w*c)
    half = w * c
    v = jnp.maximum(x[:, :half], x[:, half:])        # vertical max -> (tr, w*c)
    v = v.reshape(v.shape[0], w // 2, 2 * c)
    o = jnp.maximum(v[:, :, :c], v[:, :, c:])        # horizontal max
    o_ref[...] = o.reshape(o.shape[0], (w // 2) * c)


# ----------------------------------------------------------------------------
# Pallas wrappers
# ----------------------------------------------------------------------------
def matmul_bias_act(x, w, b, *, relu):
    """x: (M, K) f32, w: (K, N) bf16, b: (1, N) f32 -> (M, N) f32."""
    m, k = x.shape
    k2, n = w.shape
    assert k == k2 and b.shape == (1, n)

    tm = min(256, _round_up(m, 8))
    m_pad = _round_up(m, tm)
    if m_pad != m:
        x = jnp.pad(x, ((0, m_pad - m), (0, 0)))
    tn = _pick_divisor(n, (256, 512, 128, 64, 32, 16, 8))   # 256 first: v7x N-split
    tk = _pick_divisor(k, (2048, 1024, 512, 256, 128, 64, 32, 16, 8))

    out = pl.pallas_call(
        functools.partial(_matmul_bias_act_kernel, relu=relu),
        out_shape=jax.ShapeDtypeStruct((m_pad, n), jnp.float32),
        grid=(m_pad // tm, n // tn, k // tk),
        in_specs=[
            pl.BlockSpec((tm, tk), lambda i, j, kk: (i, kk)),
            pl.BlockSpec((tk, tn), lambda i, j, kk: (kk, j)),
            pl.BlockSpec((1, tn), lambda i, j, kk: (0, j)),
        ],
        out_specs=pl.BlockSpec((tm, tn), lambda i, j, kk: (i, j)),
        scratch_shapes=[pltpu.VMEM((tm, tn), jnp.float32)],
        compiler_params=pltpu.CompilerParams(
            dimension_semantics=("parallel", "parallel", "arbitrary"),
            vmem_limit_bytes=_VMEM_LIMIT),
    )(x, w, b)
    return out[:m] if m_pad != m else out


def conv3x3_relu(x_nhwc, w_mat, b_row):
    """Conv2d(k=3, pad=1, stride=1) + bias + ReLU, no im2col materialization."""
    n, h, w, cin = x_nhwc.shape
    cout = w_mat.shape[1]
    assert w_mat.shape[0] == 9 * cin
    hp, wp = h + 2, w + 2
    halo = wp + 1

    xp = jnp.pad(x_nhwc, ((0, 0), (1, 1), (1, 1), (0, 0)))
    m = n * hp * wp
    tm = _round_up(m, 8) if m <= 1024 else 512
    m_pad = _round_up(m, tm)
    xf = xp.reshape(m, cin)
    xf = jnp.pad(xf, ((halo, halo + (m_pad - m)), (0, 0)))   # halo + grid padding
    rows = tm + 2 * halo

    yf = pl.pallas_call(
        functools.partial(_conv3x3_kernel, tm=tm, cin=cin, wp=wp),
        out_shape=jax.ShapeDtypeStruct((m_pad, cout), jnp.float32),
        grid=(m_pad // tm,),
        in_specs=[
            pl.BlockSpec(memory_space=pl.ANY),                  # manual window DMA
            pl.BlockSpec((9 * cin, cout), lambda i: (0, 0)),
            pl.BlockSpec((1, cout), lambda i: (0, 0)),
        ],
        out_specs=pl.BlockSpec((tm, cout), lambda i: (i, 0)),
        scratch_shapes=[
            pltpu.VMEM((rows, cin), jnp.float32),
            pltpu.SemaphoreType.DMA,
        ],
        compiler_params=pltpu.CompilerParams(
            dimension_semantics=("parallel",),
            vmem_limit_bytes=_VMEM_LIMIT),
    )(xf, w_mat, b_row)

    y = yf[:m].reshape(n, hp, wp, cout)
    return y[:, 1:h + 1, 1:w + 1, :]                 # drop padded-coordinate rows


def maxpool2x2(x_nhwc):
    """MaxPool2d(2,2) as one tiled kernel over the contiguous (N*H/2, 2*W*C) view."""
    n, h, w, c = x_nhwc.shape
    rows = n * (h // 2)
    x2 = x_nhwc.reshape(rows, 2 * w * c)
    tr = _pick_divisor(rows, (512, 256, 128, 64, 32, 16, 8))
    out = pl.pallas_call(
        functools.partial(_maxpool2x2_kernel, w=w, c=c),
        out_shape=jax.ShapeDtypeStruct((rows, (w // 2) * c), x_nhwc.dtype),
        grid=(rows // tr,),
        in_specs=[pl.BlockSpec((tr, 2 * w * c), lambda i: (i, 0))],
        out_specs=pl.BlockSpec((tr, (w // 2) * c), lambda i: (i, 0)),
        compiler_params=pltpu.CompilerParams(
            dimension_semantics=("parallel",),
            vmem_limit_bytes=_VMEM_LIMIT),
    )(x2)
    return out.reshape(n, h // 2, w // 2, c)


# ----------------------------------------------------------------------------
# Parameters (PyTorch convention) and one-time conversion to kernel layout
# ----------------------------------------------------------------------------
def init_params(num_classes, spatial, key):
    """Deterministic synthetic parameters with PyTorch-convention shapes."""
    ks = jax.random.split(key, 10)
    s = spatial // 8                      # after three 2x2 max-pools
    feat = 128 * s * s
    return {
        "conv1_w": 0.05 * jax.random.normal(ks[0], (32, 3, 3, 3), jnp.float32),
        "conv1_b": 0.01 * jax.random.normal(ks[1], (32,), jnp.float32),
        "conv2_w": 0.05 * jax.random.normal(ks[2], (64, 32, 3, 3), jnp.float32),
        "conv2_b": 0.01 * jax.random.normal(ks[3], (64,), jnp.float32),
        "conv3_w": 0.05 * jax.random.normal(ks[4], (128, 64, 3, 3), jnp.float32),
        "conv3_b": 0.01 * jax.random.normal(ks[5], (128,), jnp.float32),
        "fc1_w": 0.02 * jax.random.normal(ks[6], (512, feat), jnp.float32),  # (out,in)
        "fc1_b": 0.01 * jax.random.normal(ks[7], (512,), jnp.float32),
        "fc2_w": 0.02 * jax.random.normal(ks[8], (num_classes, 512), jnp.float32),
        "fc2_b": 0.01 * jax.random.normal(ks[9], (num_classes,), jnp.float32),
    }


def prepare_params(p, num_classes, spatial):
    """Convert PyTorch-convention weights to kernel layout ONCE (no .T in forward)."""
    s = spatial // 8
    kp = {}
    for i in (1, 2, 3):
        w = p[f"conv{i}_w"]                                      # (O, I, 3, 3)
        o, ci = w.shape[0], w.shape[1]
        w = jnp.transpose(w, (2, 3, 1, 0)).reshape(9 * ci, o)    # (kh,kw,cin) rows
        kp[f"conv{i}_w"] = w.astype(WEIGHT_DTYPE)
        kp[f"conv{i}_b"] = p[f"conv{i}_b"].reshape(1, o).astype(jnp.float32)

    # fc1: reorder input dim from torch (c,h,w) flatten order to NHWC (h,w,c) order,
    # then store as (K, N) so the forward never transposes it.
    w1 = p["fc1_w"].reshape(512, 128, s, s)
    w1 = jnp.transpose(w1, (0, 2, 3, 1)).reshape(512, 128 * s * s)
    kp["fc1_w"] = jnp.transpose(w1, (1, 0)).astype(WEIGHT_DTYPE)           # (K, 512)
    kp["fc1_b"] = p["fc1_b"].reshape(1, 512).astype(jnp.float32)

    # fc2: (K, N) with N padded to a lane-dense 128.
    n_pad = _round_up(num_classes, 128)
    w2 = jnp.transpose(p["fc2_w"], (1, 0))                                  # (512, nc)
    kp["fc2_w"] = jnp.pad(w2, ((0, 0), (0, n_pad - num_classes))).astype(WEIGHT_DTYPE)
    kp["fc2_b"] = jnp.pad(p["fc2_b"], (0, n_pad - num_classes)
                          ).reshape(1, n_pad).astype(jnp.float32)
    return kp


# ----------------------------------------------------------------------------
# Forward pass (eval mode: Dropout = identity)
# ----------------------------------------------------------------------------
def skin_classifier_forward(kp, x_nchw, *, num_classes):
    x = jnp.transpose(x_nchw, (0, 2, 3, 1)).astype(jnp.float32)   # NCHW -> NHWC

    # features
    x = conv3x3_relu(x, kp["conv1_w"], kp["conv1_b"]); x = maxpool2x2(x)
    x = conv3x3_relu(x, kp["conv2_w"], kp["conv2_b"]); x = maxpool2x2(x)
    x = conv3x3_relu(x, kp["conv3_w"], kp["conv3_b"]); x = maxpool2x2(x)

    # flatten in NHWC order (fc1 weight rows were re-ordered to match torch flatten)
    n = x.shape[0]
    x = x.reshape(n, -1)

    # classifier (Dropout(0.5) is identity at inference)
    x = matmul_bias_act(x, kp["fc1_w"], kp["fc1_b"], relu=True)
    x = matmul_bias_act(x, kp["fc2_w"], kp["fc2_b"], relu=False)
    return x[:, :num_classes]


# ----------------------------------------------------------------------------
# Pure-JAX reference (mirrors the kernels' bf16-weight / f32-accum arithmetic)
# ----------------------------------------------------------------------------
def reference_forward(p, x_nchw):
    x = jnp.transpose(x_nchw, (0, 2, 3, 1)).astype(jnp.float32)
    for i in (1, 2, 3):
        w = jnp.transpose(p[f"conv{i}_w"], (2, 3, 1, 0)).astype(jnp.bfloat16)  # HWIO
        y = jax.lax.conv_general_dilated(
            x.astype(jnp.bfloat16), w, window_strides=(1, 1), padding="SAME",
            dimension_numbers=("NHWC", "HWIO", "NHWC"),
            preferred_element_type=jnp.float32)
        y = jnp.maximum(y + p[f"conv{i}_b"], 0.0)
        n_, h_, w_, c_ = y.shape
        x = y.reshape(n_, h_ // 2, 2, w_ // 2, 2, c_).max(axis=(2, 4))
    n_ = x.shape[0]
    feat = jnp.transpose(x, (0, 3, 1, 2)).reshape(n_, -1)        # torch flatten order
    h1 = jnp.dot(feat.astype(jnp.bfloat16),
                 jnp.transpose(p["fc1_w"]).astype(jnp.bfloat16),
                 preferred_element_type=jnp.float32) + p["fc1_b"]
    h1 = jnp.maximum(h1, 0.0)
    return jnp.dot(h1.astype(jnp.bfloat16),
                   jnp.transpose(p["fc2_w"]).astype(jnp.bfloat16),
                   preferred_element_type=jnp.float32) + p["fc2_b"]


if __name__ == "__main__":
    NUM_CLASSES = 5
    BATCH, CH, SPATIAL = 2, 3, 16   # small stand-in for the 224x224 app input

    key = jax.random.PRNGKey(0)
    k_x, k_p = jax.random.split(key)
    x = jax.random.normal(k_x, (BATCH, CH, SPATIAL, SPATIAL), jnp.float32)
    torch_params = init_params(NUM_CLASSES, SPATIAL, k_p)
    kparams = prepare_params(torch_params, NUM_CLASSES, SPATIAL)

    fwd = jax.jit(functools.partial(skin_classifier_forward,
                                    num_classes=NUM_CLASSES))
    logits = fwd(kparams, x)
    jax.block_until_ready(logits)

    assert logits.shape == (BATCH, NUM_CLASSES)
    assert logits.dtype == jnp.float32

    ref = reference_forward(torch_params, x)
    max_err = float(jnp.max(jnp.abs(logits - ref)))
    assert jnp.allclose(logits, ref, rtol=2e-2, atol=2e-2), max_err

    print("KERNEL_OK")
</pallas_src>

<mosaic_0001>
module attributes {stable_mosaic.version = 11 : i64} {
  func.func @_conv3x3_kernel(%arg0: i32, %arg1: memref<686x3xf32, #tpu.memory_space<any>>, %arg2: memref<27x32xbf16, #tpu.memory_space<vmem>>, %arg3: memref<1x32xf32, #tpu.memory_space<vmem>>, %arg4: memref<648x32xf32, #tpu.memory_space<vmem>>, %arg5: memref<686x3xf32, #tpu.memory_space<vmem>>, %arg6: memref<!tpu.dma_semaphore, #tpu.memory_space<semaphore_mem>>) attributes {dimension_semantics = [#tpu.dimension_semantics<parallel>], iteration_bounds = array<i64: 1>, scalar_prefetch = 0 : i64, scratch_operands = 2 : i64, tpu.core_type = #tpu.core_type<tc>, window_params = [{}, {pipeline_mode = #tpu.pipeline_mode<synchronous>, transform_indices = @transform_1, window_bounds = array<i64: 27, 32>}, {pipeline_mode = #tpu.pipeline_mode<synchronous>, transform_indices = @transform_2, window_bounds = array<i64: 1, 32>}, {transform_indices = @transform_3, window_bounds = array<i64: 648, 32>}]} {
    %c648_i32 = arith.constant 648 : i32
    %0 = arith.muli %arg0, %c648_i32 : i32
    %1 = tpu.assume_multiple %0, 8 : i32
    %c0_i32 = arith.constant 0 : i32
    %2 = tpu.memref_slice %arg1[%1, %c0_i32] : memref<686x3xf32, #tpu.memory_space<any>> -> memref<686x3xf32, #tpu.memory_space<any>>
    tpu.enqueue_dma source(%2 : memref<686x3xf32, #tpu.memory_space<any>>) target(%arg5 : memref<686x3xf32, #tpu.memory_space<vmem>>) target_semaphore(%arg6 : memref<!tpu.dma_semaphore, #tpu.memory_space<semaphore_mem>>)
    %c0_i32_0 = arith.constant 0 : i32
    %3 = tpu.memref_slice %arg1[%1, %c0_i32_0] : memref<686x3xf32, #tpu.memory_space<any>> -> memref<686x3xf32, #tpu.memory_space<any>>
    tpu.wait_dma2 semaphore(%arg6 : memref<!tpu.dma_semaphore, #tpu.memory_space<semaphore_mem>>) src(%3 : memref<686x3xf32, #tpu.memory_space<any>>) dst(%arg5 : memref<686x3xf32, #tpu.memory_space<vmem>>)
    %c0 = arith.constant 0 : index
    %c0_1 = arith.constant 0 : index
    %4 = vector.load %arg5[%c0, %c0_1] : memref<686x3xf32, #tpu.memory_space<vmem>>, vector<686x3xf32>
    %5 = arith.truncf %4 : vector<686x3xf32> to vector<686x3xbf16>
    %cst = arith.constant 0.000000e+00 : f32
    %6 = vector.broadcast %cst : f32 to vector<648x32xf32>
    %7 = vector.extract_strided_slice %5 {offsets = [0, 0], sizes = [648, 3], strides = [1, 1]} : vector<686x3xbf16> to vector<648x3xbf16>
    %c0_2 = arith.constant 0 : index
    %c0_3 = arith.constant 0 : index
    %8 = vector.load %arg2[%c0_2, %c0_3] : memref<27x32xbf16, #tpu.memory_space<vmem>>, vector<3x32xbf16>
    %cst_4 = arith.constant dense<0.000000e+00> : vector<648x32xf32>
    %9 = tpu.matmul %7, %8, %cst_4 {dimension_numbers = #tpu.dot_dimension_numbers<[1], [0], [0], [1], [0, 0, 1, 1], [], []>} : vector<648x3xbf16>, vector<3x32xbf16>, vector<648x32xf32> -> vector<648x32xf32>
    %10 = arith.addf %6, %9 : vector<648x32xf32>
    %11 = vector.extract_strided_slice %5 {offsets = [1, 0], sizes = [648, 3], strides = [1, 1]} : vector<686x3xbf16> to vector<648x3xbf16>
    %c3 = arith.constant 3 : index
    %c0_5 = arith.constant 0 : index
    %12 = vector.load %arg2[%c3, %c0_5] : memref<27x32xbf16, #tpu.memory_space<vmem>>, vector<3x32xbf16>
    %cst_6 = arith.constant dense<0.000000e+00> : vector<648x32xf32>
    %13 = tpu.matmul %11, %12, %cst_6 {dimension_numbers = #tpu.dot_dimension_numbers<[1], [0], [0], [1], [0, 0, 1, 1], [], []>} : vector<648x3xbf16>, vector<3x32xbf16>, vector<648x32xf32> -> vector<648x32xf32>
    %14 = arith.addf %10, %13 : vector<648x32xf32>
    %15 = vector.extract_strided_slice %5 {offsets = [2, 0], sizes = [648, 3], strides = [1, 1]} : vector<686x3xbf16> to vector<648x3xbf16>
    %c6 = arith.constant 6 : index
    %c0_7 = arith.constant 0 : index
    %16 = vector.load %arg2[%c6, %c0_7] : memref<27x32xbf16, #tpu.memory_space<vmem>>, vector<3x32xbf16>
    %cst_8 = arith.constant dense<0.000000e+00> : vector<648x32xf32>
    %17 = tpu.matmul %15, %16, %cst_8 {dimension_numbers = #tpu.dot_dimension_numbers<[1], [0], [0], [1], [0, 0, 1, 1], [], []>} : vector<648x3xbf16>, vector<3x32xbf16>, vector<648x32xf32> -> vector<648x32xf32>
    %18 = arith.addf %14, %17 : vector<648x32xf32>
    %19 = vector.extract_strided_slice %5 {offsets = [18, 0], sizes = [648, 3], strides = [1, 1]} : vector<686x3xbf16> to vector<648x3xbf16>
    %c9 = arith.constant 9 : index
    %c0_9 = arith.constant 0 : index
    %20 = vector.load %arg2[%c9, %c0_9] : memref<27x32xbf16, #tpu.memory_space<vmem>>, vector<3x32xbf16>
    %cst_10 = arith.constant dense<0.000000e+00> : vector<648x32xf32>
    %21 = tpu.matmul %19, %20, %cst_10 {dimension_numbers = #tpu.dot_dimension_numbers<[1], [0], [0], [1], [0, 0, 1, 1], [], []>} : vector<648x3xbf16>, vector<3x32xbf16>, vector<648x32xf32> -> vector<648x32xf32>
    %22 = arith.addf %18, %21 : vector<648x32xf32>
    %23 = vector.extract_strided_slice %5 {offsets = [19, 0], sizes = [648, 3], strides = [1, 1]} : vector<686x3xbf16> to vector<648x3xbf16>
    %c12 = arith.constant 12 : index
    %c0_11 = arith.constant 0 : index
    %24 = vector.load %arg2[%c12, %c0_11] : memref<27x32xbf16, #tpu.memory_space<vmem>>, vector<3x32xbf16>
    %cst_12 = arith.constant dense<0.000000e+00> : vector<648x32xf32>
    %25 = tpu.matmul %23, %24, %cst_12 {dimension_numbers = #tpu.dot_dimension_numbers<[1], [0], [0], [1], [0, 0, 1, 1], [], []>} : vector<648x3xbf16>, vector<3x32xbf16>, vector<648x32xf32> -> vector<648x32xf32>
    %26 = arith.addf %22, %25 : vector<648x32xf32>
    %27 = vector.extract_strided_slice %5 {offsets = [20, 0], sizes = [648, 3], strides = [1, 1]} : vector<686x3xbf16> to vector<648x3xbf16>
    %c15 = arith.constant 15 : index
    %c0_13 = arith.constant 0 : index
    %28 = vector.load %arg2[%c15, %c0_13] : memref<27x32xbf16, #tpu.memory_space<vmem>>, vector<3x32xbf16>
    %cst_14 = arith.constant dense<0.000000e+00> : vector<648x32xf32>
    %29 = tpu.matmul %27, %28, %cst_14 {dimension_numbers = #tpu.dot_dimension_numbers<[1], [0], [0], [1], [0, 0, 1, 1], [], []>} : vector<648x3xbf16>, vector<3x32xbf16>, vector<648x32xf32> -> vector<648x32xf32>
    %30 = arith.addf %26, %29 : vector<648x32xf32>
    %31 = vector.extract_strided_slice %5 {offsets = [36, 0], sizes = [648, 3], strides = [1, 1]} : vector<686x3xbf16> to vector<648x3xbf16>
    %c18 = arith.constant 18 : index
    %c0_15 = arith.constant 0 : index
    %32 = vector.load %arg2[%c18, %c0_15] : memref<27x32xbf16, #tpu.memory_space<vmem>>, vector<3x32xbf16>
    %cst_16 = arith.constant dense<0.000000e+00> : vector<648x32xf32>
    %33 = tpu.matmul %31, %32, %cst_16 {dimension_numbers = #tpu.dot_dimension_numbers<[1], [0], [0], [1], [0, 0, 1, 1], [], []>} : vector<648x3xbf16>, vector<3x32xbf16>, vector<648x32xf32> -> vector<648x32xf32>
    %34 = arith.addf %30, %33 : vector<648x32xf32>
    %35 = vector.extract_strided_slice %5 {offsets = [37, 0], sizes = [648, 3], strides = [1, 1]} : vector<686x3xbf16> to vector<648x3xbf16>
    %c21 = arith.constant 21 : index
    %c0_17 = arith.constant 0 : index
    %36 = vector.load %arg2[%c21, %c0_17] : memref<27x32xbf16, #tpu.memory_space<vmem>>, vector<3x32xbf16>
    %cst_18 = arith.constant dense<0.000000e+00> : vector<648x32xf32>
    %37 = tpu.matmul %35, %36, %cst_18 {dimension_numbers = #tpu.dot_dimension_numbers<[1], [0], [0], [1], [0, 0, 1, 1], [], []>} : vector<648x3xbf16>, vector<3x32xbf16>, vector<648x32xf32> -> vector<648x32xf32>
    %38 = arith.addf %34, %37 : vector<648x32xf32>
    %39 = vector.extract_strided_slice %5 {offsets = [38, 0], sizes = [648, 3], strides = [1, 1]} : vector<686x3xbf16> to vector<648x3xbf16>
    %c24 = arith.constant 24 : index
    %c0_19 = arith.constant 0 : index
    %40 = vector.load %arg2[%c24, %c0_19] : memref<27x32xbf16, #tpu.memory_space<vmem>>, vector<3x32xbf16>
    %cst_20 = arith.constant dense<0.000000e+00> : vector<648x32xf32>
    %41 = tpu.matmul %39, %40, %cst_20 {dimension_numbers = #tpu.dot_dimension_numbers<[1], [0], [0], [1], [0, 0, 1, 1], [], []>} : vector<648x3xbf16>, vector<3x32xbf16>, vector<648x32xf32> -> vector<648x32xf32>
    %42 = arith.addf %38, %41 : vector<648x32xf32>
    %c0_21 = arith.constant 0 : index
    %c0_22 = arith.constant 0 : index
    %43 = vector.load %arg3[%c0_21, %c0_22] : memref<1x32xf32, #tpu.memory_space<vmem>>, vector<1x32xf32>
    %44 = vector.broadcast %43 : vector<1x32xf32> to vector<648x32xf32>
    %45 = arith.addf %42, %44 : vector<648x32xf32>
    %cst_23 = arith.constant 0.000000e+00 : f32
    %46 = vector.broadcast %cst_23 : f32 to vector<648x32xf32>
    %47 = arith.maximumf %45, %46 : vector<648x32xf32>
    %c0_24 = arith.constant 0 : index
    %c0_25 = arith.constant 0 : index
    %48 = vector.load %arg4[%c0_24, %c0_25] : memref<648x32xf32, #tpu.memory_space<vmem>>, vector<648x32xf32>
    tpu.vector_store %arg4[%c0_24, %c0_25], %47 {strides = array<i32>} : memref<648x32xf32, #tpu.memory_space<vmem>>, vector<648x32xf32>,
    return
  }
  func.func @transform_1(%arg0: i32) -> (i32, i32) {
    %c0_i32 = arith.constant 0 : i32
    %c0_i32_0 = arith.constant 0 : i32
    %c0_i32_1 = arith.constant 0 : i32
    return %c0_i32, %c0_i32_0 : i32, i32
  }
  func.func @transform_2(%arg0: i32) -> (i32, i32) {
    %c0_i32 = arith.constant 0 : i32
    %c0_i32_0 = arith.constant 0 : i32
    %c0_i32_1 = arith.constant 0 : i32
    return %c0_i32, %c0_i32_0 : i32, i32
  }
  func.func @transform_3(%arg0: i32) -> (i32, i32) {
    %c0_i32 = arith.constant 0 : i32
    %c0_i32_0 = arith.constant 0 : i32
    return %arg0, %c0_i32 : i32, i32
  }
}

module attributes {stable_mosaic.version = 11 : i64} {
  func.func @_maxpool2x2_kernel(%arg0: i32, %arg1: memref<16x1024xf32, #tpu.memory_space<vmem>>, %arg2: memref<16x256xf32, #tpu.memory_space<vmem>>) attributes {dimension_semantics = [#tpu.dimension_semantics<parallel>], iteration_bounds = array<i64: 1>, scalar_prefetch = 0 : i64, scratch_operands = 0 : i64, tpu.core_type = #tpu.core_type<tc>, window_params = [{transform_indices = @transform_0, window_bounds = array<i64: 16, 1024>}, {transform_indices = @transform_1, window_bounds = array<i64: 16, 256>}]} {
    %c0 = arith.constant 0 : index
    %c0_0 = arith.constant 0 : index
    %0 = vector.load %arg1[%c0, %c0_0] : memref<16x1024xf32, #tpu.memory_space<vmem>>, vector<16x1024xf32>
    %1 = vector.extract_strided_slice %0 {offsets = [0, 0], sizes = [16, 512], strides = [1, 1]} : vector<16x1024xf32> to vector<16x512xf32>
    %2 = vector.extract_strided_slice %0 {offsets = [0, 512], sizes = [16, 512], strides = [1, 1]} : vector<16x1024xf32> to vector<16x512xf32>
    %3 = arith.maximumf %1, %2 : vector<16x512xf32>
    %4 = vector.shape_cast %3 : vector<16x512xf32> to vector<16x8x64xf32>
    %5 = vector.extract_strided_slice %4 {offsets = [0, 0, 0], sizes = [16, 8, 32], strides = [1, 1, 1]} : vector<16x8x64xf32> to vector<16x8x32xf32>
    %6 = vector.extract_strided_slice %4 {offsets = [0, 0, 32], sizes = [16, 8, 32], strides = [1, 1, 1]} : vector<16x8x64xf32> to vector<16x8x32xf32>
    %7 = arith.maximumf %5, %6 : vector<16x8x32xf32>
    %8 = vector.shape_cast %7 : vector<16x8x32xf32> to vector<16x256xf32>
    %c0_1 = arith.constant 0 : index
    %c0_2 = arith.constant 0 : index
    %9 = vector.load %arg2[%c0_1, %c0_2] : memref<16x256xf32, #tpu.memory_space<vmem>>, vector<16x256xf32>
    tpu.vector_store %arg2[%c0_1, %c0_2], %8 {strides = array<i32>} : memref<16x256xf32, #tpu.memory_space<vmem>>, vector<16x256xf32>,
    return
  }
  func.func @transform_0(%arg0: i32) -> (i32, i32) {
    %c0_i32 = arith.constant 0 : i32
    %c0_i32_0 = arith.constant 0 : i32
    return %arg0, %c0_i32 : i32, i32
  }
  func.func @transform_1(%arg0: i32) -> (i32, i32) {
    %c0_i32 = arith.constant 0 : i32
    %c0_i32_0 = arith.constant 0 : i32
    return %arg0, %c0_i32 : i32, i32
  }
}

module attributes {stable_mosaic.version = 11 : i64} {
  func.func @_conv3x3_kernel(%arg0: i32, %arg1: memref<222x32xf32, #tpu.memory_space<any>>, %arg2: memref<288x64xbf16, #tpu.memory_space<vmem>>, %arg3: memref<1x64xf32, #tpu.memory_space<vmem>>, %arg4: memref<200x64xf32, #tpu.memory_space<vmem>>, %arg5: memref<222x32xf32, #tpu.memory_space<vmem>>, %arg6: memref<!tpu.dma_semaphore, #tpu.memory_space<semaphore_mem>>) attributes {dimension_semantics = [#tpu.dimension_semantics<parallel>], iteration_bounds = array<i64: 1>, scalar_prefetch = 0 : i64, scratch_operands = 2 : i64, tpu.core_type = #tpu.core_type<tc>, window_params = [{}, {pipeline_mode = #tpu.pipeline_mode<synchronous>, transform_indices = @transform_1, window_bounds = array<i64: 288, 64>}, {pipeline_mode = #tpu.pipeline_mode<synchronous>, transform_indices = @transform_2, window_bounds = array<i64: 1, 64>}, {transform_indices = @transform_3, window_bounds = array<i64: 200, 64>}]} {
    %c200_i32 = arith.constant 200 : i32
    %0 = arith.muli %arg0, %c200_i32 : i32
    %1 = tpu.assume_multiple %0, 8 : i32
    %c0_i32 = arith.constant 0 : i32
    %2 = tpu.memref_slice %arg1[%1, %c0_i32] : memref<222x32xf32, #tpu.memory_space<any>> -> memref<222x32xf32, #tpu.memory_space<any>>
    tpu.enqueue_dma source(%2 : memref<222x32xf32, #tpu.memory_space<any>>) target(%arg5 : memref<222x32xf32, #tpu.memory_space<vmem>>) target_semaphore(%arg6 : memref<!tpu.dma_semaphore, #tpu.memory_space<semaphore_mem>>)
    %c0_i32_0 = arith.constant 0 : i32
    %3 = tpu.memref_slice %arg1[%1, %c0_i32_0] : memref<222x32xf32, #tpu.memory_space<any>> -> memref<222x32xf32, #tpu.memory_space<any>>
    tpu.wait_dma2 semaphore(%arg6 : memref<!tpu.dma_semaphore, #tpu.memory_space<semaphore_mem>>) src(%3 : memref<222x32xf32, #tpu.memory_space<any>>) dst(%arg5 : memref<222x32xf32, #tpu.memory_space<vmem>>)
    %c0 = arith.constant 0 : index
    %c0_1 = arith.constant 0 : index
    %4 = vector.load %arg5[%c0, %c0_1] : memref<222x32xf32, #tpu.memory_space<vmem>>, vector<222x32xf32>
    %5 = arith.truncf %4 : vector<222x32xf32> to vector<222x32xbf16>
    %cst = arith.constant 0.000000e+00 : f32
    %6 = vector.broadcast %cst : f32 to vector<200x64xf32>
    %7 = vector.extract_strided_slice %5 {offsets = [0, 0], sizes = [200, 32], strides = [1, 1]} : vector<222x32xbf16> to vector<200x32xbf16>
    %c0_2 = arith.constant 0 : index
    %c0_3 = arith.constant 0 : index
    %8 = vector.load %arg2[%c0_2, %c0_3] : memref<288x64xbf16, #tpu.memory_space<vmem>>, vector<32x64xbf16>
    %cst_4 = arith.constant dense<0.000000e+00> : vector<200x64xf32>
    %9 = tpu.matmul %7, %8, %cst_4 {dimension_numbers = #tpu.dot_dimension_numbers<[1], [0], [0], [1], [0, 0, 1, 1], [], []>} : vector<200x32xbf16>, vector<32x64xbf16>, vector<200x64xf32> -> vector<200x64xf32>
    %10 = arith.addf %6, %9 : vector<200x64xf32>
    %11 = vector.extract_strided_slice %5 {offsets = [1, 0], sizes = [200, 32], strides = [1, 1]} : vector<222x32xbf16> to vector<200x32xbf16>
    %c32 = arith.constant 32 : index
    %c0_5 = arith.constant 0 : index
    %12 = vector.load %arg2[%c32, %c0_5] : memref<288x64xbf16, #tpu.memory_space<vmem>>, vector<32x64xbf16>
    %cst_6 = arith.constant dense<0.000000e+00> : vector<200x64xf32>
    %13 = tpu.matmul %11, %12, %cst_6 {dimension_numbers = #tpu.dot_dimension_numbers<[1], [0], [0], [1], [0, 0, 1, 1], [], []>} : vector<200x32xbf16>, vector<32x64xbf16>, vector<200x64xf32> -> vector<200x64xf32>
    %14 = arith.addf %10, %13 : vector<200x64xf32>
    %15 = vector.extract_strided_slice %5 {offsets = [2, 0], sizes = [200, 32], strides = [1, 1]} : vector<222x32xbf16> to vector<200x32xbf16>
    %c64 = arith.constant 64 : index
    %c0_7 = arith.constant 0 : index
    %16 = vector.load %arg2[%c64, %c0_7] : memref<288x64xbf16, #tpu.memory_space<vmem>>, vector<32x64xbf16>
    %cst_8 = arith.constant dense<0.000000e+00> : vector<200x64xf32>
    %17 = tpu.matmul %15, %16, %cst_8 {dimension_numbers = #tpu.dot_dimension_numbers<[1], [0], [0], [1], [0, 0, 1, 1], [], []>} : vector<200x32xbf16>, vector<32x64xbf16>, vector<200x64xf32> -> vector<200x64xf32>
    %18 = arith.addf %14, %17 : vector<200x64xf32>
    %19 = vector.extract_strided_slice %5 {offsets = [10, 0], sizes = [200, 32], strides = [1, 1]} : vector<222x32xbf16> to vector<200x32xbf16>
    %c96 = arith.constant 96 : index
    %c0_9 = arith.constant 0 : index
    %20 = vector.load %arg2[%c96, %c0_9] : memref<288x64xbf16, #tpu.memory_space<vmem>>, vector<32x64xbf16>
    %cst_10 = arith.constant dense<0.000000e+00> : vector<200x64xf32>
    %21 = tpu.matmul %19, %20, %cst_10 {dimension_numbers = #tpu.dot_dimension_numbers<[1], [0], [0], [1], [0, 0, 1, 1], [], []>} : vector<200x32xbf16>, vector<32x64xbf16>, vector<200x64xf32> -> vector<200x64xf32>
    %22 = arith.addf %18, %21 : vector<200x64xf32>
    %23 = vector.extract_strided_slice %5 {offsets = [11, 0], sizes = [200, 32], strides = [1, 1]} : vector<222x32xbf16> to vector<200x32xbf16>
    %c128 = arith.constant 128 : index
    %c0_11 = arith.constant 0 : index
    %24 = vector.load %arg2[%c128, %c0_11] : memref<288x64xbf16, #tpu.memory_space<vmem>>, vector<32x64xbf16>
    %cst_12 = arith.constant dense<0.000000e+00> : vector<200x64xf32>
    %25 = tpu.matmul %23, %24, %cst_12 {dimension_numbers = #tpu.dot_dimension_numbers<[1], [0], [0], [1], [0, 0, 1, 1], [], []>} : vector<200x32xbf16>, vector<32x64xbf16>, vector<200x64xf32> -> vector<200x64xf32>
    %26 = arith.addf %22, %25 : vector<200x64xf32>
    %27 = vector.extract_strided_slice %5 {offsets = [12, 0], sizes = [200, 32], strides = [1, 1]} : vector<222x32xbf16> to vector<200x32xbf16>
    %c160 = arith.constant 160 : index
    %c0_13 = arith.constant 0 : index
    %28 = vector.load %arg2[%c160, %c0_13] : memref<288x64xbf16, #tpu.memory_space<vmem>>, vector<32x64xbf16>
    %cst_14 = arith.constant dense<0.000000e+00> : vector<200x64xf32>
    %29 = tpu.matmul %27, %28, %cst_14 {dimension_numbers = #tpu.dot_dimension_numbers<[1], [0], [0], [1], [0, 0, 1, 1], [], []>} : vector<200x32xbf16>, vector<32x64xbf16>, vector<200x64xf32> -> vector<200x64xf32>
    %30 = arith.addf %26, %29 : vector<200x64xf32>
    %31 = vector.extract_strided_slice %5 {offsets = [20, 0], sizes = [200, 32], strides = [1, 1]} : vector<222x32xbf16> to vector<200x32xbf16>
    %c192 = arith.constant 192 : index
    %c0_15 = arith.constant 0 : index
    %32 = vector.load %arg2[%c192, %c0_15] : memref<288x64xbf16, #tpu.memory_space<vmem>>, vector<32x64xbf16>
    %cst_16 = arith.constant dense<0.000000e+00> : vector<200x64xf32>
    %33 = tpu.matmul %31, %32, %cst_16 {dimension_numbers = #tpu.dot_dimension_numbers<[1], [0], [0], [1], [0, 0, 1, 1], [], []>} : vector<200x32xbf16>, vector<32x64xbf16>, vector<200x64xf32> -> vector<200x64xf32>
    %34 = arith.addf %30, %33 : vector<200x64xf32>
    %35 = vector.extract_strided_slice %5 {offsets = [21, 0], sizes = [200, 32], strides = [1, 1]} : vector<222x32xbf16> to vector<200x32xbf16>
    %c224 = arith.constant 224 : index
    %c0_17 = arith.constant 0 : index
    %36 = vector.load %arg2[%c224, %c0_17] : memref<288x64xbf16, #tpu.memory_space<vmem>>, vector<32x64xbf16>
    %cst_18 = arith.constant dense<0.000000e+00> : vector<200x64xf32>
    %37 = tpu.matmul %35, %36, %cst_18 {dimension_numbers = #tpu.dot_dimension_numbers<[1], [0], [0], [1], [0, 0, 1, 1], [], []>} : vector<200x32xbf16>, vector<32x64xbf16>, vector<200x64xf32> -> vector<200x64xf32>
    %38 = arith.addf %34, %37 : vector<200x64xf32>
    %39 = vector.extract_strided_slice %5 {offsets = [22, 0], sizes = [200, 32], strides = [1, 1]} : vector<222x32xbf16> to vector<200x32xbf16>
    %c256 = arith.constant 256 : index
    %c0_19 = arith.constant 0 : index
    %40 = vector.load %arg2[%c256, %c0_19] : memref<288x64xbf16, #tpu.memory_space<vmem>>, vector<32x64xbf16>
    %cst_20 = arith.constant dense<0.000000e+00> : vector<200x64xf32>
    %41 = tpu.matmul %39, %40, %cst_20 {dimension_numbers = #tpu.dot_dimension_numbers<[1], [0], [0], [1], [0, 0, 1, 1], [], []>} : vector<200x32xbf16>, vector<32x64xbf16>, vector<200x64xf32> -> vector<200x64xf32>
    %42 = arith.addf %38, %41 : vector<200x64xf32>
    %c0_21 = arith.constant 0 : index
    %c0_22 = arith.constant 0 : index
    %43 = vector.load %arg3[%c0_21, %c0_22] : memref<1x64xf32, #tpu.memory_space<vmem>>, vector<1x64xf32>
    %44 = vector.broadcast %43 : vector<1x64xf32> to vector<200x64xf32>
    %45 = arith.addf %42, %44 : vector<200x64xf32>
    %cst_23 = arith.constant 0.000000e+00 : f32
    %46 = vector.broadcast %cst_23 : f32 to vector<200x64xf32>
    %47 = arith.maximumf %45, %46 : vector<200x64xf32>
    %c0_24 = arith.constant 0 : index
    %c0_25 = arith.constant 0 : index
    %48 = vector.load %arg4[%c0_24, %c0_25] : memref<200x64xf32, #tpu.memory_space<vmem>>, vector<200x64xf32>
    tpu.vector_store %arg4[%c0_24, %c0_25], %47 {strides = array<i32>} : memref<200x64xf32, #tpu.memory_space<vmem>>, vector<200x64xf32>,
    return
  }
  func.func @transform_1(%arg0: i32) -> (i32, i32) {
    %c0_i32 = arith.constant 0 : i32
    %c0_i32_0 = arith.constant 0 : i32
    %c0_i32_1 = arith.constant 0 : i32
    return %c0_i32, %c0_i32_0 : i32, i32
  }
  func.func @transform_2(%arg0: i32) -> (i32, i32) {
    %c0_i32 = arith.constant 0 : i32
    %c0_i32_0 = arith.constant 0 : i32
    %c0_i32_1 = arith.constant 0 : i32
    return %c0_i32, %c0_i32_0 : i32, i32
  }
  func.func @transform_3(%arg0: i32) -> (i32, i32) {
    %c0_i32 = arith.constant 0 : i32
    %c0_i32_0 = arith.constant 0 : i32
    return %arg0, %c0_i32 : i32, i32
  }
}

module attributes {stable_mosaic.version = 11 : i64} {
  func.func @_maxpool2x2_kernel(%arg0: i32, %arg1: memref<8x1024xf32, #tpu.memory_space<vmem>>, %arg2: memref<8x256xf32, #tpu.memory_space<vmem>>) attributes {dimension_semantics = [#tpu.dimension_semantics<parallel>], iteration_bounds = array<i64: 1>, scalar_prefetch = 0 : i64, scratch_operands = 0 : i64, tpu.core_type = #tpu.core_type<tc>, window_params = [{transform_indices = @transform_0, window_bounds = array<i64: 8, 1024>}, {transform_indices = @transform_1, window_bounds = array<i64: 8, 256>}]} {
    %c0 = arith.constant 0 : index
    %c0_0 = arith.constant 0 : index
    %0 = vector.load %arg1[%c0, %c0_0] : memref<8x1024xf32, #tpu.memory_space<vmem>>, vector<8x1024xf32>
    %1 = vector.extract_strided_slice %0 {offsets = [0, 0], sizes = [8, 512], strides = [1, 1]} : vector<8x1024xf32> to vector<8x512xf32>
    %2 = vector.extract_strided_slice %0 {offsets = [0, 512], sizes = [8, 512], strides = [1, 1]} : vector<8x1024xf32> to vector<8x512xf32>
    %3 = arith.maximumf %1, %2 : vector<8x512xf32>
    %4 = vector.shape_cast %3 : vector<8x512xf32> to vector<8x4x128xf32>
    %5 = vector.extract_strided_slice %4 {offsets = [0, 0, 0], sizes = [8, 4, 64], strides = [1, 1, 1]} : vector<8x4x128xf32> to vector<8x4x64xf32>
    %6 = vector.extract_strided_slice %4 {offsets = [0, 0, 64], sizes = [8, 4, 64], strides = [1, 1, 1]} : vector<8x4x128xf32> to vector<8x4x64xf32>
    %7 = arith.maximumf %5, %6 : vector<8x4x64xf32>
    %8 = vector.shape_cast %7 : vector<8x4x64xf32> to vector<8x256xf32>
    %c0_1 = arith.constant 0 : index
    %c0_2 = arith.constant 0 : index
    %9 = vector.load %arg2[%c0_1, %c0_2] : memref<8x256xf32, #tpu.memory_space<vmem>>, vector<8x256xf32>
    tpu.vector_store %arg2[%c0_1, %c0_2], %8 {strides = array<i32>} : memref<8x256xf32, #tpu.memory_space<vmem>>, vector<8x256xf32>,
    return
  }
  func.func @transform_0(%arg0: i32) -> (i32, i32) {
    %c0_i32 = arith.constant 0 : i32
    %c0_i32_0 = arith.constant 0 : i32
    return %arg0, %c0_i32 : i32, i32
  }
  func.func @transform_1(%arg0: i32) -> (i32, i32) {
    %c0_i32 = arith.constant 0 : i32
    %c0_i32_0 = arith.constant 0 : i32
    return %arg0, %c0_i32 : i32, i32
  }
}

module attributes {stable_mosaic.version = 11 : i64} {
  func.func @_conv3x3_kernel(%arg0: i32, %arg1: memref<86x64xf32, #tpu.memory_space<any>>, %arg2: memref<576x128xbf16, #tpu.memory_space<vmem>>, %arg3: memref<1x128xf32, #tpu.memory_space<vmem>>, %arg4: memref<72x128xf32, #tpu.memory_space<vmem>>, %arg5: memref<86x64xf32, #tpu.memory_space<vmem>>, %arg6: memref<!tpu.dma_semaphore, #tpu.memory_space<semaphore_mem>>) attributes {dimension_semantics = [#tpu.dimension_semantics<parallel>], iteration_bounds = array<i64: 1>, scalar_prefetch = 0 : i64, scratch_operands = 2 : i64, tpu.core_type = #tpu.core_type<tc>, window_params = [{}, {pipeline_mode = #tpu.pipeline_mode<synchronous>, transform_indices = @transform_1, window_bounds = array<i64: 576, 128>}, {pipeline_mode = #tpu.pipeline_mode<synchronous>, transform_indices = @transform_2, window_bounds = array<i64: 1, 128>}, {transform_indices = @transform_3, window_bounds = array<i64: 72, 128>}]} {
    %c72_i32 = arith.constant 72 : i32
    %0 = arith.muli %arg0, %c72_i32 : i32
    %1 = tpu.assume_multiple %0, 8 : i32
    %c0_i32 = arith.constant 0 : i32
    %2 = tpu.memref_slice %arg1[%1, %c0_i32] : memref<86x64xf32, #tpu.memory_space<any>> -> memref<86x64xf32, #tpu.memory_space<any>>
    tpu.enqueue_dma source(%2 : memref<86x64xf32, #tpu.memory_space<any>>) target(%arg5 : memref<86x64xf32, #tpu.memory_space<vmem>>) target_semaphore(%arg6 : memref<!tpu.dma_semaphore, #tpu.memory_space<semaphore_mem>>)
    %c0_i32_0 = arith.constant 0 : i32
    %3 = tpu.memref_slice %arg1[%1, %c0_i32_0] : memref<86x64xf32, #tpu.memory_space<any>> -> memref<86x64xf32, #tpu.memory_space<any>>
    tpu.wait_dma2 semaphore(%arg6 : memref<!tpu.dma_semaphore, #tpu.memory_space<semaphore_mem>>) src(%3 : memref<86x64xf32, #tpu.memory_space<any>>) dst(%arg5 : memref<86x64xf32, #tpu.memory_space<vmem>>)
    %c0 = arith.constant 0 : index
    %c0_1 = arith.constant 0 : index
    %4 = vector.load %arg5[%c0, %c0_1] : memref<86x64xf32, #tpu.memory_space<vmem>>, vector<86x64xf32>
    %5 = arith.truncf %4 : vector<86x64xf32> to vector<86x64xbf16>
    %cst = arith.constant 0.000000e+00 : f32
    %6 = vector.broadcast %cst : f32 to vector<72x128xf32>
    %7 = vector.extract_strided_slice %5 {offsets = [0, 0], sizes = [72, 64], strides = [1, 1]} : vector<86x64xbf16> to vector<72x64xbf16>
    %c0_2 = arith.constant 0 : index
    %c0_3 = arith.constant 0 : index
    %8 = vector.load %arg2[%c0_2, %c0_3] : memref<576x128xbf16, #tpu.memory_space<vmem>>, vector<64x128xbf16>
    %cst_4 = arith.constant dense<0.000000e+00> : vector<72x128xf32>
    %9 = tpu.matmul %7, %8, %cst_4 {dimension_numbers = #tpu.dot_dimension_numbers<[1], [0], [0], [1], [0, 0, 1, 1], [], []>} : vector<72x64xbf16>, vector<64x128xbf16>, vector<72x128xf32> -> vector<72x128xf32>
    %10 = arith.addf %6, %9 : vector<72x128xf32>
    %11 = vector.extract_strided_slice %5 {offsets = [1, 0], sizes = [72, 64], strides = [1, 1]} : vector<86x64xbf16> to vector<72x64xbf16>
    %c64 = arith.constant 64 : index
    %c0_5 = arith.constant 0 : index
    %12 = vector.load %arg2[%c64, %c0_5] : memref<576x128xbf16, #tpu.memory_space<vmem>>, vector<64x128xbf16>
    %cst_6 = arith.constant dense<0.000000e+00> : vector<72x128xf32>
    %13 = tpu.matmul %11, %12, %cst_6 {dimension_numbers = #tpu.dot_dimension_numbers<[1], [0], [0], [1], [0, 0, 1, 1], [], []>} : vector<72x64xbf16>, vector<64x128xbf16>, vector<72x128xf32> -> vector<72x128xf32>
    %14 = arith.addf %10, %13 : vector<72x128xf32>
    %15 = vector.extract_strided_slice %5 {offsets = [2, 0], sizes = [72, 64], strides = [1, 1]} : vector<86x64xbf16> to vector<72x64xbf16>
    %c128 = arith.constant 128 : index
    %c0_7 = arith.constant 0 : index
    %16 = vector.load %arg2[%c128, %c0_7] : memref<576x128xbf16, #tpu.memory_space<vmem>>, vector<64x128xbf16>
    %cst_8 = arith.constant dense<0.000000e+00> : vector<72x128xf32>
    %17 = tpu.matmul %15, %16, %cst_8 {dimension_numbers = #tpu.dot_dimension_numbers<[1], [0], [0], [1], [0, 0, 1, 1], [], []>} : vector<72x64xbf16>, vector<64x128xbf16>, vector<72x128xf32> -> vector<72x128xf32>
    %18 = arith.addf %14, %17 : vector<72x128xf32>
    %19 = vector.extract_strided_slice %5 {offsets = [6, 0], sizes = [72, 64], strides = [1, 1]} : vector<86x64xbf16> to vector<72x64xbf16>
    %c192 = arith.constant 192 : index
    %c0_9 = arith.constant 0 : index
    %20 = vector.load %arg2[%c192, %c0_9] : memref<576x128xbf16, #tpu.memory_space<vmem>>, vector<64x128xbf16>
    %cst_10 = arith.constant dense<0.000000e+00> : vector<72x128xf32>
    %21 = tpu.matmul %19, %20, %cst_10 {dimension_numbers = #tpu.dot_dimension_numbers<[1], [0], [0], [1], [0, 0, 1, 1], [], []>} : vector<72x64xbf16>, vector<64x128xbf16>, vector<72x128xf32> -> vector<72x128xf32>
    %22 = arith.addf %18, %21 : vector<72x128xf32>
    %23 = vector.extract_strided_slice %5 {offsets = [7, 0], sizes = [72, 64], strides = [1, 1]} : vector<86x64xbf16> to vector<72x64xbf16>
    %c256 = arith.constant 256 : index
    %c0_11 = arith.constant 0 : index
    %24 = vector.load %arg2[%c256, %c0_11] : memref<576x128xbf16, #tpu.memory_space<vmem>>, vector<64x128xbf16>
    %cst_12 = arith.constant dense<0.000000e+00> : vector<72x128xf32>
    %25 = tpu.matmul %23, %24, %cst_12 {dimension_numbers = #tpu.dot_dimension_numbers<[1], [0], [0], [1], [0, 0, 1, 1], [], []>} : vector<72x64xbf16>, vector<64x128xbf16>, vector<72x128xf32> -> vector<72x128xf32>
    %26 = arith.addf %22, %25 : vector<72x128xf32>
    %27 = vector.extract_strided_slice %5 {offsets = [8, 0], sizes = [72, 64], strides = [1, 1]} : vector<86x64xbf16> to vector<72x64xbf16>
    %c320 = arith.constant 320 : index
    %c0_13 = arith.constant 0 : index
    %28 = vector.load %arg2[%c320, %c0_13] : memref<576x128xbf16, #tpu.memory_space<vmem>>, vector<64x128xbf16>
    %cst_14 = arith.constant dense<0.000000e+00> : vector<72x128xf32>
    %29 = tpu.matmul %27, %28, %cst_14 {dimension_numbers = #tpu.dot_dimension_numbers<[1], [0], [0], [1], [0, 0, 1, 1], [], []>} : vector<72x64xbf16>, vector<64x128xbf16>, vector<72x128xf32> -> vector<72x128xf32>
    %30 = arith.addf %26, %29 : vector<72x128xf32>
    %31 = vector.extract_strided_slice %5 {offsets = [12, 0], sizes = [72, 64], strides = [1, 1]} : vector<86x64xbf16> to vector<72x64xbf16>
    %c384 = arith.constant 384 : index
    %c0_15 = arith.constant 0 : index
    %32 = vector.load %arg2[%c384, %c0_15] : memref<576x128xbf16, #tpu.memory_space<vmem>>, vector<64x128xbf16>
    %cst_16 = arith.constant dense<0.000000e+00> : vector<72x128xf32>
    %33 = tpu.matmul %31, %32, %cst_16 {dimension_numbers = #tpu.dot_dimension_numbers<[1], [0], [0], [1], [0, 0, 1, 1], [], []>} : vector<72x64xbf16>, vector<64x128xbf16>, vector<72x128xf32> -> vector<72x128xf32>
    %34 = arith.addf %30, %33 : vector<72x128xf32>
    %35 = vector.extract_strided_slice %5 {offsets = [13, 0], sizes = [72, 64], strides = [1, 1]} : vector<86x64xbf16> to vector<72x64xbf16>
    %c448 = arith.constant 448 : index
    %c0_17 = arith.constant 0 : index
    %36 = vector.load %arg2[%c448, %c0_17] : memref<576x128xbf16, #tpu.memory_space<vmem>>, vector<64x128xbf16>
    %cst_18 = arith.constant dense<0.000000e+00> : vector<72x128xf32>
    %37 = tpu.matmul %35, %36, %cst_18 {dimension_numbers = #tpu.dot_dimension_numbers<[1], [0], [0], [1], [0, 0, 1, 1], [], []>} : vector<72x64xbf16>, vector<64x128xbf16>, vector<72x128xf32> -> vector<72x128xf32>
    %38 = arith.addf %34, %37 : vector<72x128xf32>
    %39 = vector.extract_strided_slice %5 {offsets = [14, 0], sizes = [72, 64], strides = [1, 1]} : vector<86x64xbf16> to vector<72x64xbf16>
    %c512 = arith.constant 512 : index
    %c0_19 = arith.constant 0 : index
    %40 = vector.load %arg2[%c512, %c0_19] : memref<576x128xbf16, #tpu.memory_space<vmem>>, vector<64x128xbf16>
    %cst_20 = arith.constant dense<0.000000e+00> : vector<72x128xf32>
    %41 = tpu.matmul %39, %40, %cst_20 {dimension_numbers = #tpu.dot_dimension_numbers<[1], [0], [0], [1], [0, 0, 1, 1], [], []>} : vector<72x64xbf16>, vector<64x128xbf16>, vector<72x128xf32> -> vector<72x128xf32>
    %42 = arith.addf %38, %41 : vector<72x128xf32>
    %c0_21 = arith.constant 0 : index
    %c0_22 = arith.constant 0 : index
    %43 = vector.load %arg3[%c0_21, %c0_22] : memref<1x128xf32, #tpu.memory_space<vmem>>, vector<1x128xf32>
    %44 = vector.broadcast %43 : vector<1x128xf32> to vector<72x128xf32>
    %45 = arith.addf %42, %44 : vector<72x128xf32>
    %cst_23 = arith.constant 0.000000e+00 : f32
    %46 = vector.broadcast %cst_23 : f32 to vector<72x128xf32>
    %47 = arith.maximumf %45, %46 : vector<72x128xf32>
    %c0_24 = arith.constant 0 : index
    %c0_25 = arith.constant 0 : index
    %48 = vector.load %arg4[%c0_24, %c0_25] : memref<72x128xf32, #tpu.memory_space<vmem>>, vector<72x128xf32>
    tpu.vector_store %arg4[%c0_24, %c0_25], %47 {strides = array<i32>} : memref<72x128xf32, #tpu.memory_space<vmem>>, vector<72x128xf32>,
    return
  }
  func.func @transform_1(%arg0: i32) -> (i32, i32) {
    %c0_i32 = arith.constant 0 : i32
    %c0_i32_0 = arith.constant 0 : i32
    %c0_i32_1 = arith.constant 0 : i32
    return %c0_i32, %c0_i32_0 : i32, i32
  }
  func.func @transform_2(%arg0: i32) -> (i32, i32) {
    %c0_i32 = arith.constant 0 : i32
    %c0_i32_0 = arith.constant 0 : i32
    %c0_i32_1 = arith.constant 0 : i32
    return %c0_i32, %c0_i32_0 : i32, i32
  }
  func.func @transform_3(%arg0: i32) -> (i32, i32) {
    %c0_i32 = arith.constant 0 : i32
    %c0_i32_0 = arith.constant 0 : i32
    return %arg0, %c0_i32 : i32, i32
  }
}

module attributes {stable_mosaic.version = 11 : i64} {
  func.func @_maxpool2x2_kernel(%arg0: i32, %arg1: memref<4x1024xf32, #tpu.memory_space<vmem>>, %arg2: memref<4x256xf32, #tpu.memory_space<vmem>>) attributes {dimension_semantics = [#tpu.dimension_semantics<parallel>], iteration_bounds = array<i64: 1>, scalar_prefetch = 0 : i64, scratch_operands = 0 : i64, tpu.core_type = #tpu.core_type<tc>, window_params = [{transform_indices = @transform_0, window_bounds = array<i64: 4, 1024>}, {transform_indices = @transform_1, window_bounds = array<i64: 4, 256>}]} {
    %c0 = arith.constant 0 : index
    %c0_0 = arith.constant 0 : index
    %0 = vector.load %arg1[%c0, %c0_0] : memref<4x1024xf32, #tpu.memory_space<vmem>>, vector<4x1024xf32>
    %1 = vector.extract_strided_slice %0 {offsets = [0, 0], sizes = [4, 512], strides = [1, 1]} : vector<4x1024xf32> to vector<4x512xf32>
    %2 = vector.extract_strided_slice %0 {offsets = [0, 512], sizes = [4, 512], strides = [1, 1]} : vector<4x1024xf32> to vector<4x512xf32>
    %3 = arith.maximumf %1, %2 : vector<4x512xf32>
    %4 = vector.shape_cast %3 : vector<4x512xf32> to vector<4x2x256xf32>
    %5 = vector.extract_strided_slice %4 {offsets = [0, 0, 0], sizes = [4, 2, 128], strides = [1, 1, 1]} : vector<4x2x256xf32> to vector<4x2x128xf32>
    %6 = vector.extract_strided_slice %4 {offsets = [0, 0, 128], sizes = [4, 2, 128], strides = [1, 1, 1]} : vector<4x2x256xf32> to vector<4x2x128xf32>
    %7 = arith.maximumf %5, %6 : vector<4x2x128xf32>
    %8 = vector.shape_cast %7 : vector<4x2x128xf32> to vector<4x256xf32>
    %c0_1 = arith.constant 0 : index
    %c0_2 = arith.constant 0 : index
    %9 = vector.load %arg2[%c0_1, %c0_2] : memref<4x256xf32, #tpu.memory_space<vmem>>, vector<4x256xf32>
    tpu.vector_store %arg2[%c0_1, %c0_2], %8 {strides = array<i32>} : memref<4x256xf32, #tpu.memory_space<vmem>>, vector<4x256xf32>,
    return
  }
  func.func @transform_0(%arg0: i32) -> (i32, i32) {
    %c0_i32 = arith.constant 0 : i32
    %c0_i32_0 = arith.constant 0 : i32
    return %arg0, %c0_i32 : i32, i32
  }
  func.func @transform_1(%arg0: i32) -> (i32, i32) {
    %c0_i32 = arith.constant 0 : i32
    %c0_i32_0 = arith.constant 0 : i32
    return %arg0, %c0_i32 : i32, i32
  }
}

module attributes {stable_mosaic.version = 11 : i64} {
  func.func @_matmul_bias_act_kernel(%arg0: i32, %arg1: i32, %arg2: i32, %arg3: memref<8x512xf32, #tpu.memory_space<vmem>>, %arg4: memref<512x256xbf16, #tpu.memory_space<vmem>>, %arg5: memref<1x256xf32, #tpu.memory_space<vmem>>, %arg6: memref<8x256xf32, #tpu.memory_space<vmem>>, %arg7: memref<8x256xf32, #tpu.memory_space<vmem>>) attributes {dimension_semantics = [#tpu.dimension_semantics<parallel>, #tpu.dimension_semantics<parallel>, #tpu.dimension_semantics<arbitrary>], iteration_bounds = array<i64: 1, 2, 1>, scalar_prefetch = 0 : i64, scratch_operands = 1 : i64, tpu.core_type = #tpu.core_type<tc>, window_params = [{transform_indices = @transform_0, window_bounds = array<i64: 8, 512>}, {transform_indices = @transform_1, window_bounds = array<i64: 512, 256>}, {transform_indices = @transform_2, window_bounds = array<i64: 1, 256>}, {transform_indices = @transform_3, window_bounds = array<i64: 8, 256>}]} {
    %c0_i32 = arith.constant 0 : i32
    %0 = arith.cmpi eq, %arg2, %c0_i32 : i32
    %1 = arith.extui %0 : i1 to i32
    %c0_i32_0 = arith.constant 0 : i32
    %2 = arith.cmpi ne, %1, %c0_i32_0 : i32
    scf.if %2 {
      %cst_10 = arith.constant 0.000000e+00 : f32
      %13 = vector.broadcast %cst_10 : f32 to vector<8x256xf32>
      %c0_11 = arith.constant 0 : index
      %c0_12 = arith.constant 0 : index
      %14 = vector.load %arg7[%c0_11, %c0_12] : memref<8x256xf32, #tpu.memory_space<vmem>>, vector<8x256xf32>
      tpu.vector_store %arg7[%c0_11, %c0_12], %13 {strides = array<i32>} : memref<8x256xf32, #tpu.memory_space<vmem>>, vector<8x256xf32>,
    } else {
    }
    %c0 = arith.constant 0 : index
    %c0_1 = arith.constant 0 : index
    %3 = vector.load %arg7[%c0, %c0_1] : memref<8x256xf32, #tpu.memory_space<vmem>>, vector<8x256xf32>
    %c0_2 = arith.constant 0 : index
    %c0_3 = arith.constant 0 : index
    %4 = vector.load %arg3[%c0_2, %c0_3] : memref<8x512xf32, #tpu.memory_space<vmem>>, vector<8x512xf32>
    %5 = arith.truncf %4 : vector<8x512xf32> to vector<8x512xbf16>
    %c0_4 = arith.constant 0 : index
    %c0_5 = arith.constant 0 : index
    %6 = vector.load %arg4[%c0_4, %c0_5] : memref<512x256xbf16, #tpu.memory_space<vmem>>, vector<512x256xbf16>
    %cst = arith.constant dense<0.000000e+00> : vector<8x256xf32>
    %7 = tpu.matmul %5, %6, %cst {dimension_numbers = #tpu.dot_dimension_numbers<[1], [0], [0], [1], [0, 0, 1, 1], [], []>} : vector<8x512xbf16>, vector<512x256xbf16>, vector<8x256xf32> -> vector<8x256xf32>
    %8 = arith.addf %3, %7 : vector<8x256xf32>
    %c0_6 = arith.constant 0 : index
    %c0_7 = arith.constant 0 : index
    %9 = vector.load %arg7[%c0_6, %c0_7] : memref<8x256xf32, #tpu.memory_space<vmem>>, vector<8x256xf32>
    tpu.vector_store %arg7[%c0_6, %c0_7], %8 {strides = array<i32>} : memref<8x256xf32, #tpu.memory_space<vmem>>, vector<8x256xf32>,
    %c0_i32_8 = arith.constant 0 : i32
    %10 = arith.cmpi eq, %arg2, %c0_i32_8 : i32
    %11 = arith.extui %10 : i1 to i32
    %c0_i32_9 = arith.constant 0 : i32
    %12 = arith.cmpi ne, %11, %c0_i32_9 : i32
    scf.if %12 {
      %c0_10 = arith.constant 0 : index
      %c0_11 = arith.constant 0 : index
      %13 = vector.load %arg7[%c0_10, %c0_11] : memref<8x256xf32, #tpu.memory_space<vmem>>, vector<8x256xf32>
      %c0_12 = arith.constant 0 : index
      %c0_13 = arith.constant 0 : index
      %14 = vector.load %arg5[%c0_12, %c0_13] : memref<1x256xf32, #tpu.memory_space<vmem>>, vector<1x256xf32>
      %15 = vector.broadcast %14 : vector<1x256xf32> to vector<8x256xf32>
      %16 = arith.addf %13, %15 : vector<8x256xf32>
      %cst_14 = arith.constant 0.000000e+00 : f32
      %17 = vector.broadcast %cst_14 : f32 to vector<8x256xf32>
      %18 = arith.maximumf %16, %17 : vector<8x256xf32>
      %c0_15 = arith.constant 0 : index
      %c0_16 = arith.constant 0 : index
      %19 = vector.load %arg6[%c0_15, %c0_16] : memref<8x256xf32, #tpu.memory_space<vmem>>, vector<8x256xf32>
      tpu.vector_store %arg6[%c0_15, %c0_16], %18 {strides = array<i32>} : memref<8x256xf32, #tpu.memory_space<vmem>>, vector<8x256xf32>,
    } else {
    }
    return
  }
  func.func @transform_0(%arg0: i32, %arg1: i32, %arg2: i32) -> (i32, i32) {
    %c0_i32 = arith.constant 0 : i32
    return %arg0, %arg2 : i32, i32
  }
  func.func @transform_1(%arg0: i32, %arg1: i32, %arg2: i32) -> (i32, i32) {
    %c0_i32 = arith.constant 0 : i32
    return %arg2, %arg1 : i32, i32
  }
  func.func @transform_2(%arg0: i32, %arg1: i32, %arg2: i32) -> (i32, i32) {
    %c0_i32 = arith.constant 0 : i32
    %c0_i32_0 = arith.constant 0 : i32
    return %c0_i32, %arg1 : i32, i32
  }
  func.func @transform_3(%arg0: i32, %arg1: i32, %arg2: i32) -> (i32, i32) {
    %c0_i32 = arith.constant 0 : i32
    return %arg0, %arg1 : i32, i32
  }
}

module attributes {stable_mosaic.version = 11 : i64} {
  func.func @_matmul_bias_act_kernel(%arg0: i32, %arg1: i32, %arg2: i32, %arg3: memref<8x512xf32, #tpu.memory_space<vmem>>, %arg4: memref<512x128xbf16, #tpu.memory_space<vmem>>, %arg5: memref<1x128xf32, #tpu.memory_space<vmem>>, %arg6: memref<8x128xf32, #tpu.memory_space<vmem>>, %arg7: memref<8x128xf32, #tpu.memory_space<vmem>>) attributes {dimension_semantics = [#tpu.dimension_semantics<parallel>, #tpu.dimension_semantics<parallel>, #tpu.dimension_semantics<arbitrary>], iteration_bounds = array<i64: 1, 1, 1>, scalar_prefetch = 0 : i64, scratch_operands = 1 : i64, tpu.core_type = #tpu.core_type<tc>, window_params = [{transform_indices = @transform_0, window_bounds = array<i64: 8, 512>}, {transform_indices = @transform_1, window_bounds = array<i64: 512, 128>}, {transform_indices = @transform_2, window_bounds = array<i64: 1, 128>}, {transform_indices = @transform_3, window_bounds = array<i64: 8, 128>}]} {
    %c0_i32 = arith.constant 0 : i32
    %0 = arith.cmpi eq, %arg2, %c0_i32 : i32
    %1 = arith.extui %0 : i1 to i32
    %c0_i32_0 = arith.constant 0 : i32
    %2 = arith.cmpi ne, %1, %c0_i32_0 : i32
    scf.if %2 {
      %cst_10 = arith.constant 0.000000e+00 : f32
      %13 = vector.broadcast %cst_10 : f32 to vector<8x128xf32>
      %c0_11 = arith.constant 0 : index
      %c0_12 = arith.constant 0 : index
      %14 = vector.load %arg7[%c0_11, %c0_12] : memref<8x128xf32, #tpu.memory_space<vmem>>, vector<8x128xf32>
      tpu.vector_store %arg7[%c0_11, %c0_12], %13 {strides = array<i32>} : memref<8x128xf32, #tpu.memory_space<vmem>>, vector<8x128xf32>,
    } else {
    }
    %c0 = arith.constant 0 : index
    %c0_1 = arith.constant 0 : index
    %3 = vector.load %arg7[%c0, %c0_1] : memref<8x128xf32, #tpu.memory_space<vmem>>, vector<8x128xf32>
    %c0_2 = arith.constant 0 : index
    %c0_3 = arith.constant 0 : index
    %4 = vector.load %arg3[%c0_2, %c0_3] : memref<8x512xf32, #tpu.memory_space<vmem>>, vector<8x512xf32>
    %5 = arith.truncf %4 : vector<8x512xf32> to vector<8x512xbf16>
    %c0_4 = arith.constant 0 : index
    %c0_5 = arith.constant 0 : index
    %6 = vector.load %arg4[%c0_4, %c0_5] : memref<512x128xbf16, #tpu.memory_space<vmem>>, vector<512x128xbf16>
    %cst = arith.constant dense<0.000000e+00> : vector<8x128xf32>
    %7 = tpu.matmul %5, %6, %cst {dimension_numbers = #tpu.dot_dimension_numbers<[1], [0], [0], [1], [0, 0, 1, 1], [], []>} : vector<8x512xbf16>, vector<512x128xbf16>, vector<8x128xf32> -> vector<8x128xf32>
    %8 = arith.addf %3, %7 : vector<8x128xf32>
    %c0_6 = arith.constant 0 : index
    %c0_7 = arith.constant 0 : index
    %9 = vector.load %arg7[%c0_6, %c0_7] : memref<8x128xf32, #tpu.memory_space<vmem>>, vector<8x128xf32>
    tpu.vector_store %arg7[%c0_6, %c0_7], %8 {strides = array<i32>} : memref<8x128xf32, #tpu.memory_space<vmem>>, vector<8x128xf32>,
    %c0_i32_8 = arith.constant 0 : i32
    %10 = arith.cmpi eq, %arg2, %c0_i32_8 : i32
    %11 = arith.extui %10 : i1 to i32
    %c0_i32_9 = arith.constant 0 : i32
    %12 = arith.cmpi ne, %11, %c0_i32_9 : i32
    scf.if %12 {
      %c0_10 = arith.constant 0 : index
      %c0_11 = arith.constant 0 : index
      %13 = vector.load %arg7[%c0_10, %c0_11] : memref<8x128xf32, #tpu.memory_space<vmem>>, vector<8x128xf32>
      %c0_12 = arith.constant 0 : index
      %c0_13 = arith.constant 0 : index
      %14 = vector.load %arg5[%c0_12, %c0_13] : memref<1x128xf32, #tpu.memory_space<vmem>>, vector<1x128xf32>
      %15 = vector.broadcast %14 : vector<1x128xf32> to vector<8x128xf32>
      %16 = arith.addf %13, %15 : vector<8x128xf32>
      %c0_14 = arith.constant 0 : index
      %c0_15 = arith.constant 0 : index
      %17 = vector.load %arg6[%c0_14, %c0_15] : memref<8x128xf32, #tpu.memory_space<vmem>>, vector<8x128xf32>
      tpu.vector_store %arg6[%c0_14, %c0_15], %16 {strides = array<i32>} : memref<8x128xf32, #tpu.memory_space<vmem>>, vector<8x128xf32>,
    } else {
    }
    return
  }
  func.func @transform_0(%arg0: i32, %arg1: i32, %arg2: i32) -> (i32, i32) {
    %c0_i32 = arith.constant 0 : i32
    return %arg0, %arg2 : i32, i32
  }
  func.func @transform_1(%arg0: i32, %arg1: i32, %arg2: i32) -> (i32, i32) {
    %c0_i32 = arith.constant 0 : i32
    return %arg2, %arg1 : i32, i32
  }
  func.func @transform_2(%arg0: i32, %arg1: i32, %arg2: i32) -> (i32, i32) {
    %c0_i32 = arith.constant 0 : i32
    %c0_i32_0 = arith.constant 0 : i32
    return %c0_i32, %arg1 : i32, i32
  }
  func.func @transform_3(%arg0: i32, %arg1: i32, %arg2: i32) -> (i32, i32) {
    %c0_i32 = arith.constant 0 : i32
    return %arg0, %arg1 : i32, i32
  }
}

</mosaic_0001>

<llo_original>
// kernel: skin_classifier_forward.9
$region0: #{skin_classifier_forward.9}
  #allocation0 [shape = 'u32[]', space=smem, size = 0x4, offset = 0x4, fixed_abs, tag = 'smem constant byte address 0x4 - core index']
  #allocation1 [shape = 'u32[144,128]{1,0:T(1,128)}', space=vmem, size = 0x12000, scoped, tag = 'internal scratch']
  %s0 = inlined_call_operand.vmem [shape: f32[16,1024], index: 0, kind: input, shape index: {}]
  %s1 = inlined_call_operand.vmem [shape: f32[16,256], index: 1, kind: output, shape index: {}]
  %s2 = sld [smem:[#allocation0]]
  $region14: #{skin_classifier_forward.9} parent=0
    _
  %s4 = ssub.s32 1, %s2
  %s5 = scalar_select 0, %s4, %s2
  // Predicated region
  $region2: #{skin_classifier_forward.9} parent=0 // pred_check
    _
  $region3: #{skin_classifier_forward.9} parent=0 // pred_check_branch
    %7 = sbr.rel (0) target = $region5
  $region4: #{skin_classifier_forward.9} parent=0 // pred_region
    _
  $region5: #{skin_classifier_forward.9} parent=0 // pred_fallthru
    _
  %v8 = vld [vmem:[%s0] sm:$0xff]
  %v9 = vld [vmem:[%s0 + $0x8] sm:$0xff]
  %v10 = vld [vmem:[%s0 + $0x10] sm:$0xff]
  %v11 = vld [vmem:[%s0 + $0x18] sm:$0xff]
  %v12 = vld [vmem:[%s0 + $0x20] sm:$0xff]
  %v13 = vld [vmem:[%s0 + $0x28] sm:$0xff]
  %v14 = vld [vmem:[%s0 + $0x30] sm:$0xff]
  %v15 = vld [vmem:[%s0 + $0x38] sm:$0xff]
  %v16 = vld [vmem:[%s0 + $0x40] sm:$0xff]
  %v17 = vld [vmem:[%s0 + $0x48] sm:$0xff]
  %v18 = vld [vmem:[%s0 + $0x50] sm:$0xff]
  %v19 = vld [vmem:[%s0 + $0x58] sm:$0xff]
  %v20 = vld [vmem:[%s0 + $0x60] sm:$0xff]
  %v21 = vld [vmem:[%s0 + $0x68] sm:$0xff]
  %v22 = vld [vmem:[%s0 + $0x70] sm:$0xff]
  %v23 = vld [vmem:[%s0 + $0x78] sm:$0xff]
  %v24 = vmax.f32 %v8, %v12
  %v25 = vmax.f32 %v9, %v13
  %v26 = vmax.f32 %v10, %v14
  %v27 = vmax.f32 %v11, %v15
  %v28 = vmax.f32 %v16, %v20
  %v29 = vmax.f32 %v17, %v21
  %v30 = vmax.f32 %v18, %v22
  %v31 = vmax.f32 %v19, %v23
  %34 = vrot.lane.b32.xlu0 %v24, 64
  %v35 = vpop.permute.xlu0 %34
  %36 = vrot.lane.b32.xlu0 %v28, 64
  %v37 = vpop.permute.xlu0 %36
  %42 = vrot.lane.b32.xlu0 %v25, 64
  %v43 = vpop.permute.xlu0 %42
  %44 = vrot.lane.b32.xlu0 %v29, 64
  %v45 = vpop.permute.xlu0 %44
  %50 = vrot.lane.b32.xlu0 %v26, 64
  %v51 = vpop.permute.xlu0 %50
  %52 = vrot.lane.b32.xlu0 %v30, 64
  %v53 = vpop.permute.xlu0 %52
  %58 = vrot.lane.b32.xlu0 %v27, 64
  %v59 = vpop.permute.xlu0 %58
  %60 = vrot.lane.b32.xlu0 %v31, 64
  %v61 = vpop.permute.xlu0 %60
  %v64 = vcombine.low %v24, %v25
  %v65 = vcombine.high %v24, %v25
  %v67 = vunpack.c.l.s4 1983009808
  %v68 = vunpack.c.0.s8 %v67
  %v69 = vlaneseq
  %v70 = vshrl.u32 %v69, 7
  %v71 = vsub.s32 %v68, %v70
  %v72 = vrot.slane %v64, %v71
  %v74 = vunpack.c.l.s4 1983009808
  %v75 = vunpack.c.0.s8 %v74
  %v76 = vlaneseq
  %v77 = vshrl.u32 %v76, 7
  %v78 = vsub.s32 %v75, %v77
  %v79 = vrot.slane %v65, %v78
  %v80 = vcombine.low %v35, %v43
  %v81 = vcombine.high %v35, %v43
  %v83 = vunpack.c.l.s4 1983009808
  %v84 = vunpack.c.0.s8 %v83
  %v85 = vlaneseq
  %v86 = vshrl.u32 %v85, 7
  %v87 = vsub.s32 %v84, %v86
  %v88 = vrot.slane %v80, %v87
  %v90 = vunpack.c.l.s4 1983009808
  %v91 = vunpack.c.0.s8 %v90
  %v92 = vlaneseq
  %v93 = vshrl.u32 %v92, 7
  %v94 = vsub.s32 %v91, %v93
  %v95 = vrot.slane %v81, %v94
  %v96 = vcombine.low %v26, %v27
  %v97 = vcombine.high %v26, %v27
  %v99 = vunpack.c.l.s4 1983009808
  %v100 = vunpack.c.0.s8 %v99
  %v101 = vlaneseq
  %v102 = vshrl.u32 %v101, 7
  %v103 = vsub.s32 %v100, %v102
  %v104 = vrot.slane %v96, %v103
  %v106 = vunpack.c.l.s4 1983009808
  %v107 = vunpack.c.0.s8 %v106
  %v108 = vlaneseq
  %v109 = vshrl.u32 %v108, 7
  %v110 = vsub.s32 %v107, %v109
  %v111 = vrot.slane %v97, %v110
  %v112 = vcombine.low %v51, %v59
  %v113 = vcombine.high %v51, %v59
  %v115 = vunpack.c.l.s4 1983009808
  %v116 = vunpack.c.0.s8 %v115
  %v117 = vlaneseq
  %v118 = vshrl.u32 %v117, 7
  %v119 = vsub.s32 %v116, %v118
  %v120 = vrot.slane %v112, %v119
  %v122 = vunpack.c.l.s4 1983009808
  %v123 = vunpack.c.0.s8 %v122
  %v124 = vlaneseq
  %v125 = vshrl.u32 %v124, 7
  %v126 = vsub.s32 %v123, %v125
  %v127 = vrot.slane %v113, %v126
  %v128 = vcombine.low %v72, %v88
  %v129 = vcombine.high %v72, %v88
  %v131 = vunpack.c.l.s4 1934713408
  %v132 = vunpack.c.0.s8 %v131
  %v133 = vlaneseq
  %v134 = vshrl.u32 %v133, 7
  %v135 = vsub.s32 %v132, %v134
  %v136 = vrot.slane %v128, %v135
  %v138 = vunpack.c.l.s4 1934713408
  %v139 = vunpack.c.0.s8 %v138
  %v140 = vlaneseq
  %v141 = vshrl.u32 %v140, 7
  %v142 = vsub.s32 %v139, %v141
  %v143 = vrot.slane %v129, %v142
  %v144 = vcombine.low %v79, %v95
  %v145 = vcombine.high %v79, %v95
  %v147 = vunpack.c.l.s4 1934713408
  %v148 = vunpack.c.0.s8 %v147
  %v149 = vlaneseq
  %v150 = vshrl.u32 %v149, 7
  %v151 = vsub.s32 %v148, %v150
  %v152 = vrot.slane %v144, %v151
  %v154 = vunpack.c.l.s4 1934713408
  %v155 = vunpack.c.0.s8 %v154
  %v156 = vlaneseq
  %v157 = vshrl.u32 %v156, 7
  %v158 = vsub.s32 %v155, %v157
  %v159 = vrot.slane %v145, %v158
  %v160 = vcombine.low %v104, %v120
  %v161 = vcombine.high %v104, %v120
  %v163 = vunpack.c.l.s4 1934713408
  %v164 = vunpack.c.0.s8 %v163
  %v165 = vlaneseq
  %v166 = vshrl.u32 %v165, 7
  %v167 = vsub.s32 %v164, %v166
  %v168 = vrot.slane %v160, %v167
  %v170 = vunpack.c.l.s4 1934713408
  %v171 = vunpack.c.0.s8 %v170
  %v172 = vlaneseq
  %v173 = vshrl.u32 %v172, 7
  %v174 = vsub.s32 %v171, %v173
  %v175 = vrot.slane %v161, %v174
  %v176 = vcombine.low %v111, %v127
  %v177 = vcombine.high %v111, %v127
  %v179 = vunpack.c.l.s4 1934713408
  %v180 = vunpack.c.0.s8 %v179
  %v181 = vlaneseq
  %v182 = vshrl.u32 %v181, 7
  %v183 = vsub.s32 %v180, %v182
  %v184 = vrot.slane %v176, %v183
  %v186 = vunpack.c.l.s4 1934713408
  %v187 = vunpack.c.0.s8 %v186
  %v188 = vlaneseq
  %v189 = vshrl.u32 %v188, 7
  %v190 = vsub.s32 %v187, %v189
  %v191 = vrot.slane %v177, %v190
  %v192 = vcombine.low %v136, %v168
  %v193 = vcombine.high %v136, %v168
  %v194 = vcombine.low %v143, %v175
  %v195 = vcombine.high %v143, %v175
  %v196 = vcombine.low %v152, %v184
  %v197 = vcombine.high %v152, %v184
  %v198 = vcombine.low %v159, %v191
  %v199 = vcombine.high %v159, %v191
  %v200 = vcombine.low %v28, %v29
  %v201 = vcombine.high %v28, %v29
  %v203 = vunpack.c.l.s4 1983009808
  %v204 = vunpack.c.0.s8 %v203
  %v205 = vlaneseq
  %v206 = vshrl.u32 %v205, 7
  %v207 = vsub.s32 %v204, %v206
  %v208 = vrot.slane %v200, %v207
  %v210 = vunpack.c.l.s4 1983009808
  %v211 = vunpack.c.0.s8 %v210
  %v212 = vlaneseq
  %v213 = vshrl.u32 %v212, 7
  %v214 = vsub.s32 %v211, %v213
  %v215 = vrot.slane %v201, %v214
  %v216 = vcombine.low %v37, %v45
  %v217 = vcombine.high %v37, %v45
  %v219 = vunpack.c.l.s4 1983009808
  %v220 = vunpack.c.0.s8 %v219
  %v221 = vlaneseq
  %v222 = vshrl.u32 %v221, 7
  %v223 = vsub.s32 %v220, %v222
  %v224 = vrot.slane %v216, %v223
  %v226 = vunpack.c.l.s4 1983009808
  %v227 = vunpack.c.0.s8 %v226
  %v228 = vlaneseq
  %v229 = vshrl.u32 %v228, 7
  %v230 = vsub.s32 %v227, %v229
  %v231 = vrot.slane %v217, %v230
  %v232 = vcombine.low %v30, %v31
  %v233 = vcombine.high %v30, %v31
  %v235 = vunpack.c.l.s4 1983009808
  %v236 = vunpack.c.0.s8 %v235
  %v237 = vlaneseq
  %v238 = vshrl.u32 %v237, 7
  %v239 = vsub.s32 %v236, %v238
  %v240 = vrot.slane %v232, %v239
  %v242 = vunpack.c.l.s4 1983009808
  %v243 = vunpack.c.0.s8 %v242
  %v244 = vlaneseq
  %v245 = vshrl.u32 %v244, 7
  %v246 = vsub.s32 %v243, %v245
  %v247 = vrot.slane %v233, %v246
  %v248 = vcombine.low %v53, %v61
  %v249 = vcombine.high %v53, %v61
  %v251 = vunpack.c.l.s4 1983009808
  %v252 = vunpack.c.0.s8 %v251
  %v253 = vlaneseq
  %v254 = vshrl.u32 %v253, 7
  %v255 = vsub.s32 %v252, %v254
  %v256 = vrot.slane %v248, %v255
  %v258 = vunpack.c.l.s4 1983009808
  %v259 = vunpack.c.0.s8 %v258
  %v260 = vlaneseq
  %v261 = vshrl.u32 %v260, 7
  %v262 = vsub.s32 %v259, %v261
  %v263 = vrot.slane %v249, %v262
  %v264 = vcombine.low %v208, %v224
  %v265 = vcombine.high %v208, %v224
  %v267 = vunpack.c.l.s4 1934713408
  %v268 = vunpack.c.0.s8 %v267
  %v269 = vlaneseq
  %v270 = vshrl.u32 %v269, 7
  %v271 = vsub.s32 %v268, %v270
  %v272 = vrot.slane %v264, %v271
  %v274 = vunpack.c.l.s4 1934713408
  %v275 = vunpack.c.0.s8 %v274
  %v276 = vlaneseq
  %v277 = vshrl.u32 %v276, 7
  %v278 = vsub.s32 %v275, %v277
  %v279 = vrot.slane %v265, %v278
  %v280 = vcombine.low %v215, %v231
  %v281 = vcombine.high %v215, %v231
  %v283 = vunpack.c.l.s4 1934713408
  %v284 = vunpack.c.0.s8 %v283
  %v285 = vlaneseq
  %v286 = vshrl.u32 %v285, 7
  %v287 = vsub.s32 %v284, %v286
  %v288 = vrot.slane %v280, %v287
  %v290 = vunpack.c.l.s4 1934713408
  %v291 = vunpack.c.0.s8 %v290
  %v292 = vlaneseq
  %v293 = vshrl.u32 %v292, 7
  %v294 = vsub.s32 %v291, %v293
  %v295 = vrot.slane %v281, %v294
  %v296 = vcombine.low %v240, %v256
  %v297 = vcombine.high %v240, %v256
  %v299 = vunpack.c.l.s4 1934713408
  %v300 = vunpack.c.0.s8 %v299
  %v301 = vlaneseq
  %v302 = vshrl.u32 %v301, 7
  %v303 = vsub.s32 %v300, %v302
  %v304 = vrot.slane %v296, %v303
  %v306 = vunpack.c.l.s4 1934713408
  %v307 = vunpack.c.0.s8 %v306
  %v308 = vlaneseq
  %v309 = vshrl.u32 %v308, 7
  %v310 = vsub.s32 %v307, %v309
  %v311 = vrot.slane %v297, %v310
  %v312 = vcombine.low %v247, %v263
  %v313 = vcombine.high %v247, %v263
  %v315 = vunpack.c.l.s4 1934713408
  %v316 = vunpack.c.0.s8 %v315
  %v317 = vlaneseq
  %v318 = vshrl.u32 %v317, 7
  %v319 = vsub.s32 %v316, %v318
  %v320 = vrot.slane %v312, %v319
  %v322 = vunpack.c.l.s4 1934713408
  %v323 = vunpack.c.0.s8 %v322
  %v324 = vlaneseq
  %v325 = vshrl.u32 %v324, 7
  %v326 = vsub.s32 %v323, %v325
  %v327 = vrot.slane %v313, %v326
  %v328 = vcombine.low %v272, %v304
  %v329 = vcombine.high %v272, %v304
  %v330 = vcombine.low %v279, %v311
  %v331 = vcombine.high %v279, %v311
  %v332 = vcombine.low %v288, %v320
  %v333 = vcombine.high %v288, %v320
  %v334 = vcombine.low %v295, %v327
  %v335 = vcombine.high %v295, %v327
  %352 = vrot.lane.b32.xlu0 %v192, 96
  %v353 = vpop.permute.xlu0 %352
  %354 = vrot.lane.b32.xlu0 %v193, 96
  %v355 = vpop.permute.xlu0 %354
  %356 = vrot.lane.b32.xlu0 %v194, 96
  %v357 = vpop.permute.xlu0 %356
  %358 = vrot.lane.b32.xlu0 %v195, 96
  %v359 = vpop.permute.xlu0 %358
  %360 = vrot.lane.b32.xlu0 %v196, 96
  %v361 = vpop.permute.xlu0 %360
  %362 = vrot.lane.b32.xlu0 %v197, 96
  %v363 = vpop.permute.xlu0 %362
  %364 = vrot.lane.b32.xlu0 %v198, 96
  %v365 = vpop.permute.xlu0 %364
  %366 = vrot.lane.b32.xlu0 %v199, 96
  %v367 = vpop.permute.xlu0 %366
  %368 = vrot.lane.b32.xlu0 %v328, 96
  %v369 = vpop.permute.xlu0 %368
  %370 = vrot.lane.b32.xlu0 %v329, 96
  %v371 = vpop.permute.xlu0 %370
  %372 = vrot.lane.b32.xlu0 %v330, 96
  %v373 = vpop.permute.xlu0 %372
  %374 = vrot.lane.b32.xlu0 %v331, 96
  %v375 = vpop.permute.xlu0 %374
  %376 = vrot.lane.b32.xlu0 %v332, 96
  %v377 = vpop.permute.xlu0 %376
  %378 = vrot.lane.b32.xlu0 %v333, 96
  %v379 = vpop.permute.xlu0 %378
  %380 = vrot.lane.b32.xlu0 %v334, 96
  %v381 = vpop.permute.xlu0 %380
  %382 = vrot.lane.b32.xlu0 %v335, 96
  %v383 = vpop.permute.xlu0 %382
  %v400 = vmax.f32 %v192, %v353
  %v401 = vmax.f32 %v193, %v355
  %v402 = vmax.f32 %v194, %v357
  %v403 = vmax.f32 %v195, %v359
  %v404 = vmax.f32 %v196, %v361
  %v405 = vmax.f32 %v197, %v363
  %v406 = vmax.f32 %v198, %v365
  %v407 = vmax.f32 %v199, %v367
  %v408 = vmax.f32 %v328, %v369
  %v409 = vmax.f32 %v329, %v371
  %v410 = vmax.f32 %v330, %v373
  %v411 = vmax.f32 %v331, %v375
  %v412 = vmax.f32 %v332, %v377
  %v413 = vmax.f32 %v333, %v379
  %v414 = vmax.f32 %v334, %v381
  %v415 = vmax.f32 %v335, %v383
  %v416 = vcombine.low %v400, %v402
  %v417 = vcombine.high %v400, %v402
  %v419 = vunpack.c.l.s4 1983009808
  %v420 = vunpack.c.0.s8 %v419
  %v421 = vlaneseq
  %v422 = vshrl.u32 %v421, 7
  %v423 = vsub.s32 %v420, %v422
  %v424 = vrot.slane %v416, %v423
  %v426 = vunpack.c.l.s4 1983009808
  %v427 = vunpack.c.0.s8 %v426
  %v428 = vlaneseq
  %v429 = vshrl.u32 %v428, 7
  %v430 = vsub.s32 %v427, %v429
  %v431 = vrot.slane %v417, %v430
  %v432 = vcombine.low %v401, %v403
  %v433 = vcombine.high %v401, %v403
  %v435 = vunpack.c.l.s4 1983009808
  %v436 = vunpack.c.0.s8 %v435
  %v437 = vlaneseq
  %v438 = vshrl.u32 %v437, 7
  %v439 = vsub.s32 %v436, %v438
  %v440 = vrot.slane %v432, %v439
  %v442 = vunpack.c.l.s4 1983009808
  %v443 = vunpack.c.0.s8 %v442
  %v444 = vlaneseq
  %v445 = vshrl.u32 %v444, 7
  %v446 = vsub.s32 %v443, %v445
  %v447 = vrot.slane %v433, %v446
  %v448 = vcombine.low %v404, %v406
  %v449 = vcombine.high %v404, %v406
  %v451 = vunpack.c.l.s4 1983009808
  %v452 = vunpack.c.0.s8 %v451
  %v453 = vlaneseq
  %v454 = vshrl.u32 %v453, 7
  %v455 = vsub.s32 %v452, %v454
  %v456 = vrot.slane %v448, %v455
  %v458 = vunpack.c.l.s4 1983009808
  %v459 = vunpack.c.0.s8 %v458
  %v460 = vlaneseq
  %v461 = vshrl.u32 %v460, 7
  %v462 = vsub.s32 %v459, %v461
  %v463 = vrot.slane %v449, %v462
  %v464 = vcombine.low %v405, %v407
  %v465 = vcombine.high %v405, %v407
  %v467 = vunpack.c.l.s4 1983009808
  %v468 = vunpack.c.0.s8 %v467
  %v469 = vlaneseq
  %v470 = vshrl.u32 %v469, 7
  %v471 = vsub.s32 %v468, %v470
  %v472 = vrot.slane %v464, %v471
  %v474 = vunpack.c.l.s4 1983009808
  %v475 = vunpack.c.0.s8 %v474
  %v476 = vlaneseq
  %v477 = vshrl.u32 %v476, 7
  %v478 = vsub.s32 %v475, %v477
  %v479 = vrot.slane %v465, %v478
  %v480 = vcombine.low %v424, %v440
  %v481 = vcombine.high %v424, %v440
  %v483 = vunpack.c.l.s4 1934713408
  %v484 = vunpack.c.0.s8 %v483
  %v485 = vlaneseq
  %v486 = vshrl.u32 %v485, 7
  %v487 = vsub.s32 %v484, %v486
  %v488 = vrot.slane %v480, %v487
  %v490 = vunpack.c.l.s4 1934713408
  %v491 = vunpack.c.0.s8 %v490
  %v492 = vlaneseq
  %v493 = vshrl.u32 %v492, 7
  %v494 = vsub.s32 %v491, %v493
  %v495 = vrot.slane %v481, %v494
  %v496 = vcombine.low %v431, %v447
  %v497 = vcombine.high %v431, %v447
  %v499 = vunpack.c.l.s4 1934713408
  %v500 = vunpack.c.0.s8 %v499
  %v501 = vlaneseq
  %v502 = vshrl.u32 %v501, 7
  %v503 = vsub.s32 %v500, %v502
  %v504 = vrot.slane %v496, %v503
  %v506 = vunpack.c.l.s4 1934713408
  %v507 = vunpack.c.0.s8 %v506
  %v508 = vlaneseq
  %v509 = vshrl.u32 %v508, 7
  %v510 = vsub.s32 %v507, %v509
  %v511 = vrot.slane %v497, %v510
  %v512 = vcombine.low %v456, %v472
  %v513 = vcombine.high %v456, %v472
  %v515 = vunpack.c.l.s4 1934713408
  %v516 = vunpack.c.0.s8 %v515
  %v517 = vlaneseq
  %v518 = vshrl.u32 %v517, 7
  %v519 = vsub.s32 %v516, %v518
  %v520 = vrot.slane %v512, %v519
  %v522 = vunpack.c.l.s4 1934713408
  %v523 = vunpack.c.0.s8 %v522
  %v524 = vlaneseq
  %v525 = vshrl.u32 %v524, 7
  %v526 = vsub.s32 %v523, %v525
  %v527 = vrot.slane %v513, %v526
  %v528 = vcombine.low %v463, %v479
  %v529 = vcombine.high %v463, %v479
  %v531 = vunpack.c.l.s4 1934713408
  %v532 = vunpack.c.0.s8 %v531
  %v533 = vlaneseq
  %v534 = vshrl.u32 %v533, 7
  %v535 = vsub.s32 %v532, %v534
  %v536 = vrot.slane %v528, %v535
  %v538 = vunpack.c.l.s4 1934713408
  %v539 = vunpack.c.0.s8 %v538
  %v540 = vlaneseq
  %v541 = vshrl.u32 %v540, 7
  %v542 = vsub.s32 %v539, %v541
  %v543 = vrot.slane %v529, %v542
  %v544 = vcombine.low %v488, %v520
  %v545 = vcombine.high %v488, %v520
  %v546 = vcombine.low %v495, %v527
  %v547 = vcombine.high %v495, %v527
  %v548 = vcombine.low %v504, %v536
  %v549 = vcombine.high %v504, %v536
  %v550 = vcombine.low %v511, %v543
  %v551 = vcombine.high %v511, %v543
  %v552 = vcombine.low %v408, %v410
  %v553 = vcombine.high %v408, %v410
  %v555 = vunpack.c.l.s4 1983009808
  %v556 = vunpack.c.0.s8 %v555
  %v557 = vlaneseq
  %v558 = vshrl.u32 %v557, 7
  %v559 = vsub.s32 %v556, %v558
  %v560 = vrot.slane %v552, %v559
  %v562 = vunpack.c.l.s4 1983009808
  %v563 = vunpack.c.0.s8 %v562
  %v564 = vlaneseq
  %v565 = vshrl.u32 %v564, 7
  %v566 = vsub.s32 %v563, %v565
  %v567 = vrot.slane %v553, %v566
  %v568 = vcombine.low %v409, %v411
  %v569 = vcombine.high %v409, %v411
  %v571 = vunpack.c.l.s4 1983009808
  %v572 = vunpack.c.0.s8 %v571
  %v573 = vlaneseq
  %v574 = vshrl.u32 %v573, 7
  %v575 = vsub.s32 %v572, %v574
  %v576 = vrot.slane %v568, %v575
  %v578 = vunpack.c.l.s4 1983009808
  %v579 = vunpack.c.0.s8 %v578
  %v580 = vlaneseq
  %v581 = vshrl.u32 %v580, 7
  %v582 = vsub.s32 %v579, %v581
  %v583 = vrot.slane %v569, %v582
  %v584 = vcombine.low %v412, %v414
  %v585 = vcombine.high %v412, %v414
  %v587 = vunpack.c.l.s4 1983009808
  %v588 = vunpack.c.0.s8 %v587
  %v589 = vlaneseq
  %v590 = vshrl.u32 %v589, 7
  %v591 = vsub.s32 %v588, %v590
  %v592 = vrot.slane %v584, %v591
  %v594 = vunpack.c.l.s4 1983009808
  %v595 = vunpack.c.0.s8 %v594
  %v596 = vlaneseq
  %v597 = vshrl.u32 %v596, 7
  %v598 = vsub.s32 %v595, %v597
  %v599 = vrot.slane %v585, %v598
  %v600 = vcombine.low %v413, %v415
  %v601 = vcombine.high %v413, %v415
  %v603 = vunpack.c.l.s4 1983009808
  %v604 = vunpack.c.0.s8 %v603
  %v605 = vlaneseq
  %v606 = vshrl.u32 %v605, 7
  %v607 = vsub.s32 %v604, %v606
  %v608 = vrot.slane %v600, %v607
  %v610 = vunpack.c.l.s4 1983009808
  %v611 = vunpack.c.0.s8 %v610
  %v612 = vlaneseq
  %v613 = vshrl.u32 %v612, 7
  %v614 = vsub.s32 %v611, %v613
  %v615 = vrot.slane %v601, %v614
  %v616 = vcombine.low %v560, %v576
  %v617 = vcombine.high %v560, %v576
  %v619 = vunpack.c.l.s4 1934713408
  %v620 = vunpack.c.0.s8 %v619
  %v621 = vlaneseq
  %v622 = vshrl.u32 %v621, 7
  %v623 = vsub.s32 %v620, %v622
  %v624 = vrot.slane %v616, %v623
  %v626 = vunpack.c.l.s4 1934713408
  %v627 = vunpack.c.0.s8 %v626
  %v628 = vlaneseq
  %v629 = vshrl.u32 %v628, 7
  %v630 = vsub.s32 %v627, %v629
  %v631 = vrot.slane %v617, %v630
  %v632 = vcombine.low %v567, %v583
  %v633 = vcombine.high %v567, %v583
  %v635 = vunpack.c.l.s4 1934713408
  %v636 = vunpack.c.0.s8 %v635
  %v637 = vlaneseq
  %v638 = vshrl.u32 %v637, 7
  %v639 = vsub.s32 %v636, %v638
  %v640 = vrot.slane %v632, %v639
  %v642 = vunpack.c.l.s4 1934713408
  %v643 = vunpack.c.0.s8 %v642
  %v644 = vlaneseq
  %v645 = vshrl.u32 %v644, 7
  %v646 = vsub.s32 %v643, %v645
  %v647 = vrot.slane %v633, %v646
  %v648 = vcombine.low %v592, %v608
  %v649 = vcombine.high %v592, %v608
  %v651 = vunpack.c.l.s4 1934713408
  %v652 = vunpack.c.0.s8 %v651
  %v653 = vlaneseq
  %v654 = vshrl.u32 %v653, 7
  %v655 = vsub.s32 %v652, %v654
  %v656 = vrot.slane %v648, %v655
  %v658 = vunpack.c.l.s4 1934713408
  %v659 = vunpack.c.0.s8 %v658
  %v660 = vlaneseq
  %v661 = vshrl.u32 %v660, 7
  %v662 = vsub.s32 %v659, %v661
  %v663 = vrot.slane %v649, %v662
  %v664 = vcombine.low %v599, %v615
  %v665 = vcombine.high %v599, %v615
  %v667 = vunpack.c.l.s4 1934713408
  %v668 = vunpack.c.0.s8 %v667
  %v669 = vlaneseq
  %v670 = vshrl.u32 %v669, 7
  %v671 = vsub.s32 %v668, %v670
  %v672 = vrot.slane %v664, %v671
  %v674 = vunpack.c.l.s4 1934713408
  %v675 = vunpack.c.0.s8 %v674
  %v676 = vlaneseq
  %v677 = vshrl.u32 %v676, 7
  %v678 = vsub.s32 %v675, %v677
  %v679 = vrot.slane %v665, %v678
  %v680 = vcombine.low %v624, %v656
  %v681 = vcombine.high %v624, %v656
  %v682 = vcombine.low %v631, %v663
  %v683 = vcombine.high %v631, %v663
  %v684 = vcombine.low %v640, %v672
  %v685 = vcombine.high %v640, %v672
  %v686 = vcombine.low %v647, %v679
  %v687 = vcombine.high %v647, %v679
  %690 = vrot.lane.b32.xlu0 %v545, 32
  %v691 = vpop.permute.xlu0 %690
  %692 = vrot.lane.b32.xlu0 %v681, 32
  %v693 = vpop.permute.xlu0 %692
  %698 = vrot.lane.b32.xlu0 %v546, 64
  %v699 = vpop.permute.xlu0 %698
  %700 = vrot.lane.b32.xlu0 %v682, 64
  %v701 = vpop.permute.xlu0 %700
  %706 = vrot.lane.b32.xlu0 %v547, 96
  %v707 = vpop.permute.xlu0 %706
  %708 = vrot.lane.b32.xlu0 %v683, 96
  %v709 = vpop.permute.xlu0 %708
  %714 = vrot.lane.b32.xlu0 %v549, 32
  %v715 = vpop.permute.xlu0 %714
  %716 = vrot.lane.b32.xlu0 %v685, 32
  %v717 = vpop.permute.xlu0 %716
  %722 = vrot.lane.b32.xlu0 %v550, 64
  %v723 = vpop.permute.xlu0 %722
  %724 = vrot.lane.b32.xlu0 %v686, 64
  %v725 = vpop.permute.xlu0 %724
  %730 = vrot.lane.b32.xlu0 %v551, 96
  %v731 = vpop.permute.xlu0 %730
  %732 = vrot.lane.b32.xlu0 %v687, 96
  %v733 = vpop.permute.xlu0 %732
  %vm736 = vcmask 261120
  %v737 = vsel %vm736, %v544, %v691
  %v738 = vsel %vm736, %v680, %v693
  %vm739 = vcmask 523264
  %v740 = vsel %vm739, %v737, %v699
  %v741 = vsel %vm739, %v738, %v701
  %vm742 = vcmask 785408
  %v743 = vsel %vm742, %v740, %v707
  %v744 = vsel %vm742, %v741, %v709
  %v745 = vsel %vm736, %v548, %v715
  %v746 = vsel %vm736, %v684, %v717
  %v747 = vsel %vm739, %v745, %v723
  %v748 = vsel %vm739, %v746, %v725
  %v749 = vsel %vm742, %v747, %v731
  %v750 = vsel %vm742, %v748, %v733
  %751 = vst [vmem:[%s1] sm:$0xff] %v743
  %752 = vst [vmem:[%s1 + $0x8] sm:$0xff] %v749
  %753 = vst [vmem:[%s1 + $0x10] sm:$0xff] %v744
  %754 = vst [vmem:[%s1 + $0x18] sm:$0xff] %v750
  // Predicated region
  $region6: #{skin_classifier_forward.9} parent=0 // pred_check
    _
  $region7: #{skin_classifier_forward.9} parent=0 // pred_check_branch
    %756 = sbr.rel (0) target = $region9
  $region8: #{skin_classifier_forward.9} parent=0 // pred_region
    _
  $region9: #{skin_classifier_forward.9} parent=0 // pred_fallthru
    _
  // Predicated region
  $region10: #{skin_classifier_forward.9} parent=0 // pred_check
    _
  $region11: #{skin_classifier_forward.9} parent=0 // pred_check_branch
    %758 = sbr.rel (0) target = $region13
  $region12: #{skin_classifier_forward.9} parent=0 // pred_region
    _
  $region13: #{skin_classifier_forward.9} parent=0 // pred_fallthru
    _

// kernel: skin_classifier_forward.11
$region0: #{skin_classifier_forward.11}
  #allocation0 [shape = 'u32[]', space=smem, size = 0x4, offset = 0x4, fixed_abs, tag = 'smem constant byte address 0x4 - core index']
  #allocation1 [shape = 'u32[144,128]{1,0:T(1,128)}', space=vmem, size = 0x12000, scoped, tag = 'internal scratch']
  %s0 = inlined_call_operand.vmem [shape: f32[8,1024], index: 0, kind: input, shape index: {}]
  %s1 = inlined_call_operand.vmem [shape: f32[8,256], index: 1, kind: output, shape index: {}]
  %s2 = sld [smem:[#allocation0]]
  $region14: #{skin_classifier_forward.11} parent=0
    _
  %s4 = ssub.s32 1, %s2
  %s5 = scalar_select 0, %s4, %s2
  // Predicated region
  $region2: #{skin_classifier_forward.11} parent=0 // pred_check
    _
  $region3: #{skin_classifier_forward.11} parent=0 // pred_check_branch
    %7 = sbr.rel (0) target = $region5
  $region4: #{skin_classifier_forward.11} parent=0 // pred_region
    _
  $region5: #{skin_classifier_forward.11} parent=0 // pred_fallthru
    _
  %v8 = vld [vmem:[%s0] sm:$0xff]
  %v9 = vld [vmem:[%s0 + $0x8] sm:$0xff]
  %v10 = vld [vmem:[%s0 + $0x10] sm:$0xff]
  %v11 = vld [vmem:[%s0 + $0x18] sm:$0xff]
  %v12 = vld [vmem:[%s0 + $0x20] sm:$0xff]
  %v13 = vld [vmem:[%s0 + $0x28] sm:$0xff]
  %v14 = vld [vmem:[%s0 + $0x30] sm:$0xff]
  %v15 = vld [vmem:[%s0 + $0x38] sm:$0xff]
  %v16 = vmax.f32 %v8, %v12
  %v17 = vmax.f32 %v9, %v13
  %v18 = vmax.f32 %v10, %v14
  %v19 = vmax.f32 %v11, %v15
  %v20 = vcombine.low %v16, %v18
  %v21 = vcombine.high %v16, %v18
  %v23 = vunpack.c.l.s4 1983009808
  %v24 = vunpack.c.0.s8 %v23
  %v25 = vlaneseq
  %v26 = vshrl.u32 %v25, 7
  %v27 = vsub.s32 %v24, %v26
  %v28 = vrot.slane %v20, %v27
  %v30 = vunpack.c.l.s4 1983009808
  %v31 = vunpack.c.0.s8 %v30
  %v32 = vlaneseq
  %v33 = vshrl.u32 %v32, 7
  %v34 = vsub.s32 %v31, %v33
  %v35 = vrot.slane %v21, %v34
  %v36 = vcombine.low %v17, %v19
  %v37 = vcombine.high %v17, %v19
  %v39 = vunpack.c.l.s4 1983009808
  %v40 = vunpack.c.0.s8 %v39
  %v41 = vlaneseq
  %v42 = vshrl.u32 %v41, 7
  %v43 = vsub.s32 %v40, %v42
  %v44 = vrot.slane %v36, %v43
  %v46 = vunpack.c.l.s4 1983009808
  %v47 = vunpack.c.0.s8 %v46
  %v48 = vlaneseq
  %v49 = vshrl.u32 %v48, 7
  %v50 = vsub.s32 %v47, %v49
  %v51 = vrot.slane %v37, %v50
  %v52 = vcombine.low %v28, %v44
  %v53 = vcombine.high %v28, %v44
  %v55 = vunpack.c.l.s4 1934713408
  %v56 = vunpack.c.0.s8 %v55
  %v57 = vlaneseq
  %v58 = vshrl.u32 %v57, 7
  %v59 = vsub.s32 %v56, %v58
  %v60 = vrot.slane %v52, %v59
  %v62 = vunpack.c.l.s4 1934713408
  %v63 = vunpack.c.0.s8 %v62
  %v64 = vlaneseq
  %v65 = vshrl.u32 %v64, 7
  %v66 = vsub.s32 %v63, %v65
  %v67 = vrot.slane %v53, %v66
  %v68 = vcombine.low %v35, %v51
  %v69 = vcombine.high %v35, %v51
  %v71 = vunpack.c.l.s4 1934713408
  %v72 = vunpack.c.0.s8 %v71
  %v73 = vlaneseq
  %v74 = vshrl.u32 %v73, 7
  %v75 = vsub.s32 %v72, %v74
  %v76 = vrot.slane %v68, %v75
  %v78 = vunpack.c.l.s4 1934713408
  %v79 = vunpack.c.0.s8 %v78
  %v80 = vlaneseq
  %v81 = vshrl.u32 %v80, 7
  %v82 = vsub.s32 %v79, %v81
  %v83 = vrot.slane %v69, %v82
  %v84 = vcombine.high %v60, 0.0
  %v85 = vcombine.high %v67, 0.0
  %v86 = vcombine.high %v76, 0.0
  %v87 = vcombine.high %v83, 0.0
  %96 = vrot.lane.b32.xlu0 %v60, 64
  %v97 = vpop.permute.xlu0 %96
  %98 = vrot.lane.b32.xlu0 %v84, 64
  %v99 = vpop.permute.xlu0 %98
  %100 = vrot.lane.b32.xlu0 %v67, 64
  %v101 = vpop.permute.xlu0 %100
  %102 = vrot.lane.b32.xlu0 %v85, 64
  %v103 = vpop.permute.xlu0 %102
  %104 = vrot.lane.b32.xlu0 %v76, 64
  %v105 = vpop.permute.xlu0 %104
  %106 = vrot.lane.b32.xlu0 %v86, 64
  %v107 = vpop.permute.xlu0 %106
  %108 = vrot.lane.b32.xlu0 %v83, 64
  %v109 = vpop.permute.xlu0 %108
  %110 = vrot.lane.b32.xlu0 %v87, 64
  %v111 = vpop.permute.xlu0 %110
  %v120 = vmax.f32 %v60, %v97
  %v121 = vmax.f32 %v84, %v99
  %v122 = vmax.f32 %v67, %v101
  %v123 = vmax.f32 %v85, %v103
  %v124 = vmax.f32 %v76, %v105
  %v125 = vmax.f32 %v86, %v107
  %v126 = vmax.f32 %v83, %v109
  %v127 = vmax.f32 %v87, %v111
  %v128 = vcombine.low %v120, %v122
  %v130 = vunpack.c.l.s4 1983009808
  %v131 = vunpack.c.0.s8 %v130
  %v132 = vlaneseq
  %v133 = vshrl.u32 %v132, 7
  %v134 = vsub.s32 %v131, %v133
  %v135 = vrot.slane %v128, %v134
  %v136 = vcombine.low %v121, %v123
  %v138 = vunpack.c.l.s4 1983009808
  %v139 = vunpack.c.0.s8 %v138
  %v140 = vlaneseq
  %v141 = vshrl.u32 %v140, 7
  %v142 = vsub.s32 %v139, %v141
  %v143 = vrot.slane %v136, %v142
  %v144 = vcombine.low %v124, %v126
  %v146 = vunpack.c.l.s4 1983009808
  %v147 = vunpack.c.0.s8 %v146
  %v148 = vlaneseq
  %v149 = vshrl.u32 %v148, 7
  %v150 = vsub.s32 %v147, %v149
  %v151 = vrot.slane %v144, %v150
  %v152 = vcombine.low %v125, %v127
  %v154 = vunpack.c.l.s4 1983009808
  %v155 = vunpack.c.0.s8 %v154
  %v156 = vlaneseq
  %v157 = vshrl.u32 %v156, 7
  %v158 = vsub.s32 %v155, %v157
  %v159 = vrot.slane %v152, %v158
  %v160 = vcombine.low %v135, %v143
  %v161 = vcombine.high %v135, %v143
  %v163 = vunpack.c.l.s4 1934713408
  %v164 = vunpack.c.0.s8 %v163
  %v165 = vlaneseq
  %v166 = vshrl.u32 %v165, 7
  %v167 = vsub.s32 %v164, %v166
  %v168 = vrot.slane %v160, %v167
  %v170 = vunpack.c.l.s4 1934713408
  %v171 = vunpack.c.0.s8 %v170
  %v172 = vlaneseq
  %v173 = vshrl.u32 %v172, 7
  %v174 = vsub.s32 %v171, %v173
  %v175 = vrot.slane %v161, %v174
  %v176 = vcombine.low %v151, %v159
  %v177 = vcombine.high %v151, %v159
  %v179 = vunpack.c.l.s4 1934713408
  %v180 = vunpack.c.0.s8 %v179
  %v181 = vlaneseq
  %v182 = vshrl.u32 %v181, 7
  %v183 = vsub.s32 %v180, %v182
  %v184 = vrot.slane %v176, %v183
  %v186 = vunpack.c.l.s4 1934713408
  %v187 = vunpack.c.0.s8 %v186
  %v188 = vlaneseq
  %v189 = vshrl.u32 %v188, 7
  %v190 = vsub.s32 %v187, %v189
  %v191 = vrot.slane %v177, %v190
  %v192 = vcombine.low %v168, %v184
  %v193 = vcombine.high %v168, %v184
  %v194 = vcombine.low %v175, %v191
  %v195 = vcombine.high %v175, %v191
  %197 = vrot.lane.b32.xlu0 %v193, 64
  %v198 = vpop.permute.xlu0 %197
  %201 = vrot.lane.b32.xlu0 %v195, 64
  %v202 = vpop.permute.xlu0 %201
  %vm204 = vcmask 523264
  %v205 = vsel %vm204, %v192, %v198
  %v206 = vsel %vm204, %v194, %v202
  %207 = vst [vmem:[%s1] sm:$0xff] %v205
  %208 = vst [vmem:[%s1 + $0x8] sm:$0xff] %v206
  // Predicated region
  $region6: #{skin_classifier_forward.11} parent=0 // pred_check
    _
  $region7: #{skin_classifier_forward.11} parent=0 // pred_check_branch
    %210 = sbr.rel (0) target = $region9
  $region8: #{skin_classifier_forward.11} parent=0 // pred_region
    _
  $region9: #{skin_classifier_forward.11} parent=0 // pred_fallthru
    _
  // Predicated region
  $region10: #{skin_classifier_forward.11} parent=0 // pred_check
    _
  $region11: #{skin_classifier_forward.11} parent=0 // pred_check_branch
    %212 = sbr.rel (0) target = $region13
  $region12: #{skin_classifier_forward.11} parent=0 // pred_region
    _
  $region13: #{skin_classifier_forward.11} parent=0 // pred_fallthru
    _

// kernel: skin_classifier_forward.13
$region0: #{skin_classifier_forward.13}
  #allocation0 [shape = 'u32[]', space=smem, size = 0x4, offset = 0x4, fixed_abs, tag = 'smem constant byte address 0x4 - core index']
  #allocation1 [shape = 'u32[144,128]{1,0:T(1,128)}', space=vmem, size = 0x12000, scoped, tag = 'internal scratch']
  %s0 = inlined_call_operand.vmem [shape: f32[4,1024], index: 0, kind: input, shape index: {}]
  %s1 = inlined_call_operand.vmem [shape: f32[4,256], index: 1, kind: output, shape index: {}]
  %s2 = sld [smem:[#allocation0]]
  $region14: #{skin_classifier_forward.13} parent=0
    _
  %s4 = ssub.s32 1, %s2
  %s5 = scalar_select 0, %s4, %s2
  // Predicated region
  $region2: #{skin_classifier_forward.13} parent=0 // pred_check
    _
  $region3: #{skin_classifier_forward.13} parent=0 // pred_check_branch
    %7 = sbr.rel (0) target = $region5
  $region4: #{skin_classifier_forward.13} parent=0 // pred_region
    _
  $region5: #{skin_classifier_forward.13} parent=0 // pred_fallthru
    _
  %v8 = vld [vmem:[%s0] sm:$0xff]
  %v9 = vld [vmem:[%s0 + $0x8] sm:$0xff]
  %v10 = vld [vmem:[%s0 + $0x10] sm:$0xff]
  %v11 = vld [vmem:[%s0 + $0x18] sm:$0xff]
  %v12 = vmax.f32 %v8, %v10
  %v13 = vmax.f32 %v9, %v11
  %v14 = vcombine.high %v12, 0.0
  %v16 = vunpack.c.l.s4 1983009808
  %v17 = vunpack.c.0.s8 %v16
  %v18 = vlaneseq
  %v19 = vshrl.u32 %v18, 7
  %v20 = vsub.s32 %v17, %v19
  %v21 = vrot.slane %v12, %v20
  %v23 = vunpack.c.l.s4 1983009808
  %v24 = vunpack.c.0.s8 %v23
  %v25 = vlaneseq
  %v26 = vshrl.u32 %v25, 7
  %v27 = vsub.s32 %v24, %v26
  %v28 = vrot.slane %v14, %v27
  %v29 = vcombine.high %v13, 0.0
  %v31 = vunpack.c.l.s4 1983009808
  %v32 = vunpack.c.0.s8 %v31
  %v33 = vlaneseq
  %v34 = vshrl.u32 %v33, 7
  %v35 = vsub.s32 %v32, %v34
  %v36 = vrot.slane %v13, %v35
  %v38 = vunpack.c.l.s4 1983009808
  %v39 = vunpack.c.0.s8 %v38
  %v40 = vlaneseq
  %v41 = vshrl.u32 %v40, 7
  %v42 = vsub.s32 %v39, %v41
  %v43 = vrot.slane %v29, %v42
  %v44 = vcombine.low %v21, %v36
  %v45 = vcombine.high %v21, %v36
  %v47 = vunpack.c.l.s4 1934713408
  %v48 = vunpack.c.0.s8 %v47
  %v49 = vlaneseq
  %v50 = vshrl.u32 %v49, 7
  %v51 = vsub.s32 %v48, %v50
  %v52 = vrot.slane %v44, %v51
  %v54 = vunpack.c.l.s4 1934713408
  %v55 = vunpack.c.0.s8 %v54
  %v56 = vlaneseq
  %v57 = vshrl.u32 %v56, 7
  %v58 = vsub.s32 %v55, %v57
  %v59 = vrot.slane %v45, %v58
  %v60 = vcombine.low %v28, %v43
  %v61 = vcombine.high %v28, %v43
  %v63 = vunpack.c.l.s4 1934713408
  %v64 = vunpack.c.0.s8 %v63
  %v65 = vlaneseq
  %v66 = vshrl.u32 %v65, 7
  %v67 = vsub.s32 %v64, %v66
  %v68 = vrot.slane %v60, %v67
  %v70 = vunpack.c.l.s4 1934713408
  %v71 = vunpack.c.0.s8 %v70
  %v72 = vlaneseq
  %v73 = vshrl.u32 %v72, 7
  %v74 = vsub.s32 %v71, %v73
  %v75 = vrot.slane %v61, %v74
  %v76 = vcombine.low %v52, %v68
  %v77 = vcombine.high %v52, %v68
  %v78 = vcombine.low %v59, %v75
  %v79 = vcombine.high %v59, %v75
  %v84 = vrot.slane %v76, 4
  %v85 = vrot.slane %v77, 4
  %v86 = vrot.slane %v78, 4
  %v87 = vrot.slane %v79, 4
  %v92 = vmax.f32 %v76, %v84
  %v93 = vmax.f32 %v77, %v85
  %v94 = vmax.f32 %v78, %v86
  %v95 = vmax.f32 %v79, %v87
  %v96 = vcombine.low %v92, %v94
  %v98 = vunpack.c.l.s4 1983009808
  %v99 = vunpack.c.0.s8 %v98
  %v100 = vlaneseq
  %v101 = vshrl.u32 %v100, 7
  %v102 = vsub.s32 %v99, %v101
  %v103 = vrot.slane %v96, %v102
  %v104 = vcombine.low %v93, %v95
  %v106 = vunpack.c.l.s4 1983009808
  %v107 = vunpack.c.0.s8 %v106
  %v108 = vlaneseq
  %v109 = vshrl.u32 %v108, 7
  %v110 = vsub.s32 %v107, %v109
  %v111 = vrot.slane %v104, %v110
  %v112 = vcombine.low %v103, %v111
  %v114 = vunpack.c.l.s4 1934713408
  %v115 = vunpack.c.0.s8 %v114
  %v116 = vlaneseq
  %v117 = vshrl.u32 %v116, 7
  %v118 = vsub.s32 %v115, %v117
  %v119 = vrot.slane %v112, %v118
  %v120 = vcombine.high %v119, 0.0
  %v123 = vcombine.low %v119, %v120
  %125 = vst [vmem:[%s1] sm:$0xff] %v123
  // Predicated region
  $region6: #{skin_classifier_forward.13} parent=0 // pred_check
    _
  $region7: #{skin_classifier_forward.13} parent=0 // pred_check_branch
    %127 = sbr.rel (0) target = $region9
  $region8: #{skin_classifier_forward.13} parent=0 // pred_region
    _
  $region9: #{skin_classifier_forward.13} parent=0 // pred_fallthru
    _
  // Predicated region
  $region10: #{skin_classifier_forward.13} parent=0 // pred_check
    _
  $region11: #{skin_classifier_forward.13} parent=0 // pred_check_branch
    %129 = sbr.rel (0) target = $region13
  $region12: #{skin_classifier_forward.13} parent=0 // pred_region
    _
  $region13: #{skin_classifier_forward.13} parent=0 // pred_fallthru
    _

// kernel: skin_classifier_forward.10
$region0: #{skin_classifier_forward.10}
  #allocation0 [shape = 'u32[]', space=smem, size = 0x4, offset = 0x4, fixed_abs, tag = 'smem constant byte address 0x4 - core index']
  #allocation1 [shape = 'u32[144,128]{1,0:T(1,128)}', space=vmem, size = 0x12000, scoped, tag = 'internal scratch']
  #allocation2 [shape = 'f32[222,32]{1,0:T(8,128)}', space=vmem, size = 0x1c000, scoped, tag = 'scratch operand']
  #allocation3 [shape = 's32[1]{0}', space=sflag, size = 0x4, scoped, tag = 'scratch operand']
  #allocation4 [shape = 's32[]', space=sflag, size = 0x4, offset = 0, fixed_abs, tag = 'sflag constant byte address 0x0 - dummy sync flag']
  %s0 = inlined_call_operand.vmem [shape: f32[222,32], index: 0, kind: input, shape index: {}]
  %s1 = inlined_call_operand.vmem [shape: bf16[288,64], index: 1, kind: input, shape index: {}]
  %s2 = inlined_call_operand.vmem [shape: f32[1,64], index: 2, kind: input, shape index: {}]
  %s3 = inlined_call_operand.vmem [shape: f32[200,64], index: 3, kind: output, shape index: {}]
  %s4 = sld [smem:[#allocation0]]
  $region55: #{skin_classifier_forward.10} parent=0
    _
  %s6 = ssub.s32 1, %s4
  %s7 = scalar_select 0, %s6, %s4
  // Predicated region
  $region2: #{skin_classifier_forward.10} parent=0 // pred_check
    _
  $region3: #{skin_classifier_forward.10} parent=0 // pred_check_branch
    %9 = sbr.rel (0) target = $region5
  $region4: #{skin_classifier_forward.10} parent=0 // pred_region
    _
  $region5: #{skin_classifier_forward.10} parent=0 // pred_fallthru
    _
  // Predicated region
  $region6: #{skin_classifier_forward.10} parent=0 // pred_check
    _
  $region7: #{skin_classifier_forward.10} parent=0 // pred_check_branch
    %11 = sbr.rel (0) target = $region9
  $region8: #{skin_classifier_forward.10} parent=0 // pred_region
    _
  $region9: #{skin_classifier_forward.10} parent=0 // pred_fallthru
    _
  %s13 = smul.u32 0, 200
  %s14 = scalar_lea.vmem %s0, %s13
  %p16 = scmp.lt.u32.totalorder 222, 8
  %p17 = pneg %p16
  // Predicated region
  $region10: #{skin_classifier_forward.10} parent=0 // pred_check
    _
  $region11: #{skin_classifier_forward.10} parent=0 // pred_check_branch
    %19 = sbr.rel (%p16) target = $region13
  $region12: #{skin_classifier_forward.10} parent=0 // pred_region
    %s34 = sand.u32 222, 7
    %p35 = scmp.eq.s32.totalorder %s34, 0
    %p36 = pneg %p35
    // Predicated region
    $region25: #{skin_classifier_forward.10} parent=12 // pred_check
      _
    $region26: #{skin_classifier_forward.10} parent=12 // pred_check_branch
      %38 = sbr.rel (%p35) target = $region28
    $region27: #{skin_classifier_forward.10} parent=12 // pred_region
      %s39 = sand.u32 222, 7
      %s40 = ssub.s32 222, %s39
      %s41 = scalar_lea.vmem %s14, %s40
      %s42 = ssub.s32 222, %s39
      %s43 = scalar_lea.vmem [#allocation2], %s42
      loop: start=0, step=1, limit=1
      $region29: #{skin_classifier_forward.10} parent=27 // loop_pre_header
        _
      $region30: #{skin_classifier_forward.10} parent=27 // loop_header
        %s45 = sphi 0, %s49
        %p46 = scmp.ge.s32.totalorder %s45, 1
        %s50 = sphi %s14, %s14
        %s51 = sphi [#allocation2], [#allocation2]
      $region31: #{skin_classifier_forward.10} parent=27 // loop_header_branch
        %48 = sbr.rel (%p46) target = $region35
      $region32: #{skin_classifier_forward.10} parent=27 // loop_body
        %v52 = vld [vmem:[%s50] sm:$0xff]
        %53 = vst [vmem:[%s51] sm:$0xff] %v52
        %v54 = vld [vmem:[%s50 + $0x8] sm:$0xff]
        %55 = vst [vmem:[%s51 + $0x8] sm:$0xff] %v54
        %v56 = vld [vmem:[%s50 + $0x10] sm:$0xff]
        %57 = vst [vmem:[%s51 + $0x10] sm:$0xff] %v56
        %v58 = vld [vmem:[%s50 + $0x18] sm:$0xff]
        %59 = vst [vmem:[%s51 + $0x18] sm:$0xff] %v58
        %v60 = vld [vmem:[%s50 + $0x20] sm:$0xff]
        %61 = vst [vmem:[%s51 + $0x20] sm:$0xff] %v60
        %v62 = vld [vmem:[%s50 + $0x28] sm:$0xff]
        %63 = vst [vmem:[%s51 + $0x28] sm:$0xff] %v62
        %v64 = vld [vmem:[%s50 + $0x30] sm:$0xff]
        %65 = vst [vmem:[%s51 + $0x30] sm:$0xff] %v64
        %v66 = vld [vmem:[%s50 + $0x38] sm:$0xff]
        %67 = vst [vmem:[%s51 + $0x38] sm:$0xff] %v66
        %v68 = vld [vmem:[%s50 + $0x40] sm:$0xff]
        %69 = vst [vmem:[%s51 + $0x40] sm:$0xff] %v68
        %v70 = vld [vmem:[%s50 + $0x48] sm:$0xff]
        %71 = vst [vmem:[%s51 + $0x48] sm:$0xff] %v70
        %v72 = vld [vmem:[%s50 + $0x50] sm:$0xff]
        %73 = vst [vmem:[%s51 + $0x50] sm:$0xff] %v72
        %v74 = vld [vmem:[%s50 + $0x58] sm:$0xff]
        %75 = vst [vmem:[%s51 + $0x58] sm:$0xff] %v74
        %v76 = vld [vmem:[%s50 + $0x60] sm:$0xff]
        %77 = vst [vmem:[%s51 + $0x60] sm:$0xff] %v76
        %v78 = vld [vmem:[%s50 + $0x68] sm:$0xff]
        %79 = vst [vmem:[%s51 + $0x68] sm:$0xff] %v78
        %v80 = vld [vmem:[%s50 + $0x70] sm:$0xff]
        %81 = vst [vmem:[%s51 + $0x70] sm:$0xff] %v80
        %v82 = vld [vmem:[%s50 + $0x78] sm:$0xff]
        %83 = vst [vmem:[%s51 + $0x78] sm:$0xff] %v82
        %v84 = vld [vmem:[%s50 + $0x80] sm:$0xff]
        %85 = vst [vmem:[%s51 + $0x80] sm:$0xff] %v84
        %v86 = vld [vmem:[%s50 + $0x88] sm:$0xff]
        %87 = vst [vmem:[%s51 + $0x88] sm:$0xff] %v86
        %v88 = vld [vmem:[%s50 + $0x90] sm:$0xff]
        %89 = vst [vmem:[%s51 + $0x90] sm:$0xff] %v88
        %v90 = vld [vmem:[%s50 + $0x98] sm:$0xff]
        %91 = vst [vmem:[%s51 + $0x98] sm:$0xff] %v90
        %v92 = vld [vmem:[%s50 + $0xa0] sm:$0xff]
        %93 = vst [vmem:[%s51 + $0xa0] sm:$0xff] %v92
        %v94 = vld [vmem:[%s50 + $0xa8] sm:$0xff]
        %95 = vst [vmem:[%s51 + $0xa8] sm:$0xff] %v94
        %v96 = vld [vmem:[%s50 + $0xb0] sm:$0xff]
        %97 = vst [vmem:[%s51 + $0xb0] sm:$0xff] %v96
        %v98 = vld [vmem:[%s50 + $0xb8] sm:$0xff]
        %99 = vst [vmem:[%s51 + $0xb8] sm:$0xff] %v98
        %v100 = vld [vmem:[%s50 + $0xc0] sm:$0xff]
        %101 = vst [vmem:[%s51 + $0xc0] sm:$0xff] %v100
        %v102 = vld [vmem:[%s50 + $0xc8] sm:$0xff]
        %103 = vst [vmem:[%s51 + $0xc8] sm:$0xff] %v102
        %v104 = vld [vmem:[%s50 + $0xd0] sm:$0xff]
        %105 = vst [vmem:[%s51 + $0xd0] sm:$0xff] %v104
      $region33: #{skin_classifier_forward.10} parent=27 // loop_footer
        %s49 = sadd.s32 1, %s45
      $region34: #{skin_classifier_forward.10} parent=27 // loop_footer_branch
        %44 = sbr.rel target = $region30
      $region35: #{skin_classifier_forward.10} parent=27 // loop_exit
        _
      %s106 = sshllo.u32 0, %s39
      loop: start=0, step=1, limit=1
      $region36: #{skin_classifier_forward.10} parent=27 // loop_pre_header
        _
      $region37: #{skin_classifier_forward.10} parent=27 // loop_header
        %s108 = sphi 0, %s112
        %p109 = scmp.ge.s32.totalorder %s108, 1
        %s113 = sphi %s41, %s41
        %s114 = sphi %s43, %s43
      $region38: #{skin_classifier_forward.10} parent=27 // loop_header_branch
        %111 = sbr.rel (%p109) target = $region42
      $region39: #{skin_classifier_forward.10} parent=27 // loop_body
        %v115 = vld [vmem:[%s113] sm:%s106]
        %116 = vst [vmem:[%s114] sm:%s106] %v115
      $region40: #{skin_classifier_forward.10} parent=27 // loop_footer
        %s112 = sadd.s32 1, %s108
      $region41: #{skin_classifier_forward.10} parent=27 // loop_footer_branch
        %107 = sbr.rel target = $region37
      $region42: #{skin_classifier_forward.10} parent=27 // loop_exit
        _
    $region28: #{skin_classifier_forward.10} parent=12 // pred_fallthru
      _
  $region13: #{skin_classifier_forward.10} parent=0 // pred_fallthru
    _
  // Predicated region
  $region14: #{skin_classifier_forward.10} parent=0 // pred_check
    %p20 = pneg %p16
  $region15: #{skin_classifier_forward.10} parent=0 // pred_check_branch
    %22 = sbr.rel (%p20) target = $region17
  $region16: #{skin_classifier_forward.10} parent=0 // pred_region
    %s23 = sshllo.u32 0, 222
    loop: start=0, step=1, limit=1
    $region18: #{skin_classifier_forward.10} parent=16 // loop_pre_header
      _
    $region19: #{skin_classifier_forward.10} parent=16 // loop_header
      %s25 = sphi 0, %s29
      %p26 = scmp.ge.s32.totalorder %s25, 1
      %s30 = sphi %s14, %s14
      %s31 = sphi [#allocation2], [#allocation2]
    $region20: #{skin_classifier_forward.10} parent=16 // loop_header_branch
      %28 = sbr.rel (%p26) target = $region24
    $region21: #{skin_classifier_forward.10} parent=16 // loop_body
      %v32 = vld [vmem:[%s30] sm:%s23]
      %33 = vst [vmem:[%s31] sm:%s23] %v32
    $region22: #{skin_classifier_forward.10} parent=16 // loop_footer
      %s29 = sadd.s32 1, %s25
    $region23: #{skin_classifier_forward.10} parent=16 // loop_footer_branch
      %24 = sbr.rel target = $region19
    $region24: #{skin_classifier_forward.10} parent=16 // loop_exit
      _
  $region17: #{skin_classifier_forward.10} parent=0 // pred_fallthru
    _
  // Predicated region
  $region43: #{skin_classifier_forward.10} parent=0 // pred_check
    _
  $region44: #{skin_classifier_forward.10} parent=0 // pred_check_branch
    %119 = sbr.rel (0) target = $region46
  $region45: #{skin_classifier_forward.10} parent=0 // pred_region
    %120 = vsyncadd [#allocation3], 3552
  $region46: #{skin_classifier_forward.10} parent=0 // pred_fallthru
    _
  %s121 = smul.u32 222, 1
  %s122 = sshll.u32 %s121, 4
  %123 = dma.done [#allocation3], %s122
  %v124 = vld [vmem:[#allocation2] sm:$0xff]
  %v125 = vld [vmem:[#allocation2 + $0x8] sm:$0xff]
  %v126 = vld [vmem:[#allocation2 + $0x10] sm:$0xff]
  %v127 = vld [vmem:[#allocation2 + $0x18] sm:$0xff]
  %v128 = vld [vmem:[#allocation2 + $0x20] sm:$0xff]
  %v129 = vld [vmem:[#allocation2 + $0x28] sm:$0xff]
  %v130 = vld [vmem:[#allocation2 + $0x30] sm:$0xff]
  %v131 = vld [vmem:[#allocation2 + $0x38] sm:$0xff]
  %v132 = vld [vmem:[#allocation2 + $0x40] sm:$0xff]
  %v133 = vld [vmem:[#allocation2 + $0x48] sm:$0xff]
  %v134 = vld [vmem:[#allocation2 + $0x50] sm:$0xff]
  %v135 = vld [vmem:[#allocation2 + $0x58] sm:$0xff]
  %v136 = vld [vmem:[#allocation2 + $0x60] sm:$0xff]
  %v137 = vld [vmem:[#allocation2 + $0x68] sm:$0xff]
  %v138 = vld [vmem:[#allocation2 + $0x70] sm:$0xff]
  %v139 = vld [vmem:[#allocation2 + $0x78] sm:$0xff]
  %v140 = vld [vmem:[#allocation2 + $0x80] sm:$0xff]
  %v141 = vld [vmem:[#allocation2 + $0x88] sm:$0xff]
  %v142 = vld [vmem:[#allocation2 + $0x90] sm:$0xff]
  %v143 = vld [vmem:[#allocation2 + $0x98] sm:$0xff]
  %v144 = vld [vmem:[#allocation2 + $0xa0] sm:$0xff]
  %v145 = vld [vmem:[#allocation2 + $0xa8] sm:$0xff]
  %v146 = vld [vmem:[#allocation2 + $0xb0] sm:$0xff]
  %v147 = vld [vmem:[#allocation2 + $0xb8] sm:$0xff]
  %v148 = vld [vmem:[#allocation2 + $0xc0] sm:$0xff]
  %v149 = vld [vmem:[#allocation2 + $0xc8] sm:$0xff]
  %v150 = vld [vmem:[#allocation2 + $0xd0] sm:$0xff]
  %v151 = vld [vmem:[#allocation2 + $0xd8] sm:$0x3f]
  %v152 = vpack.c.bf16 %v125, %v124
  %v153 = vpack.c.bf16 %v127, %v126
  %v154 = vpack.c.bf16 %v129, %v128
  %v155 = vpack.c.bf16 %v131, %v130
  %v156 = vpack.c.bf16 %v133, %v132
  %v157 = vpack.c.bf16 %v135, %v134
  %v158 = vpack.c.bf16 %v137, %v136
  %v159 = vpack.c.bf16 %v139, %v138
  %v160 = vpack.c.bf16 %v141, %v140
  %v161 = vpack.c.bf16 %v143, %v142
  %v162 = vpack.c.bf16 %v145, %v144
  %v163 = vpack.c.bf16 %v147, %v146
  %v164 = vpack.c.bf16 %v149, %v148
  %v165 = vpack.c.bf16 %v151, %v150
  %v166 = vld [vmem:[%s1] sm:$0xf]
  %v167 = vld [vmem:[%s1 + $0x4] sm:$0xf]
  %v168 = vld [vmem:[%s1 + $0x8] sm:$0xf]
  %v169 = vld [vmem:[%s1 + $0xc] sm:$0xf]
  %v170 = vld [vmem:[%s1 + $0x10] sm:$0xf]
  %v171 = vld [vmem:[%s1 + $0x14] sm:$0xf]
  %v172 = vld [vmem:[%s1 + $0x18] sm:$0xf]
  %v173 = vld [vmem:[%s1 + $0x1c] sm:$0xf]
  %vm174 = vsmask.f32 7424
  %v176 = vshrl.u32 %v152, 16
  %v178 = vshll.u32 %v152, 16
  %v180 = vrot.slane %v178, 1
  %v181 = vor.u32 %v176, %v180
  %v183 = vshll.u32 %v153, 16
  %v185 = vrot.slane %v183, 1
  %v186 = vsel %vm174, %v181, %v185
  %v187 = vshrl.u32 %v153, 16
  %v189 = vor.u32 %v187, %v185
  %v191 = vshll.u32 %v154, 16
  %v193 = vrot.slane %v191, 1
  %v194 = vsel %vm174, %v189, %v193
  %v195 = vshrl.u32 %v154, 16
  %v197 = vor.u32 %v195, %v193
  %v199 = vshll.u32 %v155, 16
  %v201 = vrot.slane %v199, 1
  %v202 = vsel %vm174, %v197, %v201
  %v203 = vshrl.u32 %v155, 16
  %v205 = vor.u32 %v203, %v201
  %v207 = vshll.u32 %v156, 16
  %v209 = vrot.slane %v207, 1
  %v210 = vsel %vm174, %v205, %v209
  %v211 = vshrl.u32 %v156, 16
  %v213 = vor.u32 %v211, %v209
  %v215 = vshll.u32 %v157, 16
  %v217 = vrot.slane %v215, 1
  %v218 = vsel %vm174, %v213, %v217
  %v219 = vshrl.u32 %v157, 16
  %v221 = vor.u32 %v219, %v217
  %v223 = vshll.u32 %v158, 16
  %v225 = vrot.slane %v223, 1
  %v226 = vsel %vm174, %v221, %v225
  %v227 = vshrl.u32 %v158, 16
  %v229 = vor.u32 %v227, %v225
  %v231 = vshll.u32 %v159, 16
  %v233 = vrot.slane %v231, 1
  %v234 = vsel %vm174, %v229, %v233
  %v235 = vshrl.u32 %v159, 16
  %v237 = vor.u32 %v235, %v233
  %v239 = vshll.u32 %v160, 16
  %v241 = vrot.slane %v239, 1
  %v242 = vsel %vm174, %v237, %v241
  %v243 = vshrl.u32 %v160, 16
  %v245 = vor.u32 %v243, %v241
  %v247 = vshll.u32 %v161, 16
  %v249 = vrot.slane %v247, 1
  %v250 = vsel %vm174, %v245, %v249
  %v251 = vshrl.u32 %v161, 16
  %v253 = vor.u32 %v251, %v249
  %v255 = vshll.u32 %v162, 16
  %v257 = vrot.slane %v255, 1
  %v258 = vsel %vm174, %v253, %v257
  %v259 = vshrl.u32 %v162, 16
  %v261 = vor.u32 %v259, %v257
  %v263 = vshll.u32 %v163, 16
  %v265 = vrot.slane %v263, 1
  %v266 = vsel %vm174, %v261, %v265
  %v267 = vshrl.u32 %v163, 16
  %v269 = vor.u32 %v267, %v265
  %v271 = vshll.u32 %v164, 16
  %v273 = vrot.slane %v271, 1
  %v274 = vsel %vm174, %v269, %v273
  %v275 = vshrl.u32 %v164, 16
  %v277 = vor.u32 %v275, %v273
  %v282 = vunpack.c.l.b16 %v170
  %v283 = vunpack.c.l.b16 %v171
  %v284 = vunpack.c.l.b16 %v172
  %v285 = vunpack.c.l.b16 %v173
  %v286 = vpack.c.b16 %v283, %v282
  %v287 = vpack.c.b16 %v285, %v284
  %vm290 = vcmask 261120
  %v292 = vsel %vm290, %v186, 0
  %v295 = vsel %vm290, %v194, 0
  %v298 = vsel %vm290, %v202, 0
  %v301 = vsel %vm290, %v210, 0
  %v304 = vsel %vm290, %v218, 0
  %v307 = vsel %vm290, %v226, 0
  %v310 = vsel %vm290, %v234, 0
  %v313 = vsel %vm290, %v242, 0
  %v316 = vsel %vm290, %v250, 0
  %v319 = vsel %vm290, %v258, 0
  %v322 = vsel %vm290, %v266, 0
  %v325 = vsel %vm290, %v274, 0
  %v328 = vsel %vm290, %v277, 0
  %330 = vmatprep.subr.bf16.mxu0 0
  %331 = vmatpush1.bf16.msra.mxu0 %v286
  %332 = vmatprep.subr.bf16.mxu0 0
  %333 = vmatpush1.bf16.msra.mxu0 %v287
  %334 = vmatprep.subr.bf16.mxu0 0
  %335 = vmatpush1.bf16.msra.mxu0 0
  %336 = vmatprep.subr.bf16.mxu0 0
  %337 = vmatpush1.bf16.msra.mxu0 0
  %338 = vmatprep.subr.bf16.mxu0 0
  %339 = vmatpush1.bf16.msra.mxu0 0
  %340 = vmatprep.subr.bf16.mxu0 0
  %341 = vmatpush1.bf16.msra.mxu0 0
  %342 = vmatprep.subr.bf16.mxu0 0
  %343 = vmatpush1.bf16.msra.mxu0 0
  %344 = vmatprep.subr.bf16.mxu0 0
  %345 = vmatpush1.bf16.msra.mxu0 0
  %346 = vmatprep.subr.bf16.mxu0 0
  %347 = vmatpush1.bf16.msra.mxu0 0
  %348 = vmatprep.subr.bf16.mxu0 0
  %349 = vmatpush1.bf16.msra.mxu0 0
  %350 = vmatprep.subr.bf16.mxu0 0
  %351 = vmatpush1.bf16.msra.mxu0 0
  %352 = vmatprep.subr.bf16.mxu0 0
  %353 = vmatpush1.bf16.msra.mxu0 0
  %354 = vmatprep.subr.bf16.mxu0 0
  %355 = vmatpush1.bf16.msra.mxu0 0
  %356 = vmatprep.subr.bf16.mxu0 0
  %357 = vmatpush1.bf16.msra.mxu0 0
  %358 = vmatprep.subr.bf16.mxu0 0
  %359 = vmatpush1.bf16.msra.mxu0 0
  %360 = vmatprep.subr.bf16.mxu0 0
  %361 = vmatpush1.bf16.msra.mxu0 0
  %362 = vmatprep.mubr.bf16.mxu0 0
  %363 = vmatmul.mubr.bf16.gmra.mrb[0].mxu0 %v292
  %v364 = vpop.f32.mrb[0].mxu0
  %v365 = vadd.f32 0.0, %v364
  %v366 = vpop.f32.mrb[0].mxu0
  %v367 = vpop.f32.mrb[0].mxu0
  %v368 = vadd.f32 0.0, %v367
  %v369 = vpop.f32.mrb[0].mxu0
  %370 = vmatprep.mubr.bf16.mxu0 0
  %371 = vmatmul.mubr.bf16.gmra.mrb[0].mxu0 %v295
  %v372 = vpop.f32.mrb[0].mxu0
  %v373 = vadd.f32 0.0, %v372
  %v374 = vpop.f32.mrb[0].mxu0
  %v375 = vpop.f32.mrb[0].mxu0
  %v376 = vadd.f32 0.0, %v375
  %v377 = vpop.f32.mrb[0].mxu0
  %378 = vmatprep.mubr.bf16.mxu0 0
  %379 = vmatmul.mubr.bf16.gmra.mrb[0].mxu0 %v298
  %v380 = vpop.f32.mrb[0].mxu0
  %v381 = vadd.f32 0.0, %v380
  %v382 = vpop.f32.mrb[0].mxu0
  %v383 = vpop.f32.mrb[0].mxu0
  %v384 = vadd.f32 0.0, %v383
  %v385 = vpop.f32.mrb[0].mxu0
  %386 = vmatprep.mubr.bf16.mxu0 0
  %387 = vmatmul.mubr.bf16.gmra.mrb[0].mxu0 %v301
  %v388 = vpop.f32.mrb[0].mxu0
  %v389 = vadd.f32 0.0, %v388
  %v390 = vpop.f32.mrb[0].mxu0
  %v391 = vpop.f32.mrb[0].mxu0
  %v392 = vadd.f32 0.0, %v391
  %v393 = vpop.f32.mrb[0].mxu0
  %394 = vmatprep.mubr.bf16.mxu0 0
  %395 = vmatmul.mubr.bf16.gmra.mrb[0].mxu0 %v304
  %v396 = vpop.f32.mrb[0].mxu0
  %v397 = vadd.f32 0.0, %v396
  %v398 = vpop.f32.mrb[0].mxu0
  %v399 = vpop.f32.mrb[0].mxu0
  %v400 = vadd.f32 0.0, %v399
  %v401 = vpop.f32.mrb[0].mxu0
  %402 = vmatprep.mubr.bf16.mxu0 0
  %403 = vmatmul.mubr.bf16.gmra.mrb[0].mxu0 %v307
  %v404 = vpop.f32.mrb[0].mxu0
  %v405 = vadd.f32 0.0, %v404
  %v406 = vpop.f32.mrb[0].mxu0
  %v407 = vpop.f32.mrb[0].mxu0
  %v408 = vadd.f32 0.0, %v407
  %v409 = vpop.f32.mrb[0].mxu0
  %410 = vmatprep.mubr.bf16.mxu0 0
  %411 = vmatmul.mubr.bf16.gmra.mrb[0].mxu0 %v310
  %v412 = vpop.f32.mrb[0].mxu0
  %v413 = vadd.f32 0.0, %v412
  %v414 = vpop.f32.mrb[0].mxu0
  %v415 = vpop.f32.mrb[0].mxu0
  %v416 = vadd.f32 0.0, %v415
  %v417 = vpop.f32.mrb[0].mxu0
  %418 = vmatprep.mubr.bf16.mxu0 0
  %419 = vmatmul.mubr.bf16.gmra.mrb[0].mxu0 %v313
  %v420 = vpop.f32.mrb[0].mxu0
  %v421 = vadd.f32 0.0, %v420
  %v422 = vpop.f32.mrb[0].mxu0
  %v423 = vpop.f32.mrb[0].mxu0
  %v424 = vadd.f32 0.0, %v423
  %v425 = vpop.f32.mrb[0].mxu0
  %426 = vmatprep.mubr.bf16.mxu0 0
  %427 = vmatmul.mubr.bf16.gmra.mrb[0].mxu0 %v316
  %v428 = vpop.f32.mrb[0].mxu0
  %v429 = vadd.f32 0.0, %v428
  %v430 = vpop.f32.mrb[0].mxu0
  %v431 = vpop.f32.mrb[0].mxu0
  %v432 = vadd.f32 0.0, %v431
  %v433 = vpop.f32.mrb[0].mxu0
  %434 = vmatprep.mubr.bf16.mxu0 0
  %435 = vmatmul.mubr.bf16.gmra.mrb[0].mxu0 %v319
  %v436 = vpop.f32.mrb[0].mxu0
  %v437 = vadd.f32 0.0, %v436
  %v438 = vpop.f32.mrb[0].mxu0
  %v439 = vpop.f32.mrb[0].mxu0
  %v440 = vadd.f32 0.0, %v439
  %v441 = vpop.f32.mrb[0].mxu0
  %442 = vmatprep.mubr.bf16.mxu0 0
  %443 = vmatmul.mubr.bf16.gmra.mrb[0].mxu0 %v322
  %v444 = vpop.f32.mrb[0].mxu0
  %v445 = vadd.f32 0.0, %v444
  %v446 = vpop.f32.mrb[0].mxu0
  %v447 = vpop.f32.mrb[0].mxu0
  %v448 = vadd.f32 0.0, %v447
  %v449 = vpop.f32.mrb[0].mxu0
  %450 = vmatprep.mubr.bf16.mxu0 0
  %451 = vmatmul.mubr.bf16.gmra.mrb[0].mxu0 %v325
  %v452 = vpop.f32.mrb[0].mxu0
  %v453 = vadd.f32 0.0, %v452
  %v454 = vpop.f32.mrb[0].mxu0
  %v455 = vpop.f32.mrb[0].mxu0
  %v456 = vadd.f32 0.0, %v455
  %v457 = vpop.f32.mrb[0].mxu0
  %458 = vmatprep.mubr.bf16.mxu0 0
  %459 = vmatmul.mubr.bf16.gmra.mrb[0].mxu0 %v328
  %v460 = vpop.f32.mrb[0].mxu0
  %v461 = vadd.f32 0.0, %v460
  %v462 = vpop.f32.mrb[0].mxu0
  %v463 = vpop.f32.mrb[0].mxu0
  %v464 = vpop.f32.mrb[0].mxu0
  %465 = vdwg.mxu0
  %v470 = vunpack.c.l.b16 %v166
  %v471 = vunpack.c.l.b16 %v167
  %v472 = vunpack.c.l.b16 %v168
  %v473 = vunpack.c.l.b16 %v169
  %v474 = vpack.c.b16 %v471, %v470
  %v475 = vpack.c.b16 %v473, %v472
  %v478 = vsel %vm290, %v152, 0
  %v480 = vsel %vm290, %v153, 0
  %v482 = vsel %vm290, %v154, 0
  %v484 = vsel %vm290, %v155, 0
  %v486 = vsel %vm290, %v156, 0
  %v488 = vsel %vm290, %v157, 0
  %v490 = vsel %vm290, %v158, 0
  %v492 = vsel %vm290, %v159, 0
  %v494 = vsel %vm290, %v160, 0
  %v496 = vsel %vm290, %v161, 0
  %v498 = vsel %vm290, %v162, 0
  %v500 = vsel %vm290, %v163, 0
  %v502 = vsel %vm290, %v164, 0
  %504 = vmatprep.subr.bf16.mxu0 0
  %505 = vmatpush1.bf16.msra.mxu0 %v474
  %506 = vmatprep.subr.bf16.mxu0 0
  %507 = vmatpush1.bf16.msra.mxu0 %v475
  %508 = vmatprep.subr.bf16.mxu0 0
  %509 = vmatpush1.bf16.msra.mxu0 0
  %510 = vmatprep.subr.bf16.mxu0 0
  %511 = vmatpush1.bf16.msra.mxu0 0
  %512 = vmatprep.subr.bf16.mxu0 0
  %513 = vmatpush1.bf16.msra.mxu0 0
  %514 = vmatprep.subr.bf16.mxu0 0
  %515 = vmatpush1.bf16.msra.mxu0 0
  %516 = vmatprep.subr.bf16.mxu0 0
  %517 = vmatpush1.bf16.msra.mxu0 0
  %518 = vmatprep.subr.bf16.mxu0 0
  %519 = vmatpush1.bf16.msra.mxu0 0
  %520 = vmatprep.subr.bf16.mxu0 0
  %521 = vmatpush1.bf16.msra.mxu0 0
  %522 = vmatprep.subr.bf16.mxu0 0
  %523 = vmatpush1.bf16.msra.mxu0 0
  %524 = vmatprep.subr.bf16.mxu0 0
  %525 = vmatpush1.bf16.msra.mxu0 0
  %526 = vmatprep.subr.bf16.mxu0 0
  %527 = vmatpush1.bf16.msra.mxu0 0
  %528 = vmatprep.subr.bf16.mxu0 0
  %529 = vmatpush1.bf16.msra.mxu0 0
  %530 = vmatprep.subr.bf16.mxu0 0
  %531 = vmatpush1.bf16.msra.mxu0 0
  %532 = vmatprep.subr.bf16.mxu0 0
  %533 = vmatpush1.bf16.msra.mxu0 0
  %534 = vmatprep.subr.bf16.mxu0 0
  %535 = vmatpush1.bf16.msra.mxu0 0
  %536 = vmatprep.mubr.bf16.mxu0 0
  %537 = vmatmul.mubr.bf16.gmra.mrb[0].mxu0 %v478
  %v538 = vpop.f32.mrb[0].mxu0
  %v539 = vadd.f32 %v365, %v538
  %v540 = vpop.f32.mrb[0].mxu0
  %v541 = vpop.f32.mrb[0].mxu0
  %v542 = vadd.f32 %v368, %v541
  %v543 = vpop.f32.mrb[0].mxu0
  %544 = vmatprep.mubr.bf16.mxu0 0
  %545 = vmatmul.mubr.bf16.gmra.mrb[0].mxu0 %v480
  %v546 = vpop.f32.mrb[0].mxu0
  %v547 = vadd.f32 %v373, %v546
  %v548 = vpop.f32.mrb[0].mxu0
  %v549 = vpop.f32.mrb[0].mxu0
  %v550 = vadd.f32 %v376, %v549
  %v551 = vpop.f32.mrb[0].mxu0
  %552 = vmatprep.mubr.bf16.mxu0 0
  %553 = vmatmul.mubr.bf16.gmra.mrb[0].mxu0 %v482
  %v554 = vpop.f32.mrb[0].mxu0
  %v555 = vadd.f32 %v381, %v554
  %v556 = vpop.f32.mrb[0].mxu0
  %v557 = vpop.f32.mrb[0].mxu0
  %v558 = vadd.f32 %v384, %v557
  %v559 = vpop.f32.mrb[0].mxu0
  %560 = vmatprep.mubr.bf16.mxu0 0
  %561 = vmatmul.mubr.bf16.gmra.mrb[0].mxu0 %v484
  %v562 = vpop.f32.mrb[0].mxu0
  %v563 = vadd.f32 %v389, %v562
  %v564 = vpop.f32.mrb[0].mxu0
  %v565 = vpop.f32.mrb[0].mxu0
  %v566 = vadd.f32 %v392, %v565
  %v567 = vpop.f32.mrb[0].mxu0
  %568 = vmatprep.mubr.bf16.mxu0 0
  %569 = vmatmul.mubr.bf16.gmra.mrb[0].mxu0 %v486
  %v570 = vpop.f32.mrb[0].mxu0
  %v571 = vadd.f32 %v397, %v570
  %v572 = vpop.f32.mrb[0].mxu0
  %v573 = vpop.f32.mrb[0].mxu0
  %v574 = vadd.f32 %v400, %v573
  %v575 = vpop.f32.mrb[0].mxu0
  %576 = vmatprep.mubr.bf16.mxu0 0
  %577 = vmatmul.mubr.bf16.gmra.mrb[0].mxu0 %v488
  %v578 = vpop.f32.mrb[0].mxu0
  %v579 = vadd.f32 %v405, %v578
  %v580 = vpop.f32.mrb[0].mxu0
  %v581 = vpop.f32.mrb[0].mxu0
  %v582 = vadd.f32 %v408, %v581
  %v583 = vpop.f32.mrb[0].mxu0
  %584 = vmatprep.mubr.bf16.mxu0 0
  %585 = vmatmul.mubr.bf16.gmra.mrb[0].mxu0 %v490
  %v586 = vpop.f32.mrb[0].mxu0
  %v587 = vadd.f32 %v413, %v586
  %v588 = vpop.f32.mrb[0].mxu0
  %v589 = vpop.f32.mrb[0].mxu0
  %v590 = vadd.f32 %v416, %v589
  %v591 = vpop.f32.mrb[0].mxu0
  %592 = vmatprep.mubr.bf16.mxu0 0
  %593 = vmatmul.mubr.bf16.gmra.mrb[0].mxu0 %v492
  %v594 = vpop.f32.mrb[0].mxu0
  %v595 = vadd.f32 %v421, %v594
  %v596 = vpop.f32.mrb[0].mxu0
  %v597 = vpop.f32.mrb[0].mxu0
  %v598 = vadd.f32 %v424, %v597
  %v599 = vpop.f32.mrb[0].mxu0
  %600 = vmatprep.mubr.bf16.mxu0 0
  %601 = vmatmul.mubr.bf16.gmra.mrb[0].mxu0 %v494
  %v602 = vpop.f32.mrb[0].mxu0
  %v603 = vadd.f32 %v429, %v602
  %v604 = vpop.f32.mrb[0].mxu0
  %v605 = vpop.f32.mrb[0].mxu0
  %v606 = vadd.f32 %v432, %v605
  %v607 = vpop.f32.mrb[0].mxu0
  %608 = vmatprep.mubr.bf16.mxu0 0
  %609 = vmatmul.mubr.bf16.gmra.mrb[0].mxu0 %v496
  %v610 = vpop.f32.mrb[0].mxu0
  %v611 = vadd.f32 %v437, %v610
  %v612 = vpop.f32.mrb[0].mxu0
  %v613 = vpop.f32.mrb[0].mxu0
  %v614 = vadd.f32 %v440, %v613
  %v615 = vpop.f32.mrb[0].mxu0
  %616 = vmatprep.mubr.bf16.mxu0 0
  %617 = vmatmul.mubr.bf16.gmra.mrb[0].mxu0 %v498
  %v618 = vpop.f32.mrb[0].mxu0
  %v619 = vadd.f32 %v445, %v618
  %v620 = vpop.f32.mrb[0].mxu0
  %v621 = vpop.f32.mrb[0].mxu0
  %v622 = vadd.f32 %v448, %v621
  %v623 = vpop.f32.mrb[0].mxu0
  %624 = vmatprep.mubr.bf16.mxu0 0
  %625 = vmatmul.mubr.bf16.gmra.mrb[0].mxu0 %v500
  %v626 = vpop.f32.mrb[0].mxu0
  %v627 = vadd.f32 %v453, %v626
  %v628 = vpop.f32.mrb[0].mxu0
  %v629 = vpop.f32.mrb[0].mxu0
  %v630 = vadd.f32 %v456, %v629
  %v631 = vpop.f32.mrb[0].mxu0
  %632 = vmatprep.mubr.bf16.mxu0 0
  %633 = vmatmul.mubr.bf16.gmra.mrb[0].mxu0 %v502
  %v634 = vpop.f32.mrb[0].mxu0
  %v635 = vadd.f32 %v461, %v634
  %v636 = vpop.f32.mrb[0].mxu0
  %v637 = vpop.f32.mrb[0].mxu0
  %v638 = vpop.f32.mrb[0].mxu0
  %639 = vdwg.mxu0
  %v640 = vld [vmem:[%s1 + $0x20] sm:$0xf]
  %v641 = vld [vmem:[%s1 + $0x24] sm:$0xf]
  %v642 = vld [vmem:[%s1 + $0x28] sm:$0xf]
  %v643 = vld [vmem:[%s1 + $0x2c] sm:$0xf]
  %vm657 = vcmask 1046528
  %v658 = vrot.slane %v152, 1
  %v659 = vrot.slane %v153, 1
  %v660 = vsel %vm657, %v658, %v659
  %v661 = vrot.slane %v154, 1
  %v662 = vsel %vm657, %v659, %v661
  %v663 = vrot.slane %v155, 1
  %v664 = vsel %vm657, %v661, %v663
  %v665 = vrot.slane %v156, 1
  %v666 = vsel %vm657, %v663, %v665
  %v667 = vrot.slane %v157, 1
  %v668 = vsel %vm657, %v665, %v667
  %v669 = vrot.slane %v158, 1
  %v670 = vsel %vm657, %v667, %v669
  %v671 = vrot.slane %v159, 1
  %v672 = vsel %vm657, %v669, %v671
  %v673 = vrot.slane %v160, 1
  %v674 = vsel %vm657, %v671, %v673
  %v675 = vrot.slane %v161, 1
  %v676 = vsel %vm657, %v673, %v675
  %v677 = vrot.slane %v162, 1
  %v678 = vsel %vm657, %v675, %v677
  %v679 = vrot.slane %v163, 1
  %v680 = vsel %vm657, %v677, %v679
  %v681 = vrot.slane %v164, 1
  %v682 = vsel %vm657, %v679, %v681
  %v687 = vunpack.c.l.b16 %v640
  %v688 = vunpack.c.l.b16 %v641
  %v689 = vunpack.c.l.b16 %v642
  %v690 = vunpack.c.l.b16 %v643
  %v691 = vpack.c.b16 %v688, %v687
  %v692 = vpack.c.b16 %v690, %v689
  %v696 = vsel %vm290, %v660, 0
  %v699 = vsel %vm290, %v662, 0
  %v702 = vsel %vm290, %v664, 0
  %v705 = vsel %vm290, %v666, 0
  %v708 = vsel %vm290, %v668, 0
  %v711 = vsel %vm290, %v670, 0
  %v714 = vsel %vm290, %v672, 0
  %v717 = vsel %vm290, %v674, 0
  %v720 = vsel %vm290, %v676, 0
  %v723 = vsel %vm290, %v678, 0
  %v726 = vsel %vm290, %v680, 0
  %v729 = vsel %vm290, %v682, 0
  %v732 = vsel %vm290, %v681, 0
  %734 = vmatprep.subr.bf16.mxu0 0
  %735 = vmatpush1.bf16.msra.mxu0 %v691
  %736 = vmatprep.subr.bf16.mxu0 0
  %737 = vmatpush1.bf16.msra.mxu0 %v692
  %738 = vmatprep.subr.bf16.mxu0 0
  %739 = vmatpush1.bf16.msra.mxu0 0
  %740 = vmatprep.subr.bf16.mxu0 0
  %741 = vmatpush1.bf16.msra.mxu0 0
  %742 = vmatprep.subr.bf16.mxu0 0
  %743 = vmatpush1.bf16.msra.mxu0 0
  %744 = vmatprep.subr.bf16.mxu0 0
  %745 = vmatpush1.bf16.msra.mxu0 0
  %746 = vmatprep.subr.bf16.mxu0 0
  %747 = vmatpush1.bf16.msra.mxu0 0
  %748 = vmatprep.subr.bf16.mxu0 0
  %749 = vmatpush1.bf16.msra.mxu0 0
  %750 = vmatprep.subr.bf16.mxu0 0
  %751 = vmatpush1.bf16.msra.mxu0 0
  %752 = vmatprep.subr.bf16.mxu0 0
  %753 = vmatpush1.bf16.msra.mxu0 0
  %754 = vmatprep.subr.bf16.mxu0 0
  %755 = vmatpush1.bf16.msra.mxu0 0
  %756 = vmatprep.subr.bf16.mxu0 0
  %757 = vmatpush1.bf16.msra.mxu0 0
  %758 = vmatprep.subr.bf16.mxu0 0
  %759 = vmatpush1.bf16.msra.mxu0 0
  %760 = vmatprep.subr.bf16.mxu0 0
  %761 = vmatpush1.bf16.msra.mxu0 0
  %762 = vmatprep.subr.bf16.mxu0 0
  %763 = vmatpush1.bf16.msra.mxu0 0
  %764 = vmatprep.subr.bf16.mxu0 0
  %765 = vmatpush1.bf16.msra.mxu0 0
  %766 = vmatprep.mubr.bf16.mxu0 0
  %767 = vmatmul.mubr.bf16.gmra.mrb[0].mxu0 %v696
  %v768 = vpop.f32.mrb[0].mxu0
  %v769 = vadd.f32 0.0, %v768
  %v770 = vpop.f32.mrb[0].mxu0
  %v771 = vpop.f32.mrb[0].mxu0
  %v772 = vadd.f32 0.0, %v771
  %v773 = vpop.f32.mrb[0].mxu0
  %774 = vmatprep.mubr.bf16.mxu0 0
  %775 = vmatmul.mubr.bf16.gmra.mrb[0].mxu0 %v699
  %v776 = vpop.f32.mrb[0].mxu0
  %v777 = vadd.f32 0.0, %v776
  %v778 = vpop.f32.mrb[0].mxu0
  %v779 = vpop.f32.mrb[0].mxu0
  %v780 = vadd.f32 0.0, %v779
  %v781 = vpop.f32.mrb[0].mxu0
  %782 = vmatprep.mubr.bf16.mxu0 0
  %783 = vmatmul.mubr.bf16.gmra.mrb[0].mxu0 %v702
  %v784 = vpop.f32.mrb[0].mxu0
  %v785 = vadd.f32 0.0, %v784
  %v786 = vpop.f32.mrb[0].mxu0
  %v787 = vpop.f32.mrb[0].mxu0
  %v788 = vadd.f32 0.0, %v787
  %v789 = vpop.f32.mrb[0].mxu0
  %790 = vmatprep.mubr.bf16.mxu0 0
  %791 = vmatmul.mubr.bf16.gmra.mrb[0].mxu0 %v705
  %v792 = vpop.f32.mrb[0].mxu0
  %v793 = vadd.f32 0.0, %v792
  %v794 = vpop.f32.mrb[0].mxu0
  %v795 = vpop.f32.mrb[0].mxu0
  %v796 = vadd.f32 0.0, %v795
  %v797 = vpop.f32.mrb[0].mxu0
  %798 = vmatprep.mubr.bf16.mxu0 0
  %799 = vmatmul.mubr.bf16.gmra.mrb[0].mxu0 %v708
  %v800 = vpop.f32.mrb[0].mxu0
  %v801 = vadd.f32 0.0, %v800
  %v802 = vpop.f32.mrb[0].mxu0
  %v803 = vpop.f32.mrb[0].mxu0
  %v804 = vadd.f32 0.0, %v803
  %v805 = vpop.f32.mrb[0].mxu0
  %806 = vmatprep.mubr.bf16.mxu0 0
  %807 = vmatmul.mubr.bf16.gmra.mrb[0].mxu0 %v711
  %v808 = vpop.f32.mrb[0].mxu0
  %v809 = vadd.f32 0.0, %v808
  %v810 = vpop.f32.mrb[0].mxu0
  %v811 = vpop.f32.mrb[0].mxu0
  %v812 = vadd.f32 0.0, %v811
  %v813 = vpop.f32.mrb[0].mxu0
  %814 = vmatprep.mubr.bf16.mxu0 0
  %815 = vmatmul.mubr.bf16.gmra.mrb[0].mxu0 %v714
  %v816 = vpop.f32.mrb[0].mxu0
  %v817 = vadd.f32 0.0, %v816
  %v818 = vpop.f32.mrb[0].mxu0
  %v819 = vpop.f32.mrb[0].mxu0
  %v820 = vadd.f32 0.0, %v819
  %v821 = vpop.f32.mrb[0].mxu0
  %822 = vmatprep.mubr.bf16.mxu0 0
  %823 = vmatmul.mubr.bf16.gmra.mrb[0].mxu0 %v717
  %v824 = vpop.f32.mrb[0].mxu0
  %v825 = vadd.f32 0.0, %v824
  %v826 = vpop.f32.mrb[0].mxu0
  %v827 = vpop.f32.mrb[0].mxu0
  %v828 = vadd.f32 0.0, %v827
  %v829 = vpop.f32.mrb[0].mxu0
  %830 = vmatprep.mubr.bf16.mxu0 0
  %831 = vmatmul.mubr.bf16.gmra.mrb[0].mxu0 %v720
  %v832 = vpop.f32.mrb[0].mxu0
  %v833 = vadd.f32 0.0, %v832
  %v834 = vpop.f32.mrb[0].mxu0
  %v835 = vpop.f32.mrb[0].mxu0
  %v836 = vadd.f32 0.0, %v835
  %v837 = vpop.f32.mrb[0].mxu0
  %838 = vmatprep.mubr.bf16.mxu0 0
  %839 = vmatmul.mubr.bf16.gmra.mrb[0].mxu0 %v723
  %v840 = vpop.f32.mrb[0].mxu0
  %v841 = vadd.f32 0.0, %v840
  %v842 = vpop.f32.mrb[0].mxu0
  %v843 = vpop.f32.mrb[0].mxu0
  %v844 = vadd.f32 0.0, %v843
  %v845 = vpop.f32.mrb[0].mxu0
  %846 = vmatprep.mubr.bf16.mxu0 0
  %847 = vmatmul.mubr.bf16.gmra.mrb[0].mxu0 %v726
  %v848 = vpop.f32.mrb[0].mxu0
  %v849 = vadd.f32 0.0, %v848
  %v850 = vpop.f32.mrb[0].mxu0
  %v851 = vpop.f32.mrb[0].mxu0
  %v852 = vadd.f32 0.0, %v851
  %v853 = vpop.f32.mrb[0].mxu0
  %854 = vmatprep.mubr.bf16.mxu0 0
  %855 = vmatmul.mubr.bf16.gmra.mrb[0].mxu0 %v729
  %v856 = vpop.f32.mrb[0].mxu0
  %v857 = vadd.f32 0.0, %v856
  %v858 = vpop.f32.mrb[0].mxu0
  %v859 = vpop.f32.mrb[0].mxu0
  %v860 = vadd.f32 0.0, %v859
  %v861 = vpop.f32.mrb[0].mxu0
  %862 = vmatprep.mubr.bf16.mxu0 0
  %863 = vmatmul.mubr.bf16.gmra.mrb[0].mxu0 %v732
  %v864 = vpop.f32.mrb[0].mxu0
  %v865 = vadd.f32 0.0, %v864
  %v866 = vpop.f32.mrb[0].mxu0
  %v867 = vpop.f32.mrb[0].mxu0
  %v868 = vpop.f32.mrb[0].mxu0
  %869 = vdwg.mxu0
  %v870 = vadd.f32 %v539, %v769
  %v871 = vadd.f32 %v542, %v772
  %v872 = vadd.f32 %v547, %v777
  %v873 = vadd.f32 %v550, %v780
  %v874 = vadd.f32 %v555, %v785
  %v875 = vadd.f32 %v558, %v788
  %v876 = vadd.f32 %v563, %v793
  %v877 = vadd.f32 %v566, %v796
  %v878 = vadd.f32 %v571, %v801
  %v879 = vadd.f32 %v574, %v804
  %v880 = vadd.f32 %v579, %v809
  %v881 = vadd.f32 %v582, %v812
  %v882 = vadd.f32 %v587, %v817
  %v883 = vadd.f32 %v590, %v820
  %v884 = vadd.f32 %v595, %v825
  %v885 = vadd.f32 %v598, %v828
  %v886 = vadd.f32 %v603, %v833
  %v887 = vadd.f32 %v606, %v836
  %v888 = vadd.f32 %v611, %v841
  %v889 = vadd.f32 %v614, %v844
  %v890 = vadd.f32 %v619, %v849
  %v891 = vadd.f32 %v622, %v852
  %v892 = vadd.f32 %v627, %v857
  %v893 = vadd.f32 %v630, %v860
  %v894 = vadd.f32 %v635, %v865
  %v895 = vld [vmem:[%s1 + $0x30] sm:$0xf]
  %v896 = vld [vmem:[%s1 + $0x34] sm:$0xf]
  %v897 = vld [vmem:[%s1 + $0x38] sm:$0xf]
  %v898 = vld [vmem:[%s1 + $0x3c] sm:$0xf]
  %vm900 = vcmask 1042432
  %v901 = vrot.slane %v152, 5
  %v902 = vrot.slane %v153, 5
  %v903 = vsel %vm900, %v901, %v902
  %v904 = vrot.slane %v154, 5
  %v905 = vsel %vm900, %v902, %v904
  %v906 = vrot.slane %v155, 5
  %v907 = vsel %vm900, %v904, %v906
  %v908 = vrot.slane %v156, 5
  %v909 = vsel %vm900, %v906, %v908
  %v910 = vrot.slane %v157, 5
  %v911 = vsel %vm900, %v908, %v910
  %v912 = vrot.slane %v158, 5
  %v913 = vsel %vm900, %v910, %v912
  %v914 = vrot.slane %v159, 5
  %v915 = vsel %vm900, %v912, %v914
  %v916 = vrot.slane %v160, 5
  %v917 = vsel %vm900, %v914, %v916
  %v918 = vrot.slane %v161, 5
  %v919 = vsel %vm900, %v916, %v918
  %v920 = vrot.slane %v162, 5
  %v921 = vsel %vm900, %v918, %v920
  %v922 = vrot.slane %v163, 5
  %v923 = vsel %vm900, %v920, %v922
  %v924 = vrot.slane %v164, 5
  %v925 = vsel %vm900, %v922, %v924
  %v926 = vrot.slane %v165, 5
  %v927 = vsel %vm900, %v924, %v926
  %v932 = vunpack.c.l.b16 %v895
  %v933 = vunpack.c.l.b16 %v896
  %v934 = vunpack.c.l.b16 %v897
  %v935 = vunpack.c.l.b16 %v898
  %v936 = vpack.c.b16 %v933, %v932
  %v937 = vpack.c.b16 %v935, %v934
  %v941 = vsel %vm290, %v903, 0
  %v944 = vsel %vm290, %v905, 0
  %v947 = vsel %vm290, %v907, 0
  %v950 = vsel %vm290, %v909, 0
  %v953 = vsel %vm290, %v911, 0
  %v956 = vsel %vm290, %v913, 0
  %v959 = vsel %vm290, %v915, 0
  %v962 = vsel %vm290, %v917, 0
  %v965 = vsel %vm290, %v919, 0
  %v968 = vsel %vm290, %v921, 0
  %v971 = vsel %vm290, %v923, 0
  %v974 = vsel %vm290, %v925, 0
  %v977 = vsel %vm290, %v927, 0
  %979 = vmatprep.subr.bf16.mxu0 0
  %980 = vmatpush1.bf16.msra.mxu0 %v936
  %981 = vmatprep.subr.bf16.mxu0 0
  %982 = vmatpush1.bf16.msra.mxu0 %v937
  %983 = vmatprep.subr.bf16.mxu0 0
  %984 = vmatpush1.bf16.msra.mxu0 0
  %985 = vmatprep.subr.bf16.mxu0 0
  %986 = vmatpush1.bf16.msra.mxu0 0
  %987 = vmatprep.subr.bf16.mxu0 0
  %988 = vmatpush1.bf16.msra.mxu0 0
  %989 = vmatprep.subr.bf16.mxu0 0
  %990 = vmatpush1.bf16.msra.mxu0 0
  %991 = vmatprep.subr.bf16.mxu0 0
  %992 = vmatpush1.bf16.msra.mxu0 0
  %993 = vmatprep.subr.bf16.mxu0 0
  %994 = vmatpush1.bf16.msra.mxu0 0
  %995 = vmatprep.subr.bf16.mxu0 0
  %996 = vmatpush1.bf16.msra.mxu0 0
  %997 = vmatprep.subr.bf16.mxu0 0
  %998 = vmatpush1.bf16.msra.mxu0 0
  %999 = vmatprep.subr.bf16.mxu0 0
  %1000 = vmatpush1.bf16.msra.mxu0 0
  %1001 = vmatprep.subr.bf16.mxu0 0
  %1002 = vmatpush1.bf16.msra.mxu0 0
  %1003 = vmatprep.subr.bf16.mxu0 0
  %1004 = vmatpush1.bf16.msra.mxu0 0
  %1005 = vmatprep.subr.bf16.mxu0 0
  %1006 = vmatpush1.bf16.msra.mxu0 0
  %1007 = vmatprep.subr.bf16.mxu0 0
  %1008 = vmatpush1.bf16.msra.mxu0 0
  %1009 = vmatprep.subr.bf16.mxu0 0
  %1010 = vmatpush1.bf16.msra.mxu0 0
  %1011 = vmatprep.mubr.bf16.mxu0 0
  %1012 = vmatmul.mubr.bf16.gmra.mrb[0].mxu0 %v941
  %v1013 = vpop.f32.mrb[0].mxu0
  %v1014 = vadd.f32 0.0, %v1013
  %v1015 = vpop.f32.mrb[0].mxu0
  %v1016 = vpop.f32.mrb[0].mxu0
  %v1017 = vadd.f32 0.0, %v1016
  %v1018 = vpop.f32.mrb[0].mxu0
  %1019 = vmatprep.mubr.bf16.mxu0 0
  %1020 = vmatmul.mubr.bf16.gmra.mrb[0].mxu0 %v944
  %v1021 = vpop.f32.mrb[0].mxu0
  %v1022 = vadd.f32 0.0, %v1021
  %v1023 = vpop.f32.mrb[0].mxu0
  %v1024 = vpop.f32.mrb[0].mxu0
  %v1025 = vadd.f32 0.0, %v1024
  %v1026 = vpop.f32.mrb[0].mxu0
  %1027 = vmatprep.mubr.bf16.mxu0 0
  %1028 = vmatmul.mubr.bf16.gmra.mrb[0].mxu0 %v947
  %v1029 = vpop.f32.mrb[0].mxu0
  %v1030 = vadd.f32 0.0, %v1029
  %v1031 = vpop.f32.mrb[0].mxu0
  %v1032 = vpop.f32.mrb[0].mxu0
  %v1033 = vadd.f32 0.0, %v1032
  %v1034 = vpop.f32.mrb[0].mxu0
  %1035 = vmatprep.mubr.bf16.mxu0 0
  %1036 = vmatmul.mubr.bf16.gmra.mrb[0].mxu0 %v950
  %v1037 = vpop.f32.mrb[0].mxu0
  %v1038 = vadd.f32 0.0, %v1037
  %v1039 = vpop.f32.mrb[0].mxu0
  %v1040 = vpop.f32.mrb[0].mxu0
  %v1041 = vadd.f32 0.0, %v1040
  %v1042 = vpop.f32.mrb[0].mxu0
  %1043 = vmatprep.mubr.bf16.mxu0 0
  %1044 = vmatmul.mubr.bf16.gmra.mrb[0].mxu0 %v953
  %v1045 = vpop.f32.mrb[0].mxu0
  %v1046 = vadd.f32 0.0, %v1045
  %v1047 = vpop.f32.mrb[0].mxu0
  %v1048 = vpop.f32.mrb[0].mxu0
  %v1049 = vadd.f32 0.0, %v1048
  %v1050 = vpop.f32.mrb[0].mxu0
  %1051 = vmatprep.mubr.bf16.mxu0 0
  %1052 = vmatmul.mubr.bf16.gmra.mrb[0].mxu0 %v956
  %v1053 = vpop.f32.mrb[0].mxu0
  %v1054 = vadd.f32 0.0, %v1053
  %v1055 = vpop.f32.mrb[0].mxu0
  %v1056 = vpop.f32.mrb[0].mxu0
  %v1057 = vadd.f32 0.0, %v1056
  %v1058 = vpop.f32.mrb[0].mxu0
  %1059 = vmatprep.mubr.bf16.mxu0 0
  %1060 = vmatmul.mubr.bf16.gmra.mrb[0].mxu0 %v959
  %v1061 = vpop.f32.mrb[0].mxu0
  %v1062 = vadd.f32 0.0, %v1061
  %v1063 = vpop.f32.mrb[0].mxu0
  %v1064 = vpop.f32.mrb[0].mxu0
  %v1065 = vadd.f32 0.0, %v1064
  %v1066 = vpop.f32.mrb[0].mxu0
  %1067 = vmatprep.mubr.bf16.mxu0 0
  %1068 = vmatmul.mubr.bf16.gmra.mrb[0].mxu0 %v962
  %v1069 = vpop.f32.mrb[0].mxu0
  %v1070 = vadd.f32 0.0, %v1069
  %v1071 = vpop.f32.mrb[0].mxu0
  %v1072 = vpop.f32.mrb[0].mxu0
  %v1073 = vadd.f32 0.0, %v1072
  %v1074 = vpop.f32.mrb[0].mxu0
  %1075 = vmatprep.mubr.bf16.mxu0 0
  %1076 = vmatmul.mubr.bf16.gmra.mrb[0].mxu0 %v965
  %v1077 = vpop.f32.mrb[0].mxu0
  %v1078 = vadd.f32 0.0, %v1077
  %v1079 = vpop.f32.mrb[0].mxu0
  %v1080 = vpop.f32.mrb[0].mxu0
  %v1081 = vadd.f32 0.0, %v1080
  %v1082 = vpop.f32.mrb[0].mxu0
  %1083 = vmatprep.mubr.bf16.mxu0 0
  %1084 = vmatmul.mubr.bf16.gmra.mrb[0].mxu0 %v968
  %v1085 = vpop.f32.mrb[0].mxu0
  %v1086 = vadd.f32 0.0, %v1085
  %v1087 = vpop.f32.mrb[0].mxu0
  %v1088 = vpop.f32.mrb[0].mxu0
  %v1089 = vadd.f32 0.0, %v1088
  %v1090 = vpop.f32.mrb[0].mxu0
  %1091 = vmatprep.mubr.bf16.mxu0 0
  %1092 = vmatmul.mubr.bf16.gmra.mrb[0].mxu0 %v971
  %v1093 = vpop.f32.mrb[0].mxu0
  %v1094 = vadd.f32 0.0, %v1093
  %v1095 = vpop.f32.mrb[0].mxu0
  %v1096 = vpop.f32.mrb[0].mxu0
  %v1097 = vadd.f32 0.0, %v1096
  %v1098 = vpop.f32.mrb[0].mxu0
  %1099 = vmatprep.mubr.bf16.mxu0 0
  %1100 = vmatmul.mubr.bf16.gmra.mrb[0].mxu0 %v974
  %v1101 = vpop.f32.mrb[0].mxu0
  %v1102 = vadd.f32 0.0, %v1101
  %v1103 = vpop.f32.mrb[0].mxu0
  %v1104 = vpop.f32.mrb[0].mxu0
  %v1105 = vadd.f32 0.0, %v1104
  %v1106 = vpop.f32.mrb[0].mxu0
  %1107 = vmatprep.mubr.bf16.mxu0 0
  %1108 = vmatmul.mubr.bf16.gmra.mrb[0].mxu0 %v977
  %v1109 = vpop.f32.mrb[0].mxu0
  %v1110 = vadd.f32 0.0, %v1109
  %v1111 = vpop.f32.mrb[0].mxu0
  %v1112 = vpop.f32.mrb[0].mxu0
  %v1113 = vpop.f32.mrb[0].mxu0
  %1114 = vdwg.mxu0
  %v1115 = vadd.f32 %v870, %v1014
  %v1116 = vadd.f32 %v871, %v1017
  %v1117 = vadd.f32 %v872, %v1022
  %v1118 = vadd.f32 %v873, %v1025
  %v1119 = vadd.f32 %v874, %v1030
  %v1120 = vadd.f32 %v875, %v1033
  %v1121 = vadd.f32 %v876, %v1038
  %v1122 = vadd.f32 %v877, %v1041
  %v1123 = vadd.f32 %v878, %v1046
  %v1124 = vadd.f32 %v879, %v1049
  %v1125 = vadd.f32 %v880, %v1054
  %v1126 = vadd.f32 %v881, %v1057
  %v1127 = vadd.f32 %v882, %v1062
  %v1128 = vadd.f32 %v883, %v1065
  %v1129 = vadd.f32 %v884, %v1070
  %v1130 = vadd.f32 %v885, %v1073
  %v1131 = vadd.f32 %v886, %v1078
  %v1132 = vadd.f32 %v887, %v1081
  %v1133 = vadd.f32 %v888, %v1086
  %v1134 = vadd.f32 %v889, %v1089
  %v1135 = vadd.f32 %v890, %v1094
  %v1136 = vadd.f32 %v891, %v1097
  %v1137 = vadd.f32 %v892, %v1102
  %v1138 = vadd.f32 %v893, %v1105
  %v1139 = vadd.f32 %v894, %v1110
  %v1140 = vld [vmem:[%s1 + $0x40] sm:$0xf]
  %v1141 = vld [vmem:[%s1 + $0x44] sm:$0xf]
  %v1142 = vld [vmem:[%s1 + $0x48] sm:$0xf]
  %v1143 = vld [vmem:[%s1 + $0x4c] sm:$0xf]
  %vm1144 = vsmask.f32 2304
  %v1145 = vrot.slane %v176, 5
  %v1146 = vrot.slane %v178, 6
  %v1147 = vor.u32 %v1145, %v1146
  %v1148 = vrot.slane %v187, 5
  %v1149 = vrot.slane %v183, 6
  %v1150 = vor.u32 %v1148, %v1149
  %v1151 = vsel %vm1144, %v1147, %v1150
  %v1152 = vrot.slane %v195, 5
  %v1153 = vrot.slane %v191, 6
  %v1154 = vor.u32 %v1152, %v1153
  %v1155 = vsel %vm1144, %v1150, %v1154
  %v1156 = vrot.slane %v203, 5
  %v1157 = vrot.slane %v199, 6
  %v1158 = vor.u32 %v1156, %v1157
  %v1159 = vsel %vm1144, %v1154, %v1158
  %v1160 = vrot.slane %v211, 5
  %v1161 = vrot.slane %v207, 6
  %v1162 = vor.u32 %v1160, %v1161
  %v1163 = vsel %vm1144, %v1158, %v1162
  %v1164 = vrot.slane %v219, 5
  %v1165 = vrot.slane %v215, 6
  %v1166 = vor.u32 %v1164, %v1165
  %v1167 = vsel %vm1144, %v1162, %v1166
  %v1168 = vrot.slane %v227, 5
  %v1169 = vrot.slane %v223, 6
  %v1170 = vor.u32 %v1168, %v1169
  %v1171 = vsel %vm1144, %v1166, %v1170
  %v1172 = vrot.slane %v235, 5
  %v1173 = vrot.slane %v231, 6
  %v1174 = vor.u32 %v1172, %v1173
  %v1175 = vsel %vm1144, %v1170, %v1174
  %v1176 = vrot.slane %v243, 5
  %v1177 = vrot.slane %v239, 6
  %v1178 = vor.u32 %v1176, %v1177
  %v1179 = vsel %vm1144, %v1174, %v1178
  %v1180 = vrot.slane %v251, 5
  %v1181 = vrot.slane %v247, 6
  %v1182 = vor.u32 %v1180, %v1181
  %v1183 = vsel %vm1144, %v1178, %v1182
  %v1184 = vrot.slane %v259, 5
  %v1185 = vrot.slane %v255, 6
  %v1186 = vor.u32 %v1184, %v1185
  %v1187 = vsel %vm1144, %v1182, %v1186
  %v1188 = vrot.slane %v267, 5
  %v1189 = vrot.slane %v263, 6
  %v1190 = vor.u32 %v1188, %v1189
  %v1191 = vsel %vm1144, %v1186, %v1190
  %v1192 = vrot.slane %v275, 5
  %v1193 = vrot.slane %v271, 6
  %v1194 = vor.u32 %v1192, %v1193
  %v1195 = vsel %vm1144, %v1190, %v1194
  %v1197 = vshrl.u32 %v165, 16
  %v1199 = vrot.slane %v1197, 5
  %v1200 = vshll.u32 %v165, 16
  %v1202 = vrot.slane %v1200, 6
  %v1203 = vor.u32 %v1199, %v1202
  %v1204 = vsel %vm1144, %v1194, %v1203
  %v1209 = vunpack.c.l.b16 %v1140
  %v1210 = vunpack.c.l.b16 %v1141
  %v1211 = vunpack.c.l.b16 %v1142
  %v1212 = vunpack.c.l.b16 %v1143
  %v1213 = vpack.c.b16 %v1210, %v1209
  %v1214 = vpack.c.b16 %v1212, %v1211
  %v1218 = vsel %vm290, %v1151, 0
  %v1221 = vsel %vm290, %v1155, 0
  %v1224 = vsel %vm290, %v1159, 0
  %v1227 = vsel %vm290, %v1163, 0
  %v1230 = vsel %vm290, %v1167, 0
  %v1233 = vsel %vm290, %v1171, 0
  %v1236 = vsel %vm290, %v1175, 0
  %v1239 = vsel %vm290, %v1179, 0
  %v1242 = vsel %vm290, %v1183, 0
  %v1245 = vsel %vm290, %v1187, 0
  %v1248 = vsel %vm290, %v1191, 0
  %v1251 = vsel %vm290, %v1195, 0
  %v1254 = vsel %vm290, %v1204, 0
  %1256 = vmatprep.subr.bf16.mxu0 0
  %1257 = vmatpush1.bf16.msra.mxu0 %v1213
  %1258 = vmatprep.subr.bf16.mxu0 0
  %1259 = vmatpush1.bf16.msra.mxu0 %v1214
  %1260 = vmatprep.subr.bf16.mxu0 0
  %1261 = vmatpush1.bf16.msra.mxu0 0
  %1262 = vmatprep.subr.bf16.mxu0 0
  %1263 = vmatpush1.bf16.msra.mxu0 0
  %1264 = vmatprep.subr.bf16.mxu0 0
  %1265 = vmatpush1.bf16.msra.mxu0 0
  %1266 = vmatprep.subr.bf16.mxu0 0
  %1267 = vmatpush1.bf16.msra.mxu0 0
  %1268 = vmatprep.subr.bf16.mxu0 0
  %1269 = vmatpush1.bf16.msra.mxu0 0
  %1270 = vmatprep.subr.bf16.mxu0 0
  %1271 = vmatpush1.bf16.msra.mxu0 0
  %1272 = vmatprep.subr.bf16.mxu0 0
  %1273 = vmatpush1.bf16.msra.mxu0 0
  %1274 = vmatprep.subr.bf16.mxu0 0
  %1275 = vmatpush1.bf16.msra.mxu0 0
  %1276 = vmatprep.subr.bf16.mxu0 0
  %1277 = vmatpush1.bf16.msra.mxu0 0
  %1278 = vmatprep.subr.bf16.mxu0 0
  %1279 = vmatpush1.bf16.msra.mxu0 0
  %1280 = vmatprep.subr.bf16.mxu0 0
  %1281 = vmatpush1.bf16.msra.mxu0 0
  %1282 = vmatprep.subr.bf16.mxu0 0
  %1283 = vmatpush1.bf16.msra.mxu0 0
  %1284 = vmatprep.subr.bf16.mxu0 0
  %1285 = vmatpush1.bf16.msra.mxu0 0
  %1286 = vmatprep.subr.bf16.mxu0 0
  %1287 = vmatpush1.bf16.msra.mxu0 0
  %1288 = vmatprep.mubr.bf16.mxu0 0
  %1289 = vmatmul.mubr.bf16.gmra.mrb[0].mxu0 %v1218
  %v1290 = vpop.f32.mrb[0].mxu0
  %v1291 = vadd.f32 0.0, %v1290
  %v1292 = vpop.f32.mrb[0].mxu0
  %v1293 = vpop.f32.mrb[0].mxu0
  %v1294 = vadd.f32 0.0, %v1293
  %v1295 = vpop.f32.mrb[0].mxu0
  %1296 = vmatprep.mubr.bf16.mxu0 0
  %1297 = vmatmul.mubr.bf16.gmra.mrb[0].mxu0 %v1221
  %v1298 = vpop.f32.mrb[0].mxu0
  %v1299 = vadd.f32 0.0, %v1298
  %v1300 = vpop.f32.mrb[0].mxu0
  %v1301 = vpop.f32.mrb[0].mxu0
  %v1302 = vadd.f32 0.0, %v1301
  %v1303 = vpop.f32.mrb[0].mxu0
  %1304 = vmatprep.mubr.bf16.mxu0 0
  %1305 = vmatmul.mubr.bf16.gmra.mrb[0].mxu0 %v1224
  %v1306 = vpop.f32.mrb[0].mxu0
  %v1307 = vadd.f32 0.0, %v1306
  %v1308 = vpop.f32.mrb[0].mxu0
  %v1309 = vpop.f32.mrb[0].mxu0
  %v1310 = vadd.f32 0.0, %v1309
  %v1311 = vpop.f32.mrb[0].mxu0
  %1312 = vmatprep.mubr.bf16.mxu0 0
  %1313 = vmatmul.mubr.bf16.gmra.mrb[0].mxu0 %v1227
  %v1314 = vpop.f32.mrb[0].mxu0
  %v1315 = vadd.f32 0.0, %v1314
  %v1316 = vpop.f32.mrb[0].mxu0
  %v1317 = vpop.f32.mrb[0].mxu0
  %v1318 = vadd.f32 0.0, %v1317
  %v1319 = vpop.f32.mrb[0].mxu0
  %1320 = vmatprep.mubr.bf16.mxu0 0
  %1321 = vmatmul.mubr.bf16.gmra.mrb[0].mxu0 %v1230
  %v1322 = vpop.f32.mrb[0].mxu0
  %v1323 = vadd.f32 0.0, %v1322
  %v1324 = vpop.f32.mrb[0].mxu0
  %v1325 = vpop.f32.mrb[0].mxu0
  %v1326 = vadd.f32 0.0, %v1325
  %v1327 = vpop.f32.mrb[0].mxu0
  %1328 = vmatprep.mubr.bf16.mxu0 0
  %1329 = vmatmul.mubr.bf16.gmra.mrb[0].mxu0 %v1233
  %v1330 = vpop.f32.mrb[0].mxu0
  %v1331 = vadd.f32 0.0, %v1330
  %v1332 = vpop.f32.mrb[0].mxu0
  %v1333 = vpop.f32.mrb[0].mxu0
  %v1334 = vadd.f32 0.0, %v1333
  %v1335 = vpop.f32.mrb[0].mxu0
  %1336 = vmatprep.mubr.bf16.mxu0 0
  %1337 = vmatmul.mubr.bf16.gmra.mrb[0].mxu0 %v1236
  %v1338 = vpop.f32.mrb[0].mxu0
  %v1339 = vadd.f32 0.0, %v1338
  %v1340 = vpop.f32.mrb[0].mxu0
  %v1341 = vpop.f32.mrb[0].mxu0
  %v1342 = vadd.f32 0.0, %v1341
  %v1343 = vpop.f32.mrb[0].mxu0
  %1344 = vmatprep.mubr.bf16.mxu0 0
  %1345 = vmatmul.mubr.bf16.gmra.mrb[0].mxu0 %v1239
  %v1346 = vpop.f32.mrb[0].mxu0
  %v1347 = vadd.f32 0.0, %v1346
  %v1348 = vpop.f32.mrb[0].mxu0
  %v1349 = vpop.f32.mrb[0].mxu0
  %v1350 = vadd.f32 0.0, %v1349
  %v1351 = vpop.f32.mrb[0].mxu0
  %1352 = vmatprep.mubr.bf16.mxu0 0
  %1353 = vmatmul.mubr.bf16.gmra.mrb[0].mxu0 %v1242
  %v1354 = vpop.f32.mrb[0].mxu0
  %v1355 = vadd.f32 0.0, %v1354
  %v1356 = vpop.f32.mrb[0].mxu0
  %v1357 = vpop.f32.mrb[0].mxu0
  %v1358 = vadd.f32 0.0, %v1357
  %v1359 = vpop.f32.mrb[0].mxu0
  %1360 = vmatprep.mubr.bf16.mxu0 0
  %1361 = vmatmul.mubr.bf16.gmra.mrb[0].mxu0 %v1245
  %v1362 = vpop.f32.mrb[0].mxu0
  %v1363 = vadd.f32 0.0, %v1362
  %v1364 = vpop.f32.mrb[0].mxu0
  %v1365 = vpop.f32.mrb[0].mxu0
  %v1366 = vadd.f32 0.0, %v1365
  %v1367 = vpop.f32.mrb[0].mxu0
  %1368 = vmatprep.mubr.bf16.mxu0 0
  %1369 = vmatmul.mubr.bf16.gmra.mrb[0].mxu0 %v1248
  %v1370 = vpop.f32.mrb[0].mxu0
  %v1371 = vadd.f32 0.0, %v1370
  %v1372 = vpop.f32.mrb[0].mxu0
  %v1373 = vpop.f32.mrb[0].mxu0
  %v1374 = vadd.f32 0.0, %v1373
  %v1375 = vpop.f32.mrb[0].mxu0
  %1376 = vmatprep.mubr.bf16.mxu0 0
  %1377 = vmatmul.mubr.bf16.gmra.mrb[0].mxu0 %v1251
  %v1378 = vpop.f32.mrb[0].mxu0
  %v1379 = vadd.f32 0.0, %v1378
  %v1380 = vpop.f32.mrb[0].mxu0
  %v1381 = vpop.f32.mrb[0].mxu0
  %v1382 = vadd.f32 0.0, %v1381
  %v1383 = vpop.f32.mrb[0].mxu0
  %1384 = vmatprep.mubr.bf16.mxu0 0
  %1385 = vmatmul.mubr.bf16.gmra.mrb[0].mxu0 %v1254
  %v1386 = vpop.f32.mrb[0].mxu0
  %v1387 = vadd.f32 0.0, %v1386
  %v1388 = vpop.f32.mrb[0].mxu0
  %v1389 = vpop.f32.mrb[0].mxu0
  %v1390 = vpop.f32.mrb[0].mxu0
  %1391 = vdwg.mxu0
  %v1392 = vadd.f32 %v1115, %v1291
  %v1393 = vadd.f32 %v1116, %v1294
  %v1394 = vadd.f32 %v1117, %v1299
  %v1395 = vadd.f32 %v1118, %v1302
  %v1396 = vadd.f32 %v1119, %v1307
  %v1397 = vadd.f32 %v1120, %v1310
  %v1398 = vadd.f32 %v1121, %v1315
  %v1399 = vadd.f32 %v1122, %v1318
  %v1400 = vadd.f32 %v1123, %v1323
  %v1401 = vadd.f32 %v1124, %v1326
  %v1402 = vadd.f32 %v1125, %v1331
  %v1403 = vadd.f32 %v1126, %v1334
  %v1404 = vadd.f32 %v1127, %v1339
  %v1405 = vadd.f32 %v1128, %v1342
  %v1406 = vadd.f32 %v1129, %v1347
  %v1407 = vadd.f32 %v1130, %v1350
  %v1408 = vadd.f32 %v1131, %v1355
  %v1409 = vadd.f32 %v1132, %v1358
  %v1410 = vadd.f32 %v1133, %v1363
  %v1411 = vadd.f32 %v1134, %v1366
  %v1412 = vadd.f32 %v1135, %v1371
  %v1413 = vadd.f32 %v1136, %v1374
  %v1414 = vadd.f32 %v1137, %v1379
  %v1415 = vadd.f32 %v1138, %v1382
  %v1416 = vadd.f32 %v1139, %v1387
  %v1417 = vld [vmem:[%s1 + $0x50] sm:$0xf]
  %v1418 = vld [vmem:[%s1 + $0x54] sm:$0xf]
  %v1419 = vld [vmem:[%s1 + $0x58] sm:$0xf]
  %v1420 = vld [vmem:[%s1 + $0x5c] sm:$0xf]
  %vm1421 = vcmask 1041408
  %v1422 = vrot.slane %v152, 6
  %v1423 = vrot.slane %v153, 6
  %v1424 = vsel %vm1421, %v1422, %v1423
  %v1425 = vrot.slane %v154, 6
  %v1426 = vsel %vm1421, %v1423, %v1425
  %v1427 = vrot.slane %v155, 6
  %v1428 = vsel %vm1421, %v1425, %v1427
  %v1429 = vrot.slane %v156, 6
  %v1430 = vsel %vm1421, %v1427, %v1429
  %v1431 = vrot.slane %v157, 6
  %v1432 = vsel %vm1421, %v1429, %v1431
  %v1433 = vrot.slane %v158, 6
  %v1434 = vsel %vm1421, %v1431, %v1433
  %v1435 = vrot.slane %v159, 6
  %v1436 = vsel %vm1421, %v1433, %v1435
  %v1437 = vrot.slane %v160, 6
  %v1438 = vsel %vm1421, %v1435, %v1437
  %v1439 = vrot.slane %v161, 6
  %v1440 = vsel %vm1421, %v1437, %v1439
  %v1441 = vrot.slane %v162, 6
  %v1442 = vsel %vm1421, %v1439, %v1441
  %v1443 = vrot.slane %v163, 6
  %v1444 = vsel %vm1421, %v1441, %v1443
  %v1445 = vrot.slane %v164, 6
  %v1446 = vsel %vm1421, %v1443, %v1445
  %v1447 = vrot.slane %v165, 6
  %v1448 = vsel %vm1421, %v1445, %v1447
  %v1453 = vunpack.c.l.b16 %v1417
  %v1454 = vunpack.c.l.b16 %v1418
  %v1455 = vunpack.c.l.b16 %v1419
  %v1456 = vunpack.c.l.b16 %v1420
  %v1457 = vpack.c.b16 %v1454, %v1453
  %v1458 = vpack.c.b16 %v1456, %v1455
  %v1462 = vsel %vm290, %v1424, 0
  %v1465 = vsel %vm290, %v1426, 0
  %v1468 = vsel %vm290, %v1428, 0
  %v1471 = vsel %vm290, %v1430, 0
  %v1474 = vsel %vm290, %v1432, 0
  %v1477 = vsel %vm290, %v1434, 0
  %v1480 = vsel %vm290, %v1436, 0
  %v1483 = vsel %vm290, %v1438, 0
  %v1486 = vsel %vm290, %v1440, 0
  %v1489 = vsel %vm290, %v1442, 0
  %v1492 = vsel %vm290, %v1444, 0
  %v1495 = vsel %vm290, %v1446, 0
  %v1498 = vsel %vm290, %v1448, 0
  %1500 = vmatprep.subr.bf16.mxu0 0
  %1501 = vmatpush1.bf16.msra.mxu0 %v1457
  %1502 = vmatprep.subr.bf16.mxu0 0
  %1503 = vmatpush1.bf16.msra.mxu0 %v1458
  %1504 = vmatprep.subr.bf16.mxu0 0
  %1505 = vmatpush1.bf16.msra.mxu0 0
  %1506 = vmatprep.subr.bf16.mxu0 0
  %1507 = vmatpush1.bf16.msra.mxu0 0
  %1508 = vmatprep.subr.bf16.mxu0 0
  %1509 = vmatpush1.bf16.msra.mxu0 0
  %1510 = vmatprep.subr.bf16.mxu0 0
  %1511 = vmatpush1.bf16.msra.mxu0 0
  %1512 = vmatprep.subr.bf16.mxu0 0
  %1513 = vmatpush1.bf16.msra.mxu0 0
  %1514 = vmatprep.subr.bf16.mxu0 0
  %1515 = vmatpush1.bf16.msra.mxu0 0
  %1516 = vmatprep.subr.bf16.mxu0 0
  %1517 = vmatpush1.bf16.msra.mxu0 0
  %1518 = vmatprep.subr.bf16.mxu0 0
  %1519 = vmatpush1.bf16.msra.mxu0 0
  %1520 = vmatprep.subr.bf16.mxu0 0
  %1521 = vmatpush1.bf16.msra.mxu0 0
  %1522 = vmatprep.subr.bf16.mxu0 0
  %1523 = vmatpush1.bf16.msra.mxu0 0
  %1524 = vmatprep.subr.bf16.mxu0 0
  %1525 = vmatpush1.bf16.msra.mxu0 0
  %1526 = vmatprep.subr.bf16.mxu0 0
  %1527 = vmatpush1.bf16.msra.mxu0 0
  %1528 = vmatprep.subr.bf16.mxu0 0
  %1529 = vmatpush1.bf16.msra.mxu0 0
  %1530 = vmatprep.subr.bf16.mxu0 0
  %1531 = vmatpush1.bf16.msra.mxu0 0
  %1532 = vmatprep.mubr.bf16.mxu0 0
  %1533 = vmatmul.mubr.bf16.gmra.mrb[0].mxu0 %v1462
  %v1534 = vpop.f32.mrb[0].mxu0
  %v1535 = vadd.f32 0.0, %v1534
  %v1536 = vpop.f32.mrb[0].mxu0
  %v1537 = vpop.f32.mrb[0].mxu0
  %v1538 = vadd.f32 0.0, %v1537
  %v1539 = vpop.f32.mrb[0].mxu0
  %1540 = vmatprep.mubr.bf16.mxu0 0
  %1541 = vmatmul.mubr.bf16.gmra.mrb[0].mxu0 %v1465
  %v1542 = vpop.f32.mrb[0].mxu0
  %v1543 = vadd.f32 0.0, %v1542
  %v1544 = vpop.f32.mrb[0].mxu0
  %v1545 = vpop.f32.mrb[0].mxu0
  %v1546 = vadd.f32 0.0, %v1545
  %v1547 = vpop.f32.mrb[0].mxu0
  %1548 = vmatprep.mubr.bf16.mxu0 0
  %1549 = vmatmul.mubr.bf16.gmra.mrb[0].mxu0 %v1468
  %v1550 = vpop.f32.mrb[0].mxu0
  %v1551 = vadd.f32 0.0, %v1550
  %v1552 = vpop.f32.mrb[0].mxu0
  %v1553 = vpop.f32.mrb[0].mxu0
  %v1554 = vadd.f32 0.0, %v1553
  %v1555 = vpop.f32.mrb[0].mxu0
  %1556 = vmatprep.mubr.bf16.mxu0 0
  %1557 = vmatmul.mubr.bf16.gmra.mrb[0].mxu0 %v1471
  %v1558 = vpop.f32.mrb[0].mxu0
  %v1559 = vadd.f32 0.0, %v1558
  %v1560 = vpop.f32.mrb[0].mxu0
  %v1561 = vpop.f32.mrb[0].mxu0
  %v1562 = vadd.f32 0.0, %v1561
  %v1563 = vpop.f32.mrb[0].mxu0
  %1564 = vmatprep.mubr.bf16.mxu0 0
  %1565 = vmatmul.mubr.bf16.gmra.mrb[0].mxu0 %v1474
  %v1566 = vpop.f32.mrb[0].mxu0
  %v1567 = vadd.f32 0.0, %v1566
  %v1568 = vpop.f32.mrb[0].mxu0
  %v1569 = vpop.f32.mrb[0].mxu0
  %v1570 = vadd.f32 0.0, %v1569
  %v1571 = vpop.f32.mrb[0].mxu0
  %1572 = vmatprep.mubr.bf16.mxu0 0
  %1573 = vmatmul.mubr.bf16.gmra.mrb[0].mxu0 %v1477
  %v1574 = vpop.f32.mrb[0].mxu0
  %v1575 = vadd.f32 0.0, %v1574
  %v1576 = vpop.f32.mrb[0].mxu0
  %v1577 = vpop.f32.mrb[0].mxu0
  %v1578 = vadd.f32 0.0, %v1577
  %v1579 = vpop.f32.mrb[0].mxu0
  %1580 = vmatprep.mubr.bf16.mxu0 0
  %1581 = vmatmul.mubr.bf16.gmra.mrb[0].mxu0 %v1480
  %v1582 = vpop.f32.mrb[0].mxu0
  %v1583 = vadd.f32 0.0, %v1582
  %v1584 = vpop.f32.mrb[0].mxu0
  %v1585 = vpop.f32.mrb[0].mxu0
  %v1586 = vadd.f32 0.0, %v1585
  %v1587 = vpop.f32.mrb[0].mxu0
  %1588 = vmatprep.mubr.bf16.mxu0 0
  %1589 = vmatmul.mubr.bf16.gmra.mrb[0].mxu0 %v1483
  %v1590 = vpop.f32.mrb[0].mxu0
  %v1591 = vadd.f32 0.0, %v1590
  %v1592 = vpop.f32.mrb[0].mxu0
  %v1593 = vpop.f32.mrb[0].mxu0
  %v1594 = vadd.f32 0.0, %v1593
  %v1595 = vpop.f32.mrb[0].mxu0
  %1596 = vmatprep.mubr.bf16.mxu0 0
  %1597 = vmatmul.mubr.bf16.gmra.mrb[0].mxu0 %v1486
  %v1598 = vpop.f32.mrb[0].mxu0
  %v1599 = vadd.f32 0.0, %v1598
  %v1600 = vpop.f32.mrb[0].mxu0
  %v1601 = vpop.f32.mrb[0].mxu0
  %v1602 = vadd.f32 0.0, %v1601
  %v1603 = vpop.f32.mrb[0].mxu0
  %1604 = vmatprep.mubr.bf16.mxu0 0
  %1605 = vmatmul.mubr.bf16.gmra.mrb[0].mxu0 %v1489
  %v1606 = vpop.f32.mrb[0].mxu0
  %v1607 = vadd.f32 0.0, %v1606
  %v1608 = vpop.f32.mrb[0].mxu0
  %v1609 = vpop.f32.mrb[0].mxu0
  %v1610 = vadd.f32 0.0, %v1609
  %v1611 = vpop.f32.mrb[0].mxu0
  %1612 = vmatprep.mubr.bf16.mxu0 0
  %1613 = vmatmul.mubr.bf16.gmra.mrb[0].mxu0 %v1492
  %v1614 = vpop.f32.mrb[0].mxu0
  %v1615 = vadd.f32 0.0, %v1614
  %v1616 = vpop.f32.mrb[0].mxu0
  %v1617 = vpop.f32.mrb[0].mxu0
  %v1618 = vadd.f32 0.0, %v1617
  %v1619 = vpop.f32.mrb[0].mxu0
  %1620 = vmatprep.mubr.bf16.mxu0 0
  %1621 = vmatmul.mubr.bf16.gmra.mrb[0].mxu0 %v1495
  %v1622 = vpop.f32.mrb[0].mxu0
  %v1623 = vadd.f32 0.0, %v1622
  %v1624 = vpop.f32.mrb[0].mxu0
  %v1625 = vpop.f32.mrb[0].mxu0
  %v1626 = vadd.f32 0.0, %v1625
  %v1627 = vpop.f32.mrb[0].mxu0
  %1628 = vmatprep.mubr.bf16.mxu0 0
  %1629 = vmatmul.mubr.bf16.gmra.mrb[0].mxu0 %v1498
  %v1630 = vpop.f32.mrb[0].mxu0
  %v1631 = vadd.f32 0.0, %v1630
  %v1632 = vpop.f32.mrb[0].mxu0
  %v1633 = vpop.f32.mrb[0].mxu0
  %v1634 = vpop.f32.mrb[0].mxu0
  %1635 = vdwg.mxu0
  %v1636 = vadd.f32 %v1392, %v1535
  %v1637 = vadd.f32 %v1393, %v1538
  %v1638 = vadd.f32 %v1394, %v1543
  %v1639 = vadd.f32 %v1395, %v1546
  %v1640 = vadd.f32 %v1396, %v1551
  %v1641 = vadd.f32 %v1397, %v1554
  %v1642 = vadd.f32 %v1398, %v1559
  %v1643 = vadd.f32 %v1399, %v1562
  %v1644 = vadd.f32 %v1400, %v1567
  %v1645 = vadd.f32 %v1401, %v1570
  %v1646 = vadd.f32 %v1402, %v1575
  %v1647 = vadd.f32 %v1403, %v1578
  %v1648 = vadd.f32 %v1404, %v1583
  %v1649 = vadd.f32 %v1405, %v1586
  %v1650 = vadd.f32 %v1406, %v1591
  %v1651 = vadd.f32 %v1407, %v1594
  %v1652 = vadd.f32 %v1408, %v1599
  %v1653 = vadd.f32 %v1409, %v1602
  %v1654 = vadd.f32 %v1410, %v1607
  %v1655 = vadd.f32 %v1411, %v1610
  %v1656 = vadd.f32 %v1412, %v1615
  %v1657 = vadd.f32 %v1413, %v1618
  %v1658 = vadd.f32 %v1414, %v1623
  %v1659 = vadd.f32 %v1415, %v1626
  %v1660 = vadd.f32 %v1416, %v1631
  %v1661 = vld [vmem:[%s1 + $0x60] sm:$0xf]
  %v1662 = vld [vmem:[%s1 + $0x64] sm:$0xf]
  %v1663 = vld [vmem:[%s1 + $0x68] sm:$0xf]
  %v1664 = vld [vmem:[%s1 + $0x6c] sm:$0xf]
  %vm1665 = vcmask 1045504
  %v1666 = vrot.slane %v153, 2
  %v1667 = vrot.slane %v154, 2
  %v1668 = vsel %vm1665, %v1666, %v1667
  %v1669 = vrot.slane %v155, 2
  %v1670 = vsel %vm1665, %v1667, %v1669
  %v1671 = vrot.slane %v156, 2
  %v1672 = vsel %vm1665, %v1669, %v1671
  %v1673 = vrot.slane %v157, 2
  %v1674 = vsel %vm1665, %v1671, %v1673
  %v1675 = vrot.slane %v158, 2
  %v1676 = vsel %vm1665, %v1673, %v1675
  %v1677 = vrot.slane %v159, 2
  %v1678 = vsel %vm1665, %v1675, %v1677
  %v1679 = vrot.slane %v160, 2
  %v1680 = vsel %vm1665, %v1677, %v1679
  %v1681 = vrot.slane %v161, 2
  %v1682 = vsel %vm1665, %v1679, %v1681
  %v1683 = vrot.slane %v162, 2
  %v1684 = vsel %vm1665, %v1681, %v1683
  %v1685 = vrot.slane %v163, 2
  %v1686 = vsel %vm1665, %v1683, %v1685
  %v1687 = vrot.slane %v164, 2
  %v1688 = vsel %vm1665, %v1685, %v1687
  %v1689 = vrot.slane %v165, 2
  %v1690 = vsel %vm1665, %v1687, %v1689
  %v1695 = vunpack.c.l.b16 %v1661
  %v1696 = vunpack.c.l.b16 %v1662
  %v1697 = vunpack.c.l.b16 %v1663
  %v1698 = vunpack.c.l.b16 %v1664
  %v1699 = vpack.c.b16 %v1696, %v1695
  %v1700 = vpack.c.b16 %v1698, %v1697
  %v1704 = vsel %vm290, %v1668, 0
  %v1707 = vsel %vm290, %v1670, 0
  %v1710 = vsel %vm290, %v1672, 0
  %v1713 = vsel %vm290, %v1674, 0
  %v1716 = vsel %vm290, %v1676, 0
  %v1719 = vsel %vm290, %v1678, 0
  %v1722 = vsel %vm290, %v1680, 0
  %v1725 = vsel %vm290, %v1682, 0
  %v1728 = vsel %vm290, %v1684, 0
  %v1731 = vsel %vm290, %v1686, 0
  %v1734 = vsel %vm290, %v1688, 0
  %v1737 = vsel %vm290, %v1690, 0
  %v1740 = vsel %vm290, %v1689, 0
  %1742 = vmatprep.subr.bf16.mxu0 0
  %1743 = vmatpush1.bf16.msra.mxu0 %v1699
  %1744 = vmatprep.subr.bf16.mxu0 0
  %1745 = vmatpush1.bf16.msra.mxu0 %v1700
  %1746 = vmatprep.subr.bf16.mxu0 0
  %1747 = vmatpush1.bf16.msra.mxu0 0
  %1748 = vmatprep.subr.bf16.mxu0 0
  %1749 = vmatpush1.bf16.msra.mxu0 0
  %1750 = vmatprep.subr.bf16.mxu0 0
  %1751 = vmatpush1.bf16.msra.mxu0 0
  %1752 = vmatprep.subr.bf16.mxu0 0
  %1753 = vmatpush1.bf16.msra.mxu0 0
  %1754 = vmatprep.subr.bf16.mxu0 0
  %1755 = vmatpush1.bf16.msra.mxu0 0
  %1756 = vmatprep.subr.bf16.mxu0 0
  %1757 = vmatpush1.bf16.msra.mxu0 0
  %1758 = vmatprep.subr.bf16.mxu0 0
  %1759 = vmatpush1.bf16.msra.mxu0 0
  %1760 = vmatprep.subr.bf16.mxu0 0
  %1761 = vmatpush1.bf16.msra.mxu0 0
  %1762 = vmatprep.subr.bf16.mxu0 0
  %1763 = vmatpush1.bf16.msra.mxu0 0
  %1764 = vmatprep.subr.bf16.mxu0 0
  %1765 = vmatpush1.bf16.msra.mxu0 0
  %1766 = vmatprep.subr.bf16.mxu0 0
  %1767 = vmatpush1.bf16.msra.mxu0 0
  %1768 = vmatprep.subr.bf16.mxu0 0
  %1769 = vmatpush1.bf16.msra.mxu0 0
  %1770 = vmatprep.subr.bf16.mxu0 0
  %1771 = vmatpush1.bf16.msra.mxu0 0
  %1772 = vmatprep.subr.bf16.mxu0 0
  %1773 = vmatpush1.bf16.msra.mxu0 0
  %1774 = vmatprep.mubr.bf16.mxu0 0
  %1775 = vmatmul.mubr.bf16.gmra.mrb[0].mxu0 %v1704
  %v1776 = vpop.f32.mrb[0].mxu0
  %v1777 = vadd.f32 0.0, %v1776
  %v1778 = vpop.f32.mrb[0].mxu0
  %v1779 = vpop.f32.mrb[0].mxu0
  %v1780 = vadd.f32 0.0, %v1779
  %v1781 = vpop.f32.mrb[0].mxu0
  %1782 = vmatprep.mubr.bf16.mxu0 0
  %1783 = vmatmul.mubr.bf16.gmra.mrb[0].mxu0 %v1707
  %v1784 = vpop.f32.mrb[0].mxu0
  %v1785 = vadd.f32 0.0, %v1784
  %v1786 = vpop.f32.mrb[0].mxu0
  %v1787 = vpop.f32.mrb[0].mxu0
  %v1788 = vadd.f32 0.0, %v1787
  %v1789 = vpop.f32.mrb[0].mxu0
  %1790 = vmatprep.mubr.bf16.mxu0 0
  %1791 = vmatmul.mubr.bf16.gmra.mrb[0].mxu0 %v1710
  %v1792 = vpop.f32.mrb[0].mxu0
  %v1793 = vadd.f32 0.0, %v1792
  %v1794 = vpop.f32.mrb[0].mxu0
  %v1795 = vpop.f32.mrb[0].mxu0
  %v1796 = vadd.f32 0.0, %v1795
  %v1797 = vpop.f32.mrb[0].mxu0
  %1798 = vmatprep.mubr.bf16.mxu0 0
  %1799 = vmatmul.mubr.bf16.gmra.mrb[0].mxu0 %v1713
  %v1800 = vpop.f32.mrb[0].mxu0
  %v1801 = vadd.f32 0.0, %v1800
  %v1802 = vpop.f32.mrb[0].mxu0
  %v1803 = vpop.f32.mrb[0].mxu0
  %v1804 = vadd.f32 0.0, %v1803
  %v1805 = vpop.f32.mrb[0].mxu0
  %1806 = vmatprep.mubr.bf16.mxu0 0
  %1807 = vmatmul.mubr.bf16.gmra.mrb[0].mxu0 %v1716
  %v1808 = vpop.f32.mrb[0].mxu0
  %v1809 = vadd.f32 0.0, %v1808
  %v1810 = vpop.f32.mrb[0].mxu0
  %v1811 = vpop.f32.mrb[0].mxu0
  %v1812 = vadd.f32 0.0, %v1811
  %v1813 = vpop.f32.mrb[0].mxu0
  %1814 = vmatprep.mubr.bf16.mxu0 0
  %1815 = vmatmul.mubr.bf16.gmra.mrb[0].mxu0 %v1719
  %v1816 = vpop.f32.mrb[0].mxu0
  %v1817 = vadd.f32 0.0, %v1816
  %v1818 = vpop.f32.mrb[0].mxu0
  %v1819 = vpop.f32.mrb[0].mxu0
  %v1820 = vadd.f32 0.0, %v1819
  %v1821 = vpop.f32.mrb[0].mxu0
  %1822 = vmatprep.mubr.bf16.mxu0 0
  %1823 = vmatmul.mubr.bf16.gmra.mrb[0].mxu0 %v1722
  %v1824 = vpop.f32.mrb[0].mxu0
  %v1825 = vadd.f32 0.0, %v1824
  %v1826 = vpop.f32.mrb[0].mxu0
  %v1827 = vpop.f32.mrb[0].mxu0
  %v1828 = vadd.f32 0.0, %v1827
  %v1829 = vpop.f32.mrb[0].mxu0
  %1830 = vmatprep.mubr.bf16.mxu0 0
  %1831 = vmatmul.mubr.bf16.gmra.mrb[0].mxu0 %v1725
  %v1832 = vpop.f32.mrb[0].mxu0
  %v1833 = vadd.f32 0.0, %v1832
  %v1834 = vpop.f32.mrb[0].mxu0
  %v1835 = vpop.f32.mrb[0].mxu0
  %v1836 = vadd.f32 0.0, %v1835
  %v1837 = vpop.f32.mrb[0].mxu0
  %1838 = vmatprep.mubr.bf16.mxu0 0
  %1839 = vmatmul.mubr.bf16.gmra.mrb[0].mxu0 %v1728
  %v1840 = vpop.f32.mrb[0].mxu0
  %v1841 = vadd.f32 0.0, %v1840
  %v1842 = vpop.f32.mrb[0].mxu0
  %v1843 = vpop.f32.mrb[0].mxu0
  %v1844 = vadd.f32 0.0, %v1843
  %v1845 = vpop.f32.mrb[0].mxu0
  %1846 = vmatprep.mubr.bf16.mxu0 0
  %1847 = vmatmul.mubr.bf16.gmra.mrb[0].mxu0 %v1731
  %v1848 = vpop.f32.mrb[0].mxu0
  %v1849 = vadd.f32 0.0, %v1848
  %v1850 = vpop.f32.mrb[0].mxu0
  %v1851 = vpop.f32.mrb[0].mxu0
  %v1852 = vadd.f32 0.0, %v1851
  %v1853 = vpop.f32.mrb[0].mxu0
  %1854 = vmatprep.mubr.bf16.mxu0 0
  %1855 = vmatmul.mubr.bf16.gmra.mrb[0].mxu0 %v1734
  %v1856 = vpop.f32.mrb[0].mxu0
  %v1857 = vadd.f32 0.0, %v1856
  %v1858 = vpop.f32.mrb[0].mxu0
  %v1859 = vpop.f32.mrb[0].mxu0
  %v1860 = vadd.f32 0.0, %v1859
  %v1861 = vpop.f32.mrb[0].mxu0
  %1862 = vmatprep.mubr.bf16.mxu0 0
  %1863 = vmatmul.mubr.bf16.gmra.mrb[0].mxu0 %v1737
  %v1864 = vpop.f32.mrb[0].mxu0
  %v1865 = vadd.f32 0.0, %v1864
  %v1866 = vpop.f32.mrb[0].mxu0
  %v1867 = vpop.f32.mrb[0].mxu0
  %v1868 = vadd.f32 0.0, %v1867
  %v1869 = vpop.f32.mrb[0].mxu0
  %1870 = vmatprep.mubr.bf16.mxu0 0
  %1871 = vmatmul.mubr.bf16.gmra.mrb[0].mxu0 %v1740
  %v1872 = vpop.f32.mrb[0].mxu0
  %v1873 = vadd.f32 0.0, %v1872
  %v1874 = vpop.f32.mrb[0].mxu0
  %v1875 = vpop.f32.mrb[0].mxu0
  %v1876 = vpop.f32.mrb[0].mxu0
  %1877 = vdwg.mxu0
  %v1878 = vadd.f32 %v1636, %v1777
  %v1879 = vadd.f32 %v1637, %v1780
  %v1880 = vadd.f32 %v1638, %v1785
  %v1881 = vadd.f32 %v1639, %v1788
  %v1882 = vadd.f32 %v1640, %v1793
  %v1883 = vadd.f32 %v1641, %v1796
  %v1884 = vadd.f32 %v1642, %v1801
  %v1885 = vadd.f32 %v1643, %v1804
  %v1886 = vadd.f32 %v1644, %v1809
  %v1887 = vadd.f32 %v1645, %v1812
  %v1888 = vadd.f32 %v1646, %v1817
  %v1889 = vadd.f32 %v1647, %v1820
  %v1890 = vadd.f32 %v1648, %v1825
  %v1891 = vadd.f32 %v1649, %v1828
  %v1892 = vadd.f32 %v1650, %v1833
  %v1893 = vadd.f32 %v1651, %v1836
  %v1894 = vadd.f32 %v1652, %v1841
  %v1895 = vadd.f32 %v1653, %v1844
  %v1896 = vadd.f32 %v1654, %v1849
  %v1897 = vadd.f32 %v1655, %v1852
  %v1898 = vadd.f32 %v1656, %v1857
  %v1899 = vadd.f32 %v1657, %v1860
  %v1900 = vadd.f32 %v1658, %v1865
  %v1901 = vadd.f32 %v1659, %v1868
  %v1902 = vadd.f32 %v1660, %v1873
  %v1903 = vld [vmem:[%s1 + $0x70] sm:$0xf]
  %v1904 = vld [vmem:[%s1 + $0x74] sm:$0xf]
  %v1905 = vld [vmem:[%s1 + $0x78] sm:$0xf]
  %v1906 = vld [vmem:[%s1 + $0x7c] sm:$0xf]
  %vm1907 = vsmask.f32 5376
  %v1908 = vrot.slane %v187, 2
  %v1909 = vrot.slane %v183, 3
  %v1910 = vor.u32 %v1908, %v1909
  %v1911 = vrot.slane %v195, 2
  %v1912 = vrot.slane %v191, 3
  %v1913 = vor.u32 %v1911, %v1912
  %v1914 = vsel %vm1907, %v1910, %v1913
  %v1915 = vrot.slane %v203, 2
  %v1916 = vrot.slane %v199, 3
  %v1917 = vor.u32 %v1915, %v1916
  %v1918 = vsel %vm1907, %v1913, %v1917
  %v1919 = vrot.slane %v211, 2
  %v1920 = vrot.slane %v207, 3
  %v1921 = vor.u32 %v1919, %v1920
  %v1922 = vsel %vm1907, %v1917, %v1921
  %v1923 = vrot.slane %v219, 2
  %v1924 = vrot.slane %v215, 3
  %v1925 = vor.u32 %v1923, %v1924
  %v1926 = vsel %vm1907, %v1921, %v1925
  %v1927 = vrot.slane %v227, 2
  %v1928 = vrot.slane %v223, 3
  %v1929 = vor.u32 %v1927, %v1928
  %v1930 = vsel %vm1907, %v1925, %v1929
  %v1931 = vrot.slane %v235, 2
  %v1932 = vrot.slane %v231, 3
  %v1933 = vor.u32 %v1931, %v1932
  %v1934 = vsel %vm1907, %v1929, %v1933
  %v1935 = vrot.slane %v243, 2
  %v1936 = vrot.slane %v239, 3
  %v1937 = vor.u32 %v1935, %v1936
  %v1938 = vsel %vm1907, %v1933, %v1937
  %v1939 = vrot.slane %v251, 2
  %v1940 = vrot.slane %v247, 3
  %v1941 = vor.u32 %v1939, %v1940
  %v1942 = vsel %vm1907, %v1937, %v1941
  %v1943 = vrot.slane %v259, 2
  %v1944 = vrot.slane %v255, 3
  %v1945 = vor.u32 %v1943, %v1944
  %v1946 = vsel %vm1907, %v1941, %v1945
  %v1947 = vrot.slane %v267, 2
  %v1948 = vrot.slane %v263, 3
  %v1949 = vor.u32 %v1947, %v1948
  %v1950 = vsel %vm1907, %v1945, %v1949
  %v1951 = vrot.slane %v275, 2
  %v1952 = vrot.slane %v271, 3
  %v1953 = vor.u32 %v1951, %v1952
  %v1954 = vsel %vm1907, %v1949, %v1953
  %v1955 = vrot.slane %v1197, 2
  %v1956 = vrot.slane %v1200, 3
  %v1957 = vor.u32 %v1955, %v1956
  %v1958 = vsel %vm1907, %v1953, %v1957
  %v1963 = vunpack.c.l.b16 %v1903
  %v1964 = vunpack.c.l.b16 %v1904
  %v1965 = vunpack.c.l.b16 %v1905
  %v1966 = vunpack.c.l.b16 %v1906
  %v1967 = vpack.c.b16 %v1964, %v1963
  %v1968 = vpack.c.b16 %v1966, %v1965
  %v1972 = vsel %vm290, %v1914, 0
  %v1975 = vsel %vm290, %v1918, 0
  %v1978 = vsel %vm290, %v1922, 0
  %v1981 = vsel %vm290, %v1926, 0
  %v1984 = vsel %vm290, %v1930, 0
  %v1987 = vsel %vm290, %v1934, 0
  %v1990 = vsel %vm290, %v1938, 0
  %v1993 = vsel %vm290, %v1942, 0
  %v1996 = vsel %vm290, %v1946, 0
  %v1999 = vsel %vm290, %v1950, 0
  %v2002 = vsel %vm290, %v1954, 0
  %v2005 = vsel %vm290, %v1958, 0
  %v2008 = vsel %vm290, %v1957, 0
  %2010 = vmatprep.subr.bf16.mxu0 0
  %2011 = vmatpush1.bf16.msra.mxu0 %v1967
  %2012 = vmatprep.subr.bf16.mxu0 0
  %2013 = vmatpush1.bf16.msra.mxu0 %v1968
  %2014 = vmatprep.subr.bf16.mxu0 0
  %2015 = vmatpush1.bf16.msra.mxu0 0
  %2016 = vmatprep.subr.bf16.mxu0 0
  %2017 = vmatpush1.bf16.msra.mxu0 0
  %2018 = vmatprep.subr.bf16.mxu0 0
  %2019 = vmatpush1.bf16.msra.mxu0 0
  %2020 = vmatprep.subr.bf16.mxu0 0
  %2021 = vmatpush1.bf16.msra.mxu0 0
  %2022 = vmatprep.subr.bf16.mxu0 0
  %2023 = vmatpush1.bf16.msra.mxu0 0
  %2024 = vmatprep.subr.bf16.mxu0 0
  %2025 = vmatpush1.bf16.msra.mxu0 0
  %2026 = vmatprep.subr.bf16.mxu0 0
  %2027 = vmatpush1.bf16.msra.mxu0 0
  %2028 = vmatprep.subr.bf16.mxu0 0
  %2029 = vmatpush1.bf16.msra.mxu0 0
  %2030 = vmatprep.subr.bf16.mxu0 0
  %2031 = vmatpush1.bf16.msra.mxu0 0
  %2032 = vmatprep.subr.bf16.mxu0 0
  %2033 = vmatpush1.bf16.msra.mxu0 0
  %2034 = vmatprep.subr.bf16.mxu0 0
  %2035 = vmatpush1.bf16.msra.mxu0 0
  %2036 = vmatprep.subr.bf16.mxu0 0
  %2037 = vmatpush1.bf16.msra.mxu0 0
  %2038 = vmatprep.subr.bf16.mxu0 0
  %2039 = vmatpush1.bf16.msra.mxu0 0
  %2040 = vmatprep.subr.bf16.mxu0 0
  %2041 = vmatpush1.bf16.msra.mxu0 0
  %2042 = vmatprep.mubr.bf16.mxu0 0
  %2043 = vmatmul.mubr.bf16.gmra.mrb[0].mxu0 %v1972
  %v2044 = vpop.f32.mrb[0].mxu0
  %v2045 = vadd.f32 0.0, %v2044
  %v2046 = vpop.f32.mrb[0].mxu0
  %v2047 = vpop.f32.mrb[0].mxu0
  %v2048 = vadd.f32 0.0, %v2047
  %v2049 = vpop.f32.mrb[0].mxu0
  %2050 = vmatprep.mubr.bf16.mxu0 0
  %2051 = vmatmul.mubr.bf16.gmra.mrb[0].mxu0 %v1975
  %v2052 = vpop.f32.mrb[0].mxu0
  %v2053 = vadd.f32 0.0, %v2052
  %v2054 = vpop.f32.mrb[0].mxu0
  %v2055 = vpop.f32.mrb[0].mxu0
  %v2056 = vadd.f32 0.0, %v2055
  %v2057 = vpop.f32.mrb[0].mxu0
  %2058 = vmatprep.mubr.bf16.mxu0 0
  %2059 = vmatmul.mubr.bf16.gmra.mrb[0].mxu0 %v1978
  %v2060 = vpop.f32.mrb[0].mxu0
  %v2061 = vadd.f32 0.0, %v2060
  %v2062 = vpop.f32.mrb[0].mxu0
  %v2063 = vpop.f32.mrb[0].mxu0
  %v2064 = vadd.f32 0.0, %v2063
  %v2065 = vpop.f32.mrb[0].mxu0
  %2066 = vmatprep.mubr.bf16.mxu0 0
  %2067 = vmatmul.mubr.bf16.gmra.mrb[0].mxu0 %v1981
  %v2068 = vpop.f32.mrb[0].mxu0
  %v2069 = vadd.f32 0.0, %v2068
  %v2070 = vpop.f32.mrb[0].mxu0
  %v2071 = vpop.f32.mrb[0].mxu0
  %v2072 = vadd.f32 0.0, %v2071
  %v2073 = vpop.f32.mrb[0].mxu0
  %2074 = vmatprep.mubr.bf16.mxu0 0
  %2075 = vmatmul.mubr.bf16.gmra.mrb[0].mxu0 %v1984
  %v2076 = vpop.f32.mrb[0].mxu0
  %v2077 = vadd.f32 0.0, %v2076
  %v2078 = vpop.f32.mrb[0].mxu0
  %v2079 = vpop.f32.mrb[0].mxu0
  %v2080 = vadd.f32 0.0, %v2079
  %v2081 = vpop.f32.mrb[0].mxu0
  %2082 = vmatprep.mubr.bf16.mxu0 0
  %2083 = vmatmul.mubr.bf16.gmra.mrb[0].mxu0 %v1987
  %v2084 = vpop.f32.mrb[0].mxu0
  %v2085 = vadd.f32 0.0, %v2084
  %v2086 = vpop.f32.mrb[0].mxu0
  %v2087 = vpop.f32.mrb[0].mxu0
  %v2088 = vadd.f32 0.0, %v2087
  %v2089 = vpop.f32.mrb[0].mxu0
  %2090 = vmatprep.mubr.bf16.mxu0 0
  %2091 = vmatmul.mubr.bf16.gmra.mrb[0].mxu0 %v1990
  %v2092 = vpop.f32.mrb[0].mxu0
  %v2093 = vadd.f32 0.0, %v2092
  %v2094 = vpop.f32.mrb[0].mxu0
  %v2095 = vpop.f32.mrb[0].mxu0
  %v2096 = vadd.f32 0.0, %v2095
  %v2097 = vpop.f32.mrb[0].mxu0
  %2098 = vmatprep.mubr.bf16.mxu0 0
  %2099 = vmatmul.mubr.bf16.gmra.mrb[0].mxu0 %v1993
  %v2100 = vpop.f32.mrb[0].mxu0
  %v2101 = vadd.f32 0.0, %v2100
  %v2102 = vpop.f32.mrb[0].mxu0
  %v2103 = vpop.f32.mrb[0].mxu0
  %v2104 = vadd.f32 0.0, %v2103
  %v2105 = vpop.f32.mrb[0].mxu0
  %2106 = vmatprep.mubr.bf16.mxu0 0
  %2107 = vmatmul.mubr.bf16.gmra.mrb[0].mxu0 %v1996
  %v2108 = vpop.f32.mrb[0].mxu0
  %v2109 = vadd.f32 0.0, %v2108
  %v2110 = vpop.f32.mrb[0].mxu0
  %v2111 = vpop.f32.mrb[0].mxu0
  %v2112 = vadd.f32 0.0, %v2111
  %v2113 = vpop.f32.mrb[0].mxu0
  %2114 = vmatprep.mubr.bf16.mxu0 0
  %2115 = vmatmul.mubr.bf16.gmra.mrb[0].mxu0 %v1999
  %v2116 = vpop.f32.mrb[0].mxu0
  %v2117 = vadd.f32 0.0, %v2116
  %v2118 = vpop.f32.mrb[0].mxu0
  %v2119 = vpop.f32.mrb[0].mxu0
  %v2120 = vadd.f32 0.0, %v2119
  %v2121 = vpop.f32.mrb[0].mxu0
  %2122 = vmatprep.mubr.bf16.mxu0 0
  %2123 = vmatmul.mubr.bf16.gmra.mrb[0].mxu0 %v2002
  %v2124 = vpop.f32.mrb[0].mxu0
  %v2125 = vadd.f32 0.0, %v2124
  %v2126 = vpop.f32.mrb[0].mxu0
  %v2127 = vpop.f32.mrb[0].mxu0
  %v2128 = vadd.f32 0.0, %v2127
  %v2129 = vpop.f32.mrb[0].mxu0
  %2130 = vmatprep.mubr.bf16.mxu0 0
  %2131 = vmatmul.mubr.bf16.gmra.mrb[0].mxu0 %v2005
  %v2132 = vpop.f32.mrb[0].mxu0
  %v2133 = vadd.f32 0.0, %v2132
  %v2134 = vpop.f32.mrb[0].mxu0
  %v2135 = vpop.f32.mrb[0].mxu0
  %v2136 = vadd.f32 0.0, %v2135
  %v2137 = vpop.f32.mrb[0].mxu0
  %2138 = vmatprep.mubr.bf16.mxu0 0
  %2139 = vmatmul.mubr.bf16.gmra.mrb[0].mxu0 %v2008
  %v2140 = vpop.f32.mrb[0].mxu0
  %v2141 = vadd.f32 0.0, %v2140
  %v2142 = vpop.f32.mrb[0].mxu0
  %v2143 = vpop.f32.mrb[0].mxu0
  %v2144 = vpop.f32.mrb[0].mxu0
  %2145 = vdwg.mxu0
  %v2146 = vadd.f32 %v1878, %v2045
  %v2147 = vadd.f32 %v1879, %v2048
  %v2148 = vadd.f32 %v1880, %v2053
  %v2149 = vadd.f32 %v1881, %v2056
  %v2150 = vadd.f32 %v1882, %v2061
  %v2151 = vadd.f32 %v1883, %v2064
  %v2152 = vadd.f32 %v1884, %v2069
  %v2153 = vadd.f32 %v1885, %v2072
  %v2154 = vadd.f32 %v1886, %v2077
  %v2155 = vadd.f32 %v1887, %v2080
  %v2156 = vadd.f32 %v1888, %v2085
  %v2157 = vadd.f32 %v1889, %v2088
  %v2158 = vadd.f32 %v1890, %v2093
  %v2159 = vadd.f32 %v1891, %v2096
  %v2160 = vadd.f32 %v1892, %v2101
  %v2161 = vadd.f32 %v1893, %v2104
  %v2162 = vadd.f32 %v1894, %v2109
  %v2163 = vadd.f32 %v1895, %v2112
  %v2164 = vadd.f32 %v1896, %v2117
  %v2165 = vadd.f32 %v1897, %v2120
  %v2166 = vadd.f32 %v1898, %v2125
  %v2167 = vadd.f32 %v1899, %v2128
  %v2168 = vadd.f32 %v1900, %v2133
  %v2169 = vadd.f32 %v1901, %v2136
  %v2170 = vadd.f32 %v1902, %v2141
  %v2171 = vld [vmem:[%s1 + $0x80] sm:$0xf]
  %v2172 = vld [vmem:[%s1 + $0x84] sm:$0xf]
  %v2173 = vld [vmem:[%s1 + $0x88] sm:$0xf]
  %v2174 = vld [vmem:[%s1 + $0x8c] sm:$0xf]
  %vm2175 = vcmask 1044480
  %v2176 = vrot.slane %v153, 3
  %v2177 = vrot.slane %v154, 3
  %v2178 = vsel %vm2175, %v2176, %v2177
  %v2179 = vrot.slane %v155, 3
  %v2180 = vsel %vm2175, %v2177, %v2179
  %v2181 = vrot.slane %v156, 3
  %v2182 = vsel %vm2175, %v2179, %v2181
  %v2183 = vrot.slane %v157, 3
  %v2184 = vsel %vm2175, %v2181, %v2183
  %v2185 = vrot.slane %v158, 3
  %v2186 = vsel %vm2175, %v2183, %v2185
  %v2187 = vrot.slane %v159, 3
  %v2188 = vsel %vm2175, %v2185, %v2187
  %v2189 = vrot.slane %v160, 3
  %v2190 = vsel %vm2175, %v2187, %v2189
  %v2191 = vrot.slane %v161, 3
  %v2192 = vsel %vm2175, %v2189, %v2191
  %v2193 = vrot.slane %v162, 3
  %v2194 = vsel %vm2175, %v2191, %v2193
  %v2195 = vrot.slane %v163, 3
  %v2196 = vsel %vm2175, %v2193, %v2195
  %v2197 = vrot.slane %v164, 3
  %v2198 = vsel %vm2175, %v2195, %v2197
  %v2199 = vrot.slane %v165, 3
  %v2200 = vsel %vm2175, %v2197, %v2199
  %v2205 = vunpack.c.l.b16 %v2171
  %v2206 = vunpack.c.l.b16 %v2172
  %v2207 = vunpack.c.l.b16 %v2173
  %v2208 = vunpack.c.l.b16 %v2174
  %v2209 = vpack.c.b16 %v2206, %v2205
  %v2210 = vpack.c.b16 %v2208, %v2207
  %v2214 = vsel %vm290, %v2178, 0
  %v2217 = vsel %vm290, %v2180, 0
  %v2220 = vsel %vm290, %v2182, 0
  %v2223 = vsel %vm290, %v2184, 0
  %v2226 = vsel %vm290, %v2186, 0
  %v2229 = vsel %vm290, %v2188, 0
  %v2232 = vsel %vm290, %v2190, 0
  %v2235 = vsel %vm290, %v2192, 0
  %v2238 = vsel %vm290, %v2194, 0
  %v2241 = vsel %vm290, %v2196, 0
  %v2244 = vsel %vm290, %v2198, 0
  %v2247 = vsel %vm290, %v2200, 0
  %v2250 = vsel %vm290, %v2199, 0
  %2252 = vmatprep.subr.bf16.mxu0 0
  %2253 = vmatpush1.bf16.msra.mxu0 %v2209
  %2254 = vmatprep.subr.bf16.mxu0 0
  %2255 = vmatpush1.bf16.msra.mxu0 %v2210
  %2256 = vmatprep.subr.bf16.mxu0 0
  %2257 = vmatpush1.bf16.msra.mxu0 0
  %2258 = vmatprep.subr.bf16.mxu0 0
  %2259 = vmatpush1.bf16.msra.mxu0 0
  %2260 = vmatprep.subr.bf16.mxu0 0
  %2261 = vmatpush1.bf16.msra.mxu0 0
  %2262 = vmatprep.subr.bf16.mxu0 0
  %2263 = vmatpush1.bf16.msra.mxu0 0
  %2264 = vmatprep.subr.bf16.mxu0 0
  %2265 = vmatpush1.bf16.msra.mxu0 0
  %2266 = vmatprep.subr.bf16.mxu0 0
  %2267 = vmatpush1.bf16.msra.mxu0 0
  %2268 = vmatprep.subr.bf16.mxu0 0
  %2269 = vmatpush1.bf16.msra.mxu0 0
  %2270 = vmatprep.subr.bf16.mxu0 0
  %2271 = vmatpush1.bf16.msra.mxu0 0
  %2272 = vmatprep.subr.bf16.mxu0 0
  %2273 = vmatpush1.bf16.msra.mxu0 0
  %2274 = vmatprep.subr.bf16.mxu0 0
  %2275 = vmatpush1.bf16.msra.mxu0 0
  %2276 = vmatprep.subr.bf16.mxu0 0
  %2277 = vmatpush1.bf16.msra.mxu0 0
  %2278 = vmatprep.subr.bf16.mxu0 0
  %2279 = vmatpush1.bf16.msra.mxu0 0
  %2280 = vmatprep.subr.bf16.mxu0 0
  %2281 = vmatpush1.bf16.msra.mxu0 0
  %2282 = vmatprep.subr.bf16.mxu0 0
  %2283 = vmatpush1.bf16.msra.mxu0 0
  %2284 = vmatprep.mubr.bf16.mxu0 0
  %2285 = vmatmul.mubr.bf16.gmra.mrb[0].mxu0 %v2214
  %v2286 = vpop.f32.mrb[0].mxu0
  %v2287 = vadd.f32 0.0, %v2286
  %v2288 = vpop.f32.mrb[0].mxu0
  %v2289 = vpop.f32.mrb[0].mxu0
  %v2290 = vadd.f32 0.0, %v2289
  %v2291 = vpop.f32.mrb[0].mxu0
  %2292 = vmatprep.mubr.bf16.mxu0 0
  %2293 = vmatmul.mubr.bf16.gmra.mrb[0].mxu0 %v2217
  %v2294 = vpop.f32.mrb[0].mxu0
  %v2295 = vadd.f32 0.0, %v2294
  %v2296 = vpop.f32.mrb[0].mxu0
  %v2297 = vpop.f32.mrb[0].mxu0
  %v2298 = vadd.f32 0.0, %v2297
  %v2299 = vpop.f32.mrb[0].mxu0
  %2300 = vmatprep.mubr.bf16.mxu0 0
  %2301 = vmatmul.mubr.bf16.gmra.mrb[0].mxu0 %v2220
  %v2302 = vpop.f32.mrb[0].mxu0
  %v2303 = vadd.f32 0.0, %v2302
  %v2304 = vpop.f32.mrb[0].mxu0
  %v2305 = vpop.f32.mrb[0].mxu0
  %v2306 = vadd.f32 0.0, %v2305
  %v2307 = vpop.f32.mrb[0].mxu0
  %2308 = vmatprep.mubr.bf16.mxu0 0
  %2309 = vmatmul.mubr.bf16.gmra.mrb[0].mxu0 %v2223
  %v2310 = vpop.f32.mrb[0].mxu0
  %v2311 = vadd.f32 0.0, %v2310
  %v2312 = vpop.f32.mrb[0].mxu0
  %v2313 = vpop.f32.mrb[0].mxu0
  %v2314 = vadd.f32 0.0, %v2313
  %v2315 = vpop.f32.mrb[0].mxu0
  %2316 = vmatprep.mubr.bf16.mxu0 0
  %2317 = vmatmul.mubr.bf16.gmra.mrb[0].mxu0 %v2226
  %v2318 = vpop.f32.mrb[0].mxu0
  %v2319 = vadd.f32 0.0, %v2318
  %v2320 = vpop.f32.mrb[0].mxu0
  %v2321 = vpop.f32.mrb[0].mxu0
  %v2322 = vadd.f32 0.0, %v2321
  %v2323 = vpop.f32.mrb[0].mxu0
  %2324 = vmatprep.mubr.bf16.mxu0 0
  %2325 = vmatmul.mubr.bf16.gmra.mrb[0].mxu0 %v2229
  %v2326 = vpop.f32.mrb[0].mxu0
  %v2327 = vadd.f32 0.0, %v2326
  %v2328 = vpop.f32.mrb[0].mxu0
  %v2329 = vpop.f32.mrb[0].mxu0
  %v2330 = vadd.f32 0.0, %v2329
  %v2331 = vpop.f32.mrb[0].mxu0
  %2332 = vmatprep.mubr.bf16.mxu0 0
  %2333 = vmatmul.mubr.bf16.gmra.mrb[0].mxu0 %v2232
  %v2334 = vpop.f32.mrb[0].mxu0
  %v2335 = vadd.f32 0.0, %v2334
  %v2336 = vpop.f32.mrb[0].mxu0
  %v2337 = vpop.f32.mrb[0].mxu0
  %v2338 = vadd.f32 0.0, %v2337
  %v2339 = vpop.f32.mrb[0].mxu0
  %2340 = vmatprep.mubr.bf16.mxu0 0
  %2341 = vmatmul.mubr.bf16.gmra.mrb[0].mxu0 %v2235
  %v2342 = vpop.f32.mrb[0].mxu0
  %v2343 = vadd.f32 0.0, %v2342
  %v2344 = vpop.f32.mrb[0].mxu0
  %v2345 = vpop.f32.mrb[0].mxu0
  %v2346 = vadd.f32 0.0, %v2345
  %v2347 = vpop.f32.mrb[0].mxu0
  %2348 = vmatprep.mubr.bf16.mxu0 0
  %2349 = vmatmul.mubr.bf16.gmra.mrb[0].mxu0 %v2238
  %v2350 = vpop.f32.mrb[0].mxu0
  %v2351 = vadd.f32 0.0, %v2350
  %v2352 = vpop.f32.mrb[0].mxu0
  %v2353 = vpop.f32.mrb[0].mxu0
  %v2354 = vadd.f32 0.0, %v2353
  %v2355 = vpop.f32.mrb[0].mxu0
  %2356 = vmatprep.mubr.bf16.mxu0 0
  %2357 = vmatmul.mubr.bf16.gmra.mrb[0].mxu0 %v2241
  %v2358 = vpop.f32.mrb[0].mxu0
  %v2359 = vadd.f32 0.0, %v2358
  %v2360 = vpop.f32.mrb[0].mxu0
  %v2361 = vpop.f32.mrb[0].mxu0
  %v2362 = vadd.f32 0.0, %v2361
  %v2363 = vpop.f32.mrb[0].mxu0
  %2364 = vmatprep.mubr.bf16.mxu0 0
  %2365 = vmatmul.mubr.bf16.gmra.mrb[0].mxu0 %v2244
  %v2366 = vpop.f32.mrb[0].mxu0
  %v2367 = vadd.f32 0.0, %v2366
  %v2368 = vpop.f32.mrb[0].mxu0
  %v2369 = vpop.f32.mrb[0].mxu0
  %v2370 = vadd.f32 0.0, %v2369
  %v2371 = vpop.f32.mrb[0].mxu0
  %2372 = vmatprep.mubr.bf16.mxu0 0
  %2373 = vmatmul.mubr.bf16.gmra.mrb[0].mxu0 %v2247
  %v2374 = vpop.f32.mrb[0].mxu0
  %v2375 = vadd.f32 0.0, %v2374
  %v2376 = vpop.f32.mrb[0].mxu0
  %v2377 = vpop.f32.mrb[0].mxu0
  %v2378 = vadd.f32 0.0, %v2377
  %v2379 = vpop.f32.mrb[0].mxu0
  %2380 = vmatprep.mubr.bf16.mxu0 0
  %2381 = vmatmul.mubr.bf16.gmra.mrb[0].mxu0 %v2250
  %v2382 = vpop.f32.mrb[0].mxu0
  %v2383 = vadd.f32 0.0, %v2382
  %v2384 = vpop.f32.mrb[0].mxu0
  %v2385 = vpop.f32.mrb[0].mxu0
  %v2386 = vpop.f32.mrb[0].mxu0
  %2387 = vdwg.mxu0
  %v2388 = vadd.f32 %v2146, %v2287
  %v2389 = vadd.f32 %v2147, %v2290
  %v2390 = vadd.f32 %v2148, %v2295
  %v2391 = vadd.f32 %v2149, %v2298
  %v2392 = vadd.f32 %v2150, %v2303
  %v2393 = vadd.f32 %v2151, %v2306
  %v2394 = vadd.f32 %v2152, %v2311
  %v2395 = vadd.f32 %v2153, %v2314
  %v2396 = vadd.f32 %v2154, %v2319
  %v2397 = vadd.f32 %v2155, %v2322
  %v2398 = vadd.f32 %v2156, %v2327
  %v2399 = vadd.f32 %v2157, %v2330
  %v2400 = vadd.f32 %v2158, %v2335
  %v2401 = vadd.f32 %v2159, %v2338
  %v2402 = vadd.f32 %v2160, %v2343
  %v2403 = vadd.f32 %v2161, %v2346
  %v2404 = vadd.f32 %v2162, %v2351
  %v2405 = vadd.f32 %v2163, %v2354
  %v2406 = vadd.f32 %v2164, %v2359
  %v2407 = vadd.f32 %v2165, %v2362
  %v2408 = vadd.f32 %v2166, %v2367
  %v2409 = vadd.f32 %v2167, %v2370
  %v2410 = vadd.f32 %v2168, %v2375
  %v2411 = vadd.f32 %v2169, %v2378
  %v2412 = vadd.f32 %v2170, %v2383
  %v2413 = vld [vmem:[%s2] sm:$0x1]
  %v2415 = vlaneseq
  %v2416 = vshrl.u32 %v2415, 7
  %v2417 = vsub.s32 0, %v2416
  %v2418 = vrot.slane %v2413, %v2417
  %v2420 = vadd.f32 %v2388, %v2418
  %v2421 = vadd.f32 %v2389, %v2418
  %v2422 = vadd.f32 %v2390, %v2418
  %v2423 = vadd.f32 %v2391, %v2418
  %v2424 = vadd.f32 %v2392, %v2418
  %v2425 = vadd.f32 %v2393, %v2418
  %v2426 = vadd.f32 %v2394, %v2418
  %v2427 = vadd.f32 %v2395, %v2418
  %v2428 = vadd.f32 %v2396, %v2418
  %v2429 = vadd.f32 %v2397, %v2418
  %v2430 = vadd.f32 %v2398, %v2418
  %v2431 = vadd.f32 %v2399, %v2418
  %v2432 = vadd.f32 %v2400, %v2418
  %v2433 = vadd.f32 %v2401, %v2418
  %v2434 = vadd.f32 %v2402, %v2418
  %v2435 = vadd.f32 %v2403, %v2418
  %v2436 = vadd.f32 %v2404, %v2418
  %v2437 = vadd.f32 %v2405, %v2418
  %v2438 = vadd.f32 %v2406, %v2418
  %v2439 = vadd.f32 %v2407, %v2418
  %v2440 = vadd.f32 %v2408, %v2418
  %v2441 = vadd.f32 %v2409, %v2418
  %v2442 = vadd.f32 %v2410, %v2418
  %v2443 = vadd.f32 %v2411, %v2418
  %v2444 = vadd.f32 %v2412, %v2418
  %v2445 = vmax.f32 %v2420, 0.0
  %v2446 = vmax.f32 %v2421, 0.0
  %v2447 = vmax.f32 %v2422, 0.0
  %v2448 = vmax.f32 %v2423, 0.0
  %v2449 = vmax.f32 %v2424, 0.0
  %v2450 = vmax.f32 %v2425, 0.0
  %v2451 = vmax.f32 %v2426, 0.0
  %v2452 = vmax.f32 %v2427, 0.0
  %v2453 = vmax.f32 %v2428, 0.0
  %v2454 = vmax.f32 %v2429, 0.0
  %v2455 = vmax.f32 %v2430, 0.0
  %v2456 = vmax.f32 %v2431, 0.0
  %v2457 = vmax.f32 %v2432, 0.0
  %v2458 = vmax.f32 %v2433, 0.0
  %v2459 = vmax.f32 %v2434, 0.0
  %v2460 = vmax.f32 %v2435, 0.0
  %v2461 = vmax.f32 %v2436, 0.0
  %v2462 = vmax.f32 %v2437, 0.0
  %v2463 = vmax.f32 %v2438, 0.0
  %v2464 = vmax.f32 %v2439, 0.0
  %v2465 = vmax.f32 %v2440, 0.0
  %v2466 = vmax.f32 %v2441, 0.0
  %v2467 = vmax.f32 %v2442, 0.0
  %v2468 = vmax.f32 %v2443, 0.0
  %v2469 = vmax.f32 %v2444, 0.0
  %vm2470 = vcmask 523264
  %2471 = vst.msk [vmem:[%s3] sm:$0xff] %vm2470, %v2445
  %2472 = vst.msk [vmem:[%s3 + $0x8] sm:$0xff] %vm2470, %v2446
  %2473 = vst.msk [vmem:[%s3 + $0x10] sm:$0xff] %vm2470, %v2447
  %2474 = vst.msk [vmem:[%s3 + $0x18] sm:$0xff] %vm2470, %v2448
  %2475 = vst.msk [vmem:[%s3 + $0x20] sm:$0xff] %vm2470, %v2449
  %2476 = vst.msk [vmem:[%s3 + $0x28] sm:$0xff] %vm2470, %v2450
  %2477 = vst.msk [vmem:[%s3 + $0x30] sm:$0xff] %vm2470, %v2451
  %2478 = vst.msk [vmem:[%s3 + $0x38] sm:$0xff] %vm2470, %v2452
  %2479 = vst.msk [vmem:[%s3 + $0x40] sm:$0xff] %vm2470, %v2453
  %2480 = vst.msk [vmem:[%s3 + $0x48] sm:$0xff] %vm2470, %v2454
  %2481 = vst.msk [vmem:[%s3 + $0x50] sm:$0xff] %vm2470, %v2455
  %2482 = vst.msk [vmem:[%s3 + $0x58] sm:$0xff] %vm2470, %v2456
  %2483 = vst.msk [vmem:[%s3 + $0x60] sm:$0xff] %vm2470, %v2457
  %2484 = vst.msk [vmem:[%s3 + $0x68] sm:$0xff] %vm2470, %v2458
  %2485 = vst.msk [vmem:[%s3 + $0x70] sm:$0xff] %vm2470, %v2459
  %2486 = vst.msk [vmem:[%s3 + $0x78] sm:$0xff] %vm2470, %v2460
  %2487 = vst.msk [vmem:[%s3 + $0x80] sm:$0xff] %vm2470, %v2461
  %2488 = vst.msk [vmem:[%s3 + $0x88] sm:$0xff] %vm2470, %v2462
  %2489 = vst.msk [vmem:[%s3 + $0x90] sm:$0xff] %vm2470, %v2463
  %2490 = vst.msk [vmem:[%s3 + $0x98] sm:$0xff] %vm2470, %v2464
  %2491 = vst.msk [vmem:[%s3 + $0xa0] sm:$0xff] %vm2470, %v2465
  %2492 = vst.msk [vmem:[%s3 + $0xa8] sm:$0xff] %vm2470, %v2466
  %2493 = vst.msk [vmem:[%s3 + $0xb0] sm:$0xff] %vm2470, %v2467
  %2494 = vst.msk [vmem:[%s3 + $0xb8] sm:$0xff] %vm2470, %v2468
  %2495 = vst.msk [vmem:[%s3 + $0xc0] sm:$0xff] %vm2470, %v2469
  // Predicated region
  $region47: #{skin_classifier_forward.10} parent=0 // pred_check
    _
  $region48: #{skin_classifier_forward.10} parent=0 // pred_check_branch
    %2497 = sbr.rel (0) target = $region50
  $region49: #{skin_classifier_forward.10} parent=0 // pred_region
    _
  $region50: #{skin_classifier_forward.10} parent=0 // pred_fallthru
    _
  // Predicated region
  $region51: #{skin_classifier_forward.10} parent=0 // pred_check
    _
  $region52: #{skin_classifier_forward.10} parent=0 // pred_check_branch
    %2499 = sbr.rel (0) target = $region54
  $region53: #{skin_classifier_forward.10} parent=0 // pred_region
    _
  $region54: #{skin_classifier_forward.10} parent=0 // pred_fallthru
    _
  %2500 = vsyncmov [#allocation3]
  %s2501 = vpop.sfrf %2500
  %p2502 = scmp.eq.s32.totalorder %s2501, 0
  %p2503 = pneg %p2502
  %2505 = shalt.err (%p2503)

// kernel: skin_classifier_forward.12
$region0: #{skin_classifier_forward.12}
  #allocation0 [shape = 'u32[]', space=smem, size = 0x4, offset = 0x4, fixed_abs, tag = 'smem constant byte address 0x4 - core index']
  #allocation1 [shape = 'u32[144,128]{1,0:T(1,128)}', space=vmem, size = 0x12000, scoped, tag = 'internal scratch']
  #allocation2 [shape = 'f32[86,64]{1,0:T(8,128)}', space=vmem, size = 0xb000, scoped, tag = 'scratch operand']
  #allocation3 [shape = 's32[1]{0}', space=sflag, size = 0x4, scoped, tag = 'scratch operand']
  #allocation4 [shape = 's32[]', space=sflag, size = 0x4, offset = 0, fixed_abs, tag = 'sflag constant byte address 0x0 - dummy sync flag']
  %s0 = inlined_call_operand.vmem [shape: f32[86,64], index: 0, kind: input, shape index: {}]
  %s1 = inlined_call_operand.vmem [shape: bf16[576,128], index: 1, kind: input, shape index: {}]
  %s2 = inlined_call_operand.vmem [shape: f32[1,128], index: 2, kind: input, shape index: {}]
  %s3 = inlined_call_operand.vmem [shape: f32[72,128], index: 3, kind: output, shape index: {}]
  %s4 = sld [smem:[#allocation0]]
  $region55: #{skin_classifier_forward.12} parent=0
    _
  %s6 = ssub.s32 1, %s4
  %s7 = scalar_select 0, %s6, %s4
  // Predicated region
  $region2: #{skin_classifier_forward.12} parent=0 // pred_check
    _
  $region3: #{skin_classifier_forward.12} parent=0 // pred_check_branch
    %9 = sbr.rel (0) target = $region5
  $region4: #{skin_classifier_forward.12} parent=0 // pred_region
    _
  $region5: #{skin_classifier_forward.12} parent=0 // pred_fallthru
    _
  // Predicated region
  $region6: #{skin_classifier_forward.12} parent=0 // pred_check
    _
  $region7: #{skin_classifier_forward.12} parent=0 // pred_check_branch
    %11 = sbr.rel (0) target = $region9
  $region8: #{skin_classifier_forward.12} parent=0 // pred_region
    _
  $region9: #{skin_classifier_forward.12} parent=0 // pred_fallthru
    _
  %s13 = smul.u32 0, 72
  %s14 = scalar_lea.vmem %s0, %s13
  %p16 = scmp.lt.u32.totalorder 86, 8
  %p17 = pneg %p16
  // Predicated region
  $region10: #{skin_classifier_forward.12} parent=0 // pred_check
    _
  $region11: #{skin_classifier_forward.12} parent=0 // pred_check_branch
    %19 = sbr.rel (%p16) target = $region13
  $region12: #{skin_classifier_forward.12} parent=0 // pred_region
    %s34 = sand.u32 86, 7
    %p35 = scmp.eq.s32.totalorder %s34, 0
    %p36 = pneg %p35
    // Predicated region
    $region25: #{skin_classifier_forward.12} parent=12 // pred_check
      _
    $region26: #{skin_classifier_forward.12} parent=12 // pred_check_branch
      %38 = sbr.rel (%p35) target = $region28
    $region27: #{skin_classifier_forward.12} parent=12 // pred_region
      %s39 = sand.u32 86, 7
      %s40 = ssub.s32 86, %s39
      %s41 = scalar_lea.vmem %s14, %s40
      %s42 = ssub.s32 86, %s39
      %s43 = scalar_lea.vmem [#allocation2], %s42
      loop: start=0, step=1, limit=1
      $region29: #{skin_classifier_forward.12} parent=27 // loop_pre_header
        _
      $region30: #{skin_classifier_forward.12} parent=27 // loop_header
        %s45 = sphi 0, %s49
        %p46 = scmp.ge.s32.totalorder %s45, 1
        %s50 = sphi %s14, %s14
        %s51 = sphi [#allocation2], [#allocation2]
      $region31: #{skin_classifier_forward.12} parent=27 // loop_header_branch
        %48 = sbr.rel (%p46) target = $region35
      $region32: #{skin_classifier_forward.12} parent=27 // loop_body
        %v52 = vld [vmem:[%s50] sm:$0xff]
        %53 = vst [vmem:[%s51] sm:$0xff] %v52
        %v54 = vld [vmem:[%s50 + $0x8] sm:$0xff]
        %55 = vst [vmem:[%s51 + $0x8] sm:$0xff] %v54
        %v56 = vld [vmem:[%s50 + $0x10] sm:$0xff]
        %57 = vst [vmem:[%s51 + $0x10] sm:$0xff] %v56
        %v58 = vld [vmem:[%s50 + $0x18] sm:$0xff]
        %59 = vst [vmem:[%s51 + $0x18] sm:$0xff] %v58
        %v60 = vld [vmem:[%s50 + $0x20] sm:$0xff]
        %61 = vst [vmem:[%s51 + $0x20] sm:$0xff] %v60
        %v62 = vld [vmem:[%s50 + $0x28] sm:$0xff]
        %63 = vst [vmem:[%s51 + $0x28] sm:$0xff] %v62
        %v64 = vld [vmem:[%s50 + $0x30] sm:$0xff]
        %65 = vst [vmem:[%s51 + $0x30] sm:$0xff] %v64
        %v66 = vld [vmem:[%s50 + $0x38] sm:$0xff]
        %67 = vst [vmem:[%s51 + $0x38] sm:$0xff] %v66
        %v68 = vld [vmem:[%s50 + $0x40] sm:$0xff]
        %69 = vst [vmem:[%s51 + $0x40] sm:$0xff] %v68
        %v70 = vld [vmem:[%s50 + $0x48] sm:$0xff]
        %71 = vst [vmem:[%s51 + $0x48] sm:$0xff] %v70
      $region33: #{skin_classifier_forward.12} parent=27 // loop_footer
        %s49 = sadd.s32 1, %s45
      $region34: #{skin_classifier_forward.12} parent=27 // loop_footer_branch
        %44 = sbr.rel target = $region30
      $region35: #{skin_classifier_forward.12} parent=27 // loop_exit
        _
      %s72 = sshllo.u32 0, %s39
      loop: start=0, step=1, limit=1
      $region36: #{skin_classifier_forward.12} parent=27 // loop_pre_header
        _
      $region37: #{skin_classifier_forward.12} parent=27 // loop_header
        %s74 = sphi 0, %s78
        %p75 = scmp.ge.s32.totalorder %s74, 1
        %s79 = sphi %s41, %s41
        %s80 = sphi %s43, %s43
      $region38: #{skin_classifier_forward.12} parent=27 // loop_header_branch
        %77 = sbr.rel (%p75) target = $region42
      $region39: #{skin_classifier_forward.12} parent=27 // loop_body
        %v81 = vld [vmem:[%s79] sm:%s72]
        %82 = vst [vmem:[%s80] sm:%s72] %v81
      $region40: #{skin_classifier_forward.12} parent=27 // loop_footer
        %s78 = sadd.s32 1, %s74
      $region41: #{skin_classifier_forward.12} parent=27 // loop_footer_branch
        %73 = sbr.rel target = $region37
      $region42: #{skin_classifier_forward.12} parent=27 // loop_exit
        _
    $region28: #{skin_classifier_forward.12} parent=12 // pred_fallthru
      _
  $region13: #{skin_classifier_forward.12} parent=0 // pred_fallthru
    _
  // Predicated region
  $region14: #{skin_classifier_forward.12} parent=0 // pred_check
    %p20 = pneg %p16
  $region15: #{skin_classifier_forward.12} parent=0 // pred_check_branch
    %22 = sbr.rel (%p20) target = $region17
  $region16: #{skin_classifier_forward.12} parent=0 // pred_region
    %s23 = sshllo.u32 0, 86
    loop: start=0, step=1, limit=1
    $region18: #{skin_classifier_forward.12} parent=16 // loop_pre_header
      _
    $region19: #{skin_classifier_forward.12} parent=16 // loop_header
      %s25 = sphi 0, %s29
      %p26 = scmp.ge.s32.totalorder %s25, 1
      %s30 = sphi %s14, %s14
      %s31 = sphi [#allocation2], [#allocation2]
    $region20: #{skin_classifier_forward.12} parent=16 // loop_header_branch
      %28 = sbr.rel (%p26) target = $region24
    $region21: #{skin_classifier_forward.12} parent=16 // loop_body
      %v32 = vld [vmem:[%s30] sm:%s23]
      %33 = vst [vmem:[%s31] sm:%s23] %v32
    $region22: #{skin_classifier_forward.12} parent=16 // loop_footer
      %s29 = sadd.s32 1, %s25
    $region23: #{skin_classifier_forward.12} parent=16 // loop_footer_branch
      %24 = sbr.rel target = $region19
    $region24: #{skin_classifier_forward.12} parent=16 // loop_exit
      _
  $region17: #{skin_classifier_forward.12} parent=0 // pred_fallthru
    _
  // Predicated region
  $region43: #{skin_classifier_forward.12} parent=0 // pred_check
    _
  $region44: #{skin_classifier_forward.12} parent=0 // pred_check_branch
    %85 = sbr.rel (0) target = $region46
  $region45: #{skin_classifier_forward.12} parent=0 // pred_region
    %86 = vsyncadd [#allocation3], 1376
  $region46: #{skin_classifier_forward.12} parent=0 // pred_fallthru
    _
  %s87 = smul.u32 86, 1
  %s88 = sshll.u32 %s87, 4
  %89 = dma.done [#allocation3], %s88
  %v90 = vld [vmem:[#allocation2] sm:$0xff]
  %v91 = vld [vmem:[#allocation2 + $0x8] sm:$0xff]
  %v92 = vld [vmem:[#allocation2 + $0x10] sm:$0xff]
  %v93 = vld [vmem:[#allocation2 + $0x18] sm:$0xff]
  %v94 = vld [vmem:[#allocation2 + $0x20] sm:$0xff]
  %v95 = vld [vmem:[#allocation2 + $0x28] sm:$0xff]
  %v96 = vld [vmem:[#allocation2 + $0x30] sm:$0xff]
  %v97 = vld [vmem:[#allocation2 + $0x38] sm:$0xff]
  %v98 = vld [vmem:[#allocation2 + $0x40] sm:$0xff]
  %v99 = vld [vmem:[#allocation2 + $0x48] sm:$0xff]
  %v100 = vld [vmem:[#allocation2 + $0x50] sm:$0x3f]
  %v101 = vpack.c.bf16 %v91, %v90
  %v102 = vpack.c.bf16 %v93, %v92
  %v103 = vpack.c.bf16 %v95, %v94
  %v104 = vpack.c.bf16 %v97, %v96
  %v105 = vpack.c.bf16 %v99, %v98
  %v106 = vpack.c.bf16 %v100, %v100
  %v107 = vld [vmem:[%s1] sm:$0xf]
  %v108 = vld [vmem:[%s1 + $0x4] sm:$0xf]
  %v109 = vld [vmem:[%s1 + $0x8] sm:$0xf]
  %v110 = vld [vmem:[%s1 + $0xc] sm:$0xf]
  %v111 = vld [vmem:[%s1 + $0x10] sm:$0xf]
  %v112 = vld [vmem:[%s1 + $0x14] sm:$0xf]
  %v113 = vld [vmem:[%s1 + $0x18] sm:$0xf]
  %v114 = vld [vmem:[%s1 + $0x1c] sm:$0xf]
  %v115 = vld [vmem:[%s1 + $0x20] sm:$0xf]
  %v116 = vld [vmem:[%s1 + $0x24] sm:$0xf]
  %v117 = vld [vmem:[%s1 + $0x28] sm:$0xf]
  %v118 = vld [vmem:[%s1 + $0x2c] sm:$0xf]
  %v119 = vld [vmem:[%s1 + $0x30] sm:$0xf]
  %v120 = vld [vmem:[%s1 + $0x34] sm:$0xf]
  %v121 = vld [vmem:[%s1 + $0x38] sm:$0xf]
  %v122 = vld [vmem:[%s1 + $0x3c] sm:$0xf]
  %vm123 = vsmask.f32 7424
  %v125 = vshrl.u32 %v101, 16
  %v127 = vshll.u32 %v101, 16
  %v129 = vrot.slane %v127, 1
  %v130 = vor.u32 %v125, %v129
  %v132 = vshll.u32 %v102, 16
  %v134 = vrot.slane %v132, 1
  %v135 = vsel %vm123, %v130, %v134
  %v136 = vshrl.u32 %v102, 16
  %v138 = vor.u32 %v136, %v134
  %v140 = vshll.u32 %v103, 16
  %v142 = vrot.slane %v140, 1
  %v143 = vsel %vm123, %v138, %v142
  %v144 = vshrl.u32 %v103, 16
  %v146 = vor.u32 %v144, %v142
  %v148 = vshll.u32 %v104, 16
  %v150 = vrot.slane %v148, 1
  %v151 = vsel %vm123, %v146, %v150
  %v152 = vshrl.u32 %v104, 16
  %v154 = vor.u32 %v152, %v150
  %v156 = vshll.u32 %v105, 16
  %v158 = vrot.slane %v156, 1
  %v159 = vsel %vm123, %v154, %v158
  %v160 = vshrl.u32 %v105, 16
  %v162 = vor.u32 %v160, %v158
  %v171 = vunpack.c.l.b16 %v115
  %v172 = vunpack.c.l.b16 %v116
  %v173 = vunpack.c.l.b16 %v117
  %v174 = vunpack.c.l.b16 %v118
  %v175 = vunpack.c.l.b16 %v119
  %v176 = vunpack.c.l.b16 %v120
  %v177 = vunpack.c.l.b16 %v121
  %v178 = vunpack.c.l.b16 %v122
  %v179 = vpack.c.b16 %v172, %v171
  %v180 = vpack.c.b16 %v174, %v173
  %v181 = vpack.c.b16 %v176, %v175
  %v182 = vpack.c.b16 %v178, %v177
  %vm187 = vcmask 523264
  %v189 = vsel %vm187, %v135, 0
  %v192 = vsel %vm187, %v143, 0
  %v195 = vsel %vm187, %v151, 0
  %v198 = vsel %vm187, %v159, 0
  %v201 = vsel %vm187, %v162, 0
  %203 = vmatprep.subr.bf16.mxu0 0
  %204 = vmatpush1.bf16.msra.mxu0 %v179
  %205 = vmatprep.subr.bf16.mxu0 0
  %206 = vmatpush1.bf16.msra.mxu0 %v180
  %207 = vmatprep.subr.bf16.mxu0 0
  %208 = vmatpush1.bf16.msra.mxu0 %v181
  %209 = vmatprep.subr.bf16.mxu0 0
  %210 = vmatpush1.bf16.msra.mxu0 %v182
  %211 = vmatprep.subr.bf16.mxu0 0
  %212 = vmatpush1.bf16.msra.mxu0 0
  %213 = vmatprep.subr.bf16.mxu0 0
  %214 = vmatpush1.bf16.msra.mxu0 0
  %215 = vmatprep.subr.bf16.mxu0 0
  %216 = vmatpush1.bf16.msra.mxu0 0
  %217 = vmatprep.subr.bf16.mxu0 0
  %218 = vmatpush1.bf16.msra.mxu0 0
  %219 = vmatprep.subr.bf16.mxu0 0
  %220 = vmatpush1.bf16.msra.mxu0 0
  %221 = vmatprep.subr.bf16.mxu0 0
  %222 = vmatpush1.bf16.msra.mxu0 0
  %223 = vmatprep.subr.bf16.mxu0 0
  %224 = vmatpush1.bf16.msra.mxu0 0
  %225 = vmatprep.subr.bf16.mxu0 0
  %226 = vmatpush1.bf16.msra.mxu0 0
  %227 = vmatprep.subr.bf16.mxu0 0
  %228 = vmatpush1.bf16.msra.mxu0 0
  %229 = vmatprep.subr.bf16.mxu0 0
  %230 = vmatpush1.bf16.msra.mxu0 0
  %231 = vmatprep.subr.bf16.mxu0 0
  %232 = vmatpush1.bf16.msra.mxu0 0
  %233 = vmatprep.subr.bf16.mxu0 0
  %234 = vmatpush1.bf16.msra.mxu0 0
  %235 = vmatprep.mubr.bf16.mxu0 0
  %236 = vmatmul.mubr.bf16.gmra.mrb[0].mxu0 %v189
  %v237 = vpop.f32.mrb[0].mxu0
  %v238 = vadd.f32 0.0, %v237
  %v239 = vpop.f32.mrb[0].mxu0
  %v240 = vpop.f32.mrb[0].mxu0
  %v241 = vadd.f32 0.0, %v240
  %v242 = vpop.f32.mrb[0].mxu0
  %243 = vmatprep.mubr.bf16.mxu0 0
  %244 = vmatmul.mubr.bf16.gmra.mrb[0].mxu0 %v192
  %v245 = vpop.f32.mrb[0].mxu0
  %v246 = vadd.f32 0.0, %v245
  %v247 = vpop.f32.mrb[0].mxu0
  %v248 = vpop.f32.mrb[0].mxu0
  %v249 = vadd.f32 0.0, %v248
  %v250 = vpop.f32.mrb[0].mxu0
  %251 = vmatprep.mubr.bf16.mxu0 0
  %252 = vmatmul.mubr.bf16.gmra.mrb[0].mxu0 %v195
  %v253 = vpop.f32.mrb[0].mxu0
  %v254 = vadd.f32 0.0, %v253
  %v255 = vpop.f32.mrb[0].mxu0
  %v256 = vpop.f32.mrb[0].mxu0
  %v257 = vadd.f32 0.0, %v256
  %v258 = vpop.f32.mrb[0].mxu0
  %259 = vmatprep.mubr.bf16.mxu0 0
  %260 = vmatmul.mubr.bf16.gmra.mrb[0].mxu0 %v198
  %v261 = vpop.f32.mrb[0].mxu0
  %v262 = vadd.f32 0.0, %v261
  %v263 = vpop.f32.mrb[0].mxu0
  %v264 = vpop.f32.mrb[0].mxu0
  %v265 = vadd.f32 0.0, %v264
  %v266 = vpop.f32.mrb[0].mxu0
  %267 = vmatprep.mubr.bf16.mxu0 0
  %268 = vmatmul.mubr.bf16.gmra.mrb[0].mxu0 %v201
  %v269 = vpop.f32.mrb[0].mxu0
  %v270 = vadd.f32 0.0, %v269
  %v271 = vpop.f32.mrb[0].mxu0
  %v272 = vpop.f32.mrb[0].mxu0
  %v273 = vpop.f32.mrb[0].mxu0
  %274 = vdwg.mxu0
  %v283 = vunpack.c.l.b16 %v107
  %v284 = vunpack.c.l.b16 %v108
  %v285 = vunpack.c.l.b16 %v109
  %v286 = vunpack.c.l.b16 %v110
  %v287 = vunpack.c.l.b16 %v111
  %v288 = vunpack.c.l.b16 %v112
  %v289 = vunpack.c.l.b16 %v113
  %v290 = vunpack.c.l.b16 %v114
  %v291 = vpack.c.b16 %v284, %v283
  %v292 = vpack.c.b16 %v286, %v285
  %v293 = vpack.c.b16 %v288, %v287
  %v294 = vpack.c.b16 %v290, %v289
  %v299 = vsel %vm187, %v101, 0
  %v301 = vsel %vm187, %v102, 0
  %v303 = vsel %vm187, %v103, 0
  %v305 = vsel %vm187, %v104, 0
  %v307 = vsel %vm187, %v105, 0
  %309 = vmatprep.subr.bf16.mxu0 0
  %310 = vmatpush1.bf16.msra.mxu0 %v291
  %311 = vmatprep.subr.bf16.mxu0 0
  %312 = vmatpush1.bf16.msra.mxu0 %v292
  %313 = vmatprep.subr.bf16.mxu0 0
  %314 = vmatpush1.bf16.msra.mxu0 %v293
  %315 = vmatprep.subr.bf16.mxu0 0
  %316 = vmatpush1.bf16.msra.mxu0 %v294
  %317 = vmatprep.subr.bf16.mxu0 0
  %318 = vmatpush1.bf16.msra.mxu0 0
  %319 = vmatprep.subr.bf16.mxu0 0
  %320 = vmatpush1.bf16.msra.mxu0 0
  %321 = vmatprep.subr.bf16.mxu0 0
  %322 = vmatpush1.bf16.msra.mxu0 0
  %323 = vmatprep.subr.bf16.mxu0 0
  %324 = vmatpush1.bf16.msra.mxu0 0
  %325 = vmatprep.subr.bf16.mxu0 0
  %326 = vmatpush1.bf16.msra.mxu0 0
  %327 = vmatprep.subr.bf16.mxu0 0
  %328 = vmatpush1.bf16.msra.mxu0 0
  %329 = vmatprep.subr.bf16.mxu0 0
  %330 = vmatpush1.bf16.msra.mxu0 0
  %331 = vmatprep.subr.bf16.mxu0 0
  %332 = vmatpush1.bf16.msra.mxu0 0
  %333 = vmatprep.subr.bf16.mxu0 0
  %334 = vmatpush1.bf16.msra.mxu0 0
  %335 = vmatprep.subr.bf16.mxu0 0
  %336 = vmatpush1.bf16.msra.mxu0 0
  %337 = vmatprep.subr.bf16.mxu0 0
  %338 = vmatpush1.bf16.msra.mxu0 0
  %339 = vmatprep.subr.bf16.mxu0 0
  %340 = vmatpush1.bf16.msra.mxu0 0
  %341 = vmatprep.mubr.bf16.mxu0 0
  %342 = vmatmul.mubr.bf16.gmra.mrb[0].mxu0 %v299
  %v343 = vpop.f32.mrb[0].mxu0
  %v344 = vadd.f32 %v238, %v343
  %v345 = vpop.f32.mrb[0].mxu0
  %v346 = vpop.f32.mrb[0].mxu0
  %v347 = vadd.f32 %v241, %v346
  %v348 = vpop.f32.mrb[0].mxu0
  %349 = vmatprep.mubr.bf16.mxu0 0
  %350 = vmatmul.mubr.bf16.gmra.mrb[0].mxu0 %v301
  %v351 = vpop.f32.mrb[0].mxu0
  %v352 = vadd.f32 %v246, %v351
  %v353 = vpop.f32.mrb[0].mxu0
  %v354 = vpop.f32.mrb[0].mxu0
  %v355 = vadd.f32 %v249, %v354
  %v356 = vpop.f32.mrb[0].mxu0
  %357 = vmatprep.mubr.bf16.mxu0 0
  %358 = vmatmul.mubr.bf16.gmra.mrb[0].mxu0 %v303
  %v359 = vpop.f32.mrb[0].mxu0
  %v360 = vadd.f32 %v254, %v359
  %v361 = vpop.f32.mrb[0].mxu0
  %v362 = vpop.f32.mrb[0].mxu0
  %v363 = vadd.f32 %v257, %v362
  %v364 = vpop.f32.mrb[0].mxu0
  %365 = vmatprep.mubr.bf16.mxu0 0
  %366 = vmatmul.mubr.bf16.gmra.mrb[0].mxu0 %v305
  %v367 = vpop.f32.mrb[0].mxu0
  %v368 = vadd.f32 %v262, %v367
  %v369 = vpop.f32.mrb[0].mxu0
  %v370 = vpop.f32.mrb[0].mxu0
  %v371 = vadd.f32 %v265, %v370
  %v372 = vpop.f32.mrb[0].mxu0
  %373 = vmatprep.mubr.bf16.mxu0 0
  %374 = vmatmul.mubr.bf16.gmra.mrb[0].mxu0 %v307
  %v375 = vpop.f32.mrb[0].mxu0
  %v376 = vadd.f32 %v270, %v375
  %v377 = vpop.f32.mrb[0].mxu0
  %v378 = vpop.f32.mrb[0].mxu0
  %v379 = vpop.f32.mrb[0].mxu0
  %380 = vdwg.mxu0
  %v381 = vld [vmem:[%s1 + $0x40] sm:$0xf]
  %v382 = vld [vmem:[%s1 + $0x44] sm:$0xf]
  %v383 = vld [vmem:[%s1 + $0x48] sm:$0xf]
  %v384 = vld [vmem:[%s1 + $0x4c] sm:$0xf]
  %v385 = vld [vmem:[%s1 + $0x50] sm:$0xf]
  %v386 = vld [vmem:[%s1 + $0x54] sm:$0xf]
  %v387 = vld [vmem:[%s1 + $0x58] sm:$0xf]
  %v388 = vld [vmem:[%s1 + $0x5c] sm:$0xf]
  %vm394 = vcmask 1046528
  %v395 = vrot.slane %v101, 1
  %v396 = vrot.slane %v102, 1
  %v397 = vsel %vm394, %v395, %v396
  %v398 = vrot.slane %v103, 1
  %v399 = vsel %vm394, %v396, %v398
  %v400 = vrot.slane %v104, 1
  %v401 = vsel %vm394, %v398, %v400
  %v402 = vrot.slane %v105, 1
  %v403 = vsel %vm394, %v400, %v402
  %v412 = vunpack.c.l.b16 %v381
  %v413 = vunpack.c.l.b16 %v382
  %v414 = vunpack.c.l.b16 %v383
  %v415 = vunpack.c.l.b16 %v384
  %v416 = vunpack.c.l.b16 %v385
  %v417 = vunpack.c.l.b16 %v386
  %v418 = vunpack.c.l.b16 %v387
  %v419 = vunpack.c.l.b16 %v388
  %v420 = vpack.c.b16 %v413, %v412
  %v421 = vpack.c.b16 %v415, %v414
  %v422 = vpack.c.b16 %v417, %v416
  %v423 = vpack.c.b16 %v419, %v418
  %v429 = vsel %vm187, %v397, 0
  %v432 = vsel %vm187, %v399, 0
  %v435 = vsel %vm187, %v401, 0
  %v438 = vsel %vm187, %v403, 0
  %v441 = vsel %vm187, %v402, 0
  %443 = vmatprep.subr.bf16.mxu0 0
  %444 = vmatpush1.bf16.msra.mxu0 %v420
  %445 = vmatprep.subr.bf16.mxu0 0
  %446 = vmatpush1.bf16.msra.mxu0 %v421
  %447 = vmatprep.subr.bf16.mxu0 0
  %448 = vmatpush1.bf16.msra.mxu0 %v422
  %449 = vmatprep.subr.bf16.mxu0 0
  %450 = vmatpush1.bf16.msra.mxu0 %v423
  %451 = vmatprep.subr.bf16.mxu0 0
  %452 = vmatpush1.bf16.msra.mxu0 0
  %453 = vmatprep.subr.bf16.mxu0 0
  %454 = vmatpush1.bf16.msra.mxu0 0
  %455 = vmatprep.subr.bf16.mxu0 0
  %456 = vmatpush1.bf16.msra.mxu0 0
  %457 = vmatprep.subr.bf16.mxu0 0
  %458 = vmatpush1.bf16.msra.mxu0 0
  %459 = vmatprep.subr.bf16.mxu0 0
  %460 = vmatpush1.bf16.msra.mxu0 0
  %461 = vmatprep.subr.bf16.mxu0 0
  %462 = vmatpush1.bf16.msra.mxu0 0
  %463 = vmatprep.subr.bf16.mxu0 0
  %464 = vmatpush1.bf16.msra.mxu0 0
  %465 = vmatprep.subr.bf16.mxu0 0
  %466 = vmatpush1.bf16.msra.mxu0 0
  %467 = vmatprep.subr.bf16.mxu0 0
  %468 = vmatpush1.bf16.msra.mxu0 0
  %469 = vmatprep.subr.bf16.mxu0 0
  %470 = vmatpush1.bf16.msra.mxu0 0
  %471 = vmatprep.subr.bf16.mxu0 0
  %472 = vmatpush1.bf16.msra.mxu0 0
  %473 = vmatprep.subr.bf16.mxu0 0
  %474 = vmatpush1.bf16.msra.mxu0 0
  %475 = vmatprep.mubr.bf16.mxu0 0
  %476 = vmatmul.mubr.bf16.gmra.mrb[0].mxu0 %v429
  %v477 = vpop.f32.mrb[0].mxu0
  %v478 = vadd.f32 0.0, %v477
  %v479 = vpop.f32.mrb[0].mxu0
  %v480 = vpop.f32.mrb[0].mxu0
  %v481 = vadd.f32 0.0, %v480
  %v482 = vpop.f32.mrb[0].mxu0
  %483 = vmatprep.mubr.bf16.mxu0 0
  %484 = vmatmul.mubr.bf16.gmra.mrb[0].mxu0 %v432
  %v485 = vpop.f32.mrb[0].mxu0
  %v486 = vadd.f32 0.0, %v485
  %v487 = vpop.f32.mrb[0].mxu0
  %v488 = vpop.f32.mrb[0].mxu0
  %v489 = vadd.f32 0.0, %v488
  %v490 = vpop.f32.mrb[0].mxu0
  %491 = vmatprep.mubr.bf16.mxu0 0
  %492 = vmatmul.mubr.bf16.gmra.mrb[0].mxu0 %v435
  %v493 = vpop.f32.mrb[0].mxu0
  %v494 = vadd.f32 0.0, %v493
  %v495 = vpop.f32.mrb[0].mxu0
  %v496 = vpop.f32.mrb[0].mxu0
  %v497 = vadd.f32 0.0, %v496
  %v498 = vpop.f32.mrb[0].mxu0
  %499 = vmatprep.mubr.bf16.mxu0 0
  %500 = vmatmul.mubr.bf16.gmra.mrb[0].mxu0 %v438
  %v501 = vpop.f32.mrb[0].mxu0
  %v502 = vadd.f32 0.0, %v501
  %v503 = vpop.f32.mrb[0].mxu0
  %v504 = vpop.f32.mrb[0].mxu0
  %v505 = vadd.f32 0.0, %v504
  %v506 = vpop.f32.mrb[0].mxu0
  %507 = vmatprep.mubr.bf16.mxu0 0
  %508 = vmatmul.mubr.bf16.gmra.mrb[0].mxu0 %v441
  %v509 = vpop.f32.mrb[0].mxu0
  %v510 = vadd.f32 0.0, %v509
  %v511 = vpop.f32.mrb[0].mxu0
  %v512 = vpop.f32.mrb[0].mxu0
  %v513 = vpop.f32.mrb[0].mxu0
  %514 = vdwg.mxu0
  %v515 = vadd.f32 %v344, %v478
  %v516 = vadd.f32 %v347, %v481
  %v517 = vadd.f32 %v352, %v486
  %v518 = vadd.f32 %v355, %v489
  %v519 = vadd.f32 %v360, %v494
  %v520 = vadd.f32 %v363, %v497
  %v521 = vadd.f32 %v368, %v502
  %v522 = vadd.f32 %v371, %v505
  %v523 = vadd.f32 %v376, %v510
  %v524 = vld [vmem:[%s1 + $0x60] sm:$0xf]
  %v525 = vld [vmem:[%s1 + $0x64] sm:$0xf]
  %v526 = vld [vmem:[%s1 + $0x68] sm:$0xf]
  %v527 = vld [vmem:[%s1 + $0x6c] sm:$0xf]
  %v528 = vld [vmem:[%s1 + $0x70] sm:$0xf]
  %v529 = vld [vmem:[%s1 + $0x74] sm:$0xf]
  %v530 = vld [vmem:[%s1 + $0x78] sm:$0xf]
  %v531 = vld [vmem:[%s1 + $0x7c] sm:$0xf]
  %vm532 = vcmask 1044480
  %v533 = vrot.slane %v101, 3
  %v534 = vrot.slane %v102, 3
  %v535 = vsel %vm532, %v533, %v534
  %v536 = vrot.slane %v103, 3
  %v537 = vsel %vm532, %v534, %v536
  %v538 = vrot.slane %v104, 3
  %v539 = vsel %vm532, %v536, %v538
  %v540 = vrot.slane %v105, 3
  %v541 = vsel %vm532, %v538, %v540
  %v550 = vunpack.c.l.b16 %v524
  %v551 = vunpack.c.l.b16 %v525
  %v552 = vunpack.c.l.b16 %v526
  %v553 = vunpack.c.l.b16 %v527
  %v554 = vunpack.c.l.b16 %v528
  %v555 = vunpack.c.l.b16 %v529
  %v556 = vunpack.c.l.b16 %v530
  %v557 = vunpack.c.l.b16 %v531
  %v558 = vpack.c.b16 %v551, %v550
  %v559 = vpack.c.b16 %v553, %v552
  %v560 = vpack.c.b16 %v555, %v554
  %v561 = vpack.c.b16 %v557, %v556
  %v567 = vsel %vm187, %v535, 0
  %v570 = vsel %vm187, %v537, 0
  %v573 = vsel %vm187, %v539, 0
  %v576 = vsel %vm187, %v541, 0
  %v579 = vsel %vm187, %v540, 0
  %581 = vmatprep.subr.bf16.mxu0 0
  %582 = vmatpush1.bf16.msra.mxu0 %v558
  %583 = vmatprep.subr.bf16.mxu0 0
  %584 = vmatpush1.bf16.msra.mxu0 %v559
  %585 = vmatprep.subr.bf16.mxu0 0
  %586 = vmatpush1.bf16.msra.mxu0 %v560
  %587 = vmatprep.subr.bf16.mxu0 0
  %588 = vmatpush1.bf16.msra.mxu0 %v561
  %589 = vmatprep.subr.bf16.mxu0 0
  %590 = vmatpush1.bf16.msra.mxu0 0
  %591 = vmatprep.subr.bf16.mxu0 0
  %592 = vmatpush1.bf16.msra.mxu0 0
  %593 = vmatprep.subr.bf16.mxu0 0
  %594 = vmatpush1.bf16.msra.mxu0 0
  %595 = vmatprep.subr.bf16.mxu0 0
  %596 = vmatpush1.bf16.msra.mxu0 0
  %597 = vmatprep.subr.bf16.mxu0 0
  %598 = vmatpush1.bf16.msra.mxu0 0
  %599 = vmatprep.subr.bf16.mxu0 0
  %600 = vmatpush1.bf16.msra.mxu0 0
  %601 = vmatprep.subr.bf16.mxu0 0
  %602 = vmatpush1.bf16.msra.mxu0 0
  %603 = vmatprep.subr.bf16.mxu0 0
  %604 = vmatpush1.bf16.msra.mxu0 0
  %605 = vmatprep.subr.bf16.mxu0 0
  %606 = vmatpush1.bf16.msra.mxu0 0
  %607 = vmatprep.subr.bf16.mxu0 0
  %608 = vmatpush1.bf16.msra.mxu0 0
  %609 = vmatprep.subr.bf16.mxu0 0
  %610 = vmatpush1.bf16.msra.mxu0 0
  %611 = vmatprep.subr.bf16.mxu0 0
  %612 = vmatpush1.bf16.msra.mxu0 0
  %613 = vmatprep.mubr.bf16.mxu0 0
  %614 = vmatmul.mubr.bf16.gmra.mrb[0].mxu0 %v567
  %v615 = vpop.f32.mrb[0].mxu0
  %v616 = vadd.f32 0.0, %v615
  %v617 = vpop.f32.mrb[0].mxu0
  %v618 = vpop.f32.mrb[0].mxu0
  %v619 = vadd.f32 0.0, %v618
  %v620 = vpop.f32.mrb[0].mxu0
  %621 = vmatprep.mubr.bf16.mxu0 0
  %622 = vmatmul.mubr.bf16.gmra.mrb[0].mxu0 %v570
  %v623 = vpop.f32.mrb[0].mxu0
  %v624 = vadd.f32 0.0, %v623
  %v625 = vpop.f32.mrb[0].mxu0
  %v626 = vpop.f32.mrb[0].mxu0
  %v627 = vadd.f32 0.0, %v626
  %v628 = vpop.f32.mrb[0].mxu0
  %629 = vmatprep.mubr.bf16.mxu0 0
  %630 = vmatmul.mubr.bf16.gmra.mrb[0].mxu0 %v573
  %v631 = vpop.f32.mrb[0].mxu0
  %v632 = vadd.f32 0.0, %v631
  %v633 = vpop.f32.mrb[0].mxu0
  %v634 = vpop.f32.mrb[0].mxu0
  %v635 = vadd.f32 0.0, %v634
  %v636 = vpop.f32.mrb[0].mxu0
  %637 = vmatprep.mubr.bf16.mxu0 0
  %638 = vmatmul.mubr.bf16.gmra.mrb[0].mxu0 %v576
  %v639 = vpop.f32.mrb[0].mxu0
  %v640 = vadd.f32 0.0, %v639
  %v641 = vpop.f32.mrb[0].mxu0
  %v642 = vpop.f32.mrb[0].mxu0
  %v643 = vadd.f32 0.0, %v642
  %v644 = vpop.f32.mrb[0].mxu0
  %645 = vmatprep.mubr.bf16.mxu0 0
  %646 = vmatmul.mubr.bf16.gmra.mrb[0].mxu0 %v579
  %v647 = vpop.f32.mrb[0].mxu0
  %v648 = vadd.f32 0.0, %v647
  %v649 = vpop.f32.mrb[0].mxu0
  %v650 = vpop.f32.mrb[0].mxu0
  %v651 = vpop.f32.mrb[0].mxu0
  %652 = vdwg.mxu0
  %v653 = vadd.f32 %v515, %v616
  %v654 = vadd.f32 %v516, %v619
  %v655 = vadd.f32 %v517, %v624
  %v656 = vadd.f32 %v518, %v627
  %v657 = vadd.f32 %v519, %v632
  %v658 = vadd.f32 %v520, %v635
  %v659 = vadd.f32 %v521, %v640
  %v660 = vadd.f32 %v522, %v643
  %v661 = vadd.f32 %v523, %v648
  %v662 = vld [vmem:[%s1 + $0x80] sm:$0xf]
  %v663 = vld [vmem:[%s1 + $0x84] sm:$0xf]
  %v664 = vld [vmem:[%s1 + $0x88] sm:$0xf]
  %v665 = vld [vmem:[%s1 + $0x8c] sm:$0xf]
  %v666 = vld [vmem:[%s1 + $0x90] sm:$0xf]
  %v667 = vld [vmem:[%s1 + $0x94] sm:$0xf]
  %v668 = vld [vmem:[%s1 + $0x98] sm:$0xf]
  %v669 = vld [vmem:[%s1 + $0x9c] sm:$0xf]
  %vm670 = vsmask.f32 4352
  %v671 = vrot.slane %v125, 3
  %v672 = vrot.slane %v127, 4
  %v673 = vor.u32 %v671, %v672
  %v674 = vrot.slane %v136, 3
  %v675 = vrot.slane %v132, 4
  %v676 = vor.u32 %v674, %v675
  %v677 = vsel %vm670, %v673, %v676
  %v678 = vrot.slane %v144, 3
  %v679 = vrot.slane %v140, 4
  %v680 = vor.u32 %v678, %v679
  %v681 = vsel %vm670, %v676, %v680
  %v682 = vrot.slane %v152, 3
  %v683 = vrot.slane %v148, 4
  %v684 = vor.u32 %v682, %v683
  %v685 = vsel %vm670, %v680, %v684
  %v686 = vrot.slane %v160, 3
  %v687 = vrot.slane %v156, 4
  %v688 = vor.u32 %v686, %v687
  %v689 = vsel %vm670, %v684, %v688
  %v698 = vunpack.c.l.b16 %v662
  %v699 = vunpack.c.l.b16 %v663
  %v700 = vunpack.c.l.b16 %v664
  %v701 = vunpack.c.l.b16 %v665
  %v702 = vunpack.c.l.b16 %v666
  %v703 = vunpack.c.l.b16 %v667
  %v704 = vunpack.c.l.b16 %v668
  %v705 = vunpack.c.l.b16 %v669
  %v706 = vpack.c.b16 %v699, %v698
  %v707 = vpack.c.b16 %v701, %v700
  %v708 = vpack.c.b16 %v703, %v702
  %v709 = vpack.c.b16 %v705, %v704
  %v715 = vsel %vm187, %v677, 0
  %v718 = vsel %vm187, %v681, 0
  %v721 = vsel %vm187, %v685, 0
  %v724 = vsel %vm187, %v689, 0
  %v727 = vsel %vm187, %v688, 0
  %729 = vmatprep.subr.bf16.mxu0 0
  %730 = vmatpush1.bf16.msra.mxu0 %v706
  %731 = vmatprep.subr.bf16.mxu0 0
  %732 = vmatpush1.bf16.msra.mxu0 %v707
  %733 = vmatprep.subr.bf16.mxu0 0
  %734 = vmatpush1.bf16.msra.mxu0 %v708
  %735 = vmatprep.subr.bf16.mxu0 0
  %736 = vmatpush1.bf16.msra.mxu0 %v709
  %737 = vmatprep.subr.bf16.mxu0 0
  %738 = vmatpush1.bf16.msra.mxu0 0
  %739 = vmatprep.subr.bf16.mxu0 0
  %740 = vmatpush1.bf16.msra.mxu0 0
  %741 = vmatprep.subr.bf16.mxu0 0
  %742 = vmatpush1.bf16.msra.mxu0 0
  %743 = vmatprep.subr.bf16.mxu0 0
  %744 = vmatpush1.bf16.msra.mxu0 0
  %745 = vmatprep.subr.bf16.mxu0 0
  %746 = vmatpush1.bf16.msra.mxu0 0
  %747 = vmatprep.subr.bf16.mxu0 0
  %748 = vmatpush1.bf16.msra.mxu0 0
  %749 = vmatprep.subr.bf16.mxu0 0
  %750 = vmatpush1.bf16.msra.mxu0 0
  %751 = vmatprep.subr.bf16.mxu0 0
  %752 = vmatpush1.bf16.msra.mxu0 0
  %753 = vmatprep.subr.bf16.mxu0 0
  %754 = vmatpush1.bf16.msra.mxu0 0
  %755 = vmatprep.subr.bf16.mxu0 0
  %756 = vmatpush1.bf16.msra.mxu0 0
  %757 = vmatprep.subr.bf16.mxu0 0
  %758 = vmatpush1.bf16.msra.mxu0 0
  %759 = vmatprep.subr.bf16.mxu0 0
  %760 = vmatpush1.bf16.msra.mxu0 0
  %761 = vmatprep.mubr.bf16.mxu0 0
  %762 = vmatmul.mubr.bf16.gmra.mrb[0].mxu0 %v715
  %v763 = vpop.f32.mrb[0].mxu0
  %v764 = vadd.f32 0.0, %v763
  %v765 = vpop.f32.mrb[0].mxu0
  %v766 = vpop.f32.mrb[0].mxu0
  %v767 = vadd.f32 0.0, %v766
  %v768 = vpop.f32.mrb[0].mxu0
  %769 = vmatprep.mubr.bf16.mxu0 0
  %770 = vmatmul.mubr.bf16.gmra.mrb[0].mxu0 %v718
  %v771 = vpop.f32.mrb[0].mxu0
  %v772 = vadd.f32 0.0, %v771
  %v773 = vpop.f32.mrb[0].mxu0
  %v774 = vpop.f32.mrb[0].mxu0
  %v775 = vadd.f32 0.0, %v774
  %v776 = vpop.f32.mrb[0].mxu0
  %777 = vmatprep.mubr.bf16.mxu0 0
  %778 = vmatmul.mubr.bf16.gmra.mrb[0].mxu0 %v721
  %v779 = vpop.f32.mrb[0].mxu0
  %v780 = vadd.f32 0.0, %v779
  %v781 = vpop.f32.mrb[0].mxu0
  %v782 = vpop.f32.mrb[0].mxu0
  %v783 = vadd.f32 0.0, %v782
  %v784 = vpop.f32.mrb[0].mxu0
  %785 = vmatprep.mubr.bf16.mxu0 0
  %786 = vmatmul.mubr.bf16.gmra.mrb[0].mxu0 %v724
  %v787 = vpop.f32.mrb[0].mxu0
  %v788 = vadd.f32 0.0, %v787
  %v789 = vpop.f32.mrb[0].mxu0
  %v790 = vpop.f32.mrb[0].mxu0
  %v791 = vadd.f32 0.0, %v790
  %v792 = vpop.f32.mrb[0].mxu0
  %793 = vmatprep.mubr.bf16.mxu0 0
  %794 = vmatmul.mubr.bf16.gmra.mrb[0].mxu0 %v727
  %v795 = vpop.f32.mrb[0].mxu0
  %v796 = vadd.f32 0.0, %v795
  %v797 = vpop.f32.mrb[0].mxu0
  %v798 = vpop.f32.mrb[0].mxu0
  %v799 = vpop.f32.mrb[0].mxu0
  %800 = vdwg.mxu0
  %v801 = vadd.f32 %v653, %v764
  %v802 = vadd.f32 %v654, %v767
  %v803 = vadd.f32 %v655, %v772
  %v804 = vadd.f32 %v656, %v775
  %v805 = vadd.f32 %v657, %v780
  %v806 = vadd.f32 %v658, %v783
  %v807 = vadd.f32 %v659, %v788
  %v808 = vadd.f32 %v660, %v791
  %v809 = vadd.f32 %v661, %v796
  %v810 = vld [vmem:[%s1 + $0xa0] sm:$0xf]
  %v811 = vld [vmem:[%s1 + $0xa4] sm:$0xf]
  %v812 = vld [vmem:[%s1 + $0xa8] sm:$0xf]
  %v813 = vld [vmem:[%s1 + $0xac] sm:$0xf]
  %v814 = vld [vmem:[%s1 + $0xb0] sm:$0xf]
  %v815 = vld [vmem:[%s1 + $0xb4] sm:$0xf]
  %v816 = vld [vmem:[%s1 + $0xb8] sm:$0xf]
  %v817 = vld [vmem:[%s1 + $0xbc] sm:$0xf]
  %vm818 = vcmask 1043456
  %v819 = vrot.slane %v101, 4
  %v820 = vrot.slane %v102, 4
  %v821 = vsel %vm818, %v819, %v820
  %v822 = vrot.slane %v103, 4
  %v823 = vsel %vm818, %v820, %v822
  %v824 = vrot.slane %v104, 4
  %v825 = vsel %vm818, %v822, %v824
  %v826 = vrot.slane %v105, 4
  %v827 = vsel %vm818, %v824, %v826
  %v836 = vunpack.c.l.b16 %v810
  %v837 = vunpack.c.l.b16 %v811
  %v838 = vunpack.c.l.b16 %v812
  %v839 = vunpack.c.l.b16 %v813
  %v840 = vunpack.c.l.b16 %v814
  %v841 = vunpack.c.l.b16 %v815
  %v842 = vunpack.c.l.b16 %v816
  %v843 = vunpack.c.l.b16 %v817
  %v844 = vpack.c.b16 %v837, %v836
  %v845 = vpack.c.b16 %v839, %v838
  %v846 = vpack.c.b16 %v841, %v840
  %v847 = vpack.c.b16 %v843, %v842
  %v853 = vsel %vm187, %v821, 0
  %v856 = vsel %vm187, %v823, 0
  %v859 = vsel %vm187, %v825, 0
  %v862 = vsel %vm187, %v827, 0
  %v865 = vsel %vm187, %v826, 0
  %867 = vmatprep.subr.bf16.mxu0 0
  %868 = vmatpush1.bf16.msra.mxu0 %v844
  %869 = vmatprep.subr.bf16.mxu0 0
  %870 = vmatpush1.bf16.msra.mxu0 %v845
  %871 = vmatprep.subr.bf16.mxu0 0
  %872 = vmatpush1.bf16.msra.mxu0 %v846
  %873 = vmatprep.subr.bf16.mxu0 0
  %874 = vmatpush1.bf16.msra.mxu0 %v847
  %875 = vmatprep.subr.bf16.mxu0 0
  %876 = vmatpush1.bf16.msra.mxu0 0
  %877 = vmatprep.subr.bf16.mxu0 0
  %878 = vmatpush1.bf16.msra.mxu0 0
  %879 = vmatprep.subr.bf16.mxu0 0
  %880 = vmatpush1.bf16.msra.mxu0 0
  %881 = vmatprep.subr.bf16.mxu0 0
  %882 = vmatpush1.bf16.msra.mxu0 0
  %883 = vmatprep.subr.bf16.mxu0 0
  %884 = vmatpush1.bf16.msra.mxu0 0
  %885 = vmatprep.subr.bf16.mxu0 0
  %886 = vmatpush1.bf16.msra.mxu0 0
  %887 = vmatprep.subr.bf16.mxu0 0
  %888 = vmatpush1.bf16.msra.mxu0 0
  %889 = vmatprep.subr.bf16.mxu0 0
  %890 = vmatpush1.bf16.msra.mxu0 0
  %891 = vmatprep.subr.bf16.mxu0 0
  %892 = vmatpush1.bf16.msra.mxu0 0
  %893 = vmatprep.subr.bf16.mxu0 0
  %894 = vmatpush1.bf16.msra.mxu0 0
  %895 = vmatprep.subr.bf16.mxu0 0
  %896 = vmatpush1.bf16.msra.mxu0 0
  %897 = vmatprep.subr.bf16.mxu0 0
  %898 = vmatpush1.bf16.msra.mxu0 0
  %899 = vmatprep.mubr.bf16.mxu0 0
  %900 = vmatmul.mubr.bf16.gmra.mrb[0].mxu0 %v853
  %v901 = vpop.f32.mrb[0].mxu0
  %v902 = vadd.f32 0.0, %v901
  %v903 = vpop.f32.mrb[0].mxu0
  %v904 = vpop.f32.mrb[0].mxu0
  %v905 = vadd.f32 0.0, %v904
  %v906 = vpop.f32.mrb[0].mxu0
  %907 = vmatprep.mubr.bf16.mxu0 0
  %908 = vmatmul.mubr.bf16.gmra.mrb[0].mxu0 %v856
  %v909 = vpop.f32.mrb[0].mxu0
  %v910 = vadd.f32 0.0, %v909
  %v911 = vpop.f32.mrb[0].mxu0
  %v912 = vpop.f32.mrb[0].mxu0
  %v913 = vadd.f32 0.0, %v912
  %v914 = vpop.f32.mrb[0].mxu0
  %915 = vmatprep.mubr.bf16.mxu0 0
  %916 = vmatmul.mubr.bf16.gmra.mrb[0].mxu0 %v859
  %v917 = vpop.f32.mrb[0].mxu0
  %v918 = vadd.f32 0.0, %v917
  %v919 = vpop.f32.mrb[0].mxu0
  %v920 = vpop.f32.mrb[0].mxu0
  %v921 = vadd.f32 0.0, %v920
  %v922 = vpop.f32.mrb[0].mxu0
  %923 = vmatprep.mubr.bf16.mxu0 0
  %924 = vmatmul.mubr.bf16.gmra.mrb[0].mxu0 %v862
  %v925 = vpop.f32.mrb[0].mxu0
  %v926 = vadd.f32 0.0, %v925
  %v927 = vpop.f32.mrb[0].mxu0
  %v928 = vpop.f32.mrb[0].mxu0
  %v929 = vadd.f32 0.0, %v928
  %v930 = vpop.f32.mrb[0].mxu0
  %931 = vmatprep.mubr.bf16.mxu0 0
  %932 = vmatmul.mubr.bf16.gmra.mrb[0].mxu0 %v865
  %v933 = vpop.f32.mrb[0].mxu0
  %v934 = vadd.f32 0.0, %v933
  %v935 = vpop.f32.mrb[0].mxu0
  %v936 = vpop.f32.mrb[0].mxu0
  %v937 = vpop.f32.mrb[0].mxu0
  %938 = vdwg.mxu0
  %v939 = vadd.f32 %v801, %v902
  %v940 = vadd.f32 %v802, %v905
  %v941 = vadd.f32 %v803, %v910
  %v942 = vadd.f32 %v804, %v913
  %v943 = vadd.f32 %v805, %v918
  %v944 = vadd.f32 %v806, %v921
  %v945 = vadd.f32 %v807, %v926
  %v946 = vadd.f32 %v808, %v929
  %v947 = vadd.f32 %v809, %v934
  %v948 = vld [vmem:[%s1 + $0xc0] sm:$0xf]
  %v949 = vld [vmem:[%s1 + $0xc4] sm:$0xf]
  %v950 = vld [vmem:[%s1 + $0xc8] sm:$0xf]
  %v951 = vld [vmem:[%s1 + $0xcc] sm:$0xf]
  %v952 = vld [vmem:[%s1 + $0xd0] sm:$0xf]
  %v953 = vld [vmem:[%s1 + $0xd4] sm:$0xf]
  %v954 = vld [vmem:[%s1 + $0xd8] sm:$0xf]
  %v955 = vld [vmem:[%s1 + $0xdc] sm:$0xf]
  %vm957 = vcmask 1041408
  %v958 = vrot.slane %v101, 6
  %v959 = vrot.slane %v102, 6
  %v960 = vsel %vm957, %v958, %v959
  %v961 = vrot.slane %v103, 6
  %v962 = vsel %vm957, %v959, %v961
  %v963 = vrot.slane %v104, 6
  %v964 = vsel %vm957, %v961, %v963
  %v965 = vrot.slane %v105, 6
  %v966 = vsel %vm957, %v963, %v965
  %v967 = vrot.slane %v106, 6
  %v968 = vsel %vm957, %v965, %v967
  %v977 = vunpack.c.l.b16 %v948
  %v978 = vunpack.c.l.b16 %v949
  %v979 = vunpack.c.l.b16 %v950
  %v980 = vunpack.c.l.b16 %v951
  %v981 = vunpack.c.l.b16 %v952
  %v982 = vunpack.c.l.b16 %v953
  %v983 = vunpack.c.l.b16 %v954
  %v984 = vunpack.c.l.b16 %v955
  %v985 = vpack.c.b16 %v978, %v977
  %v986 = vpack.c.b16 %v980, %v979
  %v987 = vpack.c.b16 %v982, %v981
  %v988 = vpack.c.b16 %v984, %v983
  %v994 = vsel %vm187, %v960, 0
  %v997 = vsel %vm187, %v962, 0
  %v1000 = vsel %vm187, %v964, 0
  %v1003 = vsel %vm187, %v966, 0
  %v1006 = vsel %vm187, %v968, 0
  %1008 = vmatprep.subr.bf16.mxu0 0
  %1009 = vmatpush1.bf16.msra.mxu0 %v985
  %1010 = vmatprep.subr.bf16.mxu0 0
  %1011 = vmatpush1.bf16.msra.mxu0 %v986
  %1012 = vmatprep.subr.bf16.mxu0 0
  %1013 = vmatpush1.bf16.msra.mxu0 %v987
  %1014 = vmatprep.subr.bf16.mxu0 0
  %1015 = vmatpush1.bf16.msra.mxu0 %v988
  %1016 = vmatprep.subr.bf16.mxu0 0
  %1017 = vmatpush1.bf16.msra.mxu0 0
  %1018 = vmatprep.subr.bf16.mxu0 0
  %1019 = vmatpush1.bf16.msra.mxu0 0
  %1020 = vmatprep.subr.bf16.mxu0 0
  %1021 = vmatpush1.bf16.msra.mxu0 0
  %1022 = vmatprep.subr.bf16.mxu0 0
  %1023 = vmatpush1.bf16.msra.mxu0 0
  %1024 = vmatprep.subr.bf16.mxu0 0
  %1025 = vmatpush1.bf16.msra.mxu0 0
  %1026 = vmatprep.subr.bf16.mxu0 0
  %1027 = vmatpush1.bf16.msra.mxu0 0
  %1028 = vmatprep.subr.bf16.mxu0 0
  %1029 = vmatpush1.bf16.msra.mxu0 0
  %1030 = vmatprep.subr.bf16.mxu0 0
  %1031 = vmatpush1.bf16.msra.mxu0 0
  %1032 = vmatprep.subr.bf16.mxu0 0
  %1033 = vmatpush1.bf16.msra.mxu0 0
  %1034 = vmatprep.subr.bf16.mxu0 0
  %1035 = vmatpush1.bf16.msra.mxu0 0
  %1036 = vmatprep.subr.bf16.mxu0 0
  %1037 = vmatpush1.bf16.msra.mxu0 0
  %1038 = vmatprep.subr.bf16.mxu0 0
  %1039 = vmatpush1.bf16.msra.mxu0 0
  %1040 = vmatprep.mubr.bf16.mxu0 0
  %1041 = vmatmul.mubr.bf16.gmra.mrb[0].mxu0 %v994
  %v1042 = vpop.f32.mrb[0].mxu0
  %v1043 = vadd.f32 0.0, %v1042
  %v1044 = vpop.f32.mrb[0].mxu0
  %v1045 = vpop.f32.mrb[0].mxu0
  %v1046 = vadd.f32 0.0, %v1045
  %v1047 = vpop.f32.mrb[0].mxu0
  %1048 = vmatprep.mubr.bf16.mxu0 0
  %1049 = vmatmul.mubr.bf16.gmra.mrb[0].mxu0 %v997
  %v1050 = vpop.f32.mrb[0].mxu0
  %v1051 = vadd.f32 0.0, %v1050
  %v1052 = vpop.f32.mrb[0].mxu0
  %v1053 = vpop.f32.mrb[0].mxu0
  %v1054 = vadd.f32 0.0, %v1053
  %v1055 = vpop.f32.mrb[0].mxu0
  %1056 = vmatprep.mubr.bf16.mxu0 0
  %1057 = vmatmul.mubr.bf16.gmra.mrb[0].mxu0 %v1000
  %v1058 = vpop.f32.mrb[0].mxu0
  %v1059 = vadd.f32 0.0, %v1058
  %v1060 = vpop.f32.mrb[0].mxu0
  %v1061 = vpop.f32.mrb[0].mxu0
  %v1062 = vadd.f32 0.0, %v1061
  %v1063 = vpop.f32.mrb[0].mxu0
  %1064 = vmatprep.mubr.bf16.mxu0 0
  %1065 = vmatmul.mubr.bf16.gmra.mrb[0].mxu0 %v1003
  %v1066 = vpop.f32.mrb[0].mxu0
  %v1067 = vadd.f32 0.0, %v1066
  %v1068 = vpop.f32.mrb[0].mxu0
  %v1069 = vpop.f32.mrb[0].mxu0
  %v1070 = vadd.f32 0.0, %v1069
  %v1071 = vpop.f32.mrb[0].mxu0
  %1072 = vmatprep.mubr.bf16.mxu0 0
  %1073 = vmatmul.mubr.bf16.gmra.mrb[0].mxu0 %v1006
  %v1074 = vpop.f32.mrb[0].mxu0
  %v1075 = vadd.f32 0.0, %v1074
  %v1076 = vpop.f32.mrb[0].mxu0
  %v1077 = vpop.f32.mrb[0].mxu0
  %v1078 = vpop.f32.mrb[0].mxu0
  %1079 = vdwg.mxu0
  %v1080 = vadd.f32 %v939, %v1043
  %v1081 = vadd.f32 %v940, %v1046
  %v1082 = vadd.f32 %v941, %v1051
  %v1083 = vadd.f32 %v942, %v1054
  %v1084 = vadd.f32 %v943, %v1059
  %v1085 = vadd.f32 %v944, %v1062
  %v1086 = vadd.f32 %v945, %v1067
  %v1087 = vadd.f32 %v946, %v1070
  %v1088 = vadd.f32 %v947, %v1075
  %v1089 = vld [vmem:[%s1 + $0xe0] sm:$0xf]
  %v1090 = vld [vmem:[%s1 + $0xe4] sm:$0xf]
  %v1091 = vld [vmem:[%s1 + $0xe8] sm:$0xf]
  %v1092 = vld [vmem:[%s1 + $0xec] sm:$0xf]
  %v1093 = vld [vmem:[%s1 + $0xf0] sm:$0xf]
  %v1094 = vld [vmem:[%s1 + $0xf4] sm:$0xf]
  %v1095 = vld [vmem:[%s1 + $0xf8] sm:$0xf]
  %v1096 = vld [vmem:[%s1 + $0xfc] sm:$0xf]
  %vm1097 = vsmask.f32 1280
  %v1098 = vrot.slane %v125, 6
  %v1099 = vrot.slane %v127, 7
  %v1100 = vor.u32 %v1098, %v1099
  %v1101 = vrot.slane %v136, 6
  %v1102 = vrot.slane %v132, 7
  %v1103 = vor.u32 %v1101, %v1102
  %v1104 = vsel %vm1097, %v1100, %v1103
  %v1105 = vrot.slane %v144, 6
  %v1106 = vrot.slane %v140, 7
  %v1107 = vor.u32 %v1105, %v1106
  %v1108 = vsel %vm1097, %v1103, %v1107
  %v1109 = vrot.slane %v152, 6
  %v1110 = vrot.slane %v148, 7
  %v1111 = vor.u32 %v1109, %v1110
  %v1112 = vsel %vm1097, %v1107, %v1111
  %v1113 = vrot.slane %v160, 6
  %v1114 = vrot.slane %v156, 7
  %v1115 = vor.u32 %v1113, %v1114
  %v1116 = vsel %vm1097, %v1111, %v1115
  %v1118 = vshrl.u32 %v106, 16
  %v1120 = vrot.slane %v1118, 6
  %v1121 = vshll.u32 %v106, 16
  %v1123 = vrot.slane %v1121, 7
  %v1124 = vor.u32 %v1120, %v1123
  %v1125 = vsel %vm1097, %v1115, %v1124
  %v1134 = vunpack.c.l.b16 %v1089
  %v1135 = vunpack.c.l.b16 %v1090
  %v1136 = vunpack.c.l.b16 %v1091
  %v1137 = vunpack.c.l.b16 %v1092
  %v1138 = vunpack.c.l.b16 %v1093
  %v1139 = vunpack.c.l.b16 %v1094
  %v1140 = vunpack.c.l.b16 %v1095
  %v1141 = vunpack.c.l.b16 %v1096
  %v1142 = vpack.c.b16 %v1135, %v1134
  %v1143 = vpack.c.b16 %v1137, %v1136
  %v1144 = vpack.c.b16 %v1139, %v1138
  %v1145 = vpack.c.b16 %v1141, %v1140
  %v1151 = vsel %vm187, %v1104, 0
  %v1154 = vsel %vm187, %v1108, 0
  %v1157 = vsel %vm187, %v1112, 0
  %v1160 = vsel %vm187, %v1116, 0
  %v1163 = vsel %vm187, %v1125, 0
  %1165 = vmatprep.subr.bf16.mxu0 0
  %1166 = vmatpush1.bf16.msra.mxu0 %v1142
  %1167 = vmatprep.subr.bf16.mxu0 0
  %1168 = vmatpush1.bf16.msra.mxu0 %v1143
  %1169 = vmatprep.subr.bf16.mxu0 0
  %1170 = vmatpush1.bf16.msra.mxu0 %v1144
  %1171 = vmatprep.subr.bf16.mxu0 0
  %1172 = vmatpush1.bf16.msra.mxu0 %v1145
  %1173 = vmatprep.subr.bf16.mxu0 0
  %1174 = vmatpush1.bf16.msra.mxu0 0
  %1175 = vmatprep.subr.bf16.mxu0 0
  %1176 = vmatpush1.bf16.msra.mxu0 0
  %1177 = vmatprep.subr.bf16.mxu0 0
  %1178 = vmatpush1.bf16.msra.mxu0 0
  %1179 = vmatprep.subr.bf16.mxu0 0
  %1180 = vmatpush1.bf16.msra.mxu0 0
  %1181 = vmatprep.subr.bf16.mxu0 0
  %1182 = vmatpush1.bf16.msra.mxu0 0
  %1183 = vmatprep.subr.bf16.mxu0 0
  %1184 = vmatpush1.bf16.msra.mxu0 0
  %1185 = vmatprep.subr.bf16.mxu0 0
  %1186 = vmatpush1.bf16.msra.mxu0 0
  %1187 = vmatprep.subr.bf16.mxu0 0
  %1188 = vmatpush1.bf16.msra.mxu0 0
  %1189 = vmatprep.subr.bf16.mxu0 0
  %1190 = vmatpush1.bf16.msra.mxu0 0
  %1191 = vmatprep.subr.bf16.mxu0 0
  %1192 = vmatpush1.bf16.msra.mxu0 0
  %1193 = vmatprep.subr.bf16.mxu0 0
  %1194 = vmatpush1.bf16.msra.mxu0 0
  %1195 = vmatprep.subr.bf16.mxu0 0
  %1196 = vmatpush1.bf16.msra.mxu0 0
  %1197 = vmatprep.mubr.bf16.mxu0 0
  %1198 = vmatmul.mubr.bf16.gmra.mrb[0].mxu0 %v1151
  %v1199 = vpop.f32.mrb[0].mxu0
  %v1200 = vadd.f32 0.0, %v1199
  %v1201 = vpop.f32.mrb[0].mxu0
  %v1202 = vpop.f32.mrb[0].mxu0
  %v1203 = vadd.f32 0.0, %v1202
  %v1204 = vpop.f32.mrb[0].mxu0
  %1205 = vmatprep.mubr.bf16.mxu0 0
  %1206 = vmatmul.mubr.bf16.gmra.mrb[0].mxu0 %v1154
  %v1207 = vpop.f32.mrb[0].mxu0
  %v1208 = vadd.f32 0.0, %v1207
  %v1209 = vpop.f32.mrb[0].mxu0
  %v1210 = vpop.f32.mrb[0].mxu0
  %v1211 = vadd.f32 0.0, %v1210
  %v1212 = vpop.f32.mrb[0].mxu0
  %1213 = vmatprep.mubr.bf16.mxu0 0
  %1214 = vmatmul.mubr.bf16.gmra.mrb[0].mxu0 %v1157
  %v1215 = vpop.f32.mrb[0].mxu0
  %v1216 = vadd.f32 0.0, %v1215
  %v1217 = vpop.f32.mrb[0].mxu0
  %v1218 = vpop.f32.mrb[0].mxu0
  %v1219 = vadd.f32 0.0, %v1218
  %v1220 = vpop.f32.mrb[0].mxu0
  %1221 = vmatprep.mubr.bf16.mxu0 0
  %1222 = vmatmul.mubr.bf16.gmra.mrb[0].mxu0 %v1160
  %v1223 = vpop.f32.mrb[0].mxu0
  %v1224 = vadd.f32 0.0, %v1223
  %v1225 = vpop.f32.mrb[0].mxu0
  %v1226 = vpop.f32.mrb[0].mxu0
  %v1227 = vadd.f32 0.0, %v1226
  %v1228 = vpop.f32.mrb[0].mxu0
  %1229 = vmatprep.mubr.bf16.mxu0 0
  %1230 = vmatmul.mubr.bf16.gmra.mrb[0].mxu0 %v1163
  %v1231 = vpop.f32.mrb[0].mxu0
  %v1232 = vadd.f32 0.0, %v1231
  %v1233 = vpop.f32.mrb[0].mxu0
  %v1234 = vpop.f32.mrb[0].mxu0
  %v1235 = vpop.f32.mrb[0].mxu0
  %1236 = vdwg.mxu0
  %v1237 = vadd.f32 %v1080, %v1200
  %v1238 = vadd.f32 %v1081, %v1203
  %v1239 = vadd.f32 %v1082, %v1208
  %v1240 = vadd.f32 %v1083, %v1211
  %v1241 = vadd.f32 %v1084, %v1216
  %v1242 = vadd.f32 %v1085, %v1219
  %v1243 = vadd.f32 %v1086, %v1224
  %v1244 = vadd.f32 %v1087, %v1227
  %v1245 = vadd.f32 %v1088, %v1232
  %v1246 = vld [vmem:[%s1 + $0x100] sm:$0xf]
  %v1247 = vld [vmem:[%s1 + $0x104] sm:$0xf]
  %v1248 = vld [vmem:[%s1 + $0x108] sm:$0xf]
  %v1249 = vld [vmem:[%s1 + $0x10c] sm:$0xf]
  %v1250 = vld [vmem:[%s1 + $0x110] sm:$0xf]
  %v1251 = vld [vmem:[%s1 + $0x114] sm:$0xf]
  %v1252 = vld [vmem:[%s1 + $0x118] sm:$0xf]
  %v1253 = vld [vmem:[%s1 + $0x11c] sm:$0xf]
  %vm1254 = vcmask 1040384
  %v1255 = vrot.slane %v101, 7
  %v1256 = vrot.slane %v102, 7
  %v1257 = vsel %vm1254, %v1255, %v1256
  %v1258 = vrot.slane %v103, 7
  %v1259 = vsel %vm1254, %v1256, %v1258
  %v1260 = vrot.slane %v104, 7
  %v1261 = vsel %vm1254, %v1258, %v1260
  %v1262 = vrot.slane %v105, 7
  %v1263 = vsel %vm1254, %v1260, %v1262
  %v1264 = vrot.slane %v106, 7
  %v1265 = vsel %vm1254, %v1262, %v1264
  %v1274 = vunpack.c.l.b16 %v1246
  %v1275 = vunpack.c.l.b16 %v1247
  %v1276 = vunpack.c.l.b16 %v1248
  %v1277 = vunpack.c.l.b16 %v1249
  %v1278 = vunpack.c.l.b16 %v1250
  %v1279 = vunpack.c.l.b16 %v1251
  %v1280 = vunpack.c.l.b16 %v1252
  %v1281 = vunpack.c.l.b16 %v1253
  %v1282 = vpack.c.b16 %v1275, %v1274
  %v1283 = vpack.c.b16 %v1277, %v1276
  %v1284 = vpack.c.b16 %v1279, %v1278
  %v1285 = vpack.c.b16 %v1281, %v1280
  %v1291 = vsel %vm187, %v1257, 0
  %v1294 = vsel %vm187, %v1259, 0
  %v1297 = vsel %vm187, %v1261, 0
  %v1300 = vsel %vm187, %v1263, 0
  %v1303 = vsel %vm187, %v1265, 0
  %1305 = vmatprep.subr.bf16.mxu0 0
  %1306 = vmatpush1.bf16.msra.mxu0 %v1282
  %1307 = vmatprep.subr.bf16.mxu0 0
  %1308 = vmatpush1.bf16.msra.mxu0 %v1283
  %1309 = vmatprep.subr.bf16.mxu0 0
  %1310 = vmatpush1.bf16.msra.mxu0 %v1284
  %1311 = vmatprep.subr.bf16.mxu0 0
  %1312 = vmatpush1.bf16.msra.mxu0 %v1285
  %1313 = vmatprep.subr.bf16.mxu0 0
  %1314 = vmatpush1.bf16.msra.mxu0 0
  %1315 = vmatprep.subr.bf16.mxu0 0
  %1316 = vmatpush1.bf16.msra.mxu0 0
  %1317 = vmatprep.subr.bf16.mxu0 0
  %1318 = vmatpush1.bf16.msra.mxu0 0
  %1319 = vmatprep.subr.bf16.mxu0 0
  %1320 = vmatpush1.bf16.msra.mxu0 0
  %1321 = vmatprep.subr.bf16.mxu0 0
  %1322 = vmatpush1.bf16.msra.mxu0 0
  %1323 = vmatprep.subr.bf16.mxu0 0
  %1324 = vmatpush1.bf16.msra.mxu0 0
  %1325 = vmatprep.subr.bf16.mxu0 0
  %1326 = vmatpush1.bf16.msra.mxu0 0
  %1327 = vmatprep.subr.bf16.mxu0 0
  %1328 = vmatpush1.bf16.msra.mxu0 0
  %1329 = vmatprep.subr.bf16.mxu0 0
  %1330 = vmatpush1.bf16.msra.mxu0 0
  %1331 = vmatprep.subr.bf16.mxu0 0
  %1332 = vmatpush1.bf16.msra.mxu0 0
  %1333 = vmatprep.subr.bf16.mxu0 0
  %1334 = vmatpush1.bf16.msra.mxu0 0
  %1335 = vmatprep.subr.bf16.mxu0 0
  %1336 = vmatpush1.bf16.msra.mxu0 0
  %1337 = vmatprep.mubr.bf16.mxu0 0
  %1338 = vmatmul.mubr.bf16.gmra.mrb[0].mxu0 %v1291
  %v1339 = vpop.f32.mrb[0].mxu0
  %v1340 = vadd.f32 0.0, %v1339
  %v1341 = vpop.f32.mrb[0].mxu0
  %v1342 = vpop.f32.mrb[0].mxu0
  %v1343 = vadd.f32 0.0, %v1342
  %v1344 = vpop.f32.mrb[0].mxu0
  %1345 = vmatprep.mubr.bf16.mxu0 0
  %1346 = vmatmul.mubr.bf16.gmra.mrb[0].mxu0 %v1294
  %v1347 = vpop.f32.mrb[0].mxu0
  %v1348 = vadd.f32 0.0, %v1347
  %v1349 = vpop.f32.mrb[0].mxu0
  %v1350 = vpop.f32.mrb[0].mxu0
  %v1351 = vadd.f32 0.0, %v1350
  %v1352 = vpop.f32.mrb[0].mxu0
  %1353 = vmatprep.mubr.bf16.mxu0 0
  %1354 = vmatmul.mubr.bf16.gmra.mrb[0].mxu0 %v1297
  %v1355 = vpop.f32.mrb[0].mxu0
  %v1356 = vadd.f32 0.0, %v1355
  %v1357 = vpop.f32.mrb[0].mxu0
  %v1358 = vpop.f32.mrb[0].mxu0
  %v1359 = vadd.f32 0.0, %v1358
  %v1360 = vpop.f32.mrb[0].mxu0
  %1361 = vmatprep.mubr.bf16.mxu0 0
  %1362 = vmatmul.mubr.bf16.gmra.mrb[0].mxu0 %v1300
  %v1363 = vpop.f32.mrb[0].mxu0
  %v1364 = vadd.f32 0.0, %v1363
  %v1365 = vpop.f32.mrb[0].mxu0
  %v1366 = vpop.f32.mrb[0].mxu0
  %v1367 = vadd.f32 0.0, %v1366
  %v1368 = vpop.f32.mrb[0].mxu0
  %1369 = vmatprep.mubr.bf16.mxu0 0
  %1370 = vmatmul.mubr.bf16.gmra.mrb[0].mxu0 %v1303
  %v1371 = vpop.f32.mrb[0].mxu0
  %v1372 = vadd.f32 0.0, %v1371
  %v1373 = vpop.f32.mrb[0].mxu0
  %v1374 = vpop.f32.mrb[0].mxu0
  %v1375 = vpop.f32.mrb[0].mxu0
  %1376 = vdwg.mxu0
  %v1377 = vadd.f32 %v1237, %v1340
  %v1378 = vadd.f32 %v1238, %v1343
  %v1379 = vadd.f32 %v1239, %v1348
  %v1380 = vadd.f32 %v1240, %v1351
  %v1381 = vadd.f32 %v1241, %v1356
  %v1382 = vadd.f32 %v1242, %v1359
  %v1383 = vadd.f32 %v1243, %v1364
  %v1384 = vadd.f32 %v1244, %v1367
  %v1385 = vadd.f32 %v1245, %v1372
  %v1386 = vld [vmem:[%s2] sm:$0x1]
  %v1388 = vlaneseq
  %v1389 = vshrl.u32 %v1388, 7
  %v1390 = vsub.s32 0, %v1389
  %v1391 = vrot.slane %v1386, %v1390
  %v1393 = vadd.f32 %v1377, %v1391
  %v1394 = vadd.f32 %v1378, %v1391
  %v1395 = vadd.f32 %v1379, %v1391
  %v1396 = vadd.f32 %v1380, %v1391
  %v1397 = vadd.f32 %v1381, %v1391
  %v1398 = vadd.f32 %v1382, %v1391
  %v1399 = vadd.f32 %v1383, %v1391
  %v1400 = vadd.f32 %v1384, %v1391
  %v1401 = vadd.f32 %v1385, %v1391
  %v1402 = vmax.f32 %v1393, 0.0
  %v1403 = vmax.f32 %v1394, 0.0
  %v1404 = vmax.f32 %v1395, 0.0
  %v1405 = vmax.f32 %v1396, 0.0
  %v1406 = vmax.f32 %v1397, 0.0
  %v1407 = vmax.f32 %v1398, 0.0
  %v1408 = vmax.f32 %v1399, 0.0
  %v1409 = vmax.f32 %v1400, 0.0
  %v1410 = vmax.f32 %v1401, 0.0
  %1411 = vst [vmem:[%s3] sm:$0xff] %v1402
  %1412 = vst [vmem:[%s3 + $0x8] sm:$0xff] %v1403
  %1413 = vst [vmem:[%s3 + $0x10] sm:$0xff] %v1404
  %1414 = vst [vmem:[%s3 + $0x18] sm:$0xff] %v1405
  %1415 = vst [vmem:[%s3 + $0x20] sm:$0xff] %v1406
  %1416 = vst [vmem:[%s3 + $0x28] sm:$0xff] %v1407
  %1417 = vst [vmem:[%s3 + $0x30] sm:$0xff] %v1408
  %1418 = vst [vmem:[%s3 + $0x38] sm:$0xff] %v1409
  %1419 = vst [vmem:[%s3 + $0x40] sm:$0xff] %v1410
  // Predicated region
  $region47: #{skin_classifier_forward.12} parent=0 // pred_check
    _
  $region48: #{skin_classifier_forward.12} parent=0 // pred_check_branch
    %1421 = sbr.rel (0) target = $region50
  $region49: #{skin_classifier_forward.12} parent=0 // pred_region
    _
  $region50: #{skin_classifier_forward.12} parent=0 // pred_fallthru
    _
  // Predicated region
  $region51: #{skin_classifier_forward.12} parent=0 // pred_check
    _
  $region52: #{skin_classifier_forward.12} parent=0 // pred_check_branch
    %1423 = sbr.rel (0) target = $region54
  $region53: #{skin_classifier_forward.12} parent=0 // pred_region
    _
  $region54: #{skin_classifier_forward.12} parent=0 // pred_fallthru
    _
  %1424 = vsyncmov [#allocation3]
  %s1425 = vpop.sfrf %1424
  %p1426 = scmp.eq.s32.totalorder %s1425, 0
  %p1427 = pneg %p1426
  %1429 = shalt.err (%p1427)

// kernel: skin_classifier_forward.8
$region0: #{skin_classifier_forward.8}
  #allocation0 [shape = 'u32[]', space=smem, size = 0x4, offset = 0x4, fixed_abs, tag = 'smem constant byte address 0x4 - core index']
  #allocation1 [shape = 'u32[144,128]{1,0:T(1,128)}', space=vmem, size = 0x12000, scoped, tag = 'internal scratch']
  #allocation2 [shape = 'f32[686,3]{1,0:T(8,128)}', space=vmem, size = 0x56000, scoped, tag = 'scratch operand']
  #allocation3 [shape = 's32[1]{0}', space=sflag, size = 0x4, scoped, tag = 'scratch operand']
  #allocation4 [shape = 's32[]', space=sflag, size = 0x4, offset = 0, fixed_abs, tag = 'sflag constant byte address 0x0 - dummy sync flag']
  %s0 = inlined_call_operand.vmem [shape: f32[686,3], index: 0, kind: input, shape index: {}]
  %s1 = inlined_call_operand.vmem [shape: bf16[27,32], index: 1, kind: input, shape index: {}]
  %s2 = inlined_call_operand.vmem [shape: f32[1,32], index: 2, kind: input, shape index: {}]
  %s3 = inlined_call_operand.vmem [shape: f32[648,32], index: 3, kind: output, shape index: {}]
  %s4 = sld [smem:[#allocation0]]
  $region55: #{skin_classifier_forward.8} parent=0
    _
  %s6 = ssub.s32 1, %s4
  %s7 = scalar_select 0, %s6, %s4
  // Predicated region
  $region2: #{skin_classifier_forward.8} parent=0 // pred_check
    _
  $region3: #{skin_classifier_forward.8} parent=0 // pred_check_branch
    %9 = sbr.rel (0) target = $region5
  $region4: #{skin_classifier_forward.8} parent=0 // pred_region
    _
  $region5: #{skin_classifier_forward.8} parent=0 // pred_fallthru
    _
  // Predicated region
  $region6: #{skin_classifier_forward.8} parent=0 // pred_check
    _
  $region7: #{skin_classifier_forward.8} parent=0 // pred_check_branch
    %11 = sbr.rel (0) target = $region9
  $region8: #{skin_classifier_forward.8} parent=0 // pred_region
    _
  $region9: #{skin_classifier_forward.8} parent=0 // pred_fallthru
    _
  %s13 = smul.u32 0, 648
  %s14 = scalar_lea.vmem %s0, %s13
  %p16 = scmp.lt.u32.totalorder 686, 8
  %p17 = pneg %p16
  // Predicated region
  $region10: #{skin_classifier_forward.8} parent=0 // pred_check
    _
  $region11: #{skin_classifier_forward.8} parent=0 // pred_check_branch
    %19 = sbr.rel (%p16) target = $region13
  $region12: #{skin_classifier_forward.8} parent=0 // pred_region
    %s34 = sand.u32 686, 7
    %p35 = scmp.eq.s32.totalorder %s34, 0
    %p36 = pneg %p35
    // Predicated region
    $region25: #{skin_classifier_forward.8} parent=12 // pred_check
      _
    $region26: #{skin_classifier_forward.8} parent=12 // pred_check_branch
      %38 = sbr.rel (%p35) target = $region28
    $region27: #{skin_classifier_forward.8} parent=12 // pred_region
      %s39 = sand.u32 686, 7
      %s40 = ssub.s32 686, %s39
      %s41 = scalar_lea.vmem %s14, %s40
      %s42 = ssub.s32 686, %s39
      %s43 = scalar_lea.vmem [#allocation2], %s42
      loop: start=0, step=1, limit=1
      $region29: #{skin_classifier_forward.8} parent=27 // loop_pre_header
        _
      $region30: #{skin_classifier_forward.8} parent=27 // loop_header
        %s45 = sphi 0, %s49
        %p46 = scmp.ge.s32.totalorder %s45, 1
        %s50 = sphi %s14, %s14
        %s51 = sphi [#allocation2], [#allocation2]
      $region31: #{skin_classifier_forward.8} parent=27 // loop_header_branch
        %48 = sbr.rel (%p46) target = $region35
      $region32: #{skin_classifier_forward.8} parent=27 // loop_body
        %v52 = vld [vmem:[%s50] sm:$0xff]
        %53 = vst [vmem:[%s51] sm:$0xff] %v52
        %v54 = vld [vmem:[%s50 + $0x8] sm:$0xff]
        %55 = vst [vmem:[%s51 + $0x8] sm:$0xff] %v54
        %v56 = vld [vmem:[%s50 + $0x10] sm:$0xff]
        %57 = vst [vmem:[%s51 + $0x10] sm:$0xff] %v56
        %v58 = vld [vmem:[%s50 + $0x18] sm:$0xff]
        %59 = vst [vmem:[%s51 + $0x18] sm:$0xff] %v58
        %v60 = vld [vmem:[%s50 + $0x20] sm:$0xff]
        %61 = vst [vmem:[%s51 + $0x20] sm:$0xff] %v60
        %v62 = vld [vmem:[%s50 + $0x28] sm:$0xff]
        %63 = vst [vmem:[%s51 + $0x28] sm:$0xff] %v62
        %v64 = vld [vmem:[%s50 + $0x30] sm:$0xff]
        %65 = vst [vmem:[%s51 + $0x30] sm:$0xff] %v64
        %v66 = vld [vmem:[%s50 + $0x38] sm:$0xff]
        %67 = vst [vmem:[%s51 + $0x38] sm:$0xff] %v66
        %v68 = vld [vmem:[%s50 + $0x40] sm:$0xff]
        %69 = vst [vmem:[%s51 + $0x40] sm:$0xff] %v68
        %v70 = vld [vmem:[%s50 + $0x48] sm:$0xff]
        %71 = vst [vmem:[%s51 + $0x48] sm:$0xff] %v70
        %v72 = vld [vmem:[%s50 + $0x50] sm:$0xff]
        %73 = vst [vmem:[%s51 + $0x50] sm:$0xff] %v72
        %v74 = vld [vmem:[%s50 + $0x58] sm:$0xff]
        %75 = vst [vmem:[%s51 + $0x58] sm:$0xff] %v74
        %v76 = vld [vmem:[%s50 + $0x60] sm:$0xff]
        %77 = vst [vmem:[%s51 + $0x60] sm:$0xff] %v76
        %v78 = vld [vmem:[%s50 + $0x68] sm:$0xff]
        %79 = vst [vmem:[%s51 + $0x68] sm:$0xff] %v78
        %v80 = vld [vmem:[%s50 + $0x70] sm:$0xff]
        %81 = vst [vmem:[%s51 + $0x70] sm:$0xff] %v80
        %v82 = vld [vmem:[%s50 + $0x78] sm:$0xff]
        %83 = vst [vmem:[%s51 + $0x78] sm:$0xff] %v82
        %v84 = vld [vmem:[%s50 + $0x80] sm:$0xff]
        %85 = vst [vmem:[%s51 + $0x80] sm:$0xff] %v84
        %v86 = vld [vmem:[%s50 + $0x88] sm:$0xff]
        %87 = vst [vmem:[%s51 + $0x88] sm:$0xff] %v86
        %v88 = vld [vmem:[%s50 + $0x90] sm:$0xff]
        %89 = vst [vmem:[%s51 + $0x90] sm:$0xff] %v88
        %v90 = vld [vmem:[%s50 + $0x98] sm:$0xff]
        %91 = vst [vmem:[%s51 + $0x98] sm:$0xff] %v90
        %v92 = vld [vmem:[%s50 + $0xa0] sm:$0xff]
        %93 = vst [vmem:[%s51 + $0xa0] sm:$0xff] %v92
        %v94 = vld [vmem:[%s50 + $0xa8] sm:$0xff]
        %95 = vst [vmem:[%s51 + $0xa8] sm:$0xff] %v94
        %v96 = vld [vmem:[%s50 + $0xb0] sm:$0xff]
        %97 = vst [vmem:[%s51 + $0xb0] sm:$0xff] %v96
        %v98 = vld [vmem:[%s50 + $0xb8] sm:$0xff]
        %99 = vst [vmem:[%s51 + $0xb8] sm:$0xff] %v98
        %v100 = vld [vmem:[%s50 + $0xc0] sm:$0xff]
        %101 = vst [vmem:[%s51 + $0xc0] sm:$0xff] %v100
        %v102 = vld [vmem:[%s50 + $0xc8] sm:$0xff]
        %103 = vst [vmem:[%s51 + $0xc8] sm:$0xff] %v102
        %v104 = vld [vmem:[%s50 + $0xd0] sm:$0xff]
        %105 = vst [vmem:[%s51 + $0xd0] sm:$0xff] %v104
        %v106 = vld [vmem:[%s50 + $0xd8] sm:$0xff]
        %107 = vst [vmem:[%s51 + $0xd8] sm:$0xff] %v106
        %v108 = vld [vmem:[%s50 + $0xe0] sm:$0xff]
        %109 = vst [vmem:[%s51 + $0xe0] sm:$0xff] %v108
        %v110 = vld [vmem:[%s50 + $0xe8] sm:$0xff]
        %111 = vst [vmem:[%s51 + $0xe8] sm:$0xff] %v110
        %v112 = vld [vmem:[%s50 + $0xf0] sm:$0xff]
        %113 = vst [vmem:[%s51 + $0xf0] sm:$0xff] %v112
        %v114 = vld [vmem:[%s50 + $0xf8] sm:$0xff]
        %115 = vst [vmem:[%s51 + $0xf8] sm:$0xff] %v114
        %v116 = vld [vmem:[%s50 + $0x100] sm:$0xff]
        %117 = vst [vmem:[%s51 + $0x100] sm:$0xff] %v116
        %v118 = vld [vmem:[%s50 + $0x108] sm:$0xff]
        %119 = vst [vmem:[%s51 + $0x108] sm:$0xff] %v118
        %v120 = vld [vmem:[%s50 + $0x110] sm:$0xff]
        %121 = vst [vmem:[%s51 + $0x110] sm:$0xff] %v120
        %v122 = vld [vmem:[%s50 + $0x118] sm:$0xff]
        %123 = vst [vmem:[%s51 + $0x118] sm:$0xff] %v122
        %v124 = vld [vmem:[%s50 + $0x120] sm:$0xff]
        %125 = vst [vmem:[%s51 + $0x120] sm:$0xff] %v124
        %v126 = vld [vmem:[%s50 + $0x128] sm:$0xff]
        %127 = vst [vmem:[%s51 + $0x128] sm:$0xff] %v126
        %v128 = vld [vmem:[%s50 + $0x130] sm:$0xff]
        %129 = vst [vmem:[%s51 + $0x130] sm:$0xff] %v128
        %v130 = vld [vmem:[%s50 + $0x138] sm:$0xff]
        %131 = vst [vmem:[%s51 + $0x138] sm:$0xff] %v130
        %v132 = vld [vmem:[%s50 + $0x140] sm:$0xff]
        %133 = vst [vmem:[%s51 + $0x140] sm:$0xff] %v132
        %v134 = vld [vmem:[%s50 + $0x148] sm:$0xff]
        %135 = vst [vmem:[%s51 + $0x148] sm:$0xff] %v134
        %v136 = vld [vmem:[%s50 + $0x150] sm:$0xff]
        %137 = vst [vmem:[%s51 + $0x150] sm:$0xff] %v136
        %v138 = vld [vmem:[%s50 + $0x158] sm:$0xff]
        %139 = vst [vmem:[%s51 + $0x158] sm:$0xff] %v138
        %v140 = vld [vmem:[%s50 + $0x160] sm:$0xff]
        %141 = vst [vmem:[%s51 + $0x160] sm:$0xff] %v140
        %v142 = vld [vmem:[%s50 + $0x168] sm:$0xff]
        %143 = vst [vmem:[%s51 + $0x168] sm:$0xff] %v142
        %v144 = vld [vmem:[%s50 + $0x170] sm:$0xff]
        %145 = vst [vmem:[%s51 + $0x170] sm:$0xff] %v144
        %v146 = vld [vmem:[%s50 + $0x178] sm:$0xff]
        %147 = vst [vmem:[%s51 + $0x178] sm:$0xff] %v146
        %v148 = vld [vmem:[%s50 + $0x180] sm:$0xff]
        %149 = vst [vmem:[%s51 + $0x180] sm:$0xff] %v148
        %v150 = vld [vmem:[%s50 + $0x188] sm:$0xff]
        %151 = vst [vmem:[%s51 + $0x188] sm:$0xff] %v150
        %v152 = vld [vmem:[%s50 + $0x190] sm:$0xff]
        %153 = vst [vmem:[%s51 + $0x190] sm:$0xff] %v152
        %v154 = vld [vmem:[%s50 + $0x198] sm:$0xff]
        %155 = vst [vmem:[%s51 + $0x198] sm:$0xff] %v154
        %v156 = vld [vmem:[%s50 + $0x1a0] sm:$0xff]
        %157 = vst [vmem:[%s51 + $0x1a0] sm:$0xff] %v156
        %v158 = vld [vmem:[%s50 + $0x1a8] sm:$0xff]
        %159 = vst [vmem:[%s51 + $0x1a8] sm:$0xff] %v158
        %v160 = vld [vmem:[%s50 + $0x1b0] sm:$0xff]
        %161 = vst [vmem:[%s51 + $0x1b0] sm:$0xff] %v160
        %v162 = vld [vmem:[%s50 + $0x1b8] sm:$0xff]
        %163 = vst [vmem:[%s51 + $0x1b8] sm:$0xff] %v162
        %v164 = vld [vmem:[%s50 + $0x1c0] sm:$0xff]
        %165 = vst [vmem:[%s51 + $0x1c0] sm:$0xff] %v164
        %v166 = vld [vmem:[%s50 + $0x1c8] sm:$0xff]
        %167 = vst [vmem:[%s51 + $0x1c8] sm:$0xff] %v166
        %v168 = vld [vmem:[%s50 + $0x1d0] sm:$0xff]
        %169 = vst [vmem:[%s51 + $0x1d0] sm:$0xff] %v168
        %v170 = vld [vmem:[%s50 + $0x1d8] sm:$0xff]
        %171 = vst [vmem:[%s51 + $0x1d8] sm:$0xff] %v170
        %v172 = vld [vmem:[%s50 + $0x1e0] sm:$0xff]
        %173 = vst [vmem:[%s51 + $0x1e0] sm:$0xff] %v172
        %v174 = vld [vmem:[%s50 + $0x1e8] sm:$0xff]
        %175 = vst [vmem:[%s51 + $0x1e8] sm:$0xff] %v174
        %v176 = vld [vmem:[%s50 + $0x1f0] sm:$0xff]
        %177 = vst [vmem:[%s51 + $0x1f0] sm:$0xff] %v176
        %v178 = vld [vmem:[%s50 + $0x1f8] sm:$0xff]
        %179 = vst [vmem:[%s51 + $0x1f8] sm:$0xff] %v178
        %v180 = vld [vmem:[%s50 + $0x200] sm:$0xff]
        %181 = vst [vmem:[%s51 + $0x200] sm:$0xff] %v180
        %v182 = vld [vmem:[%s50 + $0x208] sm:$0xff]
        %183 = vst [vmem:[%s51 + $0x208] sm:$0xff] %v182
        %v184 = vld [vmem:[%s50 + $0x210] sm:$0xff]
        %185 = vst [vmem:[%s51 + $0x210] sm:$0xff] %v184
        %v186 = vld [vmem:[%s50 + $0x218] sm:$0xff]
        %187 = vst [vmem:[%s51 + $0x218] sm:$0xff] %v186
        %v188 = vld [vmem:[%s50 + $0x220] sm:$0xff]
        %189 = vst [vmem:[%s51 + $0x220] sm:$0xff] %v188
        %v190 = vld [vmem:[%s50 + $0x228] sm:$0xff]
        %191 = vst [vmem:[%s51 + $0x228] sm:$0xff] %v190
        %v192 = vld [vmem:[%s50 + $0x230] sm:$0xff]
        %193 = vst [vmem:[%s51 + $0x230] sm:$0xff] %v192
        %v194 = vld [vmem:[%s50 + $0x238] sm:$0xff]
        %195 = vst [vmem:[%s51 + $0x238] sm:$0xff] %v194
        %v196 = vld [vmem:[%s50 + $0x240] sm:$0xff]
        %197 = vst [vmem:[%s51 + $0x240] sm:$0xff] %v196
        %v198 = vld [vmem:[%s50 + $0x248] sm:$0xff]
        %199 = vst [vmem:[%s51 + $0x248] sm:$0xff] %v198
        %v200 = vld [vmem:[%s50 + $0x250] sm:$0xff]
        %201 = vst [vmem:[%s51 + $0x250] sm:$0xff] %v200
        %v202 = vld [vmem:[%s50 + $0x258] sm:$0xff]
        %203 = vst [vmem:[%s51 + $0x258] sm:$0xff] %v202
        %v204 = vld [vmem:[%s50 + $0x260] sm:$0xff]
        %205 = vst [vmem:[%s51 + $0x260] sm:$0xff] %v204
        %v206 = vld [vmem:[%s50 + $0x268] sm:$0xff]
        %207 = vst [vmem:[%s51 + $0x268] sm:$0xff] %v206
        %v208 = vld [vmem:[%s50 + $0x270] sm:$0xff]
        %209 = vst [vmem:[%s51 + $0x270] sm:$0xff] %v208
        %v210 = vld [vmem:[%s50 + $0x278] sm:$0xff]
        %211 = vst [vmem:[%s51 + $0x278] sm:$0xff] %v210
        %v212 = vld [vmem:[%s50 + $0x280] sm:$0xff]
        %213 = vst [vmem:[%s51 + $0x280] sm:$0xff] %v212
        %v214 = vld [vmem:[%s50 + $0x288] sm:$0xff]
        %215 = vst [vmem:[%s51 + $0x288] sm:$0xff] %v214
        %v216 = vld [vmem:[%s50 + $0x290] sm:$0xff]
        %217 = vst [vmem:[%s51 + $0x290] sm:$0xff] %v216
        %v218 = vld [vmem:[%s50 + $0x298] sm:$0xff]
        %219 = vst [vmem:[%s51 + $0x298] sm:$0xff] %v218
        %v220 = vld [vmem:[%s50 + $0x2a0] sm:$0xff]
        %221 = vst [vmem:[%s51 + $0x2a0] sm:$0xff] %v220
      $region33: #{skin_classifier_forward.8} parent=27 // loop_footer
        %s49 = sadd.s32 1, %s45
      $region34: #{skin_classifier_forward.8} parent=27 // loop_footer_branch
        %44 = sbr.rel target = $region30
      $region35: #{skin_classifier_forward.8} parent=27 // loop_exit
        _
      %s222 = sshllo.u32 0, %s39
      loop: start=0, step=1, limit=1
      $region36: #{skin_classifier_forward.8} parent=27 // loop_pre_header
        _
      $region37: #{skin_classifier_forward.8} parent=27 // loop_header
        %s224 = sphi 0, %s228
        %p225 = scmp.ge.s32.totalorder %s224, 1
        %s229 = sphi %s41, %s41
        %s230 = sphi %s43, %s43
      $region38: #{skin_classifier_forward.8} parent=27 // loop_header_branch
        %227 = sbr.rel (%p225) target = $region42
      $region39: #{skin_classifier_forward.8} parent=27 // loop_body
        %v231 = vld [vmem:[%s229] sm:%s222]
        %232 = vst [vmem:[%s230] sm:%s222] %v231
      $region40: #{skin_classifier_forward.8} parent=27 // loop_footer
        %s228 = sadd.s32 1, %s224
      $region41: #{skin_classifier_forward.8} parent=27 // loop_footer_branch
        %223 = sbr.rel target = $region37
      $region42: #{skin_classifier_forward.8} parent=27 // loop_exit
        _
    $region28: #{skin_classifier_forward.8} parent=12 // pred_fallthru
      _
  $region13: #{skin_classifier_forward.8} parent=0 // pred_fallthru
    _
  // Predicated region
  $region14: #{skin_classifier_forward.8} parent=0 // pred_check
    %p20 = pneg %p16
  $region15: #{skin_classifier_forward.8} parent=0 // pred_check_branch
    %22 = sbr.rel (%p20) target = $region17
  $region16: #{skin_classifier_forward.8} parent=0 // pred_region
    %s23 = sshllo.u32 0, 686
    loop: start=0, step=1, limit=1
    $region18: #{skin_classifier_forward.8} parent=16 // loop_pre_header
      _
    $region19: #{skin_classifier_forward.8} parent=16 // loop_header
      %s25 = sphi 0, %s29
      %p26 = scmp.ge.s32.totalorder %s25, 1
      %s30 = sphi %s14, %s14
      %s31 = sphi [#allocation2], [#allocation2]
    $region20: #{skin_classifier_forward.8} parent=16 // loop_header_branch
      %28 = sbr.rel (%p26) target = $region24
    $region21: #{skin_classifier_forward.8} parent=16 // loop_body
      %v32 = vld [vmem:[%s30] sm:%s23]
      %33 = vst [vmem:[%s31] sm:%s23] %v32
    $region22: #{skin_classifier_forward.8} parent=16 // loop_footer
      %s29 = sadd.s32 1, %s25
    $region23: #{skin_classifier_forward.8} parent=16 // loop_footer_branch
      %24 = sbr.rel target = $region19
    $region24: #{skin_classifier_forward.8} parent=16 // loop_exit
      _
  $region17: #{skin_classifier_forward.8} parent=0 // pred_fallthru
    _
  // Predicated region
  $region43: #{skin_classifier_forward.8} parent=0 // pred_check
    _
  $region44: #{skin_classifier_forward.8} parent=0 // pred_check_branch
    %235 = sbr.rel (0) target = $region46
  $region45: #{skin_classifier_forward.8} parent=0 // pred_region
    %236 = vsyncadd [#allocation3], 10976
  $region46: #{skin_classifier_forward.8} parent=0 // pred_fallthru
    _
  %s237 = smul.u32 686, 1
  %s238 = sshll.u32 %s237, 4
  %239 = dma.done [#allocation3], %s238
  %v240 = vld [vmem:[#allocation2] sm:$0xff]
  %v241 = vld [vmem:[#allocation2 + $0x8] sm:$0xff]
  %v242 = vld [vmem:[#allocation2 + $0x10] sm:$0xff]
  %v243 = vld [vmem:[#allocation2 + $0x18] sm:$0xff]
  %v244 = vld [vmem:[#allocation2 + $0x20] sm:$0xff]
  %v245 = vld [vmem:[#allocation2 + $0x28] sm:$0xff]
  %v246 = vld [vmem:[#allocation2 + $0x30] sm:$0xff]
  %v247 = vld [vmem:[#allocation2 + $0x38] sm:$0xff]
  %v248 = vld [vmem:[#allocation2 + $0x40] sm:$0xff]
  %v249 = vld [vmem:[#allocation2 + $0x48] sm:$0xff]
  %v250 = vld [vmem:[#allocation2 + $0x50] sm:$0xff]
  %v251 = vld [vmem:[#allocation2 + $0x58] sm:$0xff]
  %v252 = vld [vmem:[#allocation2 + $0x60] sm:$0xff]
  %v253 = vld [vmem:[#allocation2 + $0x68] sm:$0xff]
  %v254 = vld [vmem:[#allocation2 + $0x70] sm:$0xff]
  %v255 = vld [vmem:[#allocation2 + $0x78] sm:$0xff]
  %v256 = vld [vmem:[#allocation2 + $0x80] sm:$0xff]
  %v257 = vld [vmem:[#allocation2 + $0x88] sm:$0xff]
  %v258 = vld [vmem:[#allocation2 + $0x90] sm:$0xff]
  %v259 = vld [vmem:[#allocation2 + $0x98] sm:$0xff]
  %v260 = vld [vmem:[#allocation2 + $0xa0] sm:$0xff]
  %v261 = vld [vmem:[#allocation2 + $0xa8] sm:$0xff]
  %v262 = vld [vmem:[#allocation2 + $0xb0] sm:$0xff]
  %v263 = vld [vmem:[#allocation2 + $0xb8] sm:$0xff]
  %v264 = vld [vmem:[#allocation2 + $0xc0] sm:$0xff]
  %v265 = vld [vmem:[#allocation2 + $0xc8] sm:$0xff]
  %v266 = vld [vmem:[#allocation2 + $0xd0] sm:$0xff]
  %v267 = vld [vmem:[#allocation2 + $0xd8] sm:$0xff]
  %v268 = vld [vmem:[#allocation2 + $0xe0] sm:$0xff]
  %v269 = vld [vmem:[#allocation2 + $0xe8] sm:$0xff]
  %v270 = vld [vmem:[#allocation2 + $0xf0] sm:$0xff]
  %v271 = vld [vmem:[#allocation2 + $0xf8] sm:$0xff]
  %v272 = vld [vmem:[#allocation2 + $0x100] sm:$0xff]
  %v273 = vld [vmem:[#allocation2 + $0x108] sm:$0xff]
  %v274 = vld [vmem:[#allocation2 + $0x110] sm:$0xff]
  %v275 = vld [vmem:[#allocation2 + $0x118] sm:$0xff]
  %v276 = vld [vmem:[#allocation2 + $0x120] sm:$0xff]
  %v277 = vld [vmem:[#allocation2 + $0x128] sm:$0xff]
  %v278 = vld [vmem:[#allocation2 + $0x130] sm:$0xff]
  %v279 = vld [vmem:[#allocation2 + $0x138] sm:$0xff]
  %v280 = vld [vmem:[#allocation2 + $0x140] sm:$0xff]
  %v281 = vld [vmem:[#allocation2 + $0x148] sm:$0xff]
  %v282 = vld [vmem:[#allocation2 + $0x150] sm:$0xff]
  %v283 = vld [vmem:[#allocation2 + $0x158] sm:$0xff]
  %v284 = vld [vmem:[#allocation2 + $0x160] sm:$0xff]
  %v285 = vld [vmem:[#allocation2 + $0x168] sm:$0xff]
  %v286 = vld [vmem:[#allocation2 + $0x170] sm:$0xff]
  %v287 = vld [vmem:[#allocation2 + $0x178] sm:$0xff]
  %v288 = vld [vmem:[#allocation2 + $0x180] sm:$0xff]
  %v289 = vld [vmem:[#allocation2 + $0x188] sm:$0xff]
  %v290 = vld [vmem:[#allocation2 + $0x190] sm:$0xff]
  %v291 = vld [vmem:[#allocation2 + $0x198] sm:$0xff]
  %v292 = vld [vmem:[#allocation2 + $0x1a0] sm:$0xff]
  %v293 = vld [vmem:[#allocation2 + $0x1a8] sm:$0xff]
  %v294 = vld [vmem:[#allocation2 + $0x1b0] sm:$0xff]
  %v295 = vld [vmem:[#allocation2 + $0x1b8] sm:$0xff]
  %v296 = vld [vmem:[#allocation2 + $0x1c0] sm:$0xff]
  %v297 = vld [vmem:[#allocation2 + $0x1c8] sm:$0xff]
  %v298 = vld [vmem:[#allocation2 + $0x1d0] sm:$0xff]
  %v299 = vld [vmem:[#allocation2 + $0x1d8] sm:$0xff]
  %v300 = vld [vmem:[#allocation2 + $0x1e0] sm:$0xff]
  %v301 = vld [vmem:[#allocation2 + $0x1e8] sm:$0xff]
  %v302 = vld [vmem:[#allocation2 + $0x1f0] sm:$0xff]
  %v303 = vld [vmem:[#allocation2 + $0x1f8] sm:$0xff]
  %v304 = vld [vmem:[#allocation2 + $0x200] sm:$0xff]
  %v305 = vld [vmem:[#allocation2 + $0x208] sm:$0xff]
  %v306 = vld [vmem:[#allocation2 + $0x210] sm:$0xff]
  %v307 = vld [vmem:[#allocation2 + $0x218] sm:$0xff]
  %v308 = vld [vmem:[#allocation2 + $0x220] sm:$0xff]
  %v309 = vld [vmem:[#allocation2 + $0x228] sm:$0xff]
  %v310 = vld [vmem:[#allocation2 + $0x230] sm:$0xff]
  %v311 = vld [vmem:[#allocation2 + $0x238] sm:$0xff]
  %v312 = vld [vmem:[#allocation2 + $0x240] sm:$0xff]
  %v313 = vld [vmem:[#allocation2 + $0x248] sm:$0xff]
  %v314 = vld [vmem:[#allocation2 + $0x250] sm:$0xff]
  %v315 = vld [vmem:[#allocation2 + $0x258] sm:$0xff]
  %v316 = vld [vmem:[#allocation2 + $0x260] sm:$0xff]
  %v317 = vld [vmem:[#allocation2 + $0x268] sm:$0xff]
  %v318 = vld [vmem:[#allocation2 + $0x270] sm:$0xff]
  %v319 = vld [vmem:[#allocation2 + $0x278] sm:$0xff]
  %v320 = vld [vmem:[#allocation2 + $0x280] sm:$0xff]
  %v321 = vld [vmem:[#allocation2 + $0x288] sm:$0xff]
  %v322 = vld [vmem:[#allocation2 + $0x290] sm:$0xff]
  %v323 = vld [vmem:[#allocation2 + $0x298] sm:$0xff]
  %v324 = vld [vmem:[#allocation2 + $0x2a0] sm:$0xff]
  %v325 = vld [vmem:[#allocation2 + $0x2a8] sm:$0x3f]
  %v326 = vpack.c.bf16 %v241, %v240
  %v327 = vpack.c.bf16 %v243, %v242
  %v328 = vpack.c.bf16 %v245, %v244
  %v329 = vpack.c.bf16 %v247, %v246
  %v330 = vpack.c.bf16 %v249, %v248
  %v331 = vpack.c.bf16 %v251, %v250
  %v332 = vpack.c.bf16 %v253, %v252
  %v333 = vpack.c.bf16 %v255, %v254
  %v334 = vpack.c.bf16 %v257, %v256
  %v335 = vpack.c.bf16 %v259, %v258
  %v336 = vpack.c.bf16 %v261, %v260
  %v337 = vpack.c.bf16 %v263, %v262
  %v338 = vpack.c.bf16 %v265, %v264
  %v339 = vpack.c.bf16 %v267, %v266
  %v340 = vpack.c.bf16 %v269, %v268
  %v341 = vpack.c.bf16 %v271, %v270
  %v342 = vpack.c.bf16 %v273, %v272
  %v343 = vpack.c.bf16 %v275, %v274
  %v344 = vpack.c.bf16 %v277, %v276
  %v345 = vpack.c.bf16 %v279, %v278
  %v346 = vpack.c.bf16 %v281, %v280
  %v347 = vpack.c.bf16 %v283, %v282
  %v348 = vpack.c.bf16 %v285, %v284
  %v349 = vpack.c.bf16 %v287, %v286
  %v350 = vpack.c.bf16 %v289, %v288
  %v351 = vpack.c.bf16 %v291, %v290
  %v352 = vpack.c.bf16 %v293, %v292
  %v353 = vpack.c.bf16 %v295, %v294
  %v354 = vpack.c.bf16 %v297, %v296
  %v355 = vpack.c.bf16 %v299, %v298
  %v356 = vpack.c.bf16 %v301, %v300
  %v357 = vpack.c.bf16 %v303, %v302
  %v358 = vpack.c.bf16 %v305, %v304
  %v359 = vpack.c.bf16 %v307, %v306
  %v360 = vpack.c.bf16 %v309, %v308
  %v361 = vpack.c.bf16 %v311, %v310
  %v362 = vpack.c.bf16 %v313, %v312
  %v363 = vpack.c.bf16 %v315, %v314
  %v364 = vpack.c.bf16 %v317, %v316
  %v365 = vpack.c.bf16 %v319, %v318
  %v366 = vpack.c.bf16 %v321, %v320
  %v367 = vpack.c.bf16 %v323, %v322
  %v368 = vpack.c.bf16 %v325, %v324
  %v369 = vld [vmem:[%s1] sm:$0x3]
  %v370 = vld [vmem:[%s1] sm:$0x6]
  %vm371 = vsmask.f32 7424
  %v373 = vshrl.u32 %v326, 16
  %v375 = vshll.u32 %v326, 16
  %v377 = vrot.slane %v375, 1
  %v378 = vor.u32 %v373, %v377
  %v380 = vshll.u32 %v327, 16
  %v382 = vrot.slane %v380, 1
  %v383 = vsel %vm371, %v378, %v382
  %v384 = vshrl.u32 %v327, 16
  %v386 = vor.u32 %v384, %v382
  %v388 = vshll.u32 %v328, 16
  %v390 = vrot.slane %v388, 1
  %v391 = vsel %vm371, %v386, %v390
  %v392 = vshrl.u32 %v328, 16
  %v394 = vor.u32 %v392, %v390
  %v396 = vshll.u32 %v329, 16
  %v398 = vrot.slane %v396, 1
  %v399 = vsel %vm371, %v394, %v398
  %v400 = vshrl.u32 %v329, 16
  %v402 = vor.u32 %v400, %v398
  %v404 = vshll.u32 %v330, 16
  %v406 = vrot.slane %v404, 1
  %v407 = vsel %vm371, %v402, %v406
  %v408 = vshrl.u32 %v330, 16
  %v410 = vor.u32 %v408, %v406
  %v412 = vshll.u32 %v331, 16
  %v414 = vrot.slane %v412, 1
  %v415 = vsel %vm371, %v410, %v414
  %v416 = vshrl.u32 %v331, 16
  %v418 = vor.u32 %v416, %v414
  %v420 = vshll.u32 %v332, 16
  %v422 = vrot.slane %v420, 1
  %v423 = vsel %vm371, %v418, %v422
  %v424 = vshrl.u32 %v332, 16
  %v426 = vor.u32 %v424, %v422
  %v428 = vshll.u32 %v333, 16
  %v430 = vrot.slane %v428, 1
  %v431 = vsel %vm371, %v426, %v430
  %v432 = vshrl.u32 %v333, 16
  %v434 = vor.u32 %v432, %v430
  %v436 = vshll.u32 %v334, 16
  %v438 = vrot.slane %v436, 1
  %v439 = vsel %vm371, %v434, %v438
  %v440 = vshrl.u32 %v334, 16
  %v442 = vor.u32 %v440, %v438
  %v444 = vshll.u32 %v335, 16
  %v446 = vrot.slane %v444, 1
  %v447 = vsel %vm371, %v442, %v446
  %v448 = vshrl.u32 %v335, 16
  %v450 = vor.u32 %v448, %v446
  %v452 = vshll.u32 %v336, 16
  %v454 = vrot.slane %v452, 1
  %v455 = vsel %vm371, %v450, %v454
  %v456 = vshrl.u32 %v336, 16
  %v458 = vor.u32 %v456, %v454
  %v460 = vshll.u32 %v337, 16
  %v462 = vrot.slane %v460, 1
  %v463 = vsel %vm371, %v458, %v462
  %v464 = vshrl.u32 %v337, 16
  %v466 = vor.u32 %v464, %v462
  %v468 = vshll.u32 %v338, 16
  %v470 = vrot.slane %v468, 1
  %v471 = vsel %vm371, %v466, %v470
  %v472 = vshrl.u32 %v338, 16
  %v474 = vor.u32 %v472, %v470
  %v476 = vshll.u32 %v339, 16
  %v478 = vrot.slane %v476, 1
  %v479 = vsel %vm371, %v474, %v478
  %v480 = vshrl.u32 %v339, 16
  %v482 = vor.u32 %v480, %v478
  %v484 = vshll.u32 %v340, 16
  %v486 = vrot.slane %v484, 1
  %v487 = vsel %vm371, %v482, %v486
  %v488 = vshrl.u32 %v340, 16
  %v490 = vor.u32 %v488, %v486
  %v492 = vshll.u32 %v341, 16
  %v494 = vrot.slane %v492, 1
  %v495 = vsel %vm371, %v490, %v494
  %v496 = vshrl.u32 %v341, 16
  %v498 = vor.u32 %v496, %v494
  %v500 = vshll.u32 %v342, 16
  %v502 = vrot.slane %v500, 1
  %v503 = vsel %vm371, %v498, %v502
  %v504 = vshrl.u32 %v342, 16
  %v506 = vor.u32 %v504, %v502
  %v508 = vshll.u32 %v343, 16
  %v510 = vrot.slane %v508, 1
  %v511 = vsel %vm371, %v506, %v510
  %v512 = vshrl.u32 %v343, 16
  %v514 = vor.u32 %v512, %v510
  %v516 = vshll.u32 %v344, 16
  %v518 = vrot.slane %v516, 1
  %v519 = vsel %vm371, %v514, %v518
  %v520 = vshrl.u32 %v344, 16
  %v522 = vor.u32 %v520, %v518
  %v524 = vshll.u32 %v345, 16
  %v526 = vrot.slane %v524, 1
  %v527 = vsel %vm371, %v522, %v526
  %v528 = vshrl.u32 %v345, 16
  %v530 = vor.u32 %v528, %v526
  %v532 = vshll.u32 %v346, 16
  %v534 = vrot.slane %v532, 1
  %v535 = vsel %vm371, %v530, %v534
  %v536 = vshrl.u32 %v346, 16
  %v538 = vor.u32 %v536, %v534
  %v540 = vshll.u32 %v347, 16
  %v542 = vrot.slane %v540, 1
  %v543 = vsel %vm371, %v538, %v542
  %v544 = vshrl.u32 %v347, 16
  %v546 = vor.u32 %v544, %v542
  %v548 = vshll.u32 %v348, 16
  %v550 = vrot.slane %v548, 1
  %v551 = vsel %vm371, %v546, %v550
  %v552 = vshrl.u32 %v348, 16
  %v554 = vor.u32 %v552, %v550
  %v556 = vshll.u32 %v349, 16
  %v558 = vrot.slane %v556, 1
  %v559 = vsel %vm371, %v554, %v558
  %v560 = vshrl.u32 %v349, 16
  %v562 = vor.u32 %v560, %v558
  %v564 = vshll.u32 %v350, 16
  %v566 = vrot.slane %v564, 1
  %v567 = vsel %vm371, %v562, %v566
  %v568 = vshrl.u32 %v350, 16
  %v570 = vor.u32 %v568, %v566
  %v572 = vshll.u32 %v351, 16
  %v574 = vrot.slane %v572, 1
  %v575 = vsel %vm371, %v570, %v574
  %v576 = vshrl.u32 %v351, 16
  %v578 = vor.u32 %v576, %v574
  %v580 = vshll.u32 %v352, 16
  %v582 = vrot.slane %v580, 1
  %v583 = vsel %vm371, %v578, %v582
  %v584 = vshrl.u32 %v352, 16
  %v586 = vor.u32 %v584, %v582
  %v588 = vshll.u32 %v353, 16
  %v590 = vrot.slane %v588, 1
  %v591 = vsel %vm371, %v586, %v590
  %v592 = vshrl.u32 %v353, 16
  %v594 = vor.u32 %v592, %v590
  %v596 = vshll.u32 %v354, 16
  %v598 = vrot.slane %v596, 1
  %v599 = vsel %vm371, %v594, %v598
  %v600 = vshrl.u32 %v354, 16
  %v602 = vor.u32 %v600, %v598
  %v604 = vshll.u32 %v355, 16
  %v606 = vrot.slane %v604, 1
  %v607 = vsel %vm371, %v602, %v606
  %v608 = vshrl.u32 %v355, 16
  %v610 = vor.u32 %v608, %v606
  %v612 = vshll.u32 %v356, 16
  %v614 = vrot.slane %v612, 1
  %v615 = vsel %vm371, %v610, %v614
  %v616 = vshrl.u32 %v356, 16
  %v618 = vor.u32 %v616, %v614
  %v620 = vshll.u32 %v357, 16
  %v622 = vrot.slane %v620, 1
  %v623 = vsel %vm371, %v618, %v622
  %v624 = vshrl.u32 %v357, 16
  %v626 = vor.u32 %v624, %v622
  %v628 = vshll.u32 %v358, 16
  %v630 = vrot.slane %v628, 1
  %v631 = vsel %vm371, %v626, %v630
  %v632 = vshrl.u32 %v358, 16
  %v634 = vor.u32 %v632, %v630
  %v636 = vshll.u32 %v359, 16
  %v638 = vrot.slane %v636, 1
  %v639 = vsel %vm371, %v634, %v638
  %v640 = vshrl.u32 %v359, 16
  %v642 = vor.u32 %v640, %v638
  %v644 = vshll.u32 %v360, 16
  %v646 = vrot.slane %v644, 1
  %v647 = vsel %vm371, %v642, %v646
  %v648 = vshrl.u32 %v360, 16
  %v650 = vor.u32 %v648, %v646
  %v652 = vshll.u32 %v361, 16
  %v654 = vrot.slane %v652, 1
  %v655 = vsel %vm371, %v650, %v654
  %v656 = vshrl.u32 %v361, 16
  %v658 = vor.u32 %v656, %v654
  %v660 = vshll.u32 %v362, 16
  %v662 = vrot.slane %v660, 1
  %v663 = vsel %vm371, %v658, %v662
  %v664 = vshrl.u32 %v362, 16
  %v666 = vor.u32 %v664, %v662
  %v668 = vshll.u32 %v363, 16
  %v670 = vrot.slane %v668, 1
  %v671 = vsel %vm371, %v666, %v670
  %v672 = vshrl.u32 %v363, 16
  %v674 = vor.u32 %v672, %v670
  %v676 = vshll.u32 %v364, 16
  %v678 = vrot.slane %v676, 1
  %v679 = vsel %vm371, %v674, %v678
  %v680 = vshrl.u32 %v364, 16
  %v682 = vor.u32 %v680, %v678
  %v684 = vshll.u32 %v365, 16
  %v686 = vrot.slane %v684, 1
  %v687 = vsel %vm371, %v682, %v686
  %v688 = vshrl.u32 %v365, 16
  %v690 = vor.u32 %v688, %v686
  %v692 = vshll.u32 %v366, 16
  %v694 = vrot.slane %v692, 1
  %v695 = vsel %vm371, %v690, %v694
  %v696 = vshrl.u32 %v366, 16
  %v698 = vor.u32 %v696, %v694
  %v700 = vunpack.c.l.b16 %v370
  %v701 = vpack.c.b16 %v700, %v700
  %v703 = vshrl.u32 %v701, 16
  %v705 = vrot.slane %v703, 1
  %v706 = vshll.u32 %v701, 16
  %v708 = vrot.slane %v706, 2
  %v709 = vor.u32 %v705, %v708
  %vm710 = vcmask 23552
  %v712 = vsel %vm710, %v383, 0
  %v715 = vsel %vm710, %v391, 0
  %v718 = vsel %vm710, %v399, 0
  %v721 = vsel %vm710, %v407, 0
  %v724 = vsel %vm710, %v415, 0
  %v727 = vsel %vm710, %v423, 0
  %v730 = vsel %vm710, %v431, 0
  %v733 = vsel %vm710, %v439, 0
  %v736 = vsel %vm710, %v447, 0
  %v739 = vsel %vm710, %v455, 0
  %v742 = vsel %vm710, %v463, 0
  %v745 = vsel %vm710, %v471, 0
  %v748 = vsel %vm710, %v479, 0
  %v751 = vsel %vm710, %v487, 0
  %v754 = vsel %vm710, %v495, 0
  %v757 = vsel %vm710, %v503, 0
  %v760 = vsel %vm710, %v511, 0
  %v763 = vsel %vm710, %v519, 0
  %v766 = vsel %vm710, %v527, 0
  %v769 = vsel %vm710, %v535, 0
  %v772 = vsel %vm710, %v543, 0
  %v775 = vsel %vm710, %v551, 0
  %v778 = vsel %vm710, %v559, 0
  %v781 = vsel %vm710, %v567, 0
  %v784 = vsel %vm710, %v575, 0
  %v787 = vsel %vm710, %v583, 0
  %v790 = vsel %vm710, %v591, 0
  %v793 = vsel %vm710, %v599, 0
  %v796 = vsel %vm710, %v607, 0
  %v799 = vsel %vm710, %v615, 0
  %v802 = vsel %vm710, %v623, 0
  %v805 = vsel %vm710, %v631, 0
  %v808 = vsel %vm710, %v639, 0
  %v811 = vsel %vm710, %v647, 0
  %v814 = vsel %vm710, %v655, 0
  %v817 = vsel %vm710, %v663, 0
  %v820 = vsel %vm710, %v671, 0
  %v823 = vsel %vm710, %v679, 0
  %v826 = vsel %vm710, %v687, 0
  %v829 = vsel %vm710, %v695, 0
  %v832 = vsel %vm710, %v698, 0
  %vm834 = vcmask 1040384
  %vm835 = vcmask 1041408
  %v836 = vsel %vm834, 4294967295, 65535
  %v837 = vsel %vm835, %v836, 0
  %v839 = vand.u32 %v709, %v837
  %841 = vmatprep.subr.bf16.mxu0 0
  %842 = vmatpush1.bf16.msra.mxu0 %v839
  %843 = vmatprep.subr.bf16.mxu0 0
  %844 = vmatpush1.bf16.msra.mxu0 0
  %845 = vmatprep.subr.bf16.mxu0 0
  %846 = vmatpush1.bf16.msra.mxu0 0
  %847 = vmatprep.subr.bf16.mxu0 0
  %848 = vmatpush1.bf16.msra.mxu0 0
  %849 = vmatprep.subr.bf16.mxu0 0
  %850 = vmatpush1.bf16.msra.mxu0 0
  %851 = vmatprep.subr.bf16.mxu0 0
  %852 = vmatpush1.bf16.msra.mxu0 0
  %853 = vmatprep.subr.bf16.mxu0 0
  %854 = vmatpush1.bf16.msra.mxu0 0
  %855 = vmatprep.subr.bf16.mxu0 0
  %856 = vmatpush1.bf16.msra.mxu0 0
  %857 = vmatprep.subr.bf16.mxu0 0
  %858 = vmatpush1.bf16.msra.mxu0 0
  %859 = vmatprep.subr.bf16.mxu0 0
  %860 = vmatpush1.bf16.msra.mxu0 0
  %861 = vmatprep.subr.bf16.mxu0 0
  %862 = vmatpush1.bf16.msra.mxu0 0
  %863 = vmatprep.subr.bf16.mxu0 0
  %864 = vmatpush1.bf16.msra.mxu0 0
  %865 = vmatprep.subr.bf16.mxu0 0
  %866 = vmatpush1.bf16.msra.mxu0 0
  %867 = vmatprep.subr.bf16.mxu0 0
  %868 = vmatpush1.bf16.msra.mxu0 0
  %869 = vmatprep.subr.bf16.mxu0 0
  %870 = vmatpush1.bf16.msra.mxu0 0
  %871 = vmatprep.subr.bf16.mxu0 0
  %872 = vmatpush1.bf16.msra.mxu0 0
  %873 = vmatprep.mubr.bf16.mxu0 0
  %874 = vmatmul.mubr.bf16.gmra.mrb[0].mxu0 %v712
  %v875 = vpop.f32.mrb[0].mxu0
  %v876 = vadd.f32 0.0, %v875
  %v877 = vpop.f32.mrb[0].mxu0
  %v878 = vpop.f32.mrb[0].mxu0
  %v879 = vadd.f32 0.0, %v878
  %v880 = vpop.f32.mrb[0].mxu0
  %881 = vmatprep.mubr.bf16.mxu0 0
  %882 = vmatmul.mubr.bf16.gmra.mrb[0].mxu0 %v715
  %v883 = vpop.f32.mrb[0].mxu0
  %v884 = vadd.f32 0.0, %v883
  %v885 = vpop.f32.mrb[0].mxu0
  %v886 = vpop.f32.mrb[0].mxu0
  %v887 = vadd.f32 0.0, %v886
  %v888 = vpop.f32.mrb[0].mxu0
  %889 = vmatprep.mubr.bf16.mxu0 0
  %890 = vmatmul.mubr.bf16.gmra.mrb[0].mxu0 %v718
  %v891 = vpop.f32.mrb[0].mxu0
  %v892 = vadd.f32 0.0, %v891
  %v893 = vpop.f32.mrb[0].mxu0
  %v894 = vpop.f32.mrb[0].mxu0
  %v895 = vadd.f32 0.0, %v894
  %v896 = vpop.f32.mrb[0].mxu0
  %897 = vmatprep.mubr.bf16.mxu0 0
  %898 = vmatmul.mubr.bf16.gmra.mrb[0].mxu0 %v721
  %v899 = vpop.f32.mrb[0].mxu0
  %v900 = vadd.f32 0.0, %v899
  %v901 = vpop.f32.mrb[0].mxu0
  %v902 = vpop.f32.mrb[0].mxu0
  %v903 = vadd.f32 0.0, %v902
  %v904 = vpop.f32.mrb[0].mxu0
  %905 = vmatprep.mubr.bf16.mxu0 0
  %906 = vmatmul.mubr.bf16.gmra.mrb[0].mxu0 %v724
  %v907 = vpop.f32.mrb[0].mxu0
  %v908 = vadd.f32 0.0, %v907
  %v909 = vpop.f32.mrb[0].mxu0
  %v910 = vpop.f32.mrb[0].mxu0
  %v911 = vadd.f32 0.0, %v910
  %v912 = vpop.f32.mrb[0].mxu0
  %913 = vmatprep.mubr.bf16.mxu0 0
  %914 = vmatmul.mubr.bf16.gmra.mrb[0].mxu0 %v727
  %v915 = vpop.f32.mrb[0].mxu0
  %v916 = vadd.f32 0.0, %v915
  %v917 = vpop.f32.mrb[0].mxu0
  %v918 = vpop.f32.mrb[0].mxu0
  %v919 = vadd.f32 0.0, %v918
  %v920 = vpop.f32.mrb[0].mxu0
  %921 = vmatprep.mubr.bf16.mxu0 0
  %922 = vmatmul.mubr.bf16.gmra.mrb[0].mxu0 %v730
  %v923 = vpop.f32.mrb[0].mxu0
  %v924 = vadd.f32 0.0, %v923
  %v925 = vpop.f32.mrb[0].mxu0
  %v926 = vpop.f32.mrb[0].mxu0
  %v927 = vadd.f32 0.0, %v926
  %v928 = vpop.f32.mrb[0].mxu0
  %929 = vmatprep.mubr.bf16.mxu0 0
  %930 = vmatmul.mubr.bf16.gmra.mrb[0].mxu0 %v733
  %v931 = vpop.f32.mrb[0].mxu0
  %v932 = vadd.f32 0.0, %v931
  %v933 = vpop.f32.mrb[0].mxu0
  %v934 = vpop.f32.mrb[0].mxu0
  %v935 = vadd.f32 0.0, %v934
  %v936 = vpop.f32.mrb[0].mxu0
  %937 = vmatprep.mubr.bf16.mxu0 0
  %938 = vmatmul.mubr.bf16.gmra.mrb[0].mxu0 %v736
  %v939 = vpop.f32.mrb[0].mxu0
  %v940 = vadd.f32 0.0, %v939
  %v941 = vpop.f32.mrb[0].mxu0
  %v942 = vpop.f32.mrb[0].mxu0
  %v943 = vadd.f32 0.0, %v942
  %v944 = vpop.f32.mrb[0].mxu0
  %945 = vmatprep.mubr.bf16.mxu0 0
  %946 = vmatmul.mubr.bf16.gmra.mrb[0].mxu0 %v739
  %v947 = vpop.f32.mrb[0].mxu0
  %v948 = vadd.f32 0.0, %v947
  %v949 = vpop.f32.mrb[0].mxu0
  %v950 = vpop.f32.mrb[0].mxu0
  %v951 = vadd.f32 0.0, %v950
  %v952 = vpop.f32.mrb[0].mxu0
  %953 = vmatprep.mubr.bf16.mxu0 0
  %954 = vmatmul.mubr.bf16.gmra.mrb[0].mxu0 %v742
  %v955 = vpop.f32.mrb[0].mxu0
  %v956 = vadd.f32 0.0, %v955
  %v957 = vpop.f32.mrb[0].mxu0
  %v958 = vpop.f32.mrb[0].mxu0
  %v959 = vadd.f32 0.0, %v958
  %v960 = vpop.f32.mrb[0].mxu0
  %961 = vmatprep.mubr.bf16.mxu0 0
  %962 = vmatmul.mubr.bf16.gmra.mrb[0].mxu0 %v745
  %v963 = vpop.f32.mrb[0].mxu0
  %v964 = vadd.f32 0.0, %v963
  %v965 = vpop.f32.mrb[0].mxu0
  %v966 = vpop.f32.mrb[0].mxu0
  %v967 = vadd.f32 0.0, %v966
  %v968 = vpop.f32.mrb[0].mxu0
  %969 = vmatprep.mubr.bf16.mxu0 0
  %970 = vmatmul.mubr.bf16.gmra.mrb[0].mxu0 %v748
  %v971 = vpop.f32.mrb[0].mxu0
  %v972 = vadd.f32 0.0, %v971
  %v973 = vpop.f32.mrb[0].mxu0
  %v974 = vpop.f32.mrb[0].mxu0
  %v975 = vadd.f32 0.0, %v974
  %v976 = vpop.f32.mrb[0].mxu0
  %977 = vmatprep.mubr.bf16.mxu0 0
  %978 = vmatmul.mubr.bf16.gmra.mrb[0].mxu0 %v751
  %v979 = vpop.f32.mrb[0].mxu0
  %v980 = vadd.f32 0.0, %v979
  %v981 = vpop.f32.mrb[0].mxu0
  %v982 = vpop.f32.mrb[0].mxu0
  %v983 = vadd.f32 0.0, %v982
  %v984 = vpop.f32.mrb[0].mxu0
  %985 = vmatprep.mubr.bf16.mxu0 0
  %986 = vmatmul.mubr.bf16.gmra.mrb[0].mxu0 %v754
  %v987 = vpop.f32.mrb[0].mxu0
  %v988 = vadd.f32 0.0, %v987
  %v989 = vpop.f32.mrb[0].mxu0
  %v990 = vpop.f32.mrb[0].mxu0
  %v991 = vadd.f32 0.0, %v990
  %v992 = vpop.f32.mrb[0].mxu0
  %993 = vmatprep.mubr.bf16.mxu0 0
  %994 = vmatmul.mubr.bf16.gmra.mrb[0].mxu0 %v757
  %v995 = vpop.f32.mrb[0].mxu0
  %v996 = vadd.f32 0.0, %v995
  %v997 = vpop.f32.mrb[0].mxu0
  %v998 = vpop.f32.mrb[0].mxu0
  %v999 = vadd.f32 0.0, %v998
  %v1000 = vpop.f32.mrb[0].mxu0
  %1001 = vmatprep.mubr.bf16.mxu0 0
  %1002 = vmatmul.mubr.bf16.gmra.mrb[0].mxu0 %v760
  %v1003 = vpop.f32.mrb[0].mxu0
  %v1004 = vadd.f32 0.0, %v1003
  %v1005 = vpop.f32.mrb[0].mxu0
  %v1006 = vpop.f32.mrb[0].mxu0
  %v1007 = vadd.f32 0.0, %v1006
  %v1008 = vpop.f32.mrb[0].mxu0
  %1009 = vmatprep.mubr.bf16.mxu0 0
  %1010 = vmatmul.mubr.bf16.gmra.mrb[0].mxu0 %v763
  %v1011 = vpop.f32.mrb[0].mxu0
  %v1012 = vadd.f32 0.0, %v1011
  %v1013 = vpop.f32.mrb[0].mxu0
  %v1014 = vpop.f32.mrb[0].mxu0
  %v1015 = vadd.f32 0.0, %v1014
  %v1016 = vpop.f32.mrb[0].mxu0
  %1017 = vmatprep.mubr.bf16.mxu0 0
  %1018 = vmatmul.mubr.bf16.gmra.mrb[0].mxu0 %v766
  %v1019 = vpop.f32.mrb[0].mxu0
  %v1020 = vadd.f32 0.0, %v1019
  %v1021 = vpop.f32.mrb[0].mxu0
  %v1022 = vpop.f32.mrb[0].mxu0
  %v1023 = vadd.f32 0.0, %v1022
  %v1024 = vpop.f32.mrb[0].mxu0
  %1025 = vmatprep.mubr.bf16.mxu0 0
  %1026 = vmatmul.mubr.bf16.gmra.mrb[0].mxu0 %v769
  %v1027 = vpop.f32.mrb[0].mxu0
  %v1028 = vadd.f32 0.0, %v1027
  %v1029 = vpop.f32.mrb[0].mxu0
  %v1030 = vpop.f32.mrb[0].mxu0
  %v1031 = vadd.f32 0.0, %v1030
  %v1032 = vpop.f32.mrb[0].mxu0
  %1033 = vmatprep.mubr.bf16.mxu0 0
  %1034 = vmatmul.mubr.bf16.gmra.mrb[0].mxu0 %v772
  %v1035 = vpop.f32.mrb[0].mxu0
  %v1036 = vadd.f32 0.0, %v1035
  %v1037 = vpop.f32.mrb[0].mxu0
  %v1038 = vpop.f32.mrb[0].mxu0
  %v1039 = vadd.f32 0.0, %v1038
  %v1040 = vpop.f32.mrb[0].mxu0
  %1041 = vmatprep.mubr.bf16.mxu0 0
  %1042 = vmatmul.mubr.bf16.gmra.mrb[0].mxu0 %v775
  %v1043 = vpop.f32.mrb[0].mxu0
  %v1044 = vadd.f32 0.0, %v1043
  %v1045 = vpop.f32.mrb[0].mxu0
  %v1046 = vpop.f32.mrb[0].mxu0
  %v1047 = vadd.f32 0.0, %v1046
  %v1048 = vpop.f32.mrb[0].mxu0
  %1049 = vmatprep.mubr.bf16.mxu0 0
  %1050 = vmatmul.mubr.bf16.gmra.mrb[0].mxu0 %v778
  %v1051 = vpop.f32.mrb[0].mxu0
  %v1052 = vadd.f32 0.0, %v1051
  %v1053 = vpop.f32.mrb[0].mxu0
  %v1054 = vpop.f32.mrb[0].mxu0
  %v1055 = vadd.f32 0.0, %v1054
  %v1056 = vpop.f32.mrb[0].mxu0
  %1057 = vmatprep.mubr.bf16.mxu0 0
  %1058 = vmatmul.mubr.bf16.gmra.mrb[0].mxu0 %v781
  %v1059 = vpop.f32.mrb[0].mxu0
  %v1060 = vadd.f32 0.0, %v1059
  %v1061 = vpop.f32.mrb[0].mxu0
  %v1062 = vpop.f32.mrb[0].mxu0
  %v1063 = vadd.f32 0.0, %v1062
  %v1064 = vpop.f32.mrb[0].mxu0
  %1065 = vmatprep.mubr.bf16.mxu0 0
  %1066 = vmatmul.mubr.bf16.gmra.mrb[0].mxu0 %v784
  %v1067 = vpop.f32.mrb[0].mxu0
  %v1068 = vadd.f32 0.0, %v1067
  %v1069 = vpop.f32.mrb[0].mxu0
  %v1070 = vpop.f32.mrb[0].mxu0
  %v1071 = vadd.f32 0.0, %v1070
  %v1072 = vpop.f32.mrb[0].mxu0
  %1073 = vmatprep.mubr.bf16.mxu0 0
  %1074 = vmatmul.mubr.bf16.gmra.mrb[0].mxu0 %v787
  %v1075 = vpop.f32.mrb[0].mxu0
  %v1076 = vadd.f32 0.0, %v1075
  %v1077 = vpop.f32.mrb[0].mxu0
  %v1078 = vpop.f32.mrb[0].mxu0
  %v1079 = vadd.f32 0.0, %v1078
  %v1080 = vpop.f32.mrb[0].mxu0
  %1081 = vmatprep.mubr.bf16.mxu0 0
  %1082 = vmatmul.mubr.bf16.gmra.mrb[0].mxu0 %v790
  %v1083 = vpop.f32.mrb[0].mxu0
  %v1084 = vadd.f32 0.0, %v1083
  %v1085 = vpop.f32.mrb[0].mxu0
  %v1086 = vpop.f32.mrb[0].mxu0
  %v1087 = vadd.f32 0.0, %v1086
  %v1088 = vpop.f32.mrb[0].mxu0
  %1089 = vmatprep.mubr.bf16.mxu0 0
  %1090 = vmatmul.mubr.bf16.gmra.mrb[0].mxu0 %v793
  %v1091 = vpop.f32.mrb[0].mxu0
  %v1092 = vadd.f32 0.0, %v1091
  %v1093 = vpop.f32.mrb[0].mxu0
  %v1094 = vpop.f32.mrb[0].mxu0
  %v1095 = vadd.f32 0.0, %v1094
  %v1096 = vpop.f32.mrb[0].mxu0
  %1097 = vmatprep.mubr.bf16.mxu0 0
  %1098 = vmatmul.mubr.bf16.gmra.mrb[0].mxu0 %v796
  %v1099 = vpop.f32.mrb[0].mxu0
  %v1100 = vadd.f32 0.0, %v1099
  %v1101 = vpop.f32.mrb[0].mxu0
  %v1102 = vpop.f32.mrb[0].mxu0
  %v1103 = vadd.f32 0.0, %v1102
  %v1104 = vpop.f32.mrb[0].mxu0
  %1105 = vmatprep.mubr.bf16.mxu0 0
  %1106 = vmatmul.mubr.bf16.gmra.mrb[0].mxu0 %v799
  %v1107 = vpop.f32.mrb[0].mxu0
  %v1108 = vadd.f32 0.0, %v1107
  %v1109 = vpop.f32.mrb[0].mxu0
  %v1110 = vpop.f32.mrb[0].mxu0
  %v1111 = vadd.f32 0.0, %v1110
  %v1112 = vpop.f32.mrb[0].mxu0
  %1113 = vmatprep.mubr.bf16.mxu0 0
  %1114 = vmatmul.mubr.bf16.gmra.mrb[0].mxu0 %v802
  %v1115 = vpop.f32.mrb[0].mxu0
  %v1116 = vadd.f32 0.0, %v1115
  %v1117 = vpop.f32.mrb[0].mxu0
  %v1118 = vpop.f32.mrb[0].mxu0
  %v1119 = vadd.f32 0.0, %v1118
  %v1120 = vpop.f32.mrb[0].mxu0
  %1121 = vmatprep.mubr.bf16.mxu0 0
  %1122 = vmatmul.mubr.bf16.gmra.mrb[0].mxu0 %v805
  %v1123 = vpop.f32.mrb[0].mxu0
  %v1124 = vadd.f32 0.0, %v1123
  %v1125 = vpop.f32.mrb[0].mxu0
  %v1126 = vpop.f32.mrb[0].mxu0
  %v1127 = vadd.f32 0.0, %v1126
  %v1128 = vpop.f32.mrb[0].mxu0
  %1129 = vmatprep.mubr.bf16.mxu0 0
  %1130 = vmatmul.mubr.bf16.gmra.mrb[0].mxu0 %v808
  %v1131 = vpop.f32.mrb[0].mxu0
  %v1132 = vadd.f32 0.0, %v1131
  %v1133 = vpop.f32.mrb[0].mxu0
  %v1134 = vpop.f32.mrb[0].mxu0
  %v1135 = vadd.f32 0.0, %v1134
  %v1136 = vpop.f32.mrb[0].mxu0
  %1137 = vmatprep.mubr.bf16.mxu0 0
  %1138 = vmatmul.mubr.bf16.gmra.mrb[0].mxu0 %v811
  %v1139 = vpop.f32.mrb[0].mxu0
  %v1140 = vadd.f32 0.0, %v1139
  %v1141 = vpop.f32.mrb[0].mxu0
  %v1142 = vpop.f32.mrb[0].mxu0
  %v1143 = vadd.f32 0.0, %v1142
  %v1144 = vpop.f32.mrb[0].mxu0
  %1145 = vmatprep.mubr.bf16.mxu0 0
  %1146 = vmatmul.mubr.bf16.gmra.mrb[0].mxu0 %v814
  %v1147 = vpop.f32.mrb[0].mxu0
  %v1148 = vadd.f32 0.0, %v1147
  %v1149 = vpop.f32.mrb[0].mxu0
  %v1150 = vpop.f32.mrb[0].mxu0
  %v1151 = vadd.f32 0.0, %v1150
  %v1152 = vpop.f32.mrb[0].mxu0
  %1153 = vmatprep.mubr.bf16.mxu0 0
  %1154 = vmatmul.mubr.bf16.gmra.mrb[0].mxu0 %v817
  %v1155 = vpop.f32.mrb[0].mxu0
  %v1156 = vadd.f32 0.0, %v1155
  %v1157 = vpop.f32.mrb[0].mxu0
  %v1158 = vpop.f32.mrb[0].mxu0
  %v1159 = vadd.f32 0.0, %v1158
  %v1160 = vpop.f32.mrb[0].mxu0
  %1161 = vmatprep.mubr.bf16.mxu0 0
  %1162 = vmatmul.mubr.bf16.gmra.mrb[0].mxu0 %v820
  %v1163 = vpop.f32.mrb[0].mxu0
  %v1164 = vadd.f32 0.0, %v1163
  %v1165 = vpop.f32.mrb[0].mxu0
  %v1166 = vpop.f32.mrb[0].mxu0
  %v1167 = vadd.f32 0.0, %v1166
  %v1168 = vpop.f32.mrb[0].mxu0
  %1169 = vmatprep.mubr.bf16.mxu0 0
  %1170 = vmatmul.mubr.bf16.gmra.mrb[0].mxu0 %v823
  %v1171 = vpop.f32.mrb[0].mxu0
  %v1172 = vadd.f32 0.0, %v1171
  %v1173 = vpop.f32.mrb[0].mxu0
  %v1174 = vpop.f32.mrb[0].mxu0
  %v1175 = vadd.f32 0.0, %v1174
  %v1176 = vpop.f32.mrb[0].mxu0
  %1177 = vmatprep.mubr.bf16.mxu0 0
  %1178 = vmatmul.mubr.bf16.gmra.mrb[0].mxu0 %v826
  %v1179 = vpop.f32.mrb[0].mxu0
  %v1180 = vadd.f32 0.0, %v1179
  %v1181 = vpop.f32.mrb[0].mxu0
  %v1182 = vpop.f32.mrb[0].mxu0
  %v1183 = vadd.f32 0.0, %v1182
  %v1184 = vpop.f32.mrb[0].mxu0
  %1185 = vmatprep.mubr.bf16.mxu0 0
  %1186 = vmatmul.mubr.bf16.gmra.mrb[0].mxu0 %v829
  %v1187 = vpop.f32.mrb[0].mxu0
  %v1188 = vadd.f32 0.0, %v1187
  %v1189 = vpop.f32.mrb[0].mxu0
  %v1190 = vpop.f32.mrb[0].mxu0
  %v1191 = vadd.f32 0.0, %v1190
  %v1192 = vpop.f32.mrb[0].mxu0
  %1193 = vmatprep.mubr.bf16.mxu0 0
  %1194 = vmatmul.mubr.bf16.gmra.mrb[0].mxu0 %v832
  %v1195 = vpop.f32.mrb[0].mxu0
  %v1196 = vadd.f32 0.0, %v1195
  %v1197 = vpop.f32.mrb[0].mxu0
  %v1198 = vpop.f32.mrb[0].mxu0
  %v1199 = vpop.f32.mrb[0].mxu0
  %1200 = vdwg.mxu0
  %v1201 = vsel %vm710, %v326, 0
  %v1203 = vsel %vm710, %v327, 0
  %v1205 = vsel %vm710, %v328, 0
  %v1207 = vsel %vm710, %v329, 0
  %v1209 = vsel %vm710, %v330, 0
  %v1211 = vsel %vm710, %v331, 0
  %v1213 = vsel %vm710, %v332, 0
  %v1215 = vsel %vm710, %v333, 0
  %v1217 = vsel %vm710, %v334, 0
  %v1219 = vsel %vm710, %v335, 0
  %v1221 = vsel %vm710, %v336, 0
  %v1223 = vsel %vm710, %v337, 0
  %v1225 = vsel %vm710, %v338, 0
  %v1227 = vsel %vm710, %v339, 0
  %v1229 = vsel %vm710, %v340, 0
  %v1231 = vsel %vm710, %v341, 0
  %v1233 = vsel %vm710, %v342, 0
  %v1235 = vsel %vm710, %v343, 0
  %v1237 = vsel %vm710, %v344, 0
  %v1239 = vsel %vm710, %v345, 0
  %v1241 = vsel %vm710, %v346, 0
  %v1243 = vsel %vm710, %v347, 0
  %v1245 = vsel %vm710, %v348, 0
  %v1247 = vsel %vm710, %v349, 0
  %v1249 = vsel %vm710, %v350, 0
  %v1251 = vsel %vm710, %v351, 0
  %v1253 = vsel %vm710, %v352, 0
  %v1255 = vsel %vm710, %v353, 0
  %v1257 = vsel %vm710, %v354, 0
  %v1259 = vsel %vm710, %v355, 0
  %v1261 = vsel %vm710, %v356, 0
  %v1263 = vsel %vm710, %v357, 0
  %v1265 = vsel %vm710, %v358, 0
  %v1267 = vsel %vm710, %v359, 0
  %v1269 = vsel %vm710, %v360, 0
  %v1271 = vsel %vm710, %v361, 0
  %v1273 = vsel %vm710, %v362, 0
  %v1275 = vsel %vm710, %v363, 0
  %v1277 = vsel %vm710, %v364, 0
  %v1279 = vsel %vm710, %v365, 0
  %v1281 = vsel %vm710, %v366, 0
  %v1284 = vand.u32 %v369, %v837
  %1286 = vmatprep.subr.bf16.mxu0 0
  %1287 = vmatpush1.bf16.msra.mxu0 %v1284
  %1288 = vmatprep.subr.bf16.mxu0 0
  %1289 = vmatpush1.bf16.msra.mxu0 0
  %1290 = vmatprep.subr.bf16.mxu0 0
  %1291 = vmatpush1.bf16.msra.mxu0 0
  %1292 = vmatprep.subr.bf16.mxu0 0
  %1293 = vmatpush1.bf16.msra.mxu0 0
  %1294 = vmatprep.subr.bf16.mxu0 0
  %1295 = vmatpush1.bf16.msra.mxu0 0
  %1296 = vmatprep.subr.bf16.mxu0 0
  %1297 = vmatpush1.bf16.msra.mxu0 0
  %1298 = vmatprep.subr.bf16.mxu0 0
  %1299 = vmatpush1.bf16.msra.mxu0 0
  %1300 = vmatprep.subr.bf16.mxu0 0
  %1301 = vmatpush1.bf16.msra.mxu0 0
  %1302 = vmatprep.subr.bf16.mxu0 0
  %1303 = vmatpush1.bf16.msra.mxu0 0
  %1304 = vmatprep.subr.bf16.mxu0 0
  %1305 = vmatpush1.bf16.msra.mxu0 0
  %1306 = vmatprep.subr.bf16.mxu0 0
  %1307 = vmatpush1.bf16.msra.mxu0 0
  %1308 = vmatprep.subr.bf16.mxu0 0
  %1309 = vmatpush1.bf16.msra.mxu0 0
  %1310 = vmatprep.subr.bf16.mxu0 0
  %1311 = vmatpush1.bf16.msra.mxu0 0
  %1312 = vmatprep.subr.bf16.mxu0 0
  %1313 = vmatpush1.bf16.msra.mxu0 0
  %1314 = vmatprep.subr.bf16.mxu0 0
  %1315 = vmatpush1.bf16.msra.mxu0 0
  %1316 = vmatprep.subr.bf16.mxu0 0
  %1317 = vmatpush1.bf16.msra.mxu0 0
  %1318 = vmatprep.mubr.bf16.mxu0 0
  %1319 = vmatmul.mubr.bf16.gmra.mrb[0].mxu0 %v1201
  %v1320 = vpop.f32.mrb[0].mxu0
  %v1321 = vadd.f32 %v876, %v1320
  %v1322 = vpop.f32.mrb[0].mxu0
  %v1323 = vpop.f32.mrb[0].mxu0
  %v1324 = vadd.f32 %v879, %v1323
  %v1325 = vpop.f32.mrb[0].mxu0
  %1326 = vmatprep.mubr.bf16.mxu0 0
  %1327 = vmatmul.mubr.bf16.gmra.mrb[0].mxu0 %v1203
  %v1328 = vpop.f32.mrb[0].mxu0
  %v1329 = vadd.f32 %v884, %v1328
  %v1330 = vpop.f32.mrb[0].mxu0
  %v1331 = vpop.f32.mrb[0].mxu0
  %v1332 = vadd.f32 %v887, %v1331
  %v1333 = vpop.f32.mrb[0].mxu0
  %1334 = vmatprep.mubr.bf16.mxu0 0
  %1335 = vmatmul.mubr.bf16.gmra.mrb[0].mxu0 %v1205
  %v1336 = vpop.f32.mrb[0].mxu0
  %v1337 = vadd.f32 %v892, %v1336
  %v1338 = vpop.f32.mrb[0].mxu0
  %v1339 = vpop.f32.mrb[0].mxu0
  %v1340 = vadd.f32 %v895, %v1339
  %v1341 = vpop.f32.mrb[0].mxu0
  %1342 = vmatprep.mubr.bf16.mxu0 0
  %1343 = vmatmul.mubr.bf16.gmra.mrb[0].mxu0 %v1207
  %v1344 = vpop.f32.mrb[0].mxu0
  %v1345 = vadd.f32 %v900, %v1344
  %v1346 = vpop.f32.mrb[0].mxu0
  %v1347 = vpop.f32.mrb[0].mxu0
  %v1348 = vadd.f32 %v903, %v1347
  %v1349 = vpop.f32.mrb[0].mxu0
  %1350 = vmatprep.mubr.bf16.mxu0 0
  %1351 = vmatmul.mubr.bf16.gmra.mrb[0].mxu0 %v1209
  %v1352 = vpop.f32.mrb[0].mxu0
  %v1353 = vadd.f32 %v908, %v1352
  %v1354 = vpop.f32.mrb[0].mxu0
  %v1355 = vpop.f32.mrb[0].mxu0
  %v1356 = vadd.f32 %v911, %v1355
  %v1357 = vpop.f32.mrb[0].mxu0
  %1358 = vmatprep.mubr.bf16.mxu0 0
  %1359 = vmatmul.mubr.bf16.gmra.mrb[0].mxu0 %v1211
  %v1360 = vpop.f32.mrb[0].mxu0
  %v1361 = vadd.f32 %v916, %v1360
  %v1362 = vpop.f32.mrb[0].mxu0
  %v1363 = vpop.f32.mrb[0].mxu0
  %v1364 = vadd.f32 %v919, %v1363
  %v1365 = vpop.f32.mrb[0].mxu0
  %1366 = vmatprep.mubr.bf16.mxu0 0
  %1367 = vmatmul.mubr.bf16.gmra.mrb[0].mxu0 %v1213
  %v1368 = vpop.f32.mrb[0].mxu0
  %v1369 = vadd.f32 %v924, %v1368
  %v1370 = vpop.f32.mrb[0].mxu0
  %v1371 = vpop.f32.mrb[0].mxu0
  %v1372 = vadd.f32 %v927, %v1371
  %v1373 = vpop.f32.mrb[0].mxu0
  %1374 = vmatprep.mubr.bf16.mxu0 0
  %1375 = vmatmul.mubr.bf16.gmra.mrb[0].mxu0 %v1215
  %v1376 = vpop.f32.mrb[0].mxu0
  %v1377 = vadd.f32 %v932, %v1376
  %v1378 = vpop.f32.mrb[0].mxu0
  %v1379 = vpop.f32.mrb[0].mxu0
  %v1380 = vadd.f32 %v935, %v1379
  %v1381 = vpop.f32.mrb[0].mxu0
  %1382 = vmatprep.mubr.bf16.mxu0 0
  %1383 = vmatmul.mubr.bf16.gmra.mrb[0].mxu0 %v1217
  %v1384 = vpop.f32.mrb[0].mxu0
  %v1385 = vadd.f32 %v940, %v1384
  %v1386 = vpop.f32.mrb[0].mxu0
  %v1387 = vpop.f32.mrb[0].mxu0
  %v1388 = vadd.f32 %v943, %v1387
  %v1389 = vpop.f32.mrb[0].mxu0
  %1390 = vmatprep.mubr.bf16.mxu0 0
  %1391 = vmatmul.mubr.bf16.gmra.mrb[0].mxu0 %v1219
  %v1392 = vpop.f32.mrb[0].mxu0
  %v1393 = vadd.f32 %v948, %v1392
  %v1394 = vpop.f32.mrb[0].mxu0
  %v1395 = vpop.f32.mrb[0].mxu0
  %v1396 = vadd.f32 %v951, %v1395
  %v1397 = vpop.f32.mrb[0].mxu0
  %1398 = vmatprep.mubr.bf16.mxu0 0
  %1399 = vmatmul.mubr.bf16.gmra.mrb[0].mxu0 %v1221
  %v1400 = vpop.f32.mrb[0].mxu0
  %v1401 = vadd.f32 %v956, %v1400
  %v1402 = vpop.f32.mrb[0].mxu0
  %v1403 = vpop.f32.mrb[0].mxu0
  %v1404 = vadd.f32 %v959, %v1403
  %v1405 = vpop.f32.mrb[0].mxu0
  %1406 = vmatprep.mubr.bf16.mxu0 0
  %1407 = vmatmul.mubr.bf16.gmra.mrb[0].mxu0 %v1223
  %v1408 = vpop.f32.mrb[0].mxu0
  %v1409 = vadd.f32 %v964, %v1408
  %v1410 = vpop.f32.mrb[0].mxu0
  %v1411 = vpop.f32.mrb[0].mxu0
  %v1412 = vadd.f32 %v967, %v1411
  %v1413 = vpop.f32.mrb[0].mxu0
  %1414 = vmatprep.mubr.bf16.mxu0 0
  %1415 = vmatmul.mubr.bf16.gmra.mrb[0].mxu0 %v1225
  %v1416 = vpop.f32.mrb[0].mxu0
  %v1417 = vadd.f32 %v972, %v1416
  %v1418 = vpop.f32.mrb[0].mxu0
  %v1419 = vpop.f32.mrb[0].mxu0
  %v1420 = vadd.f32 %v975, %v1419
  %v1421 = vpop.f32.mrb[0].mxu0
  %1422 = vmatprep.mubr.bf16.mxu0 0
  %1423 = vmatmul.mubr.bf16.gmra.mrb[0].mxu0 %v1227
  %v1424 = vpop.f32.mrb[0].mxu0
  %v1425 = vadd.f32 %v980, %v1424
  %v1426 = vpop.f32.mrb[0].mxu0
  %v1427 = vpop.f32.mrb[0].mxu0
  %v1428 = vadd.f32 %v983, %v1427
  %v1429 = vpop.f32.mrb[0].mxu0
  %1430 = vmatprep.mubr.bf16.mxu0 0
  %1431 = vmatmul.mubr.bf16.gmra.mrb[0].mxu0 %v1229
  %v1432 = vpop.f32.mrb[0].mxu0
  %v1433 = vadd.f32 %v988, %v1432
  %v1434 = vpop.f32.mrb[0].mxu0
  %v1435 = vpop.f32.mrb[0].mxu0
  %v1436 = vadd.f32 %v991, %v1435
  %v1437 = vpop.f32.mrb[0].mxu0
  %1438 = vmatprep.mubr.bf16.mxu0 0
  %1439 = vmatmul.mubr.bf16.gmra.mrb[0].mxu0 %v1231
  %v1440 = vpop.f32.mrb[0].mxu0
  %v1441 = vadd.f32 %v996, %v1440
  %v1442 = vpop.f32.mrb[0].mxu0
  %v1443 = vpop.f32.mrb[0].mxu0
  %v1444 = vadd.f32 %v999, %v1443
  %v1445 = vpop.f32.mrb[0].mxu0
  %1446 = vmatprep.mubr.bf16.mxu0 0
  %1447 = vmatmul.mubr.bf16.gmra.mrb[0].mxu0 %v1233
  %v1448 = vpop.f32.mrb[0].mxu0
  %v1449 = vadd.f32 %v1004, %v1448
  %v1450 = vpop.f32.mrb[0].mxu0
  %v1451 = vpop.f32.mrb[0].mxu0
  %v1452 = vadd.f32 %v1007, %v1451
  %v1453 = vpop.f32.mrb[0].mxu0
  %1454 = vmatprep.mubr.bf16.mxu0 0
  %1455 = vmatmul.mubr.bf16.gmra.mrb[0].mxu0 %v1235
  %v1456 = vpop.f32.mrb[0].mxu0
  %v1457 = vadd.f32 %v1012, %v1456
  %v1458 = vpop.f32.mrb[0].mxu0
  %v1459 = vpop.f32.mrb[0].mxu0
  %v1460 = vadd.f32 %v1015, %v1459
  %v1461 = vpop.f32.mrb[0].mxu0
  %1462 = vmatprep.mubr.bf16.mxu0 0
  %1463 = vmatmul.mubr.bf16.gmra.mrb[0].mxu0 %v1237
  %v1464 = vpop.f32.mrb[0].mxu0
  %v1465 = vadd.f32 %v1020, %v1464
  %v1466 = vpop.f32.mrb[0].mxu0
  %v1467 = vpop.f32.mrb[0].mxu0
  %v1468 = vadd.f32 %v1023, %v1467
  %v1469 = vpop.f32.mrb[0].mxu0
  %1470 = vmatprep.mubr.bf16.mxu0 0
  %1471 = vmatmul.mubr.bf16.gmra.mrb[0].mxu0 %v1239
  %v1472 = vpop.f32.mrb[0].mxu0
  %v1473 = vadd.f32 %v1028, %v1472
  %v1474 = vpop.f32.mrb[0].mxu0
  %v1475 = vpop.f32.mrb[0].mxu0
  %v1476 = vadd.f32 %v1031, %v1475
  %v1477 = vpop.f32.mrb[0].mxu0
  %1478 = vmatprep.mubr.bf16.mxu0 0
  %1479 = vmatmul.mubr.bf16.gmra.mrb[0].mxu0 %v1241
  %v1480 = vpop.f32.mrb[0].mxu0
  %v1481 = vadd.f32 %v1036, %v1480
  %v1482 = vpop.f32.mrb[0].mxu0
  %v1483 = vpop.f32.mrb[0].mxu0
  %v1484 = vadd.f32 %v1039, %v1483
  %v1485 = vpop.f32.mrb[0].mxu0
  %1486 = vmatprep.mubr.bf16.mxu0 0
  %1487 = vmatmul.mubr.bf16.gmra.mrb[0].mxu0 %v1243
  %v1488 = vpop.f32.mrb[0].mxu0
  %v1489 = vadd.f32 %v1044, %v1488
  %v1490 = vpop.f32.mrb[0].mxu0
  %v1491 = vpop.f32.mrb[0].mxu0
  %v1492 = vadd.f32 %v1047, %v1491
  %v1493 = vpop.f32.mrb[0].mxu0
  %1494 = vmatprep.mubr.bf16.mxu0 0
  %1495 = vmatmul.mubr.bf16.gmra.mrb[0].mxu0 %v1245
  %v1496 = vpop.f32.mrb[0].mxu0
  %v1497 = vadd.f32 %v1052, %v1496
  %v1498 = vpop.f32.mrb[0].mxu0
  %v1499 = vpop.f32.mrb[0].mxu0
  %v1500 = vadd.f32 %v1055, %v1499
  %v1501 = vpop.f32.mrb[0].mxu0
  %1502 = vmatprep.mubr.bf16.mxu0 0
  %1503 = vmatmul.mubr.bf16.gmra.mrb[0].mxu0 %v1247
  %v1504 = vpop.f32.mrb[0].mxu0
  %v1505 = vadd.f32 %v1060, %v1504
  %v1506 = vpop.f32.mrb[0].mxu0
  %v1507 = vpop.f32.mrb[0].mxu0
  %v1508 = vadd.f32 %v1063, %v1507
  %v1509 = vpop.f32.mrb[0].mxu0
  %1510 = vmatprep.mubr.bf16.mxu0 0
  %1511 = vmatmul.mubr.bf16.gmra.mrb[0].mxu0 %v1249
  %v1512 = vpop.f32.mrb[0].mxu0
  %v1513 = vadd.f32 %v1068, %v1512
  %v1514 = vpop.f32.mrb[0].mxu0
  %v1515 = vpop.f32.mrb[0].mxu0
  %v1516 = vadd.f32 %v1071, %v1515
  %v1517 = vpop.f32.mrb[0].mxu0
  %1518 = vmatprep.mubr.bf16.mxu0 0
  %1519 = vmatmul.mubr.bf16.gmra.mrb[0].mxu0 %v1251
  %v1520 = vpop.f32.mrb[0].mxu0
  %v1521 = vadd.f32 %v1076, %v1520
  %v1522 = vpop.f32.mrb[0].mxu0
  %v1523 = vpop.f32.mrb[0].mxu0
  %v1524 = vadd.f32 %v1079, %v1523
  %v1525 = vpop.f32.mrb[0].mxu0
  %1526 = vmatprep.mubr.bf16.mxu0 0
  %1527 = vmatmul.mubr.bf16.gmra.mrb[0].mxu0 %v1253
  %v1528 = vpop.f32.mrb[0].mxu0
  %v1529 = vadd.f32 %v1084, %v1528
  %v1530 = vpop.f32.mrb[0].mxu0
  %v1531 = vpop.f32.mrb[0].mxu0
  %v1532 = vadd.f32 %v1087, %v1531
  %v1533 = vpop.f32.mrb[0].mxu0
  %1534 = vmatprep.mubr.bf16.mxu0 0
  %1535 = vmatmul.mubr.bf16.gmra.mrb[0].mxu0 %v1255
  %v1536 = vpop.f32.mrb[0].mxu0
  %v1537 = vadd.f32 %v1092, %v1536
  %v1538 = vpop.f32.mrb[0].mxu0
  %v1539 = vpop.f32.mrb[0].mxu0
  %v1540 = vadd.f32 %v1095, %v1539
  %v1541 = vpop.f32.mrb[0].mxu0
  %1542 = vmatprep.mubr.bf16.mxu0 0
  %1543 = vmatmul.mubr.bf16.gmra.mrb[0].mxu0 %v1257
  %v1544 = vpop.f32.mrb[0].mxu0
  %v1545 = vadd.f32 %v1100, %v1544
  %v1546 = vpop.f32.mrb[0].mxu0
  %v1547 = vpop.f32.mrb[0].mxu0
  %v1548 = vadd.f32 %v1103, %v1547
  %v1549 = vpop.f32.mrb[0].mxu0
  %1550 = vmatprep.mubr.bf16.mxu0 0
  %1551 = vmatmul.mubr.bf16.gmra.mrb[0].mxu0 %v1259
  %v1552 = vpop.f32.mrb[0].mxu0
  %v1553 = vadd.f32 %v1108, %v1552
  %v1554 = vpop.f32.mrb[0].mxu0
  %v1555 = vpop.f32.mrb[0].mxu0
  %v1556 = vadd.f32 %v1111, %v1555
  %v1557 = vpop.f32.mrb[0].mxu0
  %1558 = vmatprep.mubr.bf16.mxu0 0
  %1559 = vmatmul.mubr.bf16.gmra.mrb[0].mxu0 %v1261
  %v1560 = vpop.f32.mrb[0].mxu0
  %v1561 = vadd.f32 %v1116, %v1560
  %v1562 = vpop.f32.mrb[0].mxu0
  %v1563 = vpop.f32.mrb[0].mxu0
  %v1564 = vadd.f32 %v1119, %v1563
  %v1565 = vpop.f32.mrb[0].mxu0
  %1566 = vmatprep.mubr.bf16.mxu0 0
  %1567 = vmatmul.mubr.bf16.gmra.mrb[0].mxu0 %v1263
  %v1568 = vpop.f32.mrb[0].mxu0
  %v1569 = vadd.f32 %v1124, %v1568
  %v1570 = vpop.f32.mrb[0].mxu0
  %v1571 = vpop.f32.mrb[0].mxu0
  %v1572 = vadd.f32 %v1127, %v1571
  %v1573 = vpop.f32.mrb[0].mxu0
  %1574 = vmatprep.mubr.bf16.mxu0 0
  %1575 = vmatmul.mubr.bf16.gmra.mrb[0].mxu0 %v1265
  %v1576 = vpop.f32.mrb[0].mxu0
  %v1577 = vadd.f32 %v1132, %v1576
  %v1578 = vpop.f32.mrb[0].mxu0
  %v1579 = vpop.f32.mrb[0].mxu0
  %v1580 = vadd.f32 %v1135, %v1579
  %v1581 = vpop.f32.mrb[0].mxu0
  %1582 = vmatprep.mubr.bf16.mxu0 0
  %1583 = vmatmul.mubr.bf16.gmra.mrb[0].mxu0 %v1267
  %v1584 = vpop.f32.mrb[0].mxu0
  %v1585 = vadd.f32 %v1140, %v1584
  %v1586 = vpop.f32.mrb[0].mxu0
  %v1587 = vpop.f32.mrb[0].mxu0
  %v1588 = vadd.f32 %v1143, %v1587
  %v1589 = vpop.f32.mrb[0].mxu0
  %1590 = vmatprep.mubr.bf16.mxu0 0
  %1591 = vmatmul.mubr.bf16.gmra.mrb[0].mxu0 %v1269
  %v1592 = vpop.f32.mrb[0].mxu0
  %v1593 = vadd.f32 %v1148, %v1592
  %v1594 = vpop.f32.mrb[0].mxu0
  %v1595 = vpop.f32.mrb[0].mxu0
  %v1596 = vadd.f32 %v1151, %v1595
  %v1597 = vpop.f32.mrb[0].mxu0
  %1598 = vmatprep.mubr.bf16.mxu0 0
  %1599 = vmatmul.mubr.bf16.gmra.mrb[0].mxu0 %v1271
  %v1600 = vpop.f32.mrb[0].mxu0
  %v1601 = vadd.f32 %v1156, %v1600
  %v1602 = vpop.f32.mrb[0].mxu0
  %v1603 = vpop.f32.mrb[0].mxu0
  %v1604 = vadd.f32 %v1159, %v1603
  %v1605 = vpop.f32.mrb[0].mxu0
  %1606 = vmatprep.mubr.bf16.mxu0 0
  %1607 = vmatmul.mubr.bf16.gmra.mrb[0].mxu0 %v1273
  %v1608 = vpop.f32.mrb[0].mxu0
  %v1609 = vadd.f32 %v1164, %v1608
  %v1610 = vpop.f32.mrb[0].mxu0
  %v1611 = vpop.f32.mrb[0].mxu0
  %v1612 = vadd.f32 %v1167, %v1611
  %v1613 = vpop.f32.mrb[0].mxu0
  %1614 = vmatprep.mubr.bf16.mxu0 0
  %1615 = vmatmul.mubr.bf16.gmra.mrb[0].mxu0 %v1275
  %v1616 = vpop.f32.mrb[0].mxu0
  %v1617 = vadd.f32 %v1172, %v1616
  %v1618 = vpop.f32.mrb[0].mxu0
  %v1619 = vpop.f32.mrb[0].mxu0
  %v1620 = vadd.f32 %v1175, %v1619
  %v1621 = vpop.f32.mrb[0].mxu0
  %1622 = vmatprep.mubr.bf16.mxu0 0
  %1623 = vmatmul.mubr.bf16.gmra.mrb[0].mxu0 %v1277
  %v1624 = vpop.f32.mrb[0].mxu0
  %v1625 = vadd.f32 %v1180, %v1624
  %v1626 = vpop.f32.mrb[0].mxu0
  %v1627 = vpop.f32.mrb[0].mxu0
  %v1628 = vadd.f32 %v1183, %v1627
  %v1629 = vpop.f32.mrb[0].mxu0
  %1630 = vmatprep.mubr.bf16.mxu0 0
  %1631 = vmatmul.mubr.bf16.gmra.mrb[0].mxu0 %v1279
  %v1632 = vpop.f32.mrb[0].mxu0
  %v1633 = vadd.f32 %v1188, %v1632
  %v1634 = vpop.f32.mrb[0].mxu0
  %v1635 = vpop.f32.mrb[0].mxu0
  %v1636 = vadd.f32 %v1191, %v1635
  %v1637 = vpop.f32.mrb[0].mxu0
  %1638 = vmatprep.mubr.bf16.mxu0 0
  %1639 = vmatmul.mubr.bf16.gmra.mrb[0].mxu0 %v1281
  %v1640 = vpop.f32.mrb[0].mxu0
  %v1641 = vadd.f32 %v1196, %v1640
  %v1642 = vpop.f32.mrb[0].mxu0
  %v1643 = vpop.f32.mrb[0].mxu0
  %v1644 = vpop.f32.mrb[0].mxu0
  %1645 = vdwg.mxu0
  %v1646 = vld [vmem:[%s1] sm:$0x8]
  %v1647 = vld [vmem:[%s1 + $0x4] sm:$0x1]
  %vm1689 = vcmask 1046528
  %v1690 = vrot.slane %v326, 1
  %v1691 = vrot.slane %v327, 1
  %v1692 = vsel %vm1689, %v1690, %v1691
  %v1693 = vrot.slane %v328, 1
  %v1694 = vsel %vm1689, %v1691, %v1693
  %v1695 = vrot.slane %v329, 1
  %v1696 = vsel %vm1689, %v1693, %v1695
  %v1697 = vrot.slane %v330, 1
  %v1698 = vsel %vm1689, %v1695, %v1697
  %v1699 = vrot.slane %v331, 1
  %v1700 = vsel %vm1689, %v1697, %v1699
  %v1701 = vrot.slane %v332, 1
  %v1702 = vsel %vm1689, %v1699, %v1701
  %v1703 = vrot.slane %v333, 1
  %v1704 = vsel %vm1689, %v1701, %v1703
  %v1705 = vrot.slane %v334, 1
  %v1706 = vsel %vm1689, %v1703, %v1705
  %v1707 = vrot.slane %v335, 1
  %v1708 = vsel %vm1689, %v1705, %v1707
  %v1709 = vrot.slane %v336, 1
  %v1710 = vsel %vm1689, %v1707, %v1709
  %v1711 = vrot.slane %v337, 1
  %v1712 = vsel %vm1689, %v1709, %v1711
  %v1713 = vrot.slane %v338, 1
  %v1714 = vsel %vm1689, %v1711, %v1713
  %v1715 = vrot.slane %v339, 1
  %v1716 = vsel %vm1689, %v1713, %v1715
  %v1717 = vrot.slane %v340, 1
  %v1718 = vsel %vm1689, %v1715, %v1717
  %v1719 = vrot.slane %v341, 1
  %v1720 = vsel %vm1689, %v1717, %v1719
  %v1721 = vrot.slane %v342, 1
  %v1722 = vsel %vm1689, %v1719, %v1721
  %v1723 = vrot.slane %v343, 1
  %v1724 = vsel %vm1689, %v1721, %v1723
  %v1725 = vrot.slane %v344, 1
  %v1726 = vsel %vm1689, %v1723, %v1725
  %v1727 = vrot.slane %v345, 1
  %v1728 = vsel %vm1689, %v1725, %v1727
  %v1729 = vrot.slane %v346, 1
  %v1730 = vsel %vm1689, %v1727, %v1729
  %v1731 = vrot.slane %v347, 1
  %v1732 = vsel %vm1689, %v1729, %v1731
  %v1733 = vrot.slane %v348, 1
  %v1734 = vsel %vm1689, %v1731, %v1733
  %v1735 = vrot.slane %v349, 1
  %v1736 = vsel %vm1689, %v1733, %v1735
  %v1737 = vrot.slane %v350, 1
  %v1738 = vsel %vm1689, %v1735, %v1737
  %v1739 = vrot.slane %v351, 1
  %v1740 = vsel %vm1689, %v1737, %v1739
  %v1741 = vrot.slane %v352, 1
  %v1742 = vsel %vm1689, %v1739, %v1741
  %v1743 = vrot.slane %v353, 1
  %v1744 = vsel %vm1689, %v1741, %v1743
  %v1745 = vrot.slane %v354, 1
  %v1746 = vsel %vm1689, %v1743, %v1745
  %v1747 = vrot.slane %v355, 1
  %v1748 = vsel %vm1689, %v1745, %v1747
  %v1749 = vrot.slane %v356, 1
  %v1750 = vsel %vm1689, %v1747, %v1749
  %v1751 = vrot.slane %v357, 1
  %v1752 = vsel %vm1689, %v1749, %v1751
  %v1753 = vrot.slane %v358, 1
  %v1754 = vsel %vm1689, %v1751, %v1753
  %v1755 = vrot.slane %v359, 1
  %v1756 = vsel %vm1689, %v1753, %v1755
  %v1757 = vrot.slane %v360, 1
  %v1758 = vsel %vm1689, %v1755, %v1757
  %v1759 = vrot.slane %v361, 1
  %v1760 = vsel %vm1689, %v1757, %v1759
  %v1761 = vrot.slane %v362, 1
  %v1762 = vsel %vm1689, %v1759, %v1761
  %v1763 = vrot.slane %v363, 1
  %v1764 = vsel %vm1689, %v1761, %v1763
  %v1765 = vrot.slane %v364, 1
  %v1766 = vsel %vm1689, %v1763, %v1765
  %v1767 = vrot.slane %v365, 1
  %v1768 = vsel %vm1689, %v1765, %v1767
  %v1769 = vrot.slane %v366, 1
  %v1770 = vsel %vm1689, %v1767, %v1769
  %v1773 = vunpack.c.l.b16 %v1646
  %v1774 = vunpack.c.l.b16 %v1647
  %v1775 = vpack.c.b16 %v1774, %v1773
  %v1776 = vrot.slane %v1775, 3
  %v1778 = vsel %vm710, %v1692, 0
  %v1781 = vsel %vm710, %v1694, 0
  %v1784 = vsel %vm710, %v1696, 0
  %v1787 = vsel %vm710, %v1698, 0
  %v1790 = vsel %vm710, %v1700, 0
  %v1793 = vsel %vm710, %v1702, 0
  %v1796 = vsel %vm710, %v1704, 0
  %v1799 = vsel %vm710, %v1706, 0
  %v1802 = vsel %vm710, %v1708, 0
  %v1805 = vsel %vm710, %v1710, 0
  %v1808 = vsel %vm710, %v1712, 0
  %v1811 = vsel %vm710, %v1714, 0
  %v1814 = vsel %vm710, %v1716, 0
  %v1817 = vsel %vm710, %v1718, 0
  %v1820 = vsel %vm710, %v1720, 0
  %v1823 = vsel %vm710, %v1722, 0
  %v1826 = vsel %vm710, %v1724, 0
  %v1829 = vsel %vm710, %v1726, 0
  %v1832 = vsel %vm710, %v1728, 0
  %v1835 = vsel %vm710, %v1730, 0
  %v1838 = vsel %vm710, %v1732, 0
  %v1841 = vsel %vm710, %v1734, 0
  %v1844 = vsel %vm710, %v1736, 0
  %v1847 = vsel %vm710, %v1738, 0
  %v1850 = vsel %vm710, %v1740, 0
  %v1853 = vsel %vm710, %v1742, 0
  %v1856 = vsel %vm710, %v1744, 0
  %v1859 = vsel %vm710, %v1746, 0
  %v1862 = vsel %vm710, %v1748, 0
  %v1865 = vsel %vm710, %v1750, 0
  %v1868 = vsel %vm710, %v1752, 0
  %v1871 = vsel %vm710, %v1754, 0
  %v1874 = vsel %vm710, %v1756, 0
  %v1877 = vsel %vm710, %v1758, 0
  %v1880 = vsel %vm710, %v1760, 0
  %v1883 = vsel %vm710, %v1762, 0
  %v1886 = vsel %vm710, %v1764, 0
  %v1889 = vsel %vm710, %v1766, 0
  %v1892 = vsel %vm710, %v1768, 0
  %v1895 = vsel %vm710, %v1770, 0
  %v1898 = vsel %vm710, %v1769, 0
  %v1901 = vand.u32 %v1776, %v837
  %1903 = vmatprep.subr.bf16.mxu0 0
  %1904 = vmatpush1.bf16.msra.mxu0 %v1901
  %1905 = vmatprep.subr.bf16.mxu0 0
  %1906 = vmatpush1.bf16.msra.mxu0 0
  %1907 = vmatprep.subr.bf16.mxu0 0
  %1908 = vmatpush1.bf16.msra.mxu0 0
  %1909 = vmatprep.subr.bf16.mxu0 0
  %1910 = vmatpush1.bf16.msra.mxu0 0
  %1911 = vmatprep.subr.bf16.mxu0 0
  %1912 = vmatpush1.bf16.msra.mxu0 0
  %1913 = vmatprep.subr.bf16.mxu0 0
  %1914 = vmatpush1.bf16.msra.mxu0 0
  %1915 = vmatprep.subr.bf16.mxu0 0
  %1916 = vmatpush1.bf16.msra.mxu0 0
  %1917 = vmatprep.subr.bf16.mxu0 0
  %1918 = vmatpush1.bf16.msra.mxu0 0
  %1919 = vmatprep.subr.bf16.mxu0 0
  %1920 = vmatpush1.bf16.msra.mxu0 0
  %1921 = vmatprep.subr.bf16.mxu0 0
  %1922 = vmatpush1.bf16.msra.mxu0 0
  %1923 = vmatprep.subr.bf16.mxu0 0
  %1924 = vmatpush1.bf16.msra.mxu0 0
  %1925 = vmatprep.subr.bf16.mxu0 0
  %1926 = vmatpush1.bf16.msra.mxu0 0
  %1927 = vmatprep.subr.bf16.mxu0 0
  %1928 = vmatpush1.bf16.msra.mxu0 0
  %1929 = vmatprep.subr.bf16.mxu0 0
  %1930 = vmatpush1.bf16.msra.mxu0 0
  %1931 = vmatprep.subr.bf16.mxu0 0
  %1932 = vmatpush1.bf16.msra.mxu0 0
  %1933 = vmatprep.subr.bf16.mxu0 0
  %1934 = vmatpush1.bf16.msra.mxu0 0
  %1935 = vmatprep.mubr.bf16.mxu0 0
  %1936 = vmatmul.mubr.bf16.gmra.mrb[0].mxu0 %v1778
  %v1937 = vpop.f32.mrb[0].mxu0
  %v1938 = vadd.f32 0.0, %v1937
  %v1939 = vpop.f32.mrb[0].mxu0
  %v1940 = vpop.f32.mrb[0].mxu0
  %v1941 = vadd.f32 0.0, %v1940
  %v1942 = vpop.f32.mrb[0].mxu0
  %1943 = vmatprep.mubr.bf16.mxu0 0
  %1944 = vmatmul.mubr.bf16.gmra.mrb[0].mxu0 %v1781
  %v1945 = vpop.f32.mrb[0].mxu0
  %v1946 = vadd.f32 0.0, %v1945
  %v1947 = vpop.f32.mrb[0].mxu0
  %v1948 = vpop.f32.mrb[0].mxu0
  %v1949 = vadd.f32 0.0, %v1948
  %v1950 = vpop.f32.mrb[0].mxu0
  %1951 = vmatprep.mubr.bf16.mxu0 0
  %1952 = vmatmul.mubr.bf16.gmra.mrb[0].mxu0 %v1784
  %v1953 = vpop.f32.mrb[0].mxu0
  %v1954 = vadd.f32 0.0, %v1953
  %v1955 = vpop.f32.mrb[0].mxu0
  %v1956 = vpop.f32.mrb[0].mxu0
  %v1957 = vadd.f32 0.0, %v1956
  %v1958 = vpop.f32.mrb[0].mxu0
  %1959 = vmatprep.mubr.bf16.mxu0 0
  %1960 = vmatmul.mubr.bf16.gmra.mrb[0].mxu0 %v1787
  %v1961 = vpop.f32.mrb[0].mxu0
  %v1962 = vadd.f32 0.0, %v1961
  %v1963 = vpop.f32.mrb[0].mxu0
  %v1964 = vpop.f32.mrb[0].mxu0
  %v1965 = vadd.f32 0.0, %v1964
  %v1966 = vpop.f32.mrb[0].mxu0
  %1967 = vmatprep.mubr.bf16.mxu0 0
  %1968 = vmatmul.mubr.bf16.gmra.mrb[0].mxu0 %v1790
  %v1969 = vpop.f32.mrb[0].mxu0
  %v1970 = vadd.f32 0.0, %v1969
  %v1971 = vpop.f32.mrb[0].mxu0
  %v1972 = vpop.f32.mrb[0].mxu0
  %v1973 = vadd.f32 0.0, %v1972
  %v1974 = vpop.f32.mrb[0].mxu0
  %1975 = vmatprep.mubr.bf16.mxu0 0
  %1976 = vmatmul.mubr.bf16.gmra.mrb[0].mxu0 %v1793
  %v1977 = vpop.f32.mrb[0].mxu0
  %v1978 = vadd.f32 0.0, %v1977
  %v1979 = vpop.f32.mrb[0].mxu0
  %v1980 = vpop.f32.mrb[0].mxu0
  %v1981 = vadd.f32 0.0, %v1980
  %v1982 = vpop.f32.mrb[0].mxu0
  %1983 = vmatprep.mubr.bf16.mxu0 0
  %1984 = vmatmul.mubr.bf16.gmra.mrb[0].mxu0 %v1796
  %v1985 = vpop.f32.mrb[0].mxu0
  %v1986 = vadd.f32 0.0, %v1985
  %v1987 = vpop.f32.mrb[0].mxu0
  %v1988 = vpop.f32.mrb[0].mxu0
  %v1989 = vadd.f32 0.0, %v1988
  %v1990 = vpop.f32.mrb[0].mxu0
  %1991 = vmatprep.mubr.bf16.mxu0 0
  %1992 = vmatmul.mubr.bf16.gmra.mrb[0].mxu0 %v1799
  %v1993 = vpop.f32.mrb[0].mxu0
  %v1994 = vadd.f32 0.0, %v1993
  %v1995 = vpop.f32.mrb[0].mxu0
  %v1996 = vpop.f32.mrb[0].mxu0
  %v1997 = vadd.f32 0.0, %v1996
  %v1998 = vpop.f32.mrb[0].mxu0
  %1999 = vmatprep.mubr.bf16.mxu0 0
  %2000 = vmatmul.mubr.bf16.gmra.mrb[0].mxu0 %v1802
  %v2001 = vpop.f32.mrb[0].mxu0
  %v2002 = vadd.f32 0.0, %v2001
  %v2003 = vpop.f32.mrb[0].mxu0
  %v2004 = vpop.f32.mrb[0].mxu0
  %v2005 = vadd.f32 0.0, %v2004
  %v2006 = vpop.f32.mrb[0].mxu0
  %2007 = vmatprep.mubr.bf16.mxu0 0
  %2008 = vmatmul.mubr.bf16.gmra.mrb[0].mxu0 %v1805
  %v2009 = vpop.f32.mrb[0].mxu0
  %v2010 = vadd.f32 0.0, %v2009
  %v2011 = vpop.f32.mrb[0].mxu0
  %v2012 = vpop.f32.mrb[0].mxu0
  %v2013 = vadd.f32 0.0, %v2012
  %v2014 = vpop.f32.mrb[0].mxu0
  %2015 = vmatprep.mubr.bf16.mxu0 0
  %2016 = vmatmul.mubr.bf16.gmra.mrb[0].mxu0 %v1808
  %v2017 = vpop.f32.mrb[0].mxu0
  %v2018 = vadd.f32 0.0, %v2017
  %v2019 = vpop.f32.mrb[0].mxu0
  %v2020 = vpop.f32.mrb[0].mxu0
  %v2021 = vadd.f32 0.0, %v2020
  %v2022 = vpop.f32.mrb[0].mxu0
  %2023 = vmatprep.mubr.bf16.mxu0 0
  %2024 = vmatmul.mubr.bf16.gmra.mrb[0].mxu0 %v1811
  %v2025 = vpop.f32.mrb[0].mxu0
  %v2026 = vadd.f32 0.0, %v2025
  %v2027 = vpop.f32.mrb[0].mxu0
  %v2028 = vpop.f32.mrb[0].mxu0
  %v2029 = vadd.f32 0.0, %v2028
  %v2030 = vpop.f32.mrb[0].mxu0
  %2031 = vmatprep.mubr.bf16.mxu0 0
  %2032 = vmatmul.mubr.bf16.gmra.mrb[0].mxu0 %v1814
  %v2033 = vpop.f32.mrb[0].mxu0
  %v2034 = vadd.f32 0.0, %v2033
  %v2035 = vpop.f32.mrb[0].mxu0
  %v2036 = vpop.f32.mrb[0].mxu0
  %v2037 = vadd.f32 0.0, %v2036
  %v2038 = vpop.f32.mrb[0].mxu0
  %2039 = vmatprep.mubr.bf16.mxu0 0
  %2040 = vmatmul.mubr.bf16.gmra.mrb[0].mxu0 %v1817
  %v2041 = vpop.f32.mrb[0].mxu0
  %v2042 = vadd.f32 0.0, %v2041
  %v2043 = vpop.f32.mrb[0].mxu0
  %v2044 = vpop.f32.mrb[0].mxu0
  %v2045 = vadd.f32 0.0, %v2044
  %v2046 = vpop.f32.mrb[0].mxu0
  %2047 = vmatprep.mubr.bf16.mxu0 0
  %2048 = vmatmul.mubr.bf16.gmra.mrb[0].mxu0 %v1820
  %v2049 = vpop.f32.mrb[0].mxu0
  %v2050 = vadd.f32 0.0, %v2049
  %v2051 = vpop.f32.mrb[0].mxu0
  %v2052 = vpop.f32.mrb[0].mxu0
  %v2053 = vadd.f32 0.0, %v2052
  %v2054 = vpop.f32.mrb[0].mxu0
  %2055 = vmatprep.mubr.bf16.mxu0 0
  %2056 = vmatmul.mubr.bf16.gmra.mrb[0].mxu0 %v1823
  %v2057 = vpop.f32.mrb[0].mxu0
  %v2058 = vadd.f32 0.0, %v2057
  %v2059 = vpop.f32.mrb[0].mxu0
  %v2060 = vpop.f32.mrb[0].mxu0
  %v2061 = vadd.f32 0.0, %v2060
  %v2062 = vpop.f32.mrb[0].mxu0
  %2063 = vmatprep.mubr.bf16.mxu0 0
  %2064 = vmatmul.mubr.bf16.gmra.mrb[0].mxu0 %v1826
  %v2065 = vpop.f32.mrb[0].mxu0
  %v2066 = vadd.f32 0.0, %v2065
  %v2067 = vpop.f32.mrb[0].mxu0
  %v2068 = vpop.f32.mrb[0].mxu0
  %v2069 = vadd.f32 0.0, %v2068
  %v2070 = vpop.f32.mrb[0].mxu0
  %2071 = vmatprep.mubr.bf16.mxu0 0
  %2072 = vmatmul.mubr.bf16.gmra.mrb[0].mxu0 %v1829
  %v2073 = vpop.f32.mrb[0].mxu0
  %v2074 = vadd.f32 0.0, %v2073
  %v2075 = vpop.f32.mrb[0].mxu0
  %v2076 = vpop.f32.mrb[0].mxu0
  %v2077 = vadd.f32 0.0, %v2076
  %v2078 = vpop.f32.mrb[0].mxu0
  %2079 = vmatprep.mubr.bf16.mxu0 0
  %2080 = vmatmul.mubr.bf16.gmra.mrb[0].mxu0 %v1832
  %v2081 = vpop.f32.mrb[0].mxu0
  %v2082 = vadd.f32 0.0, %v2081
  %v2083 = vpop.f32.mrb[0].mxu0
  %v2084 = vpop.f32.mrb[0].mxu0
  %v2085 = vadd.f32 0.0, %v2084
  %v2086 = vpop.f32.mrb[0].mxu0
  %2087 = vmatprep.mubr.bf16.mxu0 0
  %2088 = vmatmul.mubr.bf16.gmra.mrb[0].mxu0 %v1835
  %v2089 = vpop.f32.mrb[0].mxu0
  %v2090 = vadd.f32 0.0, %v2089
  %v2091 = vpop.f32.mrb[0].mxu0
  %v2092 = vpop.f32.mrb[0].mxu0
  %v2093 = vadd.f32 0.0, %v2092
  %v2094 = vpop.f32.mrb[0].mxu0
  %2095 = vmatprep.mubr.bf16.mxu0 0
  %2096 = vmatmul.mubr.bf16.gmra.mrb[0].mxu0 %v1838
  %v2097 = vpop.f32.mrb[0].mxu0
  %v2098 = vadd.f32 0.0, %v2097
  %v2099 = vpop.f32.mrb[0].mxu0
  %v2100 = vpop.f32.mrb[0].mxu0
  %v2101 = vadd.f32 0.0, %v2100
  %v2102 = vpop.f32.mrb[0].mxu0
  %2103 = vmatprep.mubr.bf16.mxu0 0
  %2104 = vmatmul.mubr.bf16.gmra.mrb[0].mxu0 %v1841
  %v2105 = vpop.f32.mrb[0].mxu0
  %v2106 = vadd.f32 0.0, %v2105
  %v2107 = vpop.f32.mrb[0].mxu0
  %v2108 = vpop.f32.mrb[0].mxu0
  %v2109 = vadd.f32 0.0, %v2108
  %v2110 = vpop.f32.mrb[0].mxu0
  %2111 = vmatprep.mubr.bf16.mxu0 0
  %2112 = vmatmul.mubr.bf16.gmra.mrb[0].mxu0 %v1844
  %v2113 = vpop.f32.mrb[0].mxu0
  %v2114 = vadd.f32 0.0, %v2113
  %v2115 = vpop.f32.mrb[0].mxu0
  %v2116 = vpop.f32.mrb[0].mxu0
  %v2117 = vadd.f32 0.0, %v2116
  %v2118 = vpop.f32.mrb[0].mxu0
  %2119 = vmatprep.mubr.bf16.mxu0 0
  %2120 = vmatmul.mubr.bf16.gmra.mrb[0].mxu0 %v1847
  %v2121 = vpop.f32.mrb[0].mxu0
  %v2122 = vadd.f32 0.0, %v2121
  %v2123 = vpop.f32.mrb[0].mxu0
  %v2124 = vpop.f32.mrb[0].mxu0
  %v2125 = vadd.f32 0.0, %v2124
  %v2126 = vpop.f32.mrb[0].mxu0
  %2127 = vmatprep.mubr.bf16.mxu0 0
  %2128 = vmatmul.mubr.bf16.gmra.mrb[0].mxu0 %v1850
  %v2129 = vpop.f32.mrb[0].mxu0
  %v2130 = vadd.f32 0.0, %v2129
  %v2131 = vpop.f32.mrb[0].mxu0
  %v2132 = vpop.f32.mrb[0].mxu0
  %v2133 = vadd.f32 0.0, %v2132
  %v2134 = vpop.f32.mrb[0].mxu0
  %2135 = vmatprep.mubr.bf16.mxu0 0
  %2136 = vmatmul.mubr.bf16.gmra.mrb[0].mxu0 %v1853
  %v2137 = vpop.f32.mrb[0].mxu0
  %v2138 = vadd.f32 0.0, %v2137
  %v2139 = vpop.f32.mrb[0].mxu0
  %v2140 = vpop.f32.mrb[0].mxu0
  %v2141 = vadd.f32 0.0, %v2140
  %v2142 = vpop.f32.mrb[0].mxu0
  %2143 = vmatprep.mubr.bf16.mxu0 0
  %2144 = vmatmul.mubr.bf16.gmra.mrb[0].mxu0 %v1856
  %v2145 = vpop.f32.mrb[0].mxu0
  %v2146 = vadd.f32 0.0, %v2145
  %v2147 = vpop.f32.mrb[0].mxu0
  %v2148 = vpop.f32.mrb[0].mxu0
  %v2149 = vadd.f32 0.0, %v2148
  %v2150 = vpop.f32.mrb[0].mxu0
  %2151 = vmatprep.mubr.bf16.mxu0 0
  %2152 = vmatmul.mubr.bf16.gmra.mrb[0].mxu0 %v1859
  %v2153 = vpop.f32.mrb[0].mxu0
  %v2154 = vadd.f32 0.0, %v2153
  %v2155 = vpop.f32.mrb[0].mxu0
  %v2156 = vpop.f32.mrb[0].mxu0
  %v2157 = vadd.f32 0.0, %v2156
  %v2158 = vpop.f32.mrb[0].mxu0
  %2159 = vmatprep.mubr.bf16.mxu0 0
  %2160 = vmatmul.mubr.bf16.gmra.mrb[0].mxu0 %v1862
  %v2161 = vpop.f32.mrb[0].mxu0
  %v2162 = vadd.f32 0.0, %v2161
  %v2163 = vpop.f32.mrb[0].mxu0
  %v2164 = vpop.f32.mrb[0].mxu0
  %v2165 = vadd.f32 0.0, %v2164
  %v2166 = vpop.f32.mrb[0].mxu0
  %2167 = vmatprep.mubr.bf16.mxu0 0
  %2168 = vmatmul.mubr.bf16.gmra.mrb[0].mxu0 %v1865
  %v2169 = vpop.f32.mrb[0].mxu0
  %v2170 = vadd.f32 0.0, %v2169
  %v2171 = vpop.f32.mrb[0].mxu0
  %v2172 = vpop.f32.mrb[0].mxu0
  %v2173 = vadd.f32 0.0, %v2172
  %v2174 = vpop.f32.mrb[0].mxu0
  %2175 = vmatprep.mubr.bf16.mxu0 0
  %2176 = vmatmul.mubr.bf16.gmra.mrb[0].mxu0 %v1868
  %v2177 = vpop.f32.mrb[0].mxu0
  %v2178 = vadd.f32 0.0, %v2177
  %v2179 = vpop.f32.mrb[0].mxu0
  %v2180 = vpop.f32.mrb[0].mxu0
  %v2181 = vadd.f32 0.0, %v2180
  %v2182 = vpop.f32.mrb[0].mxu0
  %2183 = vmatprep.mubr.bf16.mxu0 0
  %2184 = vmatmul.mubr.bf16.gmra.mrb[0].mxu0 %v1871
  %v2185 = vpop.f32.mrb[0].mxu0
  %v2186 = vadd.f32 0.0, %v2185
  %v2187 = vpop.f32.mrb[0].mxu0
  %v2188 = vpop.f32.mrb[0].mxu0
  %v2189 = vadd.f32 0.0, %v2188
  %v2190 = vpop.f32.mrb[0].mxu0
  %2191 = vmatprep.mubr.bf16.mxu0 0
  %2192 = vmatmul.mubr.bf16.gmra.mrb[0].mxu0 %v1874
  %v2193 = vpop.f32.mrb[0].mxu0
  %v2194 = vadd.f32 0.0, %v2193
  %v2195 = vpop.f32.mrb[0].mxu0
  %v2196 = vpop.f32.mrb[0].mxu0
  %v2197 = vadd.f32 0.0, %v2196
  %v2198 = vpop.f32.mrb[0].mxu0
  %2199 = vmatprep.mubr.bf16.mxu0 0
  %2200 = vmatmul.mubr.bf16.gmra.mrb[0].mxu0 %v1877
  %v2201 = vpop.f32.mrb[0].mxu0
  %v2202 = vadd.f32 0.0, %v2201
  %v2203 = vpop.f32.mrb[0].mxu0
  %v2204 = vpop.f32.mrb[0].mxu0
  %v2205 = vadd.f32 0.0, %v2204
  %v2206 = vpop.f32.mrb[0].mxu0
  %2207 = vmatprep.mubr.bf16.mxu0 0
  %2208 = vmatmul.mubr.bf16.gmra.mrb[0].mxu0 %v1880
  %v2209 = vpop.f32.mrb[0].mxu0
  %v2210 = vadd.f32 0.0, %v2209
  %v2211 = vpop.f32.mrb[0].mxu0
  %v2212 = vpop.f32.mrb[0].mxu0
  %v2213 = vadd.f32 0.0, %v2212
  %v2214 = vpop.f32.mrb[0].mxu0
  %2215 = vmatprep.mubr.bf16.mxu0 0
  %2216 = vmatmul.mubr.bf16.gmra.mrb[0].mxu0 %v1883
  %v2217 = vpop.f32.mrb[0].mxu0
  %v2218 = vadd.f32 0.0, %v2217
  %v2219 = vpop.f32.mrb[0].mxu0
  %v2220 = vpop.f32.mrb[0].mxu0
  %v2221 = vadd.f32 0.0, %v2220
  %v2222 = vpop.f32.mrb[0].mxu0
  %2223 = vmatprep.mubr.bf16.mxu0 0
  %2224 = vmatmul.mubr.bf16.gmra.mrb[0].mxu0 %v1886
  %v2225 = vpop.f32.mrb[0].mxu0
  %v2226 = vadd.f32 0.0, %v2225
  %v2227 = vpop.f32.mrb[0].mxu0
  %v2228 = vpop.f32.mrb[0].mxu0
  %v2229 = vadd.f32 0.0, %v2228
  %v2230 = vpop.f32.mrb[0].mxu0
  %2231 = vmatprep.mubr.bf16.mxu0 0
  %2232 = vmatmul.mubr.bf16.gmra.mrb[0].mxu0 %v1889
  %v2233 = vpop.f32.mrb[0].mxu0
  %v2234 = vadd.f32 0.0, %v2233
  %v2235 = vpop.f32.mrb[0].mxu0
  %v2236 = vpop.f32.mrb[0].mxu0
  %v2237 = vadd.f32 0.0, %v2236
  %v2238 = vpop.f32.mrb[0].mxu0
  %2239 = vmatprep.mubr.bf16.mxu0 0
  %2240 = vmatmul.mubr.bf16.gmra.mrb[0].mxu0 %v1892
  %v2241 = vpop.f32.mrb[0].mxu0
  %v2242 = vadd.f32 0.0, %v2241
  %v2243 = vpop.f32.mrb[0].mxu0
  %v2244 = vpop.f32.mrb[0].mxu0
  %v2245 = vadd.f32 0.0, %v2244
  %v2246 = vpop.f32.mrb[0].mxu0
  %2247 = vmatprep.mubr.bf16.mxu0 0
  %2248 = vmatmul.mubr.bf16.gmra.mrb[0].mxu0 %v1895
  %v2249 = vpop.f32.mrb[0].mxu0
  %v2250 = vadd.f32 0.0, %v2249
  %v2251 = vpop.f32.mrb[0].mxu0
  %v2252 = vpop.f32.mrb[0].mxu0
  %v2253 = vadd.f32 0.0, %v2252
  %v2254 = vpop.f32.mrb[0].mxu0
  %2255 = vmatprep.mubr.bf16.mxu0 0
  %2256 = vmatmul.mubr.bf16.gmra.mrb[0].mxu0 %v1898
  %v2257 = vpop.f32.mrb[0].mxu0
  %v2258 = vadd.f32 0.0, %v2257
  %v2259 = vpop.f32.mrb[0].mxu0
  %v2260 = vpop.f32.mrb[0].mxu0
  %v2261 = vpop.f32.mrb[0].mxu0
  %2262 = vdwg.mxu0
  %v2263 = vadd.f32 %v1321, %v1938
  %v2264 = vadd.f32 %v1324, %v1941
  %v2265 = vadd.f32 %v1329, %v1946
  %v2266 = vadd.f32 %v1332, %v1949
  %v2267 = vadd.f32 %v1337, %v1954
  %v2268 = vadd.f32 %v1340, %v1957
  %v2269 = vadd.f32 %v1345, %v1962
  %v2270 = vadd.f32 %v1348, %v1965
  %v2271 = vadd.f32 %v1353, %v1970
  %v2272 = vadd.f32 %v1356, %v1973
  %v2273 = vadd.f32 %v1361, %v1978
  %v2274 = vadd.f32 %v1364, %v1981
  %v2275 = vadd.f32 %v1369, %v1986
  %v2276 = vadd.f32 %v1372, %v1989
  %v2277 = vadd.f32 %v1377, %v1994
  %v2278 = vadd.f32 %v1380, %v1997
  %v2279 = vadd.f32 %v1385, %v2002
  %v2280 = vadd.f32 %v1388, %v2005
  %v2281 = vadd.f32 %v1393, %v2010
  %v2282 = vadd.f32 %v1396, %v2013
  %v2283 = vadd.f32 %v1401, %v2018
  %v2284 = vadd.f32 %v1404, %v2021
  %v2285 = vadd.f32 %v1409, %v2026
  %v2286 = vadd.f32 %v1412, %v2029
  %v2287 = vadd.f32 %v1417, %v2034
  %v2288 = vadd.f32 %v1420, %v2037
  %v2289 = vadd.f32 %v1425, %v2042
  %v2290 = vadd.f32 %v1428, %v2045
  %v2291 = vadd.f32 %v1433, %v2050
  %v2292 = vadd.f32 %v1436, %v2053
  %v2293 = vadd.f32 %v1441, %v2058
  %v2294 = vadd.f32 %v1444, %v2061
  %v2295 = vadd.f32 %v1449, %v2066
  %v2296 = vadd.f32 %v1452, %v2069
  %v2297 = vadd.f32 %v1457, %v2074
  %v2298 = vadd.f32 %v1460, %v2077
  %v2299 = vadd.f32 %v1465, %v2082
  %v2300 = vadd.f32 %v1468, %v2085
  %v2301 = vadd.f32 %v1473, %v2090
  %v2302 = vadd.f32 %v1476, %v2093
  %v2303 = vadd.f32 %v1481, %v2098
  %v2304 = vadd.f32 %v1484, %v2101
  %v2305 = vadd.f32 %v1489, %v2106
  %v2306 = vadd.f32 %v1492, %v2109
  %v2307 = vadd.f32 %v1497, %v2114
  %v2308 = vadd.f32 %v1500, %v2117
  %v2309 = vadd.f32 %v1505, %v2122
  %v2310 = vadd.f32 %v1508, %v2125
  %v2311 = vadd.f32 %v1513, %v2130
  %v2312 = vadd.f32 %v1516, %v2133
  %v2313 = vadd.f32 %v1521, %v2138
  %v2314 = vadd.f32 %v1524, %v2141
  %v2315 = vadd.f32 %v1529, %v2146
  %v2316 = vadd.f32 %v1532, %v2149
  %v2317 = vadd.f32 %v1537, %v2154
  %v2318 = vadd.f32 %v1540, %v2157
  %v2319 = vadd.f32 %v1545, %v2162
  %v2320 = vadd.f32 %v1548, %v2165
  %v2321 = vadd.f32 %v1553, %v2170
  %v2322 = vadd.f32 %v1556, %v2173
  %v2323 = vadd.f32 %v1561, %v2178
  %v2324 = vadd.f32 %v1564, %v2181
  %v2325 = vadd.f32 %v1569, %v2186
  %v2326 = vadd.f32 %v1572, %v2189
  %v2327 = vadd.f32 %v1577, %v2194
  %v2328 = vadd.f32 %v1580, %v2197
  %v2329 = vadd.f32 %v1585, %v2202
  %v2330 = vadd.f32 %v1588, %v2205
  %v2331 = vadd.f32 %v1593, %v2210
  %v2332 = vadd.f32 %v1596, %v2213
  %v2333 = vadd.f32 %v1601, %v2218
  %v2334 = vadd.f32 %v1604, %v2221
  %v2335 = vadd.f32 %v1609, %v2226
  %v2336 = vadd.f32 %v1612, %v2229
  %v2337 = vadd.f32 %v1617, %v2234
  %v2338 = vadd.f32 %v1620, %v2237
  %v2339 = vadd.f32 %v1625, %v2242
  %v2340 = vadd.f32 %v1628, %v2245
  %v2341 = vadd.f32 %v1633, %v2250
  %v2342 = vadd.f32 %v1636, %v2253
  %v2343 = vadd.f32 %v1641, %v2258
  %v2344 = vld [vmem:[%s1 + $0x4] sm:$0x3]
  %v2346 = vrot.slane %v367, 1
  %v2347 = vsel %vm1689, %v1769, %v2346
  %v2349 = vunpack.c.l.b16 %v2344
  %v2350 = vpack.c.b16 %v2349, %v2349
  %v2352 = vshrl.u32 %v2350, 16
  %v2354 = vshll.u32 %v2350, 16
  %v2356 = vrot.slane %v2354, 1
  %v2357 = vor.u32 %v2352, %v2356
  %v2359 = vsel %vm710, %v2347, 0
  %v2362 = vsel %vm710, %v2346, 0
  %v2365 = vand.u32 %v2357, %v837
  %2367 = vmatprep.subr.bf16.mxu0 0
  %2368 = vmatpush1.bf16.msra.mxu0 %v2365
  %2369 = vmatprep.subr.bf16.mxu0 0
  %2370 = vmatpush1.bf16.msra.mxu0 0
  %2371 = vmatprep.subr.bf16.mxu0 0
  %2372 = vmatpush1.bf16.msra.mxu0 0
  %2373 = vmatprep.subr.bf16.mxu0 0
  %2374 = vmatpush1.bf16.msra.mxu0 0
  %2375 = vmatprep.subr.bf16.mxu0 0
  %2376 = vmatpush1.bf16.msra.mxu0 0
  %2377 = vmatprep.subr.bf16.mxu0 0
  %2378 = vmatpush1.bf16.msra.mxu0 0
  %2379 = vmatprep.subr.bf16.mxu0 0
  %2380 = vmatpush1.bf16.msra.mxu0 0
  %2381 = vmatprep.subr.bf16.mxu0 0
  %2382 = vmatpush1.bf16.msra.mxu0 0
  %2383 = vmatprep.subr.bf16.mxu0 0
  %2384 = vmatpush1.bf16.msra.mxu0 0
  %2385 = vmatprep.subr.bf16.mxu0 0
  %2386 = vmatpush1.bf16.msra.mxu0 0
  %2387 = vmatprep.subr.bf16.mxu0 0
  %2388 = vmatpush1.bf16.msra.mxu0 0
  %2389 = vmatprep.subr.bf16.mxu0 0
  %2390 = vmatpush1.bf16.msra.mxu0 0
  %2391 = vmatprep.subr.bf16.mxu0 0
  %2392 = vmatpush1.bf16.msra.mxu0 0
  %2393 = vmatprep.subr.bf16.mxu0 0
  %2394 = vmatpush1.bf16.msra.mxu0 0
  %2395 = vmatprep.subr.bf16.mxu0 0
  %2396 = vmatpush1.bf16.msra.mxu0 0
  %2397 = vmatprep.subr.bf16.mxu0 0
  %2398 = vmatpush1.bf16.msra.mxu0 0
  %2399 = vmatprep.mubr.bf16.mxu0 0
  %2400 = vmatmul.mubr.bf16.gmra.mrb[0].mxu0 %v1781
  %v2401 = vpop.f32.mrb[0].mxu0
  %v2402 = vadd.f32 0.0, %v2401
  %v2403 = vpop.f32.mrb[0].mxu0
  %v2404 = vpop.f32.mrb[0].mxu0
  %v2405 = vadd.f32 0.0, %v2404
  %v2406 = vpop.f32.mrb[0].mxu0
  %2407 = vmatprep.mubr.bf16.mxu0 0
  %2408 = vmatmul.mubr.bf16.gmra.mrb[0].mxu0 %v1784
  %v2409 = vpop.f32.mrb[0].mxu0
  %v2410 = vadd.f32 0.0, %v2409
  %v2411 = vpop.f32.mrb[0].mxu0
  %v2412 = vpop.f32.mrb[0].mxu0
  %v2413 = vadd.f32 0.0, %v2412
  %v2414 = vpop.f32.mrb[0].mxu0
  %2415 = vmatprep.mubr.bf16.mxu0 0
  %2416 = vmatmul.mubr.bf16.gmra.mrb[0].mxu0 %v1787
  %v2417 = vpop.f32.mrb[0].mxu0
  %v2418 = vadd.f32 0.0, %v2417
  %v2419 = vpop.f32.mrb[0].mxu0
  %v2420 = vpop.f32.mrb[0].mxu0
  %v2421 = vadd.f32 0.0, %v2420
  %v2422 = vpop.f32.mrb[0].mxu0
  %2423 = vmatprep.mubr.bf16.mxu0 0
  %2424 = vmatmul.mubr.bf16.gmra.mrb[0].mxu0 %v1790
  %v2425 = vpop.f32.mrb[0].mxu0
  %v2426 = vadd.f32 0.0, %v2425
  %v2427 = vpop.f32.mrb[0].mxu0
  %v2428 = vpop.f32.mrb[0].mxu0
  %v2429 = vadd.f32 0.0, %v2428
  %v2430 = vpop.f32.mrb[0].mxu0
  %2431 = vmatprep.mubr.bf16.mxu0 0
  %2432 = vmatmul.mubr.bf16.gmra.mrb[0].mxu0 %v1793
  %v2433 = vpop.f32.mrb[0].mxu0
  %v2434 = vadd.f32 0.0, %v2433
  %v2435 = vpop.f32.mrb[0].mxu0
  %v2436 = vpop.f32.mrb[0].mxu0
  %v2437 = vadd.f32 0.0, %v2436
  %v2438 = vpop.f32.mrb[0].mxu0
  %2439 = vmatprep.mubr.bf16.mxu0 0
  %2440 = vmatmul.mubr.bf16.gmra.mrb[0].mxu0 %v1796
  %v2441 = vpop.f32.mrb[0].mxu0
  %v2442 = vadd.f32 0.0, %v2441
  %v2443 = vpop.f32.mrb[0].mxu0
  %v2444 = vpop.f32.mrb[0].mxu0
  %v2445 = vadd.f32 0.0, %v2444
  %v2446 = vpop.f32.mrb[0].mxu0
  %2447 = vmatprep.mubr.bf16.mxu0 0
  %2448 = vmatmul.mubr.bf16.gmra.mrb[0].mxu0 %v1799
  %v2449 = vpop.f32.mrb[0].mxu0
  %v2450 = vadd.f32 0.0, %v2449
  %v2451 = vpop.f32.mrb[0].mxu0
  %v2452 = vpop.f32.mrb[0].mxu0
  %v2453 = vadd.f32 0.0, %v2452
  %v2454 = vpop.f32.mrb[0].mxu0
  %2455 = vmatprep.mubr.bf16.mxu0 0
  %2456 = vmatmul.mubr.bf16.gmra.mrb[0].mxu0 %v1802
  %v2457 = vpop.f32.mrb[0].mxu0
  %v2458 = vadd.f32 0.0, %v2457
  %v2459 = vpop.f32.mrb[0].mxu0
  %v2460 = vpop.f32.mrb[0].mxu0
  %v2461 = vadd.f32 0.0, %v2460
  %v2462 = vpop.f32.mrb[0].mxu0
  %2463 = vmatprep.mubr.bf16.mxu0 0
  %2464 = vmatmul.mubr.bf16.gmra.mrb[0].mxu0 %v1805
  %v2465 = vpop.f32.mrb[0].mxu0
  %v2466 = vadd.f32 0.0, %v2465
  %v2467 = vpop.f32.mrb[0].mxu0
  %v2468 = vpop.f32.mrb[0].mxu0
  %v2469 = vadd.f32 0.0, %v2468
  %v2470 = vpop.f32.mrb[0].mxu0
  %2471 = vmatprep.mubr.bf16.mxu0 0
  %2472 = vmatmul.mubr.bf16.gmra.mrb[0].mxu0 %v1808
  %v2473 = vpop.f32.mrb[0].mxu0
  %v2474 = vadd.f32 0.0, %v2473
  %v2475 = vpop.f32.mrb[0].mxu0
  %v2476 = vpop.f32.mrb[0].mxu0
  %v2477 = vadd.f32 0.0, %v2476
  %v2478 = vpop.f32.mrb[0].mxu0
  %2479 = vmatprep.mubr.bf16.mxu0 0
  %2480 = vmatmul.mubr.bf16.gmra.mrb[0].mxu0 %v1811
  %v2481 = vpop.f32.mrb[0].mxu0
  %v2482 = vadd.f32 0.0, %v2481
  %v2483 = vpop.f32.mrb[0].mxu0
  %v2484 = vpop.f32.mrb[0].mxu0
  %v2485 = vadd.f32 0.0, %v2484
  %v2486 = vpop.f32.mrb[0].mxu0
  %2487 = vmatprep.mubr.bf16.mxu0 0
  %2488 = vmatmul.mubr.bf16.gmra.mrb[0].mxu0 %v1814
  %v2489 = vpop.f32.mrb[0].mxu0
  %v2490 = vadd.f32 0.0, %v2489
  %v2491 = vpop.f32.mrb[0].mxu0
  %v2492 = vpop.f32.mrb[0].mxu0
  %v2493 = vadd.f32 0.0, %v2492
  %v2494 = vpop.f32.mrb[0].mxu0
  %2495 = vmatprep.mubr.bf16.mxu0 0
  %2496 = vmatmul.mubr.bf16.gmra.mrb[0].mxu0 %v1817
  %v2497 = vpop.f32.mrb[0].mxu0
  %v2498 = vadd.f32 0.0, %v2497
  %v2499 = vpop.f32.mrb[0].mxu0
  %v2500 = vpop.f32.mrb[0].mxu0
  %v2501 = vadd.f32 0.0, %v2500
  %v2502 = vpop.f32.mrb[0].mxu0
  %2503 = vmatprep.mubr.bf16.mxu0 0
  %2504 = vmatmul.mubr.bf16.gmra.mrb[0].mxu0 %v1820
  %v2505 = vpop.f32.mrb[0].mxu0
  %v2506 = vadd.f32 0.0, %v2505
  %v2507 = vpop.f32.mrb[0].mxu0
  %v2508 = vpop.f32.mrb[0].mxu0
  %v2509 = vadd.f32 0.0, %v2508
  %v2510 = vpop.f32.mrb[0].mxu0
  %2511 = vmatprep.mubr.bf16.mxu0 0
  %2512 = vmatmul.mubr.bf16.gmra.mrb[0].mxu0 %v1823
  %v2513 = vpop.f32.mrb[0].mxu0
  %v2514 = vadd.f32 0.0, %v2513
  %v2515 = vpop.f32.mrb[0].mxu0
  %v2516 = vpop.f32.mrb[0].mxu0
  %v2517 = vadd.f32 0.0, %v2516
  %v2518 = vpop.f32.mrb[0].mxu0
  %2519 = vmatprep.mubr.bf16.mxu0 0
  %2520 = vmatmul.mubr.bf16.gmra.mrb[0].mxu0 %v1826
  %v2521 = vpop.f32.mrb[0].mxu0
  %v2522 = vadd.f32 0.0, %v2521
  %v2523 = vpop.f32.mrb[0].mxu0
  %v2524 = vpop.f32.mrb[0].mxu0
  %v2525 = vadd.f32 0.0, %v2524
  %v2526 = vpop.f32.mrb[0].mxu0
  %2527 = vmatprep.mubr.bf16.mxu0 0
  %2528 = vmatmul.mubr.bf16.gmra.mrb[0].mxu0 %v1829
  %v2529 = vpop.f32.mrb[0].mxu0
  %v2530 = vadd.f32 0.0, %v2529
  %v2531 = vpop.f32.mrb[0].mxu0
  %v2532 = vpop.f32.mrb[0].mxu0
  %v2533 = vadd.f32 0.0, %v2532
  %v2534 = vpop.f32.mrb[0].mxu0
  %2535 = vmatprep.mubr.bf16.mxu0 0
  %2536 = vmatmul.mubr.bf16.gmra.mrb[0].mxu0 %v1832
  %v2537 = vpop.f32.mrb[0].mxu0
  %v2538 = vadd.f32 0.0, %v2537
  %v2539 = vpop.f32.mrb[0].mxu0
  %v2540 = vpop.f32.mrb[0].mxu0
  %v2541 = vadd.f32 0.0, %v2540
  %v2542 = vpop.f32.mrb[0].mxu0
  %2543 = vmatprep.mubr.bf16.mxu0 0
  %2544 = vmatmul.mubr.bf16.gmra.mrb[0].mxu0 %v1835
  %v2545 = vpop.f32.mrb[0].mxu0
  %v2546 = vadd.f32 0.0, %v2545
  %v2547 = vpop.f32.mrb[0].mxu0
  %v2548 = vpop.f32.mrb[0].mxu0
  %v2549 = vadd.f32 0.0, %v2548
  %v2550 = vpop.f32.mrb[0].mxu0
  %2551 = vmatprep.mubr.bf16.mxu0 0
  %2552 = vmatmul.mubr.bf16.gmra.mrb[0].mxu0 %v1838
  %v2553 = vpop.f32.mrb[0].mxu0
  %v2554 = vadd.f32 0.0, %v2553
  %v2555 = vpop.f32.mrb[0].mxu0
  %v2556 = vpop.f32.mrb[0].mxu0
  %v2557 = vadd.f32 0.0, %v2556
  %v2558 = vpop.f32.mrb[0].mxu0
  %2559 = vmatprep.mubr.bf16.mxu0 0
  %2560 = vmatmul.mubr.bf16.gmra.mrb[0].mxu0 %v1841
  %v2561 = vpop.f32.mrb[0].mxu0
  %v2562 = vadd.f32 0.0, %v2561
  %v2563 = vpop.f32.mrb[0].mxu0
  %v2564 = vpop.f32.mrb[0].mxu0
  %v2565 = vadd.f32 0.0, %v2564
  %v2566 = vpop.f32.mrb[0].mxu0
  %2567 = vmatprep.mubr.bf16.mxu0 0
  %2568 = vmatmul.mubr.bf16.gmra.mrb[0].mxu0 %v1844
  %v2569 = vpop.f32.mrb[0].mxu0
  %v2570 = vadd.f32 0.0, %v2569
  %v2571 = vpop.f32.mrb[0].mxu0
  %v2572 = vpop.f32.mrb[0].mxu0
  %v2573 = vadd.f32 0.0, %v2572
  %v2574 = vpop.f32.mrb[0].mxu0
  %2575 = vmatprep.mubr.bf16.mxu0 0
  %2576 = vmatmul.mubr.bf16.gmra.mrb[0].mxu0 %v1847
  %v2577 = vpop.f32.mrb[0].mxu0
  %v2578 = vadd.f32 0.0, %v2577
  %v2579 = vpop.f32.mrb[0].mxu0
  %v2580 = vpop.f32.mrb[0].mxu0
  %v2581 = vadd.f32 0.0, %v2580
  %v2582 = vpop.f32.mrb[0].mxu0
  %2583 = vmatprep.mubr.bf16.mxu0 0
  %2584 = vmatmul.mubr.bf16.gmra.mrb[0].mxu0 %v1850
  %v2585 = vpop.f32.mrb[0].mxu0
  %v2586 = vadd.f32 0.0, %v2585
  %v2587 = vpop.f32.mrb[0].mxu0
  %v2588 = vpop.f32.mrb[0].mxu0
  %v2589 = vadd.f32 0.0, %v2588
  %v2590 = vpop.f32.mrb[0].mxu0
  %2591 = vmatprep.mubr.bf16.mxu0 0
  %2592 = vmatmul.mubr.bf16.gmra.mrb[0].mxu0 %v1853
  %v2593 = vpop.f32.mrb[0].mxu0
  %v2594 = vadd.f32 0.0, %v2593
  %v2595 = vpop.f32.mrb[0].mxu0
  %v2596 = vpop.f32.mrb[0].mxu0
  %v2597 = vadd.f32 0.0, %v2596
  %v2598 = vpop.f32.mrb[0].mxu0
  %2599 = vmatprep.mubr.bf16.mxu0 0
  %2600 = vmatmul.mubr.bf16.gmra.mrb[0].mxu0 %v1856
  %v2601 = vpop.f32.mrb[0].mxu0
  %v2602 = vadd.f32 0.0, %v2601
  %v2603 = vpop.f32.mrb[0].mxu0
  %v2604 = vpop.f32.mrb[0].mxu0
  %v2605 = vadd.f32 0.0, %v2604
  %v2606 = vpop.f32.mrb[0].mxu0
  %2607 = vmatprep.mubr.bf16.mxu0 0
  %2608 = vmatmul.mubr.bf16.gmra.mrb[0].mxu0 %v1859
  %v2609 = vpop.f32.mrb[0].mxu0
  %v2610 = vadd.f32 0.0, %v2609
  %v2611 = vpop.f32.mrb[0].mxu0
  %v2612 = vpop.f32.mrb[0].mxu0
  %v2613 = vadd.f32 0.0, %v2612
  %v2614 = vpop.f32.mrb[0].mxu0
  %2615 = vmatprep.mubr.bf16.mxu0 0
  %2616 = vmatmul.mubr.bf16.gmra.mrb[0].mxu0 %v1862
  %v2617 = vpop.f32.mrb[0].mxu0
  %v2618 = vadd.f32 0.0, %v2617
  %v2619 = vpop.f32.mrb[0].mxu0
  %v2620 = vpop.f32.mrb[0].mxu0
  %v2621 = vadd.f32 0.0, %v2620
  %v2622 = vpop.f32.mrb[0].mxu0
  %2623 = vmatprep.mubr.bf16.mxu0 0
  %2624 = vmatmul.mubr.bf16.gmra.mrb[0].mxu0 %v1865
  %v2625 = vpop.f32.mrb[0].mxu0
  %v2626 = vadd.f32 0.0, %v2625
  %v2627 = vpop.f32.mrb[0].mxu0
  %v2628 = vpop.f32.mrb[0].mxu0
  %v2629 = vadd.f32 0.0, %v2628
  %v2630 = vpop.f32.mrb[0].mxu0
  %2631 = vmatprep.mubr.bf16.mxu0 0
  %2632 = vmatmul.mubr.bf16.gmra.mrb[0].mxu0 %v1868
  %v2633 = vpop.f32.mrb[0].mxu0
  %v2634 = vadd.f32 0.0, %v2633
  %v2635 = vpop.f32.mrb[0].mxu0
  %v2636 = vpop.f32.mrb[0].mxu0
  %v2637 = vadd.f32 0.0, %v2636
  %v2638 = vpop.f32.mrb[0].mxu0
  %2639 = vmatprep.mubr.bf16.mxu0 0
  %2640 = vmatmul.mubr.bf16.gmra.mrb[0].mxu0 %v1871
  %v2641 = vpop.f32.mrb[0].mxu0
  %v2642 = vadd.f32 0.0, %v2641
  %v2643 = vpop.f32.mrb[0].mxu0
  %v2644 = vpop.f32.mrb[0].mxu0
  %v2645 = vadd.f32 0.0, %v2644
  %v2646 = vpop.f32.mrb[0].mxu0
  %2647 = vmatprep.mubr.bf16.mxu0 0
  %2648 = vmatmul.mubr.bf16.gmra.mrb[0].mxu0 %v1874
  %v2649 = vpop.f32.mrb[0].mxu0
  %v2650 = vadd.f32 0.0, %v2649
  %v2651 = vpop.f32.mrb[0].mxu0
  %v2652 = vpop.f32.mrb[0].mxu0
  %v2653 = vadd.f32 0.0, %v2652
  %v2654 = vpop.f32.mrb[0].mxu0
  %2655 = vmatprep.mubr.bf16.mxu0 0
  %2656 = vmatmul.mubr.bf16.gmra.mrb[0].mxu0 %v1877
  %v2657 = vpop.f32.mrb[0].mxu0
  %v2658 = vadd.f32 0.0, %v2657
  %v2659 = vpop.f32.mrb[0].mxu0
  %v2660 = vpop.f32.mrb[0].mxu0
  %v2661 = vadd.f32 0.0, %v2660
  %v2662 = vpop.f32.mrb[0].mxu0
  %2663 = vmatprep.mubr.bf16.mxu0 0
  %2664 = vmatmul.mubr.bf16.gmra.mrb[0].mxu0 %v1880
  %v2665 = vpop.f32.mrb[0].mxu0
  %v2666 = vadd.f32 0.0, %v2665
  %v2667 = vpop.f32.mrb[0].mxu0
  %v2668 = vpop.f32.mrb[0].mxu0
  %v2669 = vadd.f32 0.0, %v2668
  %v2670 = vpop.f32.mrb[0].mxu0
  %2671 = vmatprep.mubr.bf16.mxu0 0
  %2672 = vmatmul.mubr.bf16.gmra.mrb[0].mxu0 %v1883
  %v2673 = vpop.f32.mrb[0].mxu0
  %v2674 = vadd.f32 0.0, %v2673
  %v2675 = vpop.f32.mrb[0].mxu0
  %v2676 = vpop.f32.mrb[0].mxu0
  %v2677 = vadd.f32 0.0, %v2676
  %v2678 = vpop.f32.mrb[0].mxu0
  %2679 = vmatprep.mubr.bf16.mxu0 0
  %2680 = vmatmul.mubr.bf16.gmra.mrb[0].mxu0 %v1886
  %v2681 = vpop.f32.mrb[0].mxu0
  %v2682 = vadd.f32 0.0, %v2681
  %v2683 = vpop.f32.mrb[0].mxu0
  %v2684 = vpop.f32.mrb[0].mxu0
  %v2685 = vadd.f32 0.0, %v2684
  %v2686 = vpop.f32.mrb[0].mxu0
  %2687 = vmatprep.mubr.bf16.mxu0 0
  %2688 = vmatmul.mubr.bf16.gmra.mrb[0].mxu0 %v1889
  %v2689 = vpop.f32.mrb[0].mxu0
  %v2690 = vadd.f32 0.0, %v2689
  %v2691 = vpop.f32.mrb[0].mxu0
  %v2692 = vpop.f32.mrb[0].mxu0
  %v2693 = vadd.f32 0.0, %v2692
  %v2694 = vpop.f32.mrb[0].mxu0
  %2695 = vmatprep.mubr.bf16.mxu0 0
  %2696 = vmatmul.mubr.bf16.gmra.mrb[0].mxu0 %v1892
  %v2697 = vpop.f32.mrb[0].mxu0
  %v2698 = vadd.f32 0.0, %v2697
  %v2699 = vpop.f32.mrb[0].mxu0
  %v2700 = vpop.f32.mrb[0].mxu0
  %v2701 = vadd.f32 0.0, %v2700
  %v2702 = vpop.f32.mrb[0].mxu0
  %2703 = vmatprep.mubr.bf16.mxu0 0
  %2704 = vmatmul.mubr.bf16.gmra.mrb[0].mxu0 %v1895
  %v2705 = vpop.f32.mrb[0].mxu0
  %v2706 = vadd.f32 0.0, %v2705
  %v2707 = vpop.f32.mrb[0].mxu0
  %v2708 = vpop.f32.mrb[0].mxu0
  %v2709 = vadd.f32 0.0, %v2708
  %v2710 = vpop.f32.mrb[0].mxu0
  %2711 = vmatprep.mubr.bf16.mxu0 0
  %2712 = vmatmul.mubr.bf16.gmra.mrb[0].mxu0 %v2359
  %v2713 = vpop.f32.mrb[0].mxu0
  %v2714 = vadd.f32 0.0, %v2713
  %v2715 = vpop.f32.mrb[0].mxu0
  %v2716 = vpop.f32.mrb[0].mxu0
  %v2717 = vadd.f32 0.0, %v2716
  %v2718 = vpop.f32.mrb[0].mxu0
  %2719 = vmatprep.mubr.bf16.mxu0 0
  %2720 = vmatmul.mubr.bf16.gmra.mrb[0].mxu0 %v2362
  %v2721 = vpop.f32.mrb[0].mxu0
  %v2722 = vadd.f32 0.0, %v2721
  %v2723 = vpop.f32.mrb[0].mxu0
  %v2724 = vpop.f32.mrb[0].mxu0
  %v2725 = vpop.f32.mrb[0].mxu0
  %2726 = vdwg.mxu0
  %v2727 = vadd.f32 %v2263, %v2402
  %v2728 = vadd.f32 %v2264, %v2405
  %v2729 = vadd.f32 %v2265, %v2410
  %v2730 = vadd.f32 %v2266, %v2413
  %v2731 = vadd.f32 %v2267, %v2418
  %v2732 = vadd.f32 %v2268, %v2421
  %v2733 = vadd.f32 %v2269, %v2426
  %v2734 = vadd.f32 %v2270, %v2429
  %v2735 = vadd.f32 %v2271, %v2434
  %v2736 = vadd.f32 %v2272, %v2437
  %v2737 = vadd.f32 %v2273, %v2442
  %v2738 = vadd.f32 %v2274, %v2445
  %v2739 = vadd.f32 %v2275, %v2450
  %v2740 = vadd.f32 %v2276, %v2453
  %v2741 = vadd.f32 %v2277, %v2458
  %v2742 = vadd.f32 %v2278, %v2461
  %v2743 = vadd.f32 %v2279, %v2466
  %v2744 = vadd.f32 %v2280, %v2469
  %v2745 = vadd.f32 %v2281, %v2474
  %v2746 = vadd.f32 %v2282, %v2477
  %v2747 = vadd.f32 %v2283, %v2482
  %v2748 = vadd.f32 %v2284, %v2485
  %v2749 = vadd.f32 %v2285, %v2490
  %v2750 = vadd.f32 %v2286, %v2493
  %v2751 = vadd.f32 %v2287, %v2498
  %v2752 = vadd.f32 %v2288, %v2501
  %v2753 = vadd.f32 %v2289, %v2506
  %v2754 = vadd.f32 %v2290, %v2509
  %v2755 = vadd.f32 %v2291, %v2514
  %v2756 = vadd.f32 %v2292, %v2517
  %v2757 = vadd.f32 %v2293, %v2522
  %v2758 = vadd.f32 %v2294, %v2525
  %v2759 = vadd.f32 %v2295, %v2530
  %v2760 = vadd.f32 %v2296, %v2533
  %v2761 = vadd.f32 %v2297, %v2538
  %v2762 = vadd.f32 %v2298, %v2541
  %v2763 = vadd.f32 %v2299, %v2546
  %v2764 = vadd.f32 %v2300, %v2549
  %v2765 = vadd.f32 %v2301, %v2554
  %v2766 = vadd.f32 %v2302, %v2557
  %v2767 = vadd.f32 %v2303, %v2562
  %v2768 = vadd.f32 %v2304, %v2565
  %v2769 = vadd.f32 %v2305, %v2570
  %v2770 = vadd.f32 %v2306, %v2573
  %v2771 = vadd.f32 %v2307, %v2578
  %v2772 = vadd.f32 %v2308, %v2581
  %v2773 = vadd.f32 %v2309, %v2586
  %v2774 = vadd.f32 %v2310, %v2589
  %v2775 = vadd.f32 %v2311, %v2594
  %v2776 = vadd.f32 %v2312, %v2597
  %v2777 = vadd.f32 %v2313, %v2602
  %v2778 = vadd.f32 %v2314, %v2605
  %v2779 = vadd.f32 %v2315, %v2610
  %v2780 = vadd.f32 %v2316, %v2613
  %v2781 = vadd.f32 %v2317, %v2618
  %v2782 = vadd.f32 %v2318, %v2621
  %v2783 = vadd.f32 %v2319, %v2626
  %v2784 = vadd.f32 %v2320, %v2629
  %v2785 = vadd.f32 %v2321, %v2634
  %v2786 = vadd.f32 %v2322, %v2637
  %v2787 = vadd.f32 %v2323, %v2642
  %v2788 = vadd.f32 %v2324, %v2645
  %v2789 = vadd.f32 %v2325, %v2650
  %v2790 = vadd.f32 %v2326, %v2653
  %v2791 = vadd.f32 %v2327, %v2658
  %v2792 = vadd.f32 %v2328, %v2661
  %v2793 = vadd.f32 %v2329, %v2666
  %v2794 = vadd.f32 %v2330, %v2669
  %v2795 = vadd.f32 %v2331, %v2674
  %v2796 = vadd.f32 %v2332, %v2677
  %v2797 = vadd.f32 %v2333, %v2682
  %v2798 = vadd.f32 %v2334, %v2685
  %v2799 = vadd.f32 %v2335, %v2690
  %v2800 = vadd.f32 %v2336, %v2693
  %v2801 = vadd.f32 %v2337, %v2698
  %v2802 = vadd.f32 %v2338, %v2701
  %v2803 = vadd.f32 %v2339, %v2706
  %v2804 = vadd.f32 %v2340, %v2709
  %v2805 = vadd.f32 %v2341, %v2714
  %v2806 = vadd.f32 %v2342, %v2717
  %v2807 = vadd.f32 %v2343, %v2722
  %v2808 = vld [vmem:[%s1 + $0x4] sm:$0xc]
  %vm2809 = vsmask.f32 6400
  %v2810 = vrot.slane %v384, 1
  %v2811 = vrot.slane %v380, 2
  %v2812 = vor.u32 %v2810, %v2811
  %v2813 = vrot.slane %v392, 1
  %v2814 = vrot.slane %v388, 2
  %v2815 = vor.u32 %v2813, %v2814
  %v2816 = vsel %vm2809, %v2812, %v2815
  %v2817 = vrot.slane %v400, 1
  %v2818 = vrot.slane %v396, 2
  %v2819 = vor.u32 %v2817, %v2818
  %v2820 = vsel %vm2809, %v2815, %v2819
  %v2821 = vrot.slane %v408, 1
  %v2822 = vrot.slane %v404, 2
  %v2823 = vor.u32 %v2821, %v2822
  %v2824 = vsel %vm2809, %v2819, %v2823
  %v2825 = vrot.slane %v416, 1
  %v2826 = vrot.slane %v412, 2
  %v2827 = vor.u32 %v2825, %v2826
  %v2828 = vsel %vm2809, %v2823, %v2827
  %v2829 = vrot.slane %v424, 1
  %v2830 = vrot.slane %v420, 2
  %v2831 = vor.u32 %v2829, %v2830
  %v2832 = vsel %vm2809, %v2827, %v2831
  %v2833 = vrot.slane %v432, 1
  %v2834 = vrot.slane %v428, 2
  %v2835 = vor.u32 %v2833, %v2834
  %v2836 = vsel %vm2809, %v2831, %v2835
  %v2837 = vrot.slane %v440, 1
  %v2838 = vrot.slane %v436, 2
  %v2839 = vor.u32 %v2837, %v2838
  %v2840 = vsel %vm2809, %v2835, %v2839
  %v2841 = vrot.slane %v448, 1
  %v2842 = vrot.slane %v444, 2
  %v2843 = vor.u32 %v2841, %v2842
  %v2844 = vsel %vm2809, %v2839, %v2843
  %v2845 = vrot.slane %v456, 1
  %v2846 = vrot.slane %v452, 2
  %v2847 = vor.u32 %v2845, %v2846
  %v2848 = vsel %vm2809, %v2843, %v2847
  %v2849 = vrot.slane %v464, 1
  %v2850 = vrot.slane %v460, 2
  %v2851 = vor.u32 %v2849, %v2850
  %v2852 = vsel %vm2809, %v2847, %v2851
  %v2853 = vrot.slane %v472, 1
  %v2854 = vrot.slane %v468, 2
  %v2855 = vor.u32 %v2853, %v2854
  %v2856 = vsel %vm2809, %v2851, %v2855
  %v2857 = vrot.slane %v480, 1
  %v2858 = vrot.slane %v476, 2
  %v2859 = vor.u32 %v2857, %v2858
  %v2860 = vsel %vm2809, %v2855, %v2859
  %v2861 = vrot.slane %v488, 1
  %v2862 = vrot.slane %v484, 2
  %v2863 = vor.u32 %v2861, %v2862
  %v2864 = vsel %vm2809, %v2859, %v2863
  %v2865 = vrot.slane %v496, 1
  %v2866 = vrot.slane %v492, 2
  %v2867 = vor.u32 %v2865, %v2866
  %v2868 = vsel %vm2809, %v2863, %v2867
  %v2869 = vrot.slane %v504, 1
  %v2870 = vrot.slane %v500, 2
  %v2871 = vor.u32 %v2869, %v2870
  %v2872 = vsel %vm2809, %v2867, %v2871
  %v2873 = vrot.slane %v512, 1
  %v2874 = vrot.slane %v508, 2
  %v2875 = vor.u32 %v2873, %v2874
  %v2876 = vsel %vm2809, %v2871, %v2875
  %v2877 = vrot.slane %v520, 1
  %v2878 = vrot.slane %v516, 2
  %v2879 = vor.u32 %v2877, %v2878
  %v2880 = vsel %vm2809, %v2875, %v2879
  %v2881 = vrot.slane %v528, 1
  %v2882 = vrot.slane %v524, 2
  %v2883 = vor.u32 %v2881, %v2882
  %v2884 = vsel %vm2809, %v2879, %v2883
  %v2885 = vrot.slane %v536, 1
  %v2886 = vrot.slane %v532, 2
  %v2887 = vor.u32 %v2885, %v2886
  %v2888 = vsel %vm2809, %v2883, %v2887
  %v2889 = vrot.slane %v544, 1
  %v2890 = vrot.slane %v540, 2
  %v2891 = vor.u32 %v2889, %v2890
  %v2892 = vsel %vm2809, %v2887, %v2891
  %v2893 = vrot.slane %v552, 1
  %v2894 = vrot.slane %v548, 2
  %v2895 = vor.u32 %v2893, %v2894
  %v2896 = vsel %vm2809, %v2891, %v2895
  %v2897 = vrot.slane %v560, 1
  %v2898 = vrot.slane %v556, 2
  %v2899 = vor.u32 %v2897, %v2898
  %v2900 = vsel %vm2809, %v2895, %v2899
  %v2901 = vrot.slane %v568, 1
  %v2902 = vrot.slane %v564, 2
  %v2903 = vor.u32 %v2901, %v2902
  %v2904 = vsel %vm2809, %v2899, %v2903
  %v2905 = vrot.slane %v576, 1
  %v2906 = vrot.slane %v572, 2
  %v2907 = vor.u32 %v2905, %v2906
  %v2908 = vsel %vm2809, %v2903, %v2907
  %v2909 = vrot.slane %v584, 1
  %v2910 = vrot.slane %v580, 2
  %v2911 = vor.u32 %v2909, %v2910
  %v2912 = vsel %vm2809, %v2907, %v2911
  %v2913 = vrot.slane %v592, 1
  %v2914 = vrot.slane %v588, 2
  %v2915 = vor.u32 %v2913, %v2914
  %v2916 = vsel %vm2809, %v2911, %v2915
  %v2917 = vrot.slane %v600, 1
  %v2918 = vrot.slane %v596, 2
  %v2919 = vor.u32 %v2917, %v2918
  %v2920 = vsel %vm2809, %v2915, %v2919
  %v2921 = vrot.slane %v608, 1
  %v2922 = vrot.slane %v604, 2
  %v2923 = vor.u32 %v2921, %v2922
  %v2924 = vsel %vm2809, %v2919, %v2923
  %v2925 = vrot.slane %v616, 1
  %v2926 = vrot.slane %v612, 2
  %v2927 = vor.u32 %v2925, %v2926
  %v2928 = vsel %vm2809, %v2923, %v2927
  %v2929 = vrot.slane %v624, 1
  %v2930 = vrot.slane %v620, 2
  %v2931 = vor.u32 %v2929, %v2930
  %v2932 = vsel %vm2809, %v2927, %v2931
  %v2933 = vrot.slane %v632, 1
  %v2934 = vrot.slane %v628, 2
  %v2935 = vor.u32 %v2933, %v2934
  %v2936 = vsel %vm2809, %v2931, %v2935
  %v2937 = vrot.slane %v640, 1
  %v2938 = vrot.slane %v636, 2
  %v2939 = vor.u32 %v2937, %v2938
  %v2940 = vsel %vm2809, %v2935, %v2939
  %v2941 = vrot.slane %v648, 1
  %v2942 = vrot.slane %v644, 2
  %v2943 = vor.u32 %v2941, %v2942
  %v2944 = vsel %vm2809, %v2939, %v2943
  %v2945 = vrot.slane %v656, 1
  %v2946 = vrot.slane %v652, 2
  %v2947 = vor.u32 %v2945, %v2946
  %v2948 = vsel %vm2809, %v2943, %v2947
  %v2949 = vrot.slane %v664, 1
  %v2950 = vrot.slane %v660, 2
  %v2951 = vor.u32 %v2949, %v2950
  %v2952 = vsel %vm2809, %v2947, %v2951
  %v2953 = vrot.slane %v672, 1
  %v2954 = vrot.slane %v668, 2
  %v2955 = vor.u32 %v2953, %v2954
  %v2956 = vsel %vm2809, %v2951, %v2955
  %v2957 = vrot.slane %v680, 1
  %v2958 = vrot.slane %v676, 2
  %v2959 = vor.u32 %v2957, %v2958
  %v2960 = vsel %vm2809, %v2955, %v2959
  %v2961 = vrot.slane %v688, 1
  %v2962 = vrot.slane %v684, 2
  %v2963 = vor.u32 %v2961, %v2962
  %v2964 = vsel %vm2809, %v2959, %v2963
  %v2965 = vrot.slane %v696, 1
  %v2966 = vrot.slane %v692, 2
  %v2967 = vor.u32 %v2965, %v2966
  %v2968 = vsel %vm2809, %v2963, %v2967
  %v2970 = vshrl.u32 %v367, 16
  %v2972 = vrot.slane %v2970, 1
  %v2973 = vshll.u32 %v367, 16
  %v2975 = vrot.slane %v2973, 2
  %v2976 = vor.u32 %v2972, %v2975
  %v2977 = vsel %vm2809, %v2967, %v2976
  %v2979 = vunpack.c.l.b16 %v2808
  %v2980 = vpack.c.b16 %v2979, %v2979
  %v2981 = vrot.slane %v2980, 2
  %v2983 = vsel %vm710, %v2816, 0
  %v2986 = vsel %vm710, %v2820, 0
  %v2989 = vsel %vm710, %v2824, 0
  %v2992 = vsel %vm710, %v2828, 0
  %v2995 = vsel %vm710, %v2832, 0
  %v2998 = vsel %vm710, %v2836, 0
  %v3001 = vsel %vm710, %v2840, 0
  %v3004 = vsel %vm710, %v2844, 0
  %v3007 = vsel %vm710, %v2848, 0
  %v3010 = vsel %vm710, %v2852, 0
  %v3013 = vsel %vm710, %v2856, 0
  %v3016 = vsel %vm710, %v2860, 0
  %v3019 = vsel %vm710, %v2864, 0
  %v3022 = vsel %vm710, %v2868, 0
  %v3025 = vsel %vm710, %v2872, 0
  %v3028 = vsel %vm710, %v2876, 0
  %v3031 = vsel %vm710, %v2880, 0
  %v3034 = vsel %vm710, %v2884, 0
  %v3037 = vsel %vm710, %v2888, 0
  %v3040 = vsel %vm710, %v2892, 0
  %v3043 = vsel %vm710, %v2896, 0
  %v3046 = vsel %vm710, %v2900, 0
  %v3049 = vsel %vm710, %v2904, 0
  %v3052 = vsel %vm710, %v2908, 0
  %v3055 = vsel %vm710, %v2912, 0
  %v3058 = vsel %vm710, %v2916, 0
  %v3061 = vsel %vm710, %v2920, 0
  %v3064 = vsel %vm710, %v2924, 0
  %v3067 = vsel %vm710, %v2928, 0
  %v3070 = vsel %vm710, %v2932, 0
  %v3073 = vsel %vm710, %v2936, 0
  %v3076 = vsel %vm710, %v2940, 0
  %v3079 = vsel %vm710, %v2944, 0
  %v3082 = vsel %vm710, %v2948, 0
  %v3085 = vsel %vm710, %v2952, 0
  %v3088 = vsel %vm710, %v2956, 0
  %v3091 = vsel %vm710, %v2960, 0
  %v3094 = vsel %vm710, %v2964, 0
  %v3097 = vsel %vm710, %v2968, 0
  %v3100 = vsel %vm710, %v2977, 0
  %v3103 = vsel %vm710, %v2976, 0
  %v3106 = vand.u32 %v2981, %v837
  %3108 = vmatprep.subr.bf16.mxu0 0
  %3109 = vmatpush1.bf16.msra.mxu0 %v3106
  %3110 = vmatprep.subr.bf16.mxu0 0
  %3111 = vmatpush1.bf16.msra.mxu0 0
  %3112 = vmatprep.subr.bf16.mxu0 0
  %3113 = vmatpush1.bf16.msra.mxu0 0
  %3114 = vmatprep.subr.bf16.mxu0 0
  %3115 = vmatpush1.bf16.msra.mxu0 0
  %3116 = vmatprep.subr.bf16.mxu0 0
  %3117 = vmatpush1.bf16.msra.mxu0 0
  %3118 = vmatprep.subr.bf16.mxu0 0
  %3119 = vmatpush1.bf16.msra.mxu0 0
  %3120 = vmatprep.subr.bf16.mxu0 0
  %3121 = vmatpush1.bf16.msra.mxu0 0
  %3122 = vmatprep.subr.bf16.mxu0 0
  %3123 = vmatpush1.bf16.msra.mxu0 0
  %3124 = vmatprep.subr.bf16.mxu0 0
  %3125 = vmatpush1.bf16.msra.mxu0 0
  %3126 = vmatprep.subr.bf16.mxu0 0
  %3127 = vmatpush1.bf16.msra.mxu0 0
  %3128 = vmatprep.subr.bf16.mxu0 0
  %3129 = vmatpush1.bf16.msra.mxu0 0
  %3130 = vmatprep.subr.bf16.mxu0 0
  %3131 = vmatpush1.bf16.msra.mxu0 0
  %3132 = vmatprep.subr.bf16.mxu0 0
  %3133 = vmatpush1.bf16.msra.mxu0 0
  %3134 = vmatprep.subr.bf16.mxu0 0
  %3135 = vmatpush1.bf16.msra.mxu0 0
  %3136 = vmatprep.subr.bf16.mxu0 0
  %3137 = vmatpush1.bf16.msra.mxu0 0
  %3138 = vmatprep.subr.bf16.mxu0 0
  %3139 = vmatpush1.bf16.msra.mxu0 0
  %3140 = vmatprep.mubr.bf16.mxu0 0
  %3141 = vmatmul.mubr.bf16.gmra.mrb[0].mxu0 %v2983
  %v3142 = vpop.f32.mrb[0].mxu0
  %v3143 = vadd.f32 0.0, %v3142
  %v3144 = vpop.f32.mrb[0].mxu0
  %v3145 = vpop.f32.mrb[0].mxu0
  %v3146 = vadd.f32 0.0, %v3145
  %v3147 = vpop.f32.mrb[0].mxu0
  %3148 = vmatprep.mubr.bf16.mxu0 0
  %3149 = vmatmul.mubr.bf16.gmra.mrb[0].mxu0 %v2986
  %v3150 = vpop.f32.mrb[0].mxu0
  %v3151 = vadd.f32 0.0, %v3150
  %v3152 = vpop.f32.mrb[0].mxu0
  %v3153 = vpop.f32.mrb[0].mxu0
  %v3154 = vadd.f32 0.0, %v3153
  %v3155 = vpop.f32.mrb[0].mxu0
  %3156 = vmatprep.mubr.bf16.mxu0 0
  %3157 = vmatmul.mubr.bf16.gmra.mrb[0].mxu0 %v2989
  %v3158 = vpop.f32.mrb[0].mxu0
  %v3159 = vadd.f32 0.0, %v3158
  %v3160 = vpop.f32.mrb[0].mxu0
  %v3161 = vpop.f32.mrb[0].mxu0
  %v3162 = vadd.f32 0.0, %v3161
  %v3163 = vpop.f32.mrb[0].mxu0
  %3164 = vmatprep.mubr.bf16.mxu0 0
  %3165 = vmatmul.mubr.bf16.gmra.mrb[0].mxu0 %v2992
  %v3166 = vpop.f32.mrb[0].mxu0
  %v3167 = vadd.f32 0.0, %v3166
  %v3168 = vpop.f32.mrb[0].mxu0
  %v3169 = vpop.f32.mrb[0].mxu0
  %v3170 = vadd.f32 0.0, %v3169
  %v3171 = vpop.f32.mrb[0].mxu0
  %3172 = vmatprep.mubr.bf16.mxu0 0
  %3173 = vmatmul.mubr.bf16.gmra.mrb[0].mxu0 %v2995
  %v3174 = vpop.f32.mrb[0].mxu0
  %v3175 = vadd.f32 0.0, %v3174
  %v3176 = vpop.f32.mrb[0].mxu0
  %v3177 = vpop.f32.mrb[0].mxu0
  %v3178 = vadd.f32 0.0, %v3177
  %v3179 = vpop.f32.mrb[0].mxu0
  %3180 = vmatprep.mubr.bf16.mxu0 0
  %3181 = vmatmul.mubr.bf16.gmra.mrb[0].mxu0 %v2998
  %v3182 = vpop.f32.mrb[0].mxu0
  %v3183 = vadd.f32 0.0, %v3182
  %v3184 = vpop.f32.mrb[0].mxu0
  %v3185 = vpop.f32.mrb[0].mxu0
  %v3186 = vadd.f32 0.0, %v3185
  %v3187 = vpop.f32.mrb[0].mxu0
  %3188 = vmatprep.mubr.bf16.mxu0 0
  %3189 = vmatmul.mubr.bf16.gmra.mrb[0].mxu0 %v3001
  %v3190 = vpop.f32.mrb[0].mxu0
  %v3191 = vadd.f32 0.0, %v3190
  %v3192 = vpop.f32.mrb[0].mxu0
  %v3193 = vpop.f32.mrb[0].mxu0
  %v3194 = vadd.f32 0.0, %v3193
  %v3195 = vpop.f32.mrb[0].mxu0
  %3196 = vmatprep.mubr.bf16.mxu0 0
  %3197 = vmatmul.mubr.bf16.gmra.mrb[0].mxu0 %v3004
  %v3198 = vpop.f32.mrb[0].mxu0
  %v3199 = vadd.f32 0.0, %v3198
  %v3200 = vpop.f32.mrb[0].mxu0
  %v3201 = vpop.f32.mrb[0].mxu0
  %v3202 = vadd.f32 0.0, %v3201
  %v3203 = vpop.f32.mrb[0].mxu0
  %3204 = vmatprep.mubr.bf16.mxu0 0
  %3205 = vmatmul.mubr.bf16.gmra.mrb[0].mxu0 %v3007
  %v3206 = vpop.f32.mrb[0].mxu0
  %v3207 = vadd.f32 0.0, %v3206
  %v3208 = vpop.f32.mrb[0].mxu0
  %v3209 = vpop.f32.mrb[0].mxu0
  %v3210 = vadd.f32 0.0, %v3209
  %v3211 = vpop.f32.mrb[0].mxu0
  %3212 = vmatprep.mubr.bf16.mxu0 0
  %3213 = vmatmul.mubr.bf16.gmra.mrb[0].mxu0 %v3010
  %v3214 = vpop.f32.mrb[0].mxu0
  %v3215 = vadd.f32 0.0, %v3214
  %v3216 = vpop.f32.mrb[0].mxu0
  %v3217 = vpop.f32.mrb[0].mxu0
  %v3218 = vadd.f32 0.0, %v3217
  %v3219 = vpop.f32.mrb[0].mxu0
  %3220 = vmatprep.mubr.bf16.mxu0 0
  %3221 = vmatmul.mubr.bf16.gmra.mrb[0].mxu0 %v3013
  %v3222 = vpop.f32.mrb[0].mxu0
  %v3223 = vadd.f32 0.0, %v3222
  %v3224 = vpop.f32.mrb[0].mxu0
  %v3225 = vpop.f32.mrb[0].mxu0
  %v3226 = vadd.f32 0.0, %v3225
  %v3227 = vpop.f32.mrb[0].mxu0
  %3228 = vmatprep.mubr.bf16.mxu0 0
  %3229 = vmatmul.mubr.bf16.gmra.mrb[0].mxu0 %v3016
  %v3230 = vpop.f32.mrb[0].mxu0
  %v3231 = vadd.f32 0.0, %v3230
  %v3232 = vpop.f32.mrb[0].mxu0
  %v3233 = vpop.f32.mrb[0].mxu0
  %v3234 = vadd.f32 0.0, %v3233
  %v3235 = vpop.f32.mrb[0].mxu0
  %3236 = vmatprep.mubr.bf16.mxu0 0
  %3237 = vmatmul.mubr.bf16.gmra.mrb[0].mxu0 %v3019
  %v3238 = vpop.f32.mrb[0].mxu0
  %v3239 = vadd.f32 0.0, %v3238
  %v3240 = vpop.f32.mrb[0].mxu0
  %v3241 = vpop.f32.mrb[0].mxu0
  %v3242 = vadd.f32 0.0, %v3241
  %v3243 = vpop.f32.mrb[0].mxu0
  %3244 = vmatprep.mubr.bf16.mxu0 0
  %3245 = vmatmul.mubr.bf16.gmra.mrb[0].mxu0 %v3022
  %v3246 = vpop.f32.mrb[0].mxu0
  %v3247 = vadd.f32 0.0, %v3246
  %v3248 = vpop.f32.mrb[0].mxu0
  %v3249 = vpop.f32.mrb[0].mxu0
  %v3250 = vadd.f32 0.0, %v3249
  %v3251 = vpop.f32.mrb[0].mxu0
  %3252 = vmatprep.mubr.bf16.mxu0 0
  %3253 = vmatmul.mubr.bf16.gmra.mrb[0].mxu0 %v3025
  %v3254 = vpop.f32.mrb[0].mxu0
  %v3255 = vadd.f32 0.0, %v3254
  %v3256 = vpop.f32.mrb[0].mxu0
  %v3257 = vpop.f32.mrb[0].mxu0
  %v3258 = vadd.f32 0.0, %v3257
  %v3259 = vpop.f32.mrb[0].mxu0
  %3260 = vmatprep.mubr.bf16.mxu0 0
  %3261 = vmatmul.mubr.bf16.gmra.mrb[0].mxu0 %v3028
  %v3262 = vpop.f32.mrb[0].mxu0
  %v3263 = vadd.f32 0.0, %v3262
  %v3264 = vpop.f32.mrb[0].mxu0
  %v3265 = vpop.f32.mrb[0].mxu0
  %v3266 = vadd.f32 0.0, %v3265
  %v3267 = vpop.f32.mrb[0].mxu0
  %3268 = vmatprep.mubr.bf16.mxu0 0
  %3269 = vmatmul.mubr.bf16.gmra.mrb[0].mxu0 %v3031
  %v3270 = vpop.f32.mrb[0].mxu0
  %v3271 = vadd.f32 0.0, %v3270
  %v3272 = vpop.f32.mrb[0].mxu0
  %v3273 = vpop.f32.mrb[0].mxu0
  %v3274 = vadd.f32 0.0, %v3273
  %v3275 = vpop.f32.mrb[0].mxu0
  %3276 = vmatprep.mubr.bf16.mxu0 0
  %3277 = vmatmul.mubr.bf16.gmra.mrb[0].mxu0 %v3034
  %v3278 = vpop.f32.mrb[0].mxu0
  %v3279 = vadd.f32 0.0, %v3278
  %v3280 = vpop.f32.mrb[0].mxu0
  %v3281 = vpop.f32.mrb[0].mxu0
  %v3282 = vadd.f32 0.0, %v3281
  %v3283 = vpop.f32.mrb[0].mxu0
  %3284 = vmatprep.mubr.bf16.mxu0 0
  %3285 = vmatmul.mubr.bf16.gmra.mrb[0].mxu0 %v3037
  %v3286 = vpop.f32.mrb[0].mxu0
  %v3287 = vadd.f32 0.0, %v3286
  %v3288 = vpop.f32.mrb[0].mxu0
  %v3289 = vpop.f32.mrb[0].mxu0
  %v3290 = vadd.f32 0.0, %v3289
  %v3291 = vpop.f32.mrb[0].mxu0
  %3292 = vmatprep.mubr.bf16.mxu0 0
  %3293 = vmatmul.mubr.bf16.gmra.mrb[0].mxu0 %v3040
  %v3294 = vpop.f32.mrb[0].mxu0
  %v3295 = vadd.f32 0.0, %v3294
  %v3296 = vpop.f32.mrb[0].mxu0
  %v3297 = vpop.f32.mrb[0].mxu0
  %v3298 = vadd.f32 0.0, %v3297
  %v3299 = vpop.f32.mrb[0].mxu0
  %3300 = vmatprep.mubr.bf16.mxu0 0
  %3301 = vmatmul.mubr.bf16.gmra.mrb[0].mxu0 %v3043
  %v3302 = vpop.f32.mrb[0].mxu0
  %v3303 = vadd.f32 0.0, %v3302
  %v3304 = vpop.f32.mrb[0].mxu0
  %v3305 = vpop.f32.mrb[0].mxu0
  %v3306 = vadd.f32 0.0, %v3305
  %v3307 = vpop.f32.mrb[0].mxu0
  %3308 = vmatprep.mubr.bf16.mxu0 0
  %3309 = vmatmul.mubr.bf16.gmra.mrb[0].mxu0 %v3046
  %v3310 = vpop.f32.mrb[0].mxu0
  %v3311 = vadd.f32 0.0, %v3310
  %v3312 = vpop.f32.mrb[0].mxu0
  %v3313 = vpop.f32.mrb[0].mxu0
  %v3314 = vadd.f32 0.0, %v3313
  %v3315 = vpop.f32.mrb[0].mxu0
  %3316 = vmatprep.mubr.bf16.mxu0 0
  %3317 = vmatmul.mubr.bf16.gmra.mrb[0].mxu0 %v3049
  %v3318 = vpop.f32.mrb[0].mxu0
  %v3319 = vadd.f32 0.0, %v3318
  %v3320 = vpop.f32.mrb[0].mxu0
  %v3321 = vpop.f32.mrb[0].mxu0
  %v3322 = vadd.f32 0.0, %v3321
  %v3323 = vpop.f32.mrb[0].mxu0
  %3324 = vmatprep.mubr.bf16.mxu0 0
  %3325 = vmatmul.mubr.bf16.gmra.mrb[0].mxu0 %v3052
  %v3326 = vpop.f32.mrb[0].mxu0
  %v3327 = vadd.f32 0.0, %v3326
  %v3328 = vpop.f32.mrb[0].mxu0
  %v3329 = vpop.f32.mrb[0].mxu0
  %v3330 = vadd.f32 0.0, %v3329
  %v3331 = vpop.f32.mrb[0].mxu0
  %3332 = vmatprep.mubr.bf16.mxu0 0
  %3333 = vmatmul.mubr.bf16.gmra.mrb[0].mxu0 %v3055
  %v3334 = vpop.f32.mrb[0].mxu0
  %v3335 = vadd.f32 0.0, %v3334
  %v3336 = vpop.f32.mrb[0].mxu0
  %v3337 = vpop.f32.mrb[0].mxu0
  %v3338 = vadd.f32 0.0, %v3337
  %v3339 = vpop.f32.mrb[0].mxu0
  %3340 = vmatprep.mubr.bf16.mxu0 0
  %3341 = vmatmul.mubr.bf16.gmra.mrb[0].mxu0 %v3058
  %v3342 = vpop.f32.mrb[0].mxu0
  %v3343 = vadd.f32 0.0, %v3342
  %v3344 = vpop.f32.mrb[0].mxu0
  %v3345 = vpop.f32.mrb[0].mxu0
  %v3346 = vadd.f32 0.0, %v3345
  %v3347 = vpop.f32.mrb[0].mxu0
  %3348 = vmatprep.mubr.bf16.mxu0 0
  %3349 = vmatmul.mubr.bf16.gmra.mrb[0].mxu0 %v3061
  %v3350 = vpop.f32.mrb[0].mxu0
  %v3351 = vadd.f32 0.0, %v3350
  %v3352 = vpop.f32.mrb[0].mxu0
  %v3353 = vpop.f32.mrb[0].mxu0
  %v3354 = vadd.f32 0.0, %v3353
  %v3355 = vpop.f32.mrb[0].mxu0
  %3356 = vmatprep.mubr.bf16.mxu0 0
  %3357 = vmatmul.mubr.bf16.gmra.mrb[0].mxu0 %v3064
  %v3358 = vpop.f32.mrb[0].mxu0
  %v3359 = vadd.f32 0.0, %v3358
  %v3360 = vpop.f32.mrb[0].mxu0
  %v3361 = vpop.f32.mrb[0].mxu0
  %v3362 = vadd.f32 0.0, %v3361
  %v3363 = vpop.f32.mrb[0].mxu0
  %3364 = vmatprep.mubr.bf16.mxu0 0
  %3365 = vmatmul.mubr.bf16.gmra.mrb[0].mxu0 %v3067
  %v3366 = vpop.f32.mrb[0].mxu0
  %v3367 = vadd.f32 0.0, %v3366
  %v3368 = vpop.f32.mrb[0].mxu0
  %v3369 = vpop.f32.mrb[0].mxu0
  %v3370 = vadd.f32 0.0, %v3369
  %v3371 = vpop.f32.mrb[0].mxu0
  %3372 = vmatprep.mubr.bf16.mxu0 0
  %3373 = vmatmul.mubr.bf16.gmra.mrb[0].mxu0 %v3070
  %v3374 = vpop.f32.mrb[0].mxu0
  %v3375 = vadd.f32 0.0, %v3374
  %v3376 = vpop.f32.mrb[0].mxu0
  %v3377 = vpop.f32.mrb[0].mxu0
  %v3378 = vadd.f32 0.0, %v3377
  %v3379 = vpop.f32.mrb[0].mxu0
  %3380 = vmatprep.mubr.bf16.mxu0 0
  %3381 = vmatmul.mubr.bf16.gmra.mrb[0].mxu0 %v3073
  %v3382 = vpop.f32.mrb[0].mxu0
  %v3383 = vadd.f32 0.0, %v3382
  %v3384 = vpop.f32.mrb[0].mxu0
  %v3385 = vpop.f32.mrb[0].mxu0
  %v3386 = vadd.f32 0.0, %v3385
  %v3387 = vpop.f32.mrb[0].mxu0
  %3388 = vmatprep.mubr.bf16.mxu0 0
  %3389 = vmatmul.mubr.bf16.gmra.mrb[0].mxu0 %v3076
  %v3390 = vpop.f32.mrb[0].mxu0
  %v3391 = vadd.f32 0.0, %v3390
  %v3392 = vpop.f32.mrb[0].mxu0
  %v3393 = vpop.f32.mrb[0].mxu0
  %v3394 = vadd.f32 0.0, %v3393
  %v3395 = vpop.f32.mrb[0].mxu0
  %3396 = vmatprep.mubr.bf16.mxu0 0
  %3397 = vmatmul.mubr.bf16.gmra.mrb[0].mxu0 %v3079
  %v3398 = vpop.f32.mrb[0].mxu0
  %v3399 = vadd.f32 0.0, %v3398
  %v3400 = vpop.f32.mrb[0].mxu0
  %v3401 = vpop.f32.mrb[0].mxu0
  %v3402 = vadd.f32 0.0, %v3401
  %v3403 = vpop.f32.mrb[0].mxu0
  %3404 = vmatprep.mubr.bf16.mxu0 0
  %3405 = vmatmul.mubr.bf16.gmra.mrb[0].mxu0 %v3082
  %v3406 = vpop.f32.mrb[0].mxu0
  %v3407 = vadd.f32 0.0, %v3406
  %v3408 = vpop.f32.mrb[0].mxu0
  %v3409 = vpop.f32.mrb[0].mxu0
  %v3410 = vadd.f32 0.0, %v3409
  %v3411 = vpop.f32.mrb[0].mxu0
  %3412 = vmatprep.mubr.bf16.mxu0 0
  %3413 = vmatmul.mubr.bf16.gmra.mrb[0].mxu0 %v3085
  %v3414 = vpop.f32.mrb[0].mxu0
  %v3415 = vadd.f32 0.0, %v3414
  %v3416 = vpop.f32.mrb[0].mxu0
  %v3417 = vpop.f32.mrb[0].mxu0
  %v3418 = vadd.f32 0.0, %v3417
  %v3419 = vpop.f32.mrb[0].mxu0
  %3420 = vmatprep.mubr.bf16.mxu0 0
  %3421 = vmatmul.mubr.bf16.gmra.mrb[0].mxu0 %v3088
  %v3422 = vpop.f32.mrb[0].mxu0
  %v3423 = vadd.f32 0.0, %v3422
  %v3424 = vpop.f32.mrb[0].mxu0
  %v3425 = vpop.f32.mrb[0].mxu0
  %v3426 = vadd.f32 0.0, %v3425
  %v3427 = vpop.f32.mrb[0].mxu0
  %3428 = vmatprep.mubr.bf16.mxu0 0
  %3429 = vmatmul.mubr.bf16.gmra.mrb[0].mxu0 %v3091
  %v3430 = vpop.f32.mrb[0].mxu0
  %v3431 = vadd.f32 0.0, %v3430
  %v3432 = vpop.f32.mrb[0].mxu0
  %v3433 = vpop.f32.mrb[0].mxu0
  %v3434 = vadd.f32 0.0, %v3433
  %v3435 = vpop.f32.mrb[0].mxu0
  %3436 = vmatprep.mubr.bf16.mxu0 0
  %3437 = vmatmul.mubr.bf16.gmra.mrb[0].mxu0 %v3094
  %v3438 = vpop.f32.mrb[0].mxu0
  %v3439 = vadd.f32 0.0, %v3438
  %v3440 = vpop.f32.mrb[0].mxu0
  %v3441 = vpop.f32.mrb[0].mxu0
  %v3442 = vadd.f32 0.0, %v3441
  %v3443 = vpop.f32.mrb[0].mxu0
  %3444 = vmatprep.mubr.bf16.mxu0 0
  %3445 = vmatmul.mubr.bf16.gmra.mrb[0].mxu0 %v3097
  %v3446 = vpop.f32.mrb[0].mxu0
  %v3447 = vadd.f32 0.0, %v3446
  %v3448 = vpop.f32.mrb[0].mxu0
  %v3449 = vpop.f32.mrb[0].mxu0
  %v3450 = vadd.f32 0.0, %v3449
  %v3451 = vpop.f32.mrb[0].mxu0
  %3452 = vmatprep.mubr.bf16.mxu0 0
  %3453 = vmatmul.mubr.bf16.gmra.mrb[0].mxu0 %v3100
  %v3454 = vpop.f32.mrb[0].mxu0
  %v3455 = vadd.f32 0.0, %v3454
  %v3456 = vpop.f32.mrb[0].mxu0
  %v3457 = vpop.f32.mrb[0].mxu0
  %v3458 = vadd.f32 0.0, %v3457
  %v3459 = vpop.f32.mrb[0].mxu0
  %3460 = vmatprep.mubr.bf16.mxu0 0
  %3461 = vmatmul.mubr.bf16.gmra.mrb[0].mxu0 %v3103
  %v3462 = vpop.f32.mrb[0].mxu0
  %v3463 = vadd.f32 0.0, %v3462
  %v3464 = vpop.f32.mrb[0].mxu0
  %v3465 = vpop.f32.mrb[0].mxu0
  %v3466 = vpop.f32.mrb[0].mxu0
  %3467 = vdwg.mxu0
  %v3468 = vadd.f32 %v2727, %v3143
  %v3469 = vadd.f32 %v2728, %v3146
  %v3470 = vadd.f32 %v2729, %v3151
  %v3471 = vadd.f32 %v2730, %v3154
  %v3472 = vadd.f32 %v2731, %v3159
  %v3473 = vadd.f32 %v2732, %v3162
  %v3474 = vadd.f32 %v2733, %v3167
  %v3475 = vadd.f32 %v2734, %v3170
  %v3476 = vadd.f32 %v2735, %v3175
  %v3477 = vadd.f32 %v2736, %v3178
  %v3478 = vadd.f32 %v2737, %v3183
  %v3479 = vadd.f32 %v2738, %v3186
  %v3480 = vadd.f32 %v2739, %v3191
  %v3481 = vadd.f32 %v2740, %v3194
  %v3482 = vadd.f32 %v2741, %v3199
  %v3483 = vadd.f32 %v2742, %v3202
  %v3484 = vadd.f32 %v2743, %v3207
  %v3485 = vadd.f32 %v2744, %v3210
  %v3486 = vadd.f32 %v2745, %v3215
  %v3487 = vadd.f32 %v2746, %v3218
  %v3488 = vadd.f32 %v2747, %v3223
  %v3489 = vadd.f32 %v2748, %v3226
  %v3490 = vadd.f32 %v2749, %v3231
  %v3491 = vadd.f32 %v2750, %v3234
  %v3492 = vadd.f32 %v2751, %v3239
  %v3493 = vadd.f32 %v2752, %v3242
  %v3494 = vadd.f32 %v2753, %v3247
  %v3495 = vadd.f32 %v2754, %v3250
  %v3496 = vadd.f32 %v2755, %v3255
  %v3497 = vadd.f32 %v2756, %v3258
  %v3498 = vadd.f32 %v2757, %v3263
  %v3499 = vadd.f32 %v2758, %v3266
  %v3500 = vadd.f32 %v2759, %v3271
  %v3501 = vadd.f32 %v2760, %v3274
  %v3502 = vadd.f32 %v2761, %v3279
  %v3503 = vadd.f32 %v2762, %v3282
  %v3504 = vadd.f32 %v2763, %v3287
  %v3505 = vadd.f32 %v2764, %v3290
  %v3506 = vadd.f32 %v2765, %v3295
  %v3507 = vadd.f32 %v2766, %v3298
  %v3508 = vadd.f32 %v2767, %v3303
  %v3509 = vadd.f32 %v2768, %v3306
  %v3510 = vadd.f32 %v2769, %v3311
  %v3511 = vadd.f32 %v2770, %v3314
  %v3512 = vadd.f32 %v2771, %v3319
  %v3513 = vadd.f32 %v2772, %v3322
  %v3514 = vadd.f32 %v2773, %v3327
  %v3515 = vadd.f32 %v2774, %v3330
  %v3516 = vadd.f32 %v2775, %v3335
  %v3517 = vadd.f32 %v2776, %v3338
  %v3518 = vadd.f32 %v2777, %v3343
  %v3519 = vadd.f32 %v2778, %v3346
  %v3520 = vadd.f32 %v2779, %v3351
  %v3521 = vadd.f32 %v2780, %v3354
  %v3522 = vadd.f32 %v2781, %v3359
  %v3523 = vadd.f32 %v2782, %v3362
  %v3524 = vadd.f32 %v2783, %v3367
  %v3525 = vadd.f32 %v2784, %v3370
  %v3526 = vadd.f32 %v2785, %v3375
  %v3527 = vadd.f32 %v2786, %v3378
  %v3528 = vadd.f32 %v2787, %v3383
  %v3529 = vadd.f32 %v2788, %v3386
  %v3530 = vadd.f32 %v2789, %v3391
  %v3531 = vadd.f32 %v2790, %v3394
  %v3532 = vadd.f32 %v2791, %v3399
  %v3533 = vadd.f32 %v2792, %v3402
  %v3534 = vadd.f32 %v2793, %v3407
  %v3535 = vadd.f32 %v2794, %v3410
  %v3536 = vadd.f32 %v2795, %v3415
  %v3537 = vadd.f32 %v2796, %v3418
  %v3538 = vadd.f32 %v2797, %v3423
  %v3539 = vadd.f32 %v2798, %v3426
  %v3540 = vadd.f32 %v2799, %v3431
  %v3541 = vadd.f32 %v2800, %v3434
  %v3542 = vadd.f32 %v2801, %v3439
  %v3543 = vadd.f32 %v2802, %v3442
  %v3544 = vadd.f32 %v2803, %v3447
  %v3545 = vadd.f32 %v2804, %v3450
  %v3546 = vadd.f32 %v2805, %v3455
  %v3547 = vadd.f32 %v2806, %v3458
  %v3548 = vadd.f32 %v2807, %v3463
  %v3549 = vld [vmem:[%s1 + $0x4] sm:$0x8]
  %v3550 = vld [vmem:[%s1 + $0x8] sm:$0x1]
  %vm3551 = vcmask 1045504
  %v3552 = vrot.slane %v327, 2
  %v3553 = vrot.slane %v328, 2
  %v3554 = vsel %vm3551, %v3552, %v3553
  %v3555 = vrot.slane %v329, 2
  %v3556 = vsel %vm3551, %v3553, %v3555
  %v3557 = vrot.slane %v330, 2
  %v3558 = vsel %vm3551, %v3555, %v3557
  %v3559 = vrot.slane %v331, 2
  %v3560 = vsel %vm3551, %v3557, %v3559
  %v3561 = vrot.slane %v332, 2
  %v3562 = vsel %vm3551, %v3559, %v3561
  %v3563 = vrot.slane %v333, 2
  %v3564 = vsel %vm3551, %v3561, %v3563
  %v3565 = vrot.slane %v334, 2
  %v3566 = vsel %vm3551, %v3563, %v3565
  %v3567 = vrot.slane %v335, 2
  %v3568 = vsel %vm3551, %v3565, %v3567
  %v3569 = vrot.slane %v336, 2
  %v3570 = vsel %vm3551, %v3567, %v3569
  %v3571 = vrot.slane %v337, 2
  %v3572 = vsel %vm3551, %v3569, %v3571
  %v3573 = vrot.slane %v338, 2
  %v3574 = vsel %vm3551, %v3571, %v3573
  %v3575 = vrot.slane %v339, 2
  %v3576 = vsel %vm3551, %v3573, %v3575
  %v3577 = vrot.slane %v340, 2
  %v3578 = vsel %vm3551, %v3575, %v3577
  %v3579 = vrot.slane %v341, 2
  %v3580 = vsel %vm3551, %v3577, %v3579
  %v3581 = vrot.slane %v342, 2
  %v3582 = vsel %vm3551, %v3579, %v3581
  %v3583 = vrot.slane %v343, 2
  %v3584 = vsel %vm3551, %v3581, %v3583
  %v3585 = vrot.slane %v344, 2
  %v3586 = vsel %vm3551, %v3583, %v3585
  %v3587 = vrot.slane %v345, 2
  %v3588 = vsel %vm3551, %v3585, %v3587
  %v3589 = vrot.slane %v346, 2
  %v3590 = vsel %vm3551, %v3587, %v3589
  %v3591 = vrot.slane %v347, 2
  %v3592 = vsel %vm3551, %v3589, %v3591
  %v3593 = vrot.slane %v348, 2
  %v3594 = vsel %vm3551, %v3591, %v3593
  %v3595 = vrot.slane %v349, 2
  %v3596 = vsel %vm3551, %v3593, %v3595
  %v3597 = vrot.slane %v350, 2
  %v3598 = vsel %vm3551, %v3595, %v3597
  %v3599 = vrot.slane %v351, 2
  %v3600 = vsel %vm3551, %v3597, %v3599
  %v3601 = vrot.slane %v352, 2
  %v3602 = vsel %vm3551, %v3599, %v3601
  %v3603 = vrot.slane %v353, 2
  %v3604 = vsel %vm3551, %v3601, %v3603
  %v3605 = vrot.slane %v354, 2
  %v3606 = vsel %vm3551, %v3603, %v3605
  %v3607 = vrot.slane %v355, 2
  %v3608 = vsel %vm3551, %v3605, %v3607
  %v3609 = vrot.slane %v356, 2
  %v3610 = vsel %vm3551, %v3607, %v3609
  %v3611 = vrot.slane %v357, 2
  %v3612 = vsel %vm3551, %v3609, %v3611
  %v3613 = vrot.slane %v358, 2
  %v3614 = vsel %vm3551, %v3611, %v3613
  %v3615 = vrot.slane %v359, 2
  %v3616 = vsel %vm3551, %v3613, %v3615
  %v3617 = vrot.slane %v360, 2
  %v3618 = vsel %vm3551, %v3615, %v3617
  %v3619 = vrot.slane %v361, 2
  %v3620 = vsel %vm3551, %v3617, %v3619
  %v3621 = vrot.slane %v362, 2
  %v3622 = vsel %vm3551, %v3619, %v3621
  %v3623 = vrot.slane %v363, 2
  %v3624 = vsel %vm3551, %v3621, %v3623
  %v3625 = vrot.slane %v364, 2
  %v3626 = vsel %vm3551, %v3623, %v3625
  %v3627 = vrot.slane %v365, 2
  %v3628 = vsel %vm3551, %v3625, %v3627
  %v3629 = vrot.slane %v366, 2
  %v3630 = vsel %vm3551, %v3627, %v3629
  %v3631 = vrot.slane %v367, 2
  %v3632 = vsel %vm3551, %v3629, %v3631
  %v3635 = vunpack.c.l.b16 %v3549
  %v3636 = vunpack.c.l.b16 %v3550
  %v3637 = vpack.c.b16 %v3636, %v3635
  %v3639 = vshrl.u32 %v3637, 16
  %v3641 = vrot.slane %v3639, 3
  %v3642 = vshll.u32 %v3637, 16
  %v3644 = vrot.slane %v3642, 4
  %v3645 = vor.u32 %v3641, %v3644
  %v3647 = vsel %vm710, %v3554, 0
  %v3650 = vsel %vm710, %v3556, 0
  %v3653 = vsel %vm710, %v3558, 0
  %v3656 = vsel %vm710, %v3560, 0
  %v3659 = vsel %vm710, %v3562, 0
  %v3662 = vsel %vm710, %v3564, 0
  %v3665 = vsel %vm710, %v3566, 0
  %v3668 = vsel %vm710, %v3568, 0
  %v3671 = vsel %vm710, %v3570, 0
  %v3674 = vsel %vm710, %v3572, 0
  %v3677 = vsel %vm710, %v3574, 0
  %v3680 = vsel %vm710, %v3576, 0
  %v3683 = vsel %vm710, %v3578, 0
  %v3686 = vsel %vm710, %v3580, 0
  %v3689 = vsel %vm710, %v3582, 0
  %v3692 = vsel %vm710, %v3584, 0
  %v3695 = vsel %vm710, %v3586, 0
  %v3698 = vsel %vm710, %v3588, 0
  %v3701 = vsel %vm710, %v3590, 0
  %v3704 = vsel %vm710, %v3592, 0
  %v3707 = vsel %vm710, %v3594, 0
  %v3710 = vsel %vm710, %v3596, 0
  %v3713 = vsel %vm710, %v3598, 0
  %v3716 = vsel %vm710, %v3600, 0
  %v3719 = vsel %vm710, %v3602, 0
  %v3722 = vsel %vm710, %v3604, 0
  %v3725 = vsel %vm710, %v3606, 0
  %v3728 = vsel %vm710, %v3608, 0
  %v3731 = vsel %vm710, %v3610, 0
  %v3734 = vsel %vm710, %v3612, 0
  %v3737 = vsel %vm710, %v3614, 0
  %v3740 = vsel %vm710, %v3616, 0
  %v3743 = vsel %vm710, %v3618, 0
  %v3746 = vsel %vm710, %v3620, 0
  %v3749 = vsel %vm710, %v3622, 0
  %v3752 = vsel %vm710, %v3624, 0
  %v3755 = vsel %vm710, %v3626, 0
  %v3758 = vsel %vm710, %v3628, 0
  %v3761 = vsel %vm710, %v3630, 0
  %v3764 = vsel %vm710, %v3632, 0
  %v3767 = vsel %vm710, %v3631, 0
  %v3770 = vand.u32 %v3645, %v837
  %3772 = vmatprep.subr.bf16.mxu0 0
  %3773 = vmatpush1.bf16.msra.mxu0 %v3770
  %3774 = vmatprep.subr.bf16.mxu0 0
  %3775 = vmatpush1.bf16.msra.mxu0 0
  %3776 = vmatprep.subr.bf16.mxu0 0
  %3777 = vmatpush1.bf16.msra.mxu0 0
  %3778 = vmatprep.subr.bf16.mxu0 0
  %3779 = vmatpush1.bf16.msra.mxu0 0
  %3780 = vmatprep.subr.bf16.mxu0 0
  %3781 = vmatpush1.bf16.msra.mxu0 0
  %3782 = vmatprep.subr.bf16.mxu0 0
  %3783 = vmatpush1.bf16.msra.mxu0 0
  %3784 = vmatprep.subr.bf16.mxu0 0
  %3785 = vmatpush1.bf16.msra.mxu0 0
  %3786 = vmatprep.subr.bf16.mxu0 0
  %3787 = vmatpush1.bf16.msra.mxu0 0
  %3788 = vmatprep.subr.bf16.mxu0 0
  %3789 = vmatpush1.bf16.msra.mxu0 0
  %3790 = vmatprep.subr.bf16.mxu0 0
  %3791 = vmatpush1.bf16.msra.mxu0 0
  %3792 = vmatprep.subr.bf16.mxu0 0
  %3793 = vmatpush1.bf16.msra.mxu0 0
  %3794 = vmatprep.subr.bf16.mxu0 0
  %3795 = vmatpush1.bf16.msra.mxu0 0
  %3796 = vmatprep.subr.bf16.mxu0 0
  %3797 = vmatpush1.bf16.msra.mxu0 0
  %3798 = vmatprep.subr.bf16.mxu0 0
  %3799 = vmatpush1.bf16.msra.mxu0 0
  %3800 = vmatprep.subr.bf16.mxu0 0
  %3801 = vmatpush1.bf16.msra.mxu0 0
  %3802 = vmatprep.subr.bf16.mxu0 0
  %3803 = vmatpush1.bf16.msra.mxu0 0
  %3804 = vmatprep.mubr.bf16.mxu0 0
  %3805 = vmatmul.mubr.bf16.gmra.mrb[0].mxu0 %v3647
  %v3806 = vpop.f32.mrb[0].mxu0
  %v3807 = vadd.f32 0.0, %v3806
  %v3808 = vpop.f32.mrb[0].mxu0
  %v3809 = vpop.f32.mrb[0].mxu0
  %v3810 = vadd.f32 0.0, %v3809
  %v3811 = vpop.f32.mrb[0].mxu0
  %3812 = vmatprep.mubr.bf16.mxu0 0
  %3813 = vmatmul.mubr.bf16.gmra.mrb[0].mxu0 %v3650
  %v3814 = vpop.f32.mrb[0].mxu0
  %v3815 = vadd.f32 0.0, %v3814
  %v3816 = vpop.f32.mrb[0].mxu0
  %v3817 = vpop.f32.mrb[0].mxu0
  %v3818 = vadd.f32 0.0, %v3817
  %v3819 = vpop.f32.mrb[0].mxu0
  %3820 = vmatprep.mubr.bf16.mxu0 0
  %3821 = vmatmul.mubr.bf16.gmra.mrb[0].mxu0 %v3653
  %v3822 = vpop.f32.mrb[0].mxu0
  %v3823 = vadd.f32 0.0, %v3822
  %v3824 = vpop.f32.mrb[0].mxu0
  %v3825 = vpop.f32.mrb[0].mxu0
  %v3826 = vadd.f32 0.0, %v3825
  %v3827 = vpop.f32.mrb[0].mxu0
  %3828 = vmatprep.mubr.bf16.mxu0 0
  %3829 = vmatmul.mubr.bf16.gmra.mrb[0].mxu0 %v3656
  %v3830 = vpop.f32.mrb[0].mxu0
  %v3831 = vadd.f32 0.0, %v3830
  %v3832 = vpop.f32.mrb[0].mxu0
  %v3833 = vpop.f32.mrb[0].mxu0
  %v3834 = vadd.f32 0.0, %v3833
  %v3835 = vpop.f32.mrb[0].mxu0
  %3836 = vmatprep.mubr.bf16.mxu0 0
  %3837 = vmatmul.mubr.bf16.gmra.mrb[0].mxu0 %v3659
  %v3838 = vpop.f32.mrb[0].mxu0
  %v3839 = vadd.f32 0.0, %v3838
  %v3840 = vpop.f32.mrb[0].mxu0
  %v3841 = vpop.f32.mrb[0].mxu0
  %v3842 = vadd.f32 0.0, %v3841
  %v3843 = vpop.f32.mrb[0].mxu0
  %3844 = vmatprep.mubr.bf16.mxu0 0
  %3845 = vmatmul.mubr.bf16.gmra.mrb[0].mxu0 %v3662
  %v3846 = vpop.f32.mrb[0].mxu0
  %v3847 = vadd.f32 0.0, %v3846
  %v3848 = vpop.f32.mrb[0].mxu0
  %v3849 = vpop.f32.mrb[0].mxu0
  %v3850 = vadd.f32 0.0, %v3849
  %v3851 = vpop.f32.mrb[0].mxu0
  %3852 = vmatprep.mubr.bf16.mxu0 0
  %3853 = vmatmul.mubr.bf16.gmra.mrb[0].mxu0 %v3665
  %v3854 = vpop.f32.mrb[0].mxu0
  %v3855 = vadd.f32 0.0, %v3854
  %v3856 = vpop.f32.mrb[0].mxu0
  %v3857 = vpop.f32.mrb[0].mxu0
  %v3858 = vadd.f32 0.0, %v3857
  %v3859 = vpop.f32.mrb[0].mxu0
  %3860 = vmatprep.mubr.bf16.mxu0 0
  %3861 = vmatmul.mubr.bf16.gmra.mrb[0].mxu0 %v3668
  %v3862 = vpop.f32.mrb[0].mxu0
  %v3863 = vadd.f32 0.0, %v3862
  %v3864 = vpop.f32.mrb[0].mxu0
  %v3865 = vpop.f32.mrb[0].mxu0
  %v3866 = vadd.f32 0.0, %v3865
  %v3867 = vpop.f32.mrb[0].mxu0
  %3868 = vmatprep.mubr.bf16.mxu0 0
  %3869 = vmatmul.mubr.bf16.gmra.mrb[0].mxu0 %v3671
  %v3870 = vpop.f32.mrb[0].mxu0
  %v3871 = vadd.f32 0.0, %v3870
  %v3872 = vpop.f32.mrb[0].mxu0
  %v3873 = vpop.f32.mrb[0].mxu0
  %v3874 = vadd.f32 0.0, %v3873
  %v3875 = vpop.f32.mrb[0].mxu0
  %3876 = vmatprep.mubr.bf16.mxu0 0
  %3877 = vmatmul.mubr.bf16.gmra.mrb[0].mxu0 %v3674
  %v3878 = vpop.f32.mrb[0].mxu0
  %v3879 = vadd.f32 0.0, %v3878
  %v3880 = vpop.f32.mrb[0].mxu0
  %v3881 = vpop.f32.mrb[0].mxu0
  %v3882 = vadd.f32 0.0, %v3881
  %v3883 = vpop.f32.mrb[0].mxu0
  %3884 = vmatprep.mubr.bf16.mxu0 0
  %3885 = vmatmul.mubr.bf16.gmra.mrb[0].mxu0 %v3677
  %v3886 = vpop.f32.mrb[0].mxu0
  %v3887 = vadd.f32 0.0, %v3886
  %v3888 = vpop.f32.mrb[0].mxu0
  %v3889 = vpop.f32.mrb[0].mxu0
  %v3890 = vadd.f32 0.0, %v3889
  %v3891 = vpop.f32.mrb[0].mxu0
  %3892 = vmatprep.mubr.bf16.mxu0 0
  %3893 = vmatmul.mubr.bf16.gmra.mrb[0].mxu0 %v3680
  %v3894 = vpop.f32.mrb[0].mxu0
  %v3895 = vadd.f32 0.0, %v3894
  %v3896 = vpop.f32.mrb[0].mxu0
  %v3897 = vpop.f32.mrb[0].mxu0
  %v3898 = vadd.f32 0.0, %v3897
  %v3899 = vpop.f32.mrb[0].mxu0
  %3900 = vmatprep.mubr.bf16.mxu0 0
  %3901 = vmatmul.mubr.bf16.gmra.mrb[0].mxu0 %v3683
  %v3902 = vpop.f32.mrb[0].mxu0
  %v3903 = vadd.f32 0.0, %v3902
  %v3904 = vpop.f32.mrb[0].mxu0
  %v3905 = vpop.f32.mrb[0].mxu0
  %v3906 = vadd.f32 0.0, %v3905
  %v3907 = vpop.f32.mrb[0].mxu0
  %3908 = vmatprep.mubr.bf16.mxu0 0
  %3909 = vmatmul.mubr.bf16.gmra.mrb[0].mxu0 %v3686
  %v3910 = vpop.f32.mrb[0].mxu0
  %v3911 = vadd.f32 0.0, %v3910
  %v3912 = vpop.f32.mrb[0].mxu0
  %v3913 = vpop.f32.mrb[0].mxu0
  %v3914 = vadd.f32 0.0, %v3913
  %v3915 = vpop.f32.mrb[0].mxu0
  %3916 = vmatprep.mubr.bf16.mxu0 0
  %3917 = vmatmul.mubr.bf16.gmra.mrb[0].mxu0 %v3689
  %v3918 = vpop.f32.mrb[0].mxu0
  %v3919 = vadd.f32 0.0, %v3918
  %v3920 = vpop.f32.mrb[0].mxu0
  %v3921 = vpop.f32.mrb[0].mxu0
  %v3922 = vadd.f32 0.0, %v3921
  %v3923 = vpop.f32.mrb[0].mxu0
  %3924 = vmatprep.mubr.bf16.mxu0 0
  %3925 = vmatmul.mubr.bf16.gmra.mrb[0].mxu0 %v3692
  %v3926 = vpop.f32.mrb[0].mxu0
  %v3927 = vadd.f32 0.0, %v3926
  %v3928 = vpop.f32.mrb[0].mxu0
  %v3929 = vpop.f32.mrb[0].mxu0
  %v3930 = vadd.f32 0.0, %v3929
  %v3931 = vpop.f32.mrb[0].mxu0
  %3932 = vmatprep.mubr.bf16.mxu0 0
  %3933 = vmatmul.mubr.bf16.gmra.mrb[0].mxu0 %v3695
  %v3934 = vpop.f32.mrb[0].mxu0
  %v3935 = vadd.f32 0.0, %v3934
  %v3936 = vpop.f32.mrb[0].mxu0
  %v3937 = vpop.f32.mrb[0].mxu0
  %v3938 = vadd.f32 0.0, %v3937
  %v3939 = vpop.f32.mrb[0].mxu0
  %3940 = vmatprep.mubr.bf16.mxu0 0
  %3941 = vmatmul.mubr.bf16.gmra.mrb[0].mxu0 %v3698
  %v3942 = vpop.f32.mrb[0].mxu0
  %v3943 = vadd.f32 0.0, %v3942
  %v3944 = vpop.f32.mrb[0].mxu0
  %v3945 = vpop.f32.mrb[0].mxu0
  %v3946 = vadd.f32 0.0, %v3945
  %v3947 = vpop.f32.mrb[0].mxu0
  %3948 = vmatprep.mubr.bf16.mxu0 0
  %3949 = vmatmul.mubr.bf16.gmra.mrb[0].mxu0 %v3701
  %v3950 = vpop.f32.mrb[0].mxu0
  %v3951 = vadd.f32 0.0, %v3950
  %v3952 = vpop.f32.mrb[0].mxu0
  %v3953 = vpop.f32.mrb[0].mxu0
  %v3954 = vadd.f32 0.0, %v3953
  %v3955 = vpop.f32.mrb[0].mxu0
  %3956 = vmatprep.mubr.bf16.mxu0 0
  %3957 = vmatmul.mubr.bf16.gmra.mrb[0].mxu0 %v3704
  %v3958 = vpop.f32.mrb[0].mxu0
  %v3959 = vadd.f32 0.0, %v3958
  %v3960 = vpop.f32.mrb[0].mxu0
  %v3961 = vpop.f32.mrb[0].mxu0
  %v3962 = vadd.f32 0.0, %v3961
  %v3963 = vpop.f32.mrb[0].mxu0
  %3964 = vmatprep.mubr.bf16.mxu0 0
  %3965 = vmatmul.mubr.bf16.gmra.mrb[0].mxu0 %v3707
  %v3966 = vpop.f32.mrb[0].mxu0
  %v3967 = vadd.f32 0.0, %v3966
  %v3968 = vpop.f32.mrb[0].mxu0
  %v3969 = vpop.f32.mrb[0].mxu0
  %v3970 = vadd.f32 0.0, %v3969
  %v3971 = vpop.f32.mrb[0].mxu0
  %3972 = vmatprep.mubr.bf16.mxu0 0
  %3973 = vmatmul.mubr.bf16.gmra.mrb[0].mxu0 %v3710
  %v3974 = vpop.f32.mrb[0].mxu0
  %v3975 = vadd.f32 0.0, %v3974
  %v3976 = vpop.f32.mrb[0].mxu0
  %v3977 = vpop.f32.mrb[0].mxu0
  %v3978 = vadd.f32 0.0, %v3977
  %v3979 = vpop.f32.mrb[0].mxu0
  %3980 = vmatprep.mubr.bf16.mxu0 0
  %3981 = vmatmul.mubr.bf16.gmra.mrb[0].mxu0 %v3713
  %v3982 = vpop.f32.mrb[0].mxu0
  %v3983 = vadd.f32 0.0, %v3982
  %v3984 = vpop.f32.mrb[0].mxu0
  %v3985 = vpop.f32.mrb[0].mxu0
  %v3986 = vadd.f32 0.0, %v3985
  %v3987 = vpop.f32.mrb[0].mxu0
  %3988 = vmatprep.mubr.bf16.mxu0 0
  %3989 = vmatmul.mubr.bf16.gmra.mrb[0].mxu0 %v3716
  %v3990 = vpop.f32.mrb[0].mxu0
  %v3991 = vadd.f32 0.0, %v3990
  %v3992 = vpop.f32.mrb[0].mxu0
  %v3993 = vpop.f32.mrb[0].mxu0
  %v3994 = vadd.f32 0.0, %v3993
  %v3995 = vpop.f32.mrb[0].mxu0
  %3996 = vmatprep.mubr.bf16.mxu0 0
  %3997 = vmatmul.mubr.bf16.gmra.mrb[0].mxu0 %v3719
  %v3998 = vpop.f32.mrb[0].mxu0
  %v3999 = vadd.f32 0.0, %v3998
  %v4000 = vpop.f32.mrb[0].mxu0
  %v4001 = vpop.f32.mrb[0].mxu0
  %v4002 = vadd.f32 0.0, %v4001
  %v4003 = vpop.f32.mrb[0].mxu0
  %4004 = vmatprep.mubr.bf16.mxu0 0
  %4005 = vmatmul.mubr.bf16.gmra.mrb[0].mxu0 %v3722
  %v4006 = vpop.f32.mrb[0].mxu0
  %v4007 = vadd.f32 0.0, %v4006
  %v4008 = vpop.f32.mrb[0].mxu0
  %v4009 = vpop.f32.mrb[0].mxu0
  %v4010 = vadd.f32 0.0, %v4009
  %v4011 = vpop.f32.mrb[0].mxu0
  %4012 = vmatprep.mubr.bf16.mxu0 0
  %4013 = vmatmul.mubr.bf16.gmra.mrb[0].mxu0 %v3725
  %v4014 = vpop.f32.mrb[0].mxu0
  %v4015 = vadd.f32 0.0, %v4014
  %v4016 = vpop.f32.mrb[0].mxu0
  %v4017 = vpop.f32.mrb[0].mxu0
  %v4018 = vadd.f32 0.0, %v4017
  %v4019 = vpop.f32.mrb[0].mxu0
  %4020 = vmatprep.mubr.bf16.mxu0 0
  %4021 = vmatmul.mubr.bf16.gmra.mrb[0].mxu0 %v3728
  %v4022 = vpop.f32.mrb[0].mxu0
  %v4023 = vadd.f32 0.0, %v4022
  %v4024 = vpop.f32.mrb[0].mxu0
  %v4025 = vpop.f32.mrb[0].mxu0
  %v4026 = vadd.f32 0.0, %v4025
  %v4027 = vpop.f32.mrb[0].mxu0
  %4028 = vmatprep.mubr.bf16.mxu0 0
  %4029 = vmatmul.mubr.bf16.gmra.mrb[0].mxu0 %v3731
  %v4030 = vpop.f32.mrb[0].mxu0
  %v4031 = vadd.f32 0.0, %v4030
  %v4032 = vpop.f32.mrb[0].mxu0
  %v4033 = vpop.f32.mrb[0].mxu0
  %v4034 = vadd.f32 0.0, %v4033
  %v4035 = vpop.f32.mrb[0].mxu0
  %4036 = vmatprep.mubr.bf16.mxu0 0
  %4037 = vmatmul.mubr.bf16.gmra.mrb[0].mxu0 %v3734
  %v4038 = vpop.f32.mrb[0].mxu0
  %v4039 = vadd.f32 0.0, %v4038
  %v4040 = vpop.f32.mrb[0].mxu0
  %v4041 = vpop.f32.mrb[0].mxu0
  %v4042 = vadd.f32 0.0, %v4041
  %v4043 = vpop.f32.mrb[0].mxu0
  %4044 = vmatprep.mubr.bf16.mxu0 0
  %4045 = vmatmul.mubr.bf16.gmra.mrb[0].mxu0 %v3737
  %v4046 = vpop.f32.mrb[0].mxu0
  %v4047 = vadd.f32 0.0, %v4046
  %v4048 = vpop.f32.mrb[0].mxu0
  %v4049 = vpop.f32.mrb[0].mxu0
  %v4050 = vadd.f32 0.0, %v4049
  %v4051 = vpop.f32.mrb[0].mxu0
  %4052 = vmatprep.mubr.bf16.mxu0 0
  %4053 = vmatmul.mubr.bf16.gmra.mrb[0].mxu0 %v3740
  %v4054 = vpop.f32.mrb[0].mxu0
  %v4055 = vadd.f32 0.0, %v4054
  %v4056 = vpop.f32.mrb[0].mxu0
  %v4057 = vpop.f32.mrb[0].mxu0
  %v4058 = vadd.f32 0.0, %v4057
  %v4059 = vpop.f32.mrb[0].mxu0
  %4060 = vmatprep.mubr.bf16.mxu0 0
  %4061 = vmatmul.mubr.bf16.gmra.mrb[0].mxu0 %v3743
  %v4062 = vpop.f32.mrb[0].mxu0
  %v4063 = vadd.f32 0.0, %v4062
  %v4064 = vpop.f32.mrb[0].mxu0
  %v4065 = vpop.f32.mrb[0].mxu0
  %v4066 = vadd.f32 0.0, %v4065
  %v4067 = vpop.f32.mrb[0].mxu0
  %4068 = vmatprep.mubr.bf16.mxu0 0
  %4069 = vmatmul.mubr.bf16.gmra.mrb[0].mxu0 %v3746
  %v4070 = vpop.f32.mrb[0].mxu0
  %v4071 = vadd.f32 0.0, %v4070
  %v4072 = vpop.f32.mrb[0].mxu0
  %v4073 = vpop.f32.mrb[0].mxu0
  %v4074 = vadd.f32 0.0, %v4073
  %v4075 = vpop.f32.mrb[0].mxu0
  %4076 = vmatprep.mubr.bf16.mxu0 0
  %4077 = vmatmul.mubr.bf16.gmra.mrb[0].mxu0 %v3749
  %v4078 = vpop.f32.mrb[0].mxu0
  %v4079 = vadd.f32 0.0, %v4078
  %v4080 = vpop.f32.mrb[0].mxu0
  %v4081 = vpop.f32.mrb[0].mxu0
  %v4082 = vadd.f32 0.0, %v4081
  %v4083 = vpop.f32.mrb[0].mxu0
  %4084 = vmatprep.mubr.bf16.mxu0 0
  %4085 = vmatmul.mubr.bf16.gmra.mrb[0].mxu0 %v3752
  %v4086 = vpop.f32.mrb[0].mxu0
  %v4087 = vadd.f32 0.0, %v4086
  %v4088 = vpop.f32.mrb[0].mxu0
  %v4089 = vpop.f32.mrb[0].mxu0
  %v4090 = vadd.f32 0.0, %v4089
  %v4091 = vpop.f32.mrb[0].mxu0
  %4092 = vmatprep.mubr.bf16.mxu0 0
  %4093 = vmatmul.mubr.bf16.gmra.mrb[0].mxu0 %v3755
  %v4094 = vpop.f32.mrb[0].mxu0
  %v4095 = vadd.f32 0.0, %v4094
  %v4096 = vpop.f32.mrb[0].mxu0
  %v4097 = vpop.f32.mrb[0].mxu0
  %v4098 = vadd.f32 0.0, %v4097
  %v4099 = vpop.f32.mrb[0].mxu0
  %4100 = vmatprep.mubr.bf16.mxu0 0
  %4101 = vmatmul.mubr.bf16.gmra.mrb[0].mxu0 %v3758
  %v4102 = vpop.f32.mrb[0].mxu0
  %v4103 = vadd.f32 0.0, %v4102
  %v4104 = vpop.f32.mrb[0].mxu0
  %v4105 = vpop.f32.mrb[0].mxu0
  %v4106 = vadd.f32 0.0, %v4105
  %v4107 = vpop.f32.mrb[0].mxu0
  %4108 = vmatprep.mubr.bf16.mxu0 0
  %4109 = vmatmul.mubr.bf16.gmra.mrb[0].mxu0 %v3761
  %v4110 = vpop.f32.mrb[0].mxu0
  %v4111 = vadd.f32 0.0, %v4110
  %v4112 = vpop.f32.mrb[0].mxu0
  %v4113 = vpop.f32.mrb[0].mxu0
  %v4114 = vadd.f32 0.0, %v4113
  %v4115 = vpop.f32.mrb[0].mxu0
  %4116 = vmatprep.mubr.bf16.mxu0 0
  %4117 = vmatmul.mubr.bf16.gmra.mrb[0].mxu0 %v3764
  %v4118 = vpop.f32.mrb[0].mxu0
  %v4119 = vadd.f32 0.0, %v4118
  %v4120 = vpop.f32.mrb[0].mxu0
  %v4121 = vpop.f32.mrb[0].mxu0
  %v4122 = vadd.f32 0.0, %v4121
  %v4123 = vpop.f32.mrb[0].mxu0
  %4124 = vmatprep.mubr.bf16.mxu0 0
  %4125 = vmatmul.mubr.bf16.gmra.mrb[0].mxu0 %v3767
  %v4126 = vpop.f32.mrb[0].mxu0
  %v4127 = vadd.f32 0.0, %v4126
  %v4128 = vpop.f32.mrb[0].mxu0
  %v4129 = vpop.f32.mrb[0].mxu0
  %v4130 = vpop.f32.mrb[0].mxu0
  %4131 = vdwg.mxu0
  %v4132 = vadd.f32 %v3468, %v3807
  %v4133 = vadd.f32 %v3469, %v3810
  %v4134 = vadd.f32 %v3470, %v3815
  %v4135 = vadd.f32 %v3471, %v3818
  %v4136 = vadd.f32 %v3472, %v3823
  %v4137 = vadd.f32 %v3473, %v3826
  %v4138 = vadd.f32 %v3474, %v3831
  %v4139 = vadd.f32 %v3475, %v3834
  %v4140 = vadd.f32 %v3476, %v3839
  %v4141 = vadd.f32 %v3477, %v3842
  %v4142 = vadd.f32 %v3478, %v3847
  %v4143 = vadd.f32 %v3479, %v3850
  %v4144 = vadd.f32 %v3480, %v3855
  %v4145 = vadd.f32 %v3481, %v3858
  %v4146 = vadd.f32 %v3482, %v3863
  %v4147 = vadd.f32 %v3483, %v3866
  %v4148 = vadd.f32 %v3484, %v3871
  %v4149 = vadd.f32 %v3485, %v3874
  %v4150 = vadd.f32 %v3486, %v3879
  %v4151 = vadd.f32 %v3487, %v3882
  %v4152 = vadd.f32 %v3488, %v3887
  %v4153 = vadd.f32 %v3489, %v3890
  %v4154 = vadd.f32 %v3490, %v3895
  %v4155 = vadd.f32 %v3491, %v3898
  %v4156 = vadd.f32 %v3492, %v3903
  %v4157 = vadd.f32 %v3493, %v3906
  %v4158 = vadd.f32 %v3494, %v3911
  %v4159 = vadd.f32 %v3495, %v3914
  %v4160 = vadd.f32 %v3496, %v3919
  %v4161 = vadd.f32 %v3497, %v3922
  %v4162 = vadd.f32 %v3498, %v3927
  %v4163 = vadd.f32 %v3499, %v3930
  %v4164 = vadd.f32 %v3500, %v3935
  %v4165 = vadd.f32 %v3501, %v3938
  %v4166 = vadd.f32 %v3502, %v3943
  %v4167 = vadd.f32 %v3503, %v3946
  %v4168 = vadd.f32 %v3504, %v3951
  %v4169 = vadd.f32 %v3505, %v3954
  %v4170 = vadd.f32 %v3506, %v3959
  %v4171 = vadd.f32 %v3507, %v3962
  %v4172 = vadd.f32 %v3508, %v3967
  %v4173 = vadd.f32 %v3509, %v3970
  %v4174 = vadd.f32 %v3510, %v3975
  %v4175 = vadd.f32 %v3511, %v3978
  %v4176 = vadd.f32 %v3512, %v3983
  %v4177 = vadd.f32 %v3513, %v3986
  %v4178 = vadd.f32 %v3514, %v3991
  %v4179 = vadd.f32 %v3515, %v3994
  %v4180 = vadd.f32 %v3516, %v3999
  %v4181 = vadd.f32 %v3517, %v4002
  %v4182 = vadd.f32 %v3518, %v4007
  %v4183 = vadd.f32 %v3519, %v4010
  %v4184 = vadd.f32 %v3520, %v4015
  %v4185 = vadd.f32 %v3521, %v4018
  %v4186 = vadd.f32 %v3522, %v4023
  %v4187 = vadd.f32 %v3523, %v4026
  %v4188 = vadd.f32 %v3524, %v4031
  %v4189 = vadd.f32 %v3525, %v4034
  %v4190 = vadd.f32 %v3526, %v4039
  %v4191 = vadd.f32 %v3527, %v4042
  %v4192 = vadd.f32 %v3528, %v4047
  %v4193 = vadd.f32 %v3529, %v4050
  %v4194 = vadd.f32 %v3530, %v4055
  %v4195 = vadd.f32 %v3531, %v4058
  %v4196 = vadd.f32 %v3532, %v4063
  %v4197 = vadd.f32 %v3533, %v4066
  %v4198 = vadd.f32 %v3534, %v4071
  %v4199 = vadd.f32 %v3535, %v4074
  %v4200 = vadd.f32 %v3536, %v4079
  %v4201 = vadd.f32 %v3537, %v4082
  %v4202 = vadd.f32 %v3538, %v4087
  %v4203 = vadd.f32 %v3539, %v4090
  %v4204 = vadd.f32 %v3540, %v4095
  %v4205 = vadd.f32 %v3541, %v4098
  %v4206 = vadd.f32 %v3542, %v4103
  %v4207 = vadd.f32 %v3543, %v4106
  %v4208 = vadd.f32 %v3544, %v4111
  %v4209 = vadd.f32 %v3545, %v4114
  %v4210 = vadd.f32 %v3546, %v4119
  %v4211 = vadd.f32 %v3547, %v4122
  %v4212 = vadd.f32 %v3548, %v4127
  %v4213 = vld [vmem:[%s1 + $0x8] sm:$0x6]
  %v4215 = vrot.slane %v368, 2
  %v4216 = vsel %vm3551, %v3631, %v4215
  %v4218 = vunpack.c.l.b16 %v4213
  %v4219 = vpack.c.b16 %v4218, %v4218
  %v4220 = vrot.slane %v4219, 1
  %v4222 = vsel %vm710, %v4216, 0
  %v4225 = vsel %vm710, %v4215, 0
  %v4228 = vand.u32 %v4220, %v837
  %4230 = vmatprep.subr.bf16.mxu0 0
  %4231 = vmatpush1.bf16.msra.mxu0 %v4228
  %4232 = vmatprep.subr.bf16.mxu0 0
  %4233 = vmatpush1.bf16.msra.mxu0 0
  %4234 = vmatprep.subr.bf16.mxu0 0
  %4235 = vmatpush1.bf16.msra.mxu0 0
  %4236 = vmatprep.subr.bf16.mxu0 0
  %4237 = vmatpush1.bf16.msra.mxu0 0
  %4238 = vmatprep.subr.bf16.mxu0 0
  %4239 = vmatpush1.bf16.msra.mxu0 0
  %4240 = vmatprep.subr.bf16.mxu0 0
  %4241 = vmatpush1.bf16.msra.mxu0 0
  %4242 = vmatprep.subr.bf16.mxu0 0
  %4243 = vmatpush1.bf16.msra.mxu0 0
  %4244 = vmatprep.subr.bf16.mxu0 0
  %4245 = vmatpush1.bf16.msra.mxu0 0
  %4246 = vmatprep.subr.bf16.mxu0 0
  %4247 = vmatpush1.bf16.msra.mxu0 0
  %4248 = vmatprep.subr.bf16.mxu0 0
  %4249 = vmatpush1.bf16.msra.mxu0 0
  %4250 = vmatprep.subr.bf16.mxu0 0
  %4251 = vmatpush1.bf16.msra.mxu0 0
  %4252 = vmatprep.subr.bf16.mxu0 0
  %4253 = vmatpush1.bf16.msra.mxu0 0
  %4254 = vmatprep.subr.bf16.mxu0 0
  %4255 = vmatpush1.bf16.msra.mxu0 0
  %4256 = vmatprep.subr.bf16.mxu0 0
  %4257 = vmatpush1.bf16.msra.mxu0 0
  %4258 = vmatprep.subr.bf16.mxu0 0
  %4259 = vmatpush1.bf16.msra.mxu0 0
  %4260 = vmatprep.subr.bf16.mxu0 0
  %4261 = vmatpush1.bf16.msra.mxu0 0
  %4262 = vmatprep.mubr.bf16.mxu0 0
  %4263 = vmatmul.mubr.bf16.gmra.mrb[0].mxu0 %v3650
  %v4264 = vpop.f32.mrb[0].mxu0
  %v4265 = vadd.f32 0.0, %v4264
  %v4266 = vpop.f32.mrb[0].mxu0
  %v4267 = vpop.f32.mrb[0].mxu0
  %v4268 = vadd.f32 0.0, %v4267
  %v4269 = vpop.f32.mrb[0].mxu0
  %4270 = vmatprep.mubr.bf16.mxu0 0
  %4271 = vmatmul.mubr.bf16.gmra.mrb[0].mxu0 %v3653
  %v4272 = vpop.f32.mrb[0].mxu0
  %v4273 = vadd.f32 0.0, %v4272
  %v4274 = vpop.f32.mrb[0].mxu0
  %v4275 = vpop.f32.mrb[0].mxu0
  %v4276 = vadd.f32 0.0, %v4275
  %v4277 = vpop.f32.mrb[0].mxu0
  %4278 = vmatprep.mubr.bf16.mxu0 0
  %4279 = vmatmul.mubr.bf16.gmra.mrb[0].mxu0 %v3656
  %v4280 = vpop.f32.mrb[0].mxu0
  %v4281 = vadd.f32 0.0, %v4280
  %v4282 = vpop.f32.mrb[0].mxu0
  %v4283 = vpop.f32.mrb[0].mxu0
  %v4284 = vadd.f32 0.0, %v4283
  %v4285 = vpop.f32.mrb[0].mxu0
  %4286 = vmatprep.mubr.bf16.mxu0 0
  %4287 = vmatmul.mubr.bf16.gmra.mrb[0].mxu0 %v3659
  %v4288 = vpop.f32.mrb[0].mxu0
  %v4289 = vadd.f32 0.0, %v4288
  %v4290 = vpop.f32.mrb[0].mxu0
  %v4291 = vpop.f32.mrb[0].mxu0
  %v4292 = vadd.f32 0.0, %v4291
  %v4293 = vpop.f32.mrb[0].mxu0
  %4294 = vmatprep.mubr.bf16.mxu0 0
  %4295 = vmatmul.mubr.bf16.gmra.mrb[0].mxu0 %v3662
  %v4296 = vpop.f32.mrb[0].mxu0
  %v4297 = vadd.f32 0.0, %v4296
  %v4298 = vpop.f32.mrb[0].mxu0
  %v4299 = vpop.f32.mrb[0].mxu0
  %v4300 = vadd.f32 0.0, %v4299
  %v4301 = vpop.f32.mrb[0].mxu0
  %4302 = vmatprep.mubr.bf16.mxu0 0
  %4303 = vmatmul.mubr.bf16.gmra.mrb[0].mxu0 %v3665
  %v4304 = vpop.f32.mrb[0].mxu0
  %v4305 = vadd.f32 0.0, %v4304
  %v4306 = vpop.f32.mrb[0].mxu0
  %v4307 = vpop.f32.mrb[0].mxu0
  %v4308 = vadd.f32 0.0, %v4307
  %v4309 = vpop.f32.mrb[0].mxu0
  %4310 = vmatprep.mubr.bf16.mxu0 0
  %4311 = vmatmul.mubr.bf16.gmra.mrb[0].mxu0 %v3668
  %v4312 = vpop.f32.mrb[0].mxu0
  %v4313 = vadd.f32 0.0, %v4312
  %v4314 = vpop.f32.mrb[0].mxu0
  %v4315 = vpop.f32.mrb[0].mxu0
  %v4316 = vadd.f32 0.0, %v4315
  %v4317 = vpop.f32.mrb[0].mxu0
  %4318 = vmatprep.mubr.bf16.mxu0 0
  %4319 = vmatmul.mubr.bf16.gmra.mrb[0].mxu0 %v3671
  %v4320 = vpop.f32.mrb[0].mxu0
  %v4321 = vadd.f32 0.0, %v4320
  %v4322 = vpop.f32.mrb[0].mxu0
  %v4323 = vpop.f32.mrb[0].mxu0
  %v4324 = vadd.f32 0.0, %v4323
  %v4325 = vpop.f32.mrb[0].mxu0
  %4326 = vmatprep.mubr.bf16.mxu0 0
  %4327 = vmatmul.mubr.bf16.gmra.mrb[0].mxu0 %v3674
  %v4328 = vpop.f32.mrb[0].mxu0
  %v4329 = vadd.f32 0.0, %v4328
  %v4330 = vpop.f32.mrb[0].mxu0
  %v4331 = vpop.f32.mrb[0].mxu0
  %v4332 = vadd.f32 0.0, %v4331
  %v4333 = vpop.f32.mrb[0].mxu0
  %4334 = vmatprep.mubr.bf16.mxu0 0
  %4335 = vmatmul.mubr.bf16.gmra.mrb[0].mxu0 %v3677
  %v4336 = vpop.f32.mrb[0].mxu0
  %v4337 = vadd.f32 0.0, %v4336
  %v4338 = vpop.f32.mrb[0].mxu0
  %v4339 = vpop.f32.mrb[0].mxu0
  %v4340 = vadd.f32 0.0, %v4339
  %v4341 = vpop.f32.mrb[0].mxu0
  %4342 = vmatprep.mubr.bf16.mxu0 0
  %4343 = vmatmul.mubr.bf16.gmra.mrb[0].mxu0 %v3680
  %v4344 = vpop.f32.mrb[0].mxu0
  %v4345 = vadd.f32 0.0, %v4344
  %v4346 = vpop.f32.mrb[0].mxu0
  %v4347 = vpop.f32.mrb[0].mxu0
  %v4348 = vadd.f32 0.0, %v4347
  %v4349 = vpop.f32.mrb[0].mxu0
  %4350 = vmatprep.mubr.bf16.mxu0 0
  %4351 = vmatmul.mubr.bf16.gmra.mrb[0].mxu0 %v3683
  %v4352 = vpop.f32.mrb[0].mxu0
  %v4353 = vadd.f32 0.0, %v4352
  %v4354 = vpop.f32.mrb[0].mxu0
  %v4355 = vpop.f32.mrb[0].mxu0
  %v4356 = vadd.f32 0.0, %v4355
  %v4357 = vpop.f32.mrb[0].mxu0
  %4358 = vmatprep.mubr.bf16.mxu0 0
  %4359 = vmatmul.mubr.bf16.gmra.mrb[0].mxu0 %v3686
  %v4360 = vpop.f32.mrb[0].mxu0
  %v4361 = vadd.f32 0.0, %v4360
  %v4362 = vpop.f32.mrb[0].mxu0
  %v4363 = vpop.f32.mrb[0].mxu0
  %v4364 = vadd.f32 0.0, %v4363
  %v4365 = vpop.f32.mrb[0].mxu0
  %4366 = vmatprep.mubr.bf16.mxu0 0
  %4367 = vmatmul.mubr.bf16.gmra.mrb[0].mxu0 %v3689
  %v4368 = vpop.f32.mrb[0].mxu0
  %v4369 = vadd.f32 0.0, %v4368
  %v4370 = vpop.f32.mrb[0].mxu0
  %v4371 = vpop.f32.mrb[0].mxu0
  %v4372 = vadd.f32 0.0, %v4371
  %v4373 = vpop.f32.mrb[0].mxu0
  %4374 = vmatprep.mubr.bf16.mxu0 0
  %4375 = vmatmul.mubr.bf16.gmra.mrb[0].mxu0 %v3692
  %v4376 = vpop.f32.mrb[0].mxu0
  %v4377 = vadd.f32 0.0, %v4376
  %v4378 = vpop.f32.mrb[0].mxu0
  %v4379 = vpop.f32.mrb[0].mxu0
  %v4380 = vadd.f32 0.0, %v4379
  %v4381 = vpop.f32.mrb[0].mxu0
  %4382 = vmatprep.mubr.bf16.mxu0 0
  %4383 = vmatmul.mubr.bf16.gmra.mrb[0].mxu0 %v3695
  %v4384 = vpop.f32.mrb[0].mxu0
  %v4385 = vadd.f32 0.0, %v4384
  %v4386 = vpop.f32.mrb[0].mxu0
  %v4387 = vpop.f32.mrb[0].mxu0
  %v4388 = vadd.f32 0.0, %v4387
  %v4389 = vpop.f32.mrb[0].mxu0
  %4390 = vmatprep.mubr.bf16.mxu0 0
  %4391 = vmatmul.mubr.bf16.gmra.mrb[0].mxu0 %v3698
  %v4392 = vpop.f32.mrb[0].mxu0
  %v4393 = vadd.f32 0.0, %v4392
  %v4394 = vpop.f32.mrb[0].mxu0
  %v4395 = vpop.f32.mrb[0].mxu0
  %v4396 = vadd.f32 0.0, %v4395
  %v4397 = vpop.f32.mrb[0].mxu0
  %4398 = vmatprep.mubr.bf16.mxu0 0
  %4399 = vmatmul.mubr.bf16.gmra.mrb[0].mxu0 %v3701
  %v4400 = vpop.f32.mrb[0].mxu0
  %v4401 = vadd.f32 0.0, %v4400
  %v4402 = vpop.f32.mrb[0].mxu0
  %v4403 = vpop.f32.mrb[0].mxu0
  %v4404 = vadd.f32 0.0, %v4403
  %v4405 = vpop.f32.mrb[0].mxu0
  %4406 = vmatprep.mubr.bf16.mxu0 0
  %4407 = vmatmul.mubr.bf16.gmra.mrb[0].mxu0 %v3704
  %v4408 = vpop.f32.mrb[0].mxu0
  %v4409 = vadd.f32 0.0, %v4408
  %v4410 = vpop.f32.mrb[0].mxu0
  %v4411 = vpop.f32.mrb[0].mxu0
  %v4412 = vadd.f32 0.0, %v4411
  %v4413 = vpop.f32.mrb[0].mxu0
  %4414 = vmatprep.mubr.bf16.mxu0 0
  %4415 = vmatmul.mubr.bf16.gmra.mrb[0].mxu0 %v3707
  %v4416 = vpop.f32.mrb[0].mxu0
  %v4417 = vadd.f32 0.0, %v4416
  %v4418 = vpop.f32.mrb[0].mxu0
  %v4419 = vpop.f32.mrb[0].mxu0
  %v4420 = vadd.f32 0.0, %v4419
  %v4421 = vpop.f32.mrb[0].mxu0
  %4422 = vmatprep.mubr.bf16.mxu0 0
  %4423 = vmatmul.mubr.bf16.gmra.mrb[0].mxu0 %v3710
  %v4424 = vpop.f32.mrb[0].mxu0
  %v4425 = vadd.f32 0.0, %v4424
  %v4426 = vpop.f32.mrb[0].mxu0
  %v4427 = vpop.f32.mrb[0].mxu0
  %v4428 = vadd.f32 0.0, %v4427
  %v4429 = vpop.f32.mrb[0].mxu0
  %4430 = vmatprep.mubr.bf16.mxu0 0
  %4431 = vmatmul.mubr.bf16.gmra.mrb[0].mxu0 %v3713
  %v4432 = vpop.f32.mrb[0].mxu0
  %v4433 = vadd.f32 0.0, %v4432
  %v4434 = vpop.f32.mrb[0].mxu0
  %v4435 = vpop.f32.mrb[0].mxu0
  %v4436 = vadd.f32 0.0, %v4435
  %v4437 = vpop.f32.mrb[0].mxu0
  %4438 = vmatprep.mubr.bf16.mxu0 0
  %4439 = vmatmul.mubr.bf16.gmra.mrb[0].mxu0 %v3716
  %v4440 = vpop.f32.mrb[0].mxu0
  %v4441 = vadd.f32 0.0, %v4440
  %v4442 = vpop.f32.mrb[0].mxu0
  %v4443 = vpop.f32.mrb[0].mxu0
  %v4444 = vadd.f32 0.0, %v4443
  %v4445 = vpop.f32.mrb[0].mxu0
  %4446 = vmatprep.mubr.bf16.mxu0 0
  %4447 = vmatmul.mubr.bf16.gmra.mrb[0].mxu0 %v3719
  %v4448 = vpop.f32.mrb[0].mxu0
  %v4449 = vadd.f32 0.0, %v4448
  %v4450 = vpop.f32.mrb[0].mxu0
  %v4451 = vpop.f32.mrb[0].mxu0
  %v4452 = vadd.f32 0.0, %v4451
  %v4453 = vpop.f32.mrb[0].mxu0
  %4454 = vmatprep.mubr.bf16.mxu0 0
  %4455 = vmatmul.mubr.bf16.gmra.mrb[0].mxu0 %v3722
  %v4456 = vpop.f32.mrb[0].mxu0
  %v4457 = vadd.f32 0.0, %v4456
  %v4458 = vpop.f32.mrb[0].mxu0
  %v4459 = vpop.f32.mrb[0].mxu0
  %v4460 = vadd.f32 0.0, %v4459
  %v4461 = vpop.f32.mrb[0].mxu0
  %4462 = vmatprep.mubr.bf16.mxu0 0
  %4463 = vmatmul.mubr.bf16.gmra.mrb[0].mxu0 %v3725
  %v4464 = vpop.f32.mrb[0].mxu0
  %v4465 = vadd.f32 0.0, %v4464
  %v4466 = vpop.f32.mrb[0].mxu0
  %v4467 = vpop.f32.mrb[0].mxu0
  %v4468 = vadd.f32 0.0, %v4467
  %v4469 = vpop.f32.mrb[0].mxu0
  %4470 = vmatprep.mubr.bf16.mxu0 0
  %4471 = vmatmul.mubr.bf16.gmra.mrb[0].mxu0 %v3728
  %v4472 = vpop.f32.mrb[0].mxu0
  %v4473 = vadd.f32 0.0, %v4472
  %v4474 = vpop.f32.mrb[0].mxu0
  %v4475 = vpop.f32.mrb[0].mxu0
  %v4476 = vadd.f32 0.0, %v4475
  %v4477 = vpop.f32.mrb[0].mxu0
  %4478 = vmatprep.mubr.bf16.mxu0 0
  %4479 = vmatmul.mubr.bf16.gmra.mrb[0].mxu0 %v3731
  %v4480 = vpop.f32.mrb[0].mxu0
  %v4481 = vadd.f32 0.0, %v4480
  %v4482 = vpop.f32.mrb[0].mxu0
  %v4483 = vpop.f32.mrb[0].mxu0
  %v4484 = vadd.f32 0.0, %v4483
  %v4485 = vpop.f32.mrb[0].mxu0
  %4486 = vmatprep.mubr.bf16.mxu0 0
  %4487 = vmatmul.mubr.bf16.gmra.mrb[0].mxu0 %v3734
  %v4488 = vpop.f32.mrb[0].mxu0
  %v4489 = vadd.f32 0.0, %v4488
  %v4490 = vpop.f32.mrb[0].mxu0
  %v4491 = vpop.f32.mrb[0].mxu0
  %v4492 = vadd.f32 0.0, %v4491
  %v4493 = vpop.f32.mrb[0].mxu0
  %4494 = vmatprep.mubr.bf16.mxu0 0
  %4495 = vmatmul.mubr.bf16.gmra.mrb[0].mxu0 %v3737
  %v4496 = vpop.f32.mrb[0].mxu0
  %v4497 = vadd.f32 0.0, %v4496
  %v4498 = vpop.f32.mrb[0].mxu0
  %v4499 = vpop.f32.mrb[0].mxu0
  %v4500 = vadd.f32 0.0, %v4499
  %v4501 = vpop.f32.mrb[0].mxu0
  %4502 = vmatprep.mubr.bf16.mxu0 0
  %4503 = vmatmul.mubr.bf16.gmra.mrb[0].mxu0 %v3740
  %v4504 = vpop.f32.mrb[0].mxu0
  %v4505 = vadd.f32 0.0, %v4504
  %v4506 = vpop.f32.mrb[0].mxu0
  %v4507 = vpop.f32.mrb[0].mxu0
  %v4508 = vadd.f32 0.0, %v4507
  %v4509 = vpop.f32.mrb[0].mxu0
  %4510 = vmatprep.mubr.bf16.mxu0 0
  %4511 = vmatmul.mubr.bf16.gmra.mrb[0].mxu0 %v3743
  %v4512 = vpop.f32.mrb[0].mxu0
  %v4513 = vadd.f32 0.0, %v4512
  %v4514 = vpop.f32.mrb[0].mxu0
  %v4515 = vpop.f32.mrb[0].mxu0
  %v4516 = vadd.f32 0.0, %v4515
  %v4517 = vpop.f32.mrb[0].mxu0
  %4518 = vmatprep.mubr.bf16.mxu0 0
  %4519 = vmatmul.mubr.bf16.gmra.mrb[0].mxu0 %v3746
  %v4520 = vpop.f32.mrb[0].mxu0
  %v4521 = vadd.f32 0.0, %v4520
  %v4522 = vpop.f32.mrb[0].mxu0
  %v4523 = vpop.f32.mrb[0].mxu0
  %v4524 = vadd.f32 0.0, %v4523
  %v4525 = vpop.f32.mrb[0].mxu0
  %4526 = vmatprep.mubr.bf16.mxu0 0
  %4527 = vmatmul.mubr.bf16.gmra.mrb[0].mxu0 %v3749
  %v4528 = vpop.f32.mrb[0].mxu0
  %v4529 = vadd.f32 0.0, %v4528
  %v4530 = vpop.f32.mrb[0].mxu0
  %v4531 = vpop.f32.mrb[0].mxu0
  %v4532 = vadd.f32 0.0, %v4531
  %v4533 = vpop.f32.mrb[0].mxu0
  %4534 = vmatprep.mubr.bf16.mxu0 0
  %4535 = vmatmul.mubr.bf16.gmra.mrb[0].mxu0 %v3752
  %v4536 = vpop.f32.mrb[0].mxu0
  %v4537 = vadd.f32 0.0, %v4536
  %v4538 = vpop.f32.mrb[0].mxu0
  %v4539 = vpop.f32.mrb[0].mxu0
  %v4540 = vadd.f32 0.0, %v4539
  %v4541 = vpop.f32.mrb[0].mxu0
  %4542 = vmatprep.mubr.bf16.mxu0 0
  %4543 = vmatmul.mubr.bf16.gmra.mrb[0].mxu0 %v3755
  %v4544 = vpop.f32.mrb[0].mxu0
  %v4545 = vadd.f32 0.0, %v4544
  %v4546 = vpop.f32.mrb[0].mxu0
  %v4547 = vpop.f32.mrb[0].mxu0
  %v4548 = vadd.f32 0.0, %v4547
  %v4549 = vpop.f32.mrb[0].mxu0
  %4550 = vmatprep.mubr.bf16.mxu0 0
  %4551 = vmatmul.mubr.bf16.gmra.mrb[0].mxu0 %v3758
  %v4552 = vpop.f32.mrb[0].mxu0
  %v4553 = vadd.f32 0.0, %v4552
  %v4554 = vpop.f32.mrb[0].mxu0
  %v4555 = vpop.f32.mrb[0].mxu0
  %v4556 = vadd.f32 0.0, %v4555
  %v4557 = vpop.f32.mrb[0].mxu0
  %4558 = vmatprep.mubr.bf16.mxu0 0
  %4559 = vmatmul.mubr.bf16.gmra.mrb[0].mxu0 %v3761
  %v4560 = vpop.f32.mrb[0].mxu0
  %v4561 = vadd.f32 0.0, %v4560
  %v4562 = vpop.f32.mrb[0].mxu0
  %v4563 = vpop.f32.mrb[0].mxu0
  %v4564 = vadd.f32 0.0, %v4563
  %v4565 = vpop.f32.mrb[0].mxu0
  %4566 = vmatprep.mubr.bf16.mxu0 0
  %4567 = vmatmul.mubr.bf16.gmra.mrb[0].mxu0 %v3764
  %v4568 = vpop.f32.mrb[0].mxu0
  %v4569 = vadd.f32 0.0, %v4568
  %v4570 = vpop.f32.mrb[0].mxu0
  %v4571 = vpop.f32.mrb[0].mxu0
  %v4572 = vadd.f32 0.0, %v4571
  %v4573 = vpop.f32.mrb[0].mxu0
  %4574 = vmatprep.mubr.bf16.mxu0 0
  %4575 = vmatmul.mubr.bf16.gmra.mrb[0].mxu0 %v4222
  %v4576 = vpop.f32.mrb[0].mxu0
  %v4577 = vadd.f32 0.0, %v4576
  %v4578 = vpop.f32.mrb[0].mxu0
  %v4579 = vpop.f32.mrb[0].mxu0
  %v4580 = vadd.f32 0.0, %v4579
  %v4581 = vpop.f32.mrb[0].mxu0
  %4582 = vmatprep.mubr.bf16.mxu0 0
  %4583 = vmatmul.mubr.bf16.gmra.mrb[0].mxu0 %v4225
  %v4584 = vpop.f32.mrb[0].mxu0
  %v4585 = vadd.f32 0.0, %v4584
  %v4586 = vpop.f32.mrb[0].mxu0
  %v4587 = vpop.f32.mrb[0].mxu0
  %v4588 = vpop.f32.mrb[0].mxu0
  %4589 = vdwg.mxu0
  %v4590 = vadd.f32 %v4132, %v4265
  %v4591 = vadd.f32 %v4133, %v4268
  %v4592 = vadd.f32 %v4134, %v4273
  %v4593 = vadd.f32 %v4135, %v4276
  %v4594 = vadd.f32 %v4136, %v4281
  %v4595 = vadd.f32 %v4137, %v4284
  %v4596 = vadd.f32 %v4138, %v4289
  %v4597 = vadd.f32 %v4139, %v4292
  %v4598 = vadd.f32 %v4140, %v4297
  %v4599 = vadd.f32 %v4141, %v4300
  %v4600 = vadd.f32 %v4142, %v4305
  %v4601 = vadd.f32 %v4143, %v4308
  %v4602 = vadd.f32 %v4144, %v4313
  %v4603 = vadd.f32 %v4145, %v4316
  %v4604 = vadd.f32 %v4146, %v4321
  %v4605 = vadd.f32 %v4147, %v4324
  %v4606 = vadd.f32 %v4148, %v4329
  %v4607 = vadd.f32 %v4149, %v4332
  %v4608 = vadd.f32 %v4150, %v4337
  %v4609 = vadd.f32 %v4151, %v4340
  %v4610 = vadd.f32 %v4152, %v4345
  %v4611 = vadd.f32 %v4153, %v4348
  %v4612 = vadd.f32 %v4154, %v4353
  %v4613 = vadd.f32 %v4155, %v4356
  %v4614 = vadd.f32 %v4156, %v4361
  %v4615 = vadd.f32 %v4157, %v4364
  %v4616 = vadd.f32 %v4158, %v4369
  %v4617 = vadd.f32 %v4159, %v4372
  %v4618 = vadd.f32 %v4160, %v4377
  %v4619 = vadd.f32 %v4161, %v4380
  %v4620 = vadd.f32 %v4162, %v4385
  %v4621 = vadd.f32 %v4163, %v4388
  %v4622 = vadd.f32 %v4164, %v4393
  %v4623 = vadd.f32 %v4165, %v4396
  %v4624 = vadd.f32 %v4166, %v4401
  %v4625 = vadd.f32 %v4167, %v4404
  %v4626 = vadd.f32 %v4168, %v4409
  %v4627 = vadd.f32 %v4169, %v4412
  %v4628 = vadd.f32 %v4170, %v4417
  %v4629 = vadd.f32 %v4171, %v4420
  %v4630 = vadd.f32 %v4172, %v4425
  %v4631 = vadd.f32 %v4173, %v4428
  %v4632 = vadd.f32 %v4174, %v4433
  %v4633 = vadd.f32 %v4175, %v4436
  %v4634 = vadd.f32 %v4176, %v4441
  %v4635 = vadd.f32 %v4177, %v4444
  %v4636 = vadd.f32 %v4178, %v4449
  %v4637 = vadd.f32 %v4179, %v4452
  %v4638 = vadd.f32 %v4180, %v4457
  %v4639 = vadd.f32 %v4181, %v4460
  %v4640 = vadd.f32 %v4182, %v4465
  %v4641 = vadd.f32 %v4183, %v4468
  %v4642 = vadd.f32 %v4184, %v4473
  %v4643 = vadd.f32 %v4185, %v4476
  %v4644 = vadd.f32 %v4186, %v4481
  %v4645 = vadd.f32 %v4187, %v4484
  %v4646 = vadd.f32 %v4188, %v4489
  %v4647 = vadd.f32 %v4189, %v4492
  %v4648 = vadd.f32 %v4190, %v4497
  %v4649 = vadd.f32 %v4191, %v4500
  %v4650 = vadd.f32 %v4192, %v4505
  %v4651 = vadd.f32 %v4193, %v4508
  %v4652 = vadd.f32 %v4194, %v4513
  %v4653 = vadd.f32 %v4195, %v4516
  %v4654 = vadd.f32 %v4196, %v4521
  %v4655 = vadd.f32 %v4197, %v4524
  %v4656 = vadd.f32 %v4198, %v4529
  %v4657 = vadd.f32 %v4199, %v4532
  %v4658 = vadd.f32 %v4200, %v4537
  %v4659 = vadd.f32 %v4201, %v4540
  %v4660 = vadd.f32 %v4202, %v4545
  %v4661 = vadd.f32 %v4203, %v4548
  %v4662 = vadd.f32 %v4204, %v4553
  %v4663 = vadd.f32 %v4205, %v4556
  %v4664 = vadd.f32 %v4206, %v4561
  %v4665 = vadd.f32 %v4207, %v4564
  %v4666 = vadd.f32 %v4208, %v4569
  %v4667 = vadd.f32 %v4209, %v4572
  %v4668 = vadd.f32 %v4210, %v4577
  %v4669 = vadd.f32 %v4211, %v4580
  %v4670 = vadd.f32 %v4212, %v4585
  %v4671 = vld [vmem:[%s1 + $0x8] sm:$0xc]
  %vm4672 = vsmask.f32 5376
  %v4673 = vrot.slane %v392, 2
  %v4674 = vrot.slane %v388, 3
  %v4675 = vor.u32 %v4673, %v4674
  %v4676 = vrot.slane %v400, 2
  %v4677 = vrot.slane %v396, 3
  %v4678 = vor.u32 %v4676, %v4677
  %v4679 = vsel %vm4672, %v4675, %v4678
  %v4680 = vrot.slane %v408, 2
  %v4681 = vrot.slane %v404, 3
  %v4682 = vor.u32 %v4680, %v4681
  %v4683 = vsel %vm4672, %v4678, %v4682
  %v4684 = vrot.slane %v416, 2
  %v4685 = vrot.slane %v412, 3
  %v4686 = vor.u32 %v4684, %v4685
  %v4687 = vsel %vm4672, %v4682, %v4686
  %v4688 = vrot.slane %v424, 2
  %v4689 = vrot.slane %v420, 3
  %v4690 = vor.u32 %v4688, %v4689
  %v4691 = vsel %vm4672, %v4686, %v4690
  %v4692 = vrot.slane %v432, 2
  %v4693 = vrot.slane %v428, 3
  %v4694 = vor.u32 %v4692, %v4693
  %v4695 = vsel %vm4672, %v4690, %v4694
  %v4696 = vrot.slane %v440, 2
  %v4697 = vrot.slane %v436, 3
  %v4698 = vor.u32 %v4696, %v4697
  %v4699 = vsel %vm4672, %v4694, %v4698
  %v4700 = vrot.slane %v448, 2
  %v4701 = vrot.slane %v444, 3
  %v4702 = vor.u32 %v4700, %v4701
  %v4703 = vsel %vm4672, %v4698, %v4702
  %v4704 = vrot.slane %v456, 2
  %v4705 = vrot.slane %v452, 3
  %v4706 = vor.u32 %v4704, %v4705
  %v4707 = vsel %vm4672, %v4702, %v4706
  %v4708 = vrot.slane %v464, 2
  %v4709 = vrot.slane %v460, 3
  %v4710 = vor.u32 %v4708, %v4709
  %v4711 = vsel %vm4672, %v4706, %v4710
  %v4712 = vrot.slane %v472, 2
  %v4713 = vrot.slane %v468, 3
  %v4714 = vor.u32 %v4712, %v4713
  %v4715 = vsel %vm4672, %v4710, %v4714
  %v4716 = vrot.slane %v480, 2
  %v4717 = vrot.slane %v476, 3
  %v4718 = vor.u32 %v4716, %v4717
  %v4719 = vsel %vm4672, %v4714, %v4718
  %v4720 = vrot.slane %v488, 2
  %v4721 = vrot.slane %v484, 3
  %v4722 = vor.u32 %v4720, %v4721
  %v4723 = vsel %vm4672, %v4718, %v4722
  %v4724 = vrot.slane %v496, 2
  %v4725 = vrot.slane %v492, 3
  %v4726 = vor.u32 %v4724, %v4725
  %v4727 = vsel %vm4672, %v4722, %v4726
  %v4728 = vrot.slane %v504, 2
  %v4729 = vrot.slane %v500, 3
  %v4730 = vor.u32 %v4728, %v4729
  %v4731 = vsel %vm4672, %v4726, %v4730
  %v4732 = vrot.slane %v512, 2
  %v4733 = vrot.slane %v508, 3
  %v4734 = vor.u32 %v4732, %v4733
  %v4735 = vsel %vm4672, %v4730, %v4734
  %v4736 = vrot.slane %v520, 2
  %v4737 = vrot.slane %v516, 3
  %v4738 = vor.u32 %v4736, %v4737
  %v4739 = vsel %vm4672, %v4734, %v4738
  %v4740 = vrot.slane %v528, 2
  %v4741 = vrot.slane %v524, 3
  %v4742 = vor.u32 %v4740, %v4741
  %v4743 = vsel %vm4672, %v4738, %v4742
  %v4744 = vrot.slane %v536, 2
  %v4745 = vrot.slane %v532, 3
  %v4746 = vor.u32 %v4744, %v4745
  %v4747 = vsel %vm4672, %v4742, %v4746
  %v4748 = vrot.slane %v544, 2
  %v4749 = vrot.slane %v540, 3
  %v4750 = vor.u32 %v4748, %v4749
  %v4751 = vsel %vm4672, %v4746, %v4750
  %v4752 = vrot.slane %v552, 2
  %v4753 = vrot.slane %v548, 3
  %v4754 = vor.u32 %v4752, %v4753
  %v4755 = vsel %vm4672, %v4750, %v4754
  %v4756 = vrot.slane %v560, 2
  %v4757 = vrot.slane %v556, 3
  %v4758 = vor.u32 %v4756, %v4757
  %v4759 = vsel %vm4672, %v4754, %v4758
  %v4760 = vrot.slane %v568, 2
  %v4761 = vrot.slane %v564, 3
  %v4762 = vor.u32 %v4760, %v4761
  %v4763 = vsel %vm4672, %v4758, %v4762
  %v4764 = vrot.slane %v576, 2
  %v4765 = vrot.slane %v572, 3
  %v4766 = vor.u32 %v4764, %v4765
  %v4767 = vsel %vm4672, %v4762, %v4766
  %v4768 = vrot.slane %v584, 2
  %v4769 = vrot.slane %v580, 3
  %v4770 = vor.u32 %v4768, %v4769
  %v4771 = vsel %vm4672, %v4766, %v4770
  %v4772 = vrot.slane %v592, 2
  %v4773 = vrot.slane %v588, 3
  %v4774 = vor.u32 %v4772, %v4773
  %v4775 = vsel %vm4672, %v4770, %v4774
  %v4776 = vrot.slane %v600, 2
  %v4777 = vrot.slane %v596, 3
  %v4778 = vor.u32 %v4776, %v4777
  %v4779 = vsel %vm4672, %v4774, %v4778
  %v4780 = vrot.slane %v608, 2
  %v4781 = vrot.slane %v604, 3
  %v4782 = vor.u32 %v4780, %v4781
  %v4783 = vsel %vm4672, %v4778, %v4782
  %v4784 = vrot.slane %v616, 2
  %v4785 = vrot.slane %v612, 3
  %v4786 = vor.u32 %v4784, %v4785
  %v4787 = vsel %vm4672, %v4782, %v4786
  %v4788 = vrot.slane %v624, 2
  %v4789 = vrot.slane %v620, 3
  %v4790 = vor.u32 %v4788, %v4789
  %v4791 = vsel %vm4672, %v4786, %v4790
  %v4792 = vrot.slane %v632, 2
  %v4793 = vrot.slane %v628, 3
  %v4794 = vor.u32 %v4792, %v4793
  %v4795 = vsel %vm4672, %v4790, %v4794
  %v4796 = vrot.slane %v640, 2
  %v4797 = vrot.slane %v636, 3
  %v4798 = vor.u32 %v4796, %v4797
  %v4799 = vsel %vm4672, %v4794, %v4798
  %v4800 = vrot.slane %v648, 2
  %v4801 = vrot.slane %v644, 3
  %v4802 = vor.u32 %v4800, %v4801
  %v4803 = vsel %vm4672, %v4798, %v4802
  %v4804 = vrot.slane %v656, 2
  %v4805 = vrot.slane %v652, 3
  %v4806 = vor.u32 %v4804, %v4805
  %v4807 = vsel %vm4672, %v4802, %v4806
  %v4808 = vrot.slane %v664, 2
  %v4809 = vrot.slane %v660, 3
  %v4810 = vor.u32 %v4808, %v4809
  %v4811 = vsel %vm4672, %v4806, %v4810
  %v4812 = vrot.slane %v672, 2
  %v4813 = vrot.slane %v668, 3
  %v4814 = vor.u32 %v4812, %v4813
  %v4815 = vsel %vm4672, %v4810, %v4814
  %v4816 = vrot.slane %v680, 2
  %v4817 = vrot.slane %v676, 3
  %v4818 = vor.u32 %v4816, %v4817
  %v4819 = vsel %vm4672, %v4814, %v4818
  %v4820 = vrot.slane %v688, 2
  %v4821 = vrot.slane %v684, 3
  %v4822 = vor.u32 %v4820, %v4821
  %v4823 = vsel %vm4672, %v4818, %v4822
  %v4824 = vrot.slane %v696, 2
  %v4825 = vrot.slane %v692, 3
  %v4826 = vor.u32 %v4824, %v4825
  %v4827 = vsel %vm4672, %v4822, %v4826
  %v4828 = vrot.slane %v2970, 2
  %v4829 = vrot.slane %v2973, 3
  %v4830 = vor.u32 %v4828, %v4829
  %v4831 = vsel %vm4672, %v4826, %v4830
  %v4833 = vshrl.u32 %v368, 16
  %v4835 = vrot.slane %v4833, 2
  %v4836 = vshll.u32 %v368, 16
  %v4838 = vrot.slane %v4836, 3
  %v4839 = vor.u32 %v4835, %v4838
  %v4840 = vsel %vm4672, %v4830, %v4839
  %v4842 = vunpack.c.l.b16 %v4671
  %v4843 = vpack.c.b16 %v4842, %v4842
  %v4845 = vshrl.u32 %v4843, 16
  %v4847 = vrot.slane %v4845, 2
  %v4848 = vshll.u32 %v4843, 16
  %v4850 = vrot.slane %v4848, 3
  %v4851 = vor.u32 %v4847, %v4850
  %v4853 = vsel %vm710, %v4679, 0
  %v4856 = vsel %vm710, %v4683, 0
  %v4859 = vsel %vm710, %v4687, 0
  %v4862 = vsel %vm710, %v4691, 0
  %v4865 = vsel %vm710, %v4695, 0
  %v4868 = vsel %vm710, %v4699, 0
  %v4871 = vsel %vm710, %v4703, 0
  %v4874 = vsel %vm710, %v4707, 0
  %v4877 = vsel %vm710, %v4711, 0
  %v4880 = vsel %vm710, %v4715, 0
  %v4883 = vsel %vm710, %v4719, 0
  %v4886 = vsel %vm710, %v4723, 0
  %v4889 = vsel %vm710, %v4727, 0
  %v4892 = vsel %vm710, %v4731, 0
  %v4895 = vsel %vm710, %v4735, 0
  %v4898 = vsel %vm710, %v4739, 0
  %v4901 = vsel %vm710, %v4743, 0
  %v4904 = vsel %vm710, %v4747, 0
  %v4907 = vsel %vm710, %v4751, 0
  %v4910 = vsel %vm710, %v4755, 0
  %v4913 = vsel %vm710, %v4759, 0
  %v4916 = vsel %vm710, %v4763, 0
  %v4919 = vsel %vm710, %v4767, 0
  %v4922 = vsel %vm710, %v4771, 0
  %v4925 = vsel %vm710, %v4775, 0
  %v4928 = vsel %vm710, %v4779, 0
  %v4931 = vsel %vm710, %v4783, 0
  %v4934 = vsel %vm710, %v4787, 0
  %v4937 = vsel %vm710, %v4791, 0
  %v4940 = vsel %vm710, %v4795, 0
  %v4943 = vsel %vm710, %v4799, 0
  %v4946 = vsel %vm710, %v4803, 0
  %v4949 = vsel %vm710, %v4807, 0
  %v4952 = vsel %vm710, %v4811, 0
  %v4955 = vsel %vm710, %v4815, 0
  %v4958 = vsel %vm710, %v4819, 0
  %v4961 = vsel %vm710, %v4823, 0
  %v4964 = vsel %vm710, %v4827, 0
  %v4967 = vsel %vm710, %v4831, 0
  %v4970 = vsel %vm710, %v4840, 0
  %v4973 = vsel %vm710, %v4839, 0
  %v4976 = vand.u32 %v4851, %v837
  %4978 = vmatprep.subr.bf16.mxu0 0
  %4979 = vmatpush1.bf16.msra.mxu0 %v4976
  %4980 = vmatprep.subr.bf16.mxu0 0
  %4981 = vmatpush1.bf16.msra.mxu0 0
  %4982 = vmatprep.subr.bf16.mxu0 0
  %4983 = vmatpush1.bf16.msra.mxu0 0
  %4984 = vmatprep.subr.bf16.mxu0 0
  %4985 = vmatpush1.bf16.msra.mxu0 0
  %4986 = vmatprep.subr.bf16.mxu0 0
  %4987 = vmatpush1.bf16.msra.mxu0 0
  %4988 = vmatprep.subr.bf16.mxu0 0
  %4989 = vmatpush1.bf16.msra.mxu0 0
  %4990 = vmatprep.subr.bf16.mxu0 0
  %4991 = vmatpush1.bf16.msra.mxu0 0
  %4992 = vmatprep.subr.bf16.mxu0 0
  %4993 = vmatpush1.bf16.msra.mxu0 0
  %4994 = vmatprep.subr.bf16.mxu0 0
  %4995 = vmatpush1.bf16.msra.mxu0 0
  %4996 = vmatprep.subr.bf16.mxu0 0
  %4997 = vmatpush1.bf16.msra.mxu0 0
  %4998 = vmatprep.subr.bf16.mxu0 0
  %4999 = vmatpush1.bf16.msra.mxu0 0
  %5000 = vmatprep.subr.bf16.mxu0 0
  %5001 = vmatpush1.bf16.msra.mxu0 0
  %5002 = vmatprep.subr.bf16.mxu0 0
  %5003 = vmatpush1.bf16.msra.mxu0 0
  %5004 = vmatprep.subr.bf16.mxu0 0
  %5005 = vmatpush1.bf16.msra.mxu0 0
  %5006 = vmatprep.subr.bf16.mxu0 0
  %5007 = vmatpush1.bf16.msra.mxu0 0
  %5008 = vmatprep.subr.bf16.mxu0 0
  %5009 = vmatpush1.bf16.msra.mxu0 0
  %5010 = vmatprep.mubr.bf16.mxu0 0
  %5011 = vmatmul.mubr.bf16.gmra.mrb[0].mxu0 %v4853
  %v5012 = vpop.f32.mrb[0].mxu0
  %v5013 = vadd.f32 0.0, %v5012
  %v5014 = vpop.f32.mrb[0].mxu0
  %v5015 = vpop.f32.mrb[0].mxu0
  %v5016 = vadd.f32 0.0, %v5015
  %v5017 = vpop.f32.mrb[0].mxu0
  %5018 = vmatprep.mubr.bf16.mxu0 0
  %5019 = vmatmul.mubr.bf16.gmra.mrb[0].mxu0 %v4856
  %v5020 = vpop.f32.mrb[0].mxu0
  %v5021 = vadd.f32 0.0, %v5020
  %v5022 = vpop.f32.mrb[0].mxu0
  %v5023 = vpop.f32.mrb[0].mxu0
  %v5024 = vadd.f32 0.0, %v5023
  %v5025 = vpop.f32.mrb[0].mxu0
  %5026 = vmatprep.mubr.bf16.mxu0 0
  %5027 = vmatmul.mubr.bf16.gmra.mrb[0].mxu0 %v4859
  %v5028 = vpop.f32.mrb[0].mxu0
  %v5029 = vadd.f32 0.0, %v5028
  %v5030 = vpop.f32.mrb[0].mxu0
  %v5031 = vpop.f32.mrb[0].mxu0
  %v5032 = vadd.f32 0.0, %v5031
  %v5033 = vpop.f32.mrb[0].mxu0
  %5034 = vmatprep.mubr.bf16.mxu0 0
  %5035 = vmatmul.mubr.bf16.gmra.mrb[0].mxu0 %v4862
  %v5036 = vpop.f32.mrb[0].mxu0
  %v5037 = vadd.f32 0.0, %v5036
  %v5038 = vpop.f32.mrb[0].mxu0
  %v5039 = vpop.f32.mrb[0].mxu0
  %v5040 = vadd.f32 0.0, %v5039
  %v5041 = vpop.f32.mrb[0].mxu0
  %5042 = vmatprep.mubr.bf16.mxu0 0
  %5043 = vmatmul.mubr.bf16.gmra.mrb[0].mxu0 %v4865
  %v5044 = vpop.f32.mrb[0].mxu0
  %v5045 = vadd.f32 0.0, %v5044
  %v5046 = vpop.f32.mrb[0].mxu0
  %v5047 = vpop.f32.mrb[0].mxu0
  %v5048 = vadd.f32 0.0, %v5047
  %v5049 = vpop.f32.mrb[0].mxu0
  %5050 = vmatprep.mubr.bf16.mxu0 0
  %5051 = vmatmul.mubr.bf16.gmra.mrb[0].mxu0 %v4868
  %v5052 = vpop.f32.mrb[0].mxu0
  %v5053 = vadd.f32 0.0, %v5052
  %v5054 = vpop.f32.mrb[0].mxu0
  %v5055 = vpop.f32.mrb[0].mxu0
  %v5056 = vadd.f32 0.0, %v5055
  %v5057 = vpop.f32.mrb[0].mxu0
  %5058 = vmatprep.mubr.bf16.mxu0 0
  %5059 = vmatmul.mubr.bf16.gmra.mrb[0].mxu0 %v4871
  %v5060 = vpop.f32.mrb[0].mxu0
  %v5061 = vadd.f32 0.0, %v5060
  %v5062 = vpop.f32.mrb[0].mxu0
  %v5063 = vpop.f32.mrb[0].mxu0
  %v5064 = vadd.f32 0.0, %v5063
  %v5065 = vpop.f32.mrb[0].mxu0
  %5066 = vmatprep.mubr.bf16.mxu0 0
  %5067 = vmatmul.mubr.bf16.gmra.mrb[0].mxu0 %v4874
  %v5068 = vpop.f32.mrb[0].mxu0
  %v5069 = vadd.f32 0.0, %v5068
  %v5070 = vpop.f32.mrb[0].mxu0
  %v5071 = vpop.f32.mrb[0].mxu0
  %v5072 = vadd.f32 0.0, %v5071
  %v5073 = vpop.f32.mrb[0].mxu0
  %5074 = vmatprep.mubr.bf16.mxu0 0
  %5075 = vmatmul.mubr.bf16.gmra.mrb[0].mxu0 %v4877
  %v5076 = vpop.f32.mrb[0].mxu0
  %v5077 = vadd.f32 0.0, %v5076
  %v5078 = vpop.f32.mrb[0].mxu0
  %v5079 = vpop.f32.mrb[0].mxu0
  %v5080 = vadd.f32 0.0, %v5079
  %v5081 = vpop.f32.mrb[0].mxu0
  %5082 = vmatprep.mubr.bf16.mxu0 0
  %5083 = vmatmul.mubr.bf16.gmra.mrb[0].mxu0 %v4880
  %v5084 = vpop.f32.mrb[0].mxu0
  %v5085 = vadd.f32 0.0, %v5084
  %v5086 = vpop.f32.mrb[0].mxu0
  %v5087 = vpop.f32.mrb[0].mxu0
  %v5088 = vadd.f32 0.0, %v5087
  %v5089 = vpop.f32.mrb[0].mxu0
  %5090 = vmatprep.mubr.bf16.mxu0 0
  %5091 = vmatmul.mubr.bf16.gmra.mrb[0].mxu0 %v4883
  %v5092 = vpop.f32.mrb[0].mxu0
  %v5093 = vadd.f32 0.0, %v5092
  %v5094 = vpop.f32.mrb[0].mxu0
  %v5095 = vpop.f32.mrb[0].mxu0
  %v5096 = vadd.f32 0.0, %v5095
  %v5097 = vpop.f32.mrb[0].mxu0
  %5098 = vmatprep.mubr.bf16.mxu0 0
  %5099 = vmatmul.mubr.bf16.gmra.mrb[0].mxu0 %v4886
  %v5100 = vpop.f32.mrb[0].mxu0
  %v5101 = vadd.f32 0.0, %v5100
  %v5102 = vpop.f32.mrb[0].mxu0
  %v5103 = vpop.f32.mrb[0].mxu0
  %v5104 = vadd.f32 0.0, %v5103
  %v5105 = vpop.f32.mrb[0].mxu0
  %5106 = vmatprep.mubr.bf16.mxu0 0
  %5107 = vmatmul.mubr.bf16.gmra.mrb[0].mxu0 %v4889
  %v5108 = vpop.f32.mrb[0].mxu0
  %v5109 = vadd.f32 0.0, %v5108
  %v5110 = vpop.f32.mrb[0].mxu0
  %v5111 = vpop.f32.mrb[0].mxu0
  %v5112 = vadd.f32 0.0, %v5111
  %v5113 = vpop.f32.mrb[0].mxu0
  %5114 = vmatprep.mubr.bf16.mxu0 0
  %5115 = vmatmul.mubr.bf16.gmra.mrb[0].mxu0 %v4892
  %v5116 = vpop.f32.mrb[0].mxu0
  %v5117 = vadd.f32 0.0, %v5116
  %v5118 = vpop.f32.mrb[0].mxu0
  %v5119 = vpop.f32.mrb[0].mxu0
  %v5120 = vadd.f32 0.0, %v5119
  %v5121 = vpop.f32.mrb[0].mxu0
  %5122 = vmatprep.mubr.bf16.mxu0 0
  %5123 = vmatmul.mubr.bf16.gmra.mrb[0].mxu0 %v4895
  %v5124 = vpop.f32.mrb[0].mxu0
  %v5125 = vadd.f32 0.0, %v5124
  %v5126 = vpop.f32.mrb[0].mxu0
  %v5127 = vpop.f32.mrb[0].mxu0
  %v5128 = vadd.f32 0.0, %v5127
  %v5129 = vpop.f32.mrb[0].mxu0
  %5130 = vmatprep.mubr.bf16.mxu0 0
  %5131 = vmatmul.mubr.bf16.gmra.mrb[0].mxu0 %v4898
  %v5132 = vpop.f32.mrb[0].mxu0
  %v5133 = vadd.f32 0.0, %v5132
  %v5134 = vpop.f32.mrb[0].mxu0
  %v5135 = vpop.f32.mrb[0].mxu0
  %v5136 = vadd.f32 0.0, %v5135
  %v5137 = vpop.f32.mrb[0].mxu0
  %5138 = vmatprep.mubr.bf16.mxu0 0
  %5139 = vmatmul.mubr.bf16.gmra.mrb[0].mxu0 %v4901
  %v5140 = vpop.f32.mrb[0].mxu0
  %v5141 = vadd.f32 0.0, %v5140
  %v5142 = vpop.f32.mrb[0].mxu0
  %v5143 = vpop.f32.mrb[0].mxu0
  %v5144 = vadd.f32 0.0, %v5143
  %v5145 = vpop.f32.mrb[0].mxu0
  %5146 = vmatprep.mubr.bf16.mxu0 0
  %5147 = vmatmul.mubr.bf16.gmra.mrb[0].mxu0 %v4904
  %v5148 = vpop.f32.mrb[0].mxu0
  %v5149 = vadd.f32 0.0, %v5148
  %v5150 = vpop.f32.mrb[0].mxu0
  %v5151 = vpop.f32.mrb[0].mxu0
  %v5152 = vadd.f32 0.0, %v5151
  %v5153 = vpop.f32.mrb[0].mxu0
  %5154 = vmatprep.mubr.bf16.mxu0 0
  %5155 = vmatmul.mubr.bf16.gmra.mrb[0].mxu0 %v4907
  %v5156 = vpop.f32.mrb[0].mxu0
  %v5157 = vadd.f32 0.0, %v5156
  %v5158 = vpop.f32.mrb[0].mxu0
  %v5159 = vpop.f32.mrb[0].mxu0
  %v5160 = vadd.f32 0.0, %v5159
  %v5161 = vpop.f32.mrb[0].mxu0
  %5162 = vmatprep.mubr.bf16.mxu0 0
  %5163 = vmatmul.mubr.bf16.gmra.mrb[0].mxu0 %v4910
  %v5164 = vpop.f32.mrb[0].mxu0
  %v5165 = vadd.f32 0.0, %v5164
  %v5166 = vpop.f32.mrb[0].mxu0
  %v5167 = vpop.f32.mrb[0].mxu0
  %v5168 = vadd.f32 0.0, %v5167
  %v5169 = vpop.f32.mrb[0].mxu0
  %5170 = vmatprep.mubr.bf16.mxu0 0
  %5171 = vmatmul.mubr.bf16.gmra.mrb[0].mxu0 %v4913
  %v5172 = vpop.f32.mrb[0].mxu0
  %v5173 = vadd.f32 0.0, %v5172
  %v5174 = vpop.f32.mrb[0].mxu0
  %v5175 = vpop.f32.mrb[0].mxu0
  %v5176 = vadd.f32 0.0, %v5175
  %v5177 = vpop.f32.mrb[0].mxu0
  %5178 = vmatprep.mubr.bf16.mxu0 0
  %5179 = vmatmul.mubr.bf16.gmra.mrb[0].mxu0 %v4916
  %v5180 = vpop.f32.mrb[0].mxu0
  %v5181 = vadd.f32 0.0, %v5180
  %v5182 = vpop.f32.mrb[0].mxu0
  %v5183 = vpop.f32.mrb[0].mxu0
  %v5184 = vadd.f32 0.0, %v5183
  %v5185 = vpop.f32.mrb[0].mxu0
  %5186 = vmatprep.mubr.bf16.mxu0 0
  %5187 = vmatmul.mubr.bf16.gmra.mrb[0].mxu0 %v4919
  %v5188 = vpop.f32.mrb[0].mxu0
  %v5189 = vadd.f32 0.0, %v5188
  %v5190 = vpop.f32.mrb[0].mxu0
  %v5191 = vpop.f32.mrb[0].mxu0
  %v5192 = vadd.f32 0.0, %v5191
  %v5193 = vpop.f32.mrb[0].mxu0
  %5194 = vmatprep.mubr.bf16.mxu0 0
  %5195 = vmatmul.mubr.bf16.gmra.mrb[0].mxu0 %v4922
  %v5196 = vpop.f32.mrb[0].mxu0
  %v5197 = vadd.f32 0.0, %v5196
  %v5198 = vpop.f32.mrb[0].mxu0
  %v5199 = vpop.f32.mrb[0].mxu0
  %v5200 = vadd.f32 0.0, %v5199
  %v5201 = vpop.f32.mrb[0].mxu0
  %5202 = vmatprep.mubr.bf16.mxu0 0
  %5203 = vmatmul.mubr.bf16.gmra.mrb[0].mxu0 %v4925
  %v5204 = vpop.f32.mrb[0].mxu0
  %v5205 = vadd.f32 0.0, %v5204
  %v5206 = vpop.f32.mrb[0].mxu0
  %v5207 = vpop.f32.mrb[0].mxu0
  %v5208 = vadd.f32 0.0, %v5207
  %v5209 = vpop.f32.mrb[0].mxu0
  %5210 = vmatprep.mubr.bf16.mxu0 0
  %5211 = vmatmul.mubr.bf16.gmra.mrb[0].mxu0 %v4928
  %v5212 = vpop.f32.mrb[0].mxu0
  %v5213 = vadd.f32 0.0, %v5212
  %v5214 = vpop.f32.mrb[0].mxu0
  %v5215 = vpop.f32.mrb[0].mxu0
  %v5216 = vadd.f32 0.0, %v5215
  %v5217 = vpop.f32.mrb[0].mxu0
  %5218 = vmatprep.mubr.bf16.mxu0 0
  %5219 = vmatmul.mubr.bf16.gmra.mrb[0].mxu0 %v4931
  %v5220 = vpop.f32.mrb[0].mxu0
  %v5221 = vadd.f32 0.0, %v5220
  %v5222 = vpop.f32.mrb[0].mxu0
  %v5223 = vpop.f32.mrb[0].mxu0
  %v5224 = vadd.f32 0.0, %v5223
  %v5225 = vpop.f32.mrb[0].mxu0
  %5226 = vmatprep.mubr.bf16.mxu0 0
  %5227 = vmatmul.mubr.bf16.gmra.mrb[0].mxu0 %v4934
  %v5228 = vpop.f32.mrb[0].mxu0
  %v5229 = vadd.f32 0.0, %v5228
  %v5230 = vpop.f32.mrb[0].mxu0
  %v5231 = vpop.f32.mrb[0].mxu0
  %v5232 = vadd.f32 0.0, %v5231
  %v5233 = vpop.f32.mrb[0].mxu0
  %5234 = vmatprep.mubr.bf16.mxu0 0
  %5235 = vmatmul.mubr.bf16.gmra.mrb[0].mxu0 %v4937
  %v5236 = vpop.f32.mrb[0].mxu0
  %v5237 = vadd.f32 0.0, %v5236
  %v5238 = vpop.f32.mrb[0].mxu0
  %v5239 = vpop.f32.mrb[0].mxu0
  %v5240 = vadd.f32 0.0, %v5239
  %v5241 = vpop.f32.mrb[0].mxu0
  %5242 = vmatprep.mubr.bf16.mxu0 0
  %5243 = vmatmul.mubr.bf16.gmra.mrb[0].mxu0 %v4940
  %v5244 = vpop.f32.mrb[0].mxu0
  %v5245 = vadd.f32 0.0, %v5244
  %v5246 = vpop.f32.mrb[0].mxu0
  %v5247 = vpop.f32.mrb[0].mxu0
  %v5248 = vadd.f32 0.0, %v5247
  %v5249 = vpop.f32.mrb[0].mxu0
  %5250 = vmatprep.mubr.bf16.mxu0 0
  %5251 = vmatmul.mubr.bf16.gmra.mrb[0].mxu0 %v4943
  %v5252 = vpop.f32.mrb[0].mxu0
  %v5253 = vadd.f32 0.0, %v5252
  %v5254 = vpop.f32.mrb[0].mxu0
  %v5255 = vpop.f32.mrb[0].mxu0
  %v5256 = vadd.f32 0.0, %v5255
  %v5257 = vpop.f32.mrb[0].mxu0
  %5258 = vmatprep.mubr.bf16.mxu0 0
  %5259 = vmatmul.mubr.bf16.gmra.mrb[0].mxu0 %v4946
  %v5260 = vpop.f32.mrb[0].mxu0
  %v5261 = vadd.f32 0.0, %v5260
  %v5262 = vpop.f32.mrb[0].mxu0
  %v5263 = vpop.f32.mrb[0].mxu0
  %v5264 = vadd.f32 0.0, %v5263
  %v5265 = vpop.f32.mrb[0].mxu0
  %5266 = vmatprep.mubr.bf16.mxu0 0
  %5267 = vmatmul.mubr.bf16.gmra.mrb[0].mxu0 %v4949
  %v5268 = vpop.f32.mrb[0].mxu0
  %v5269 = vadd.f32 0.0, %v5268
  %v5270 = vpop.f32.mrb[0].mxu0
  %v5271 = vpop.f32.mrb[0].mxu0
  %v5272 = vadd.f32 0.0, %v5271
  %v5273 = vpop.f32.mrb[0].mxu0
  %5274 = vmatprep.mubr.bf16.mxu0 0
  %5275 = vmatmul.mubr.bf16.gmra.mrb[0].mxu0 %v4952
  %v5276 = vpop.f32.mrb[0].mxu0
  %v5277 = vadd.f32 0.0, %v5276
  %v5278 = vpop.f32.mrb[0].mxu0
  %v5279 = vpop.f32.mrb[0].mxu0
  %v5280 = vadd.f32 0.0, %v5279
  %v5281 = vpop.f32.mrb[0].mxu0
  %5282 = vmatprep.mubr.bf16.mxu0 0
  %5283 = vmatmul.mubr.bf16.gmra.mrb[0].mxu0 %v4955
  %v5284 = vpop.f32.mrb[0].mxu0
  %v5285 = vadd.f32 0.0, %v5284
  %v5286 = vpop.f32.mrb[0].mxu0
  %v5287 = vpop.f32.mrb[0].mxu0
  %v5288 = vadd.f32 0.0, %v5287
  %v5289 = vpop.f32.mrb[0].mxu0
  %5290 = vmatprep.mubr.bf16.mxu0 0
  %5291 = vmatmul.mubr.bf16.gmra.mrb[0].mxu0 %v4958
  %v5292 = vpop.f32.mrb[0].mxu0
  %v5293 = vadd.f32 0.0, %v5292
  %v5294 = vpop.f32.mrb[0].mxu0
  %v5295 = vpop.f32.mrb[0].mxu0
  %v5296 = vadd.f32 0.0, %v5295
  %v5297 = vpop.f32.mrb[0].mxu0
  %5298 = vmatprep.mubr.bf16.mxu0 0
  %5299 = vmatmul.mubr.bf16.gmra.mrb[0].mxu0 %v4961
  %v5300 = vpop.f32.mrb[0].mxu0
  %v5301 = vadd.f32 0.0, %v5300
  %v5302 = vpop.f32.mrb[0].mxu0
  %v5303 = vpop.f32.mrb[0].mxu0
  %v5304 = vadd.f32 0.0, %v5303
  %v5305 = vpop.f32.mrb[0].mxu0
  %5306 = vmatprep.mubr.bf16.mxu0 0
  %5307 = vmatmul.mubr.bf16.gmra.mrb[0].mxu0 %v4964
  %v5308 = vpop.f32.mrb[0].mxu0
  %v5309 = vadd.f32 0.0, %v5308
  %v5310 = vpop.f32.mrb[0].mxu0
  %v5311 = vpop.f32.mrb[0].mxu0
  %v5312 = vadd.f32 0.0, %v5311
  %v5313 = vpop.f32.mrb[0].mxu0
  %5314 = vmatprep.mubr.bf16.mxu0 0
  %5315 = vmatmul.mubr.bf16.gmra.mrb[0].mxu0 %v4967
  %v5316 = vpop.f32.mrb[0].mxu0
  %v5317 = vadd.f32 0.0, %v5316
  %v5318 = vpop.f32.mrb[0].mxu0
  %v5319 = vpop.f32.mrb[0].mxu0
  %v5320 = vadd.f32 0.0, %v5319
  %v5321 = vpop.f32.mrb[0].mxu0
  %5322 = vmatprep.mubr.bf16.mxu0 0
  %5323 = vmatmul.mubr.bf16.gmra.mrb[0].mxu0 %v4970
  %v5324 = vpop.f32.mrb[0].mxu0
  %v5325 = vadd.f32 0.0, %v5324
  %v5326 = vpop.f32.mrb[0].mxu0
  %v5327 = vpop.f32.mrb[0].mxu0
  %v5328 = vadd.f32 0.0, %v5327
  %v5329 = vpop.f32.mrb[0].mxu0
  %5330 = vmatprep.mubr.bf16.mxu0 0
  %5331 = vmatmul.mubr.bf16.gmra.mrb[0].mxu0 %v4973
  %v5332 = vpop.f32.mrb[0].mxu0
  %v5333 = vadd.f32 0.0, %v5332
  %v5334 = vpop.f32.mrb[0].mxu0
  %v5335 = vpop.f32.mrb[0].mxu0
  %v5336 = vpop.f32.mrb[0].mxu0
  %5337 = vdwg.mxu0
  %v5338 = vadd.f32 %v4590, %v5013
  %v5339 = vadd.f32 %v4591, %v5016
  %v5340 = vadd.f32 %v4592, %v5021
  %v5341 = vadd.f32 %v4593, %v5024
  %v5342 = vadd.f32 %v4594, %v5029
  %v5343 = vadd.f32 %v4595, %v5032
  %v5344 = vadd.f32 %v4596, %v5037
  %v5345 = vadd.f32 %v4597, %v5040
  %v5346 = vadd.f32 %v4598, %v5045
  %v5347 = vadd.f32 %v4599, %v5048
  %v5348 = vadd.f32 %v4600, %v5053
  %v5349 = vadd.f32 %v4601, %v5056
  %v5350 = vadd.f32 %v4602, %v5061
  %v5351 = vadd.f32 %v4603, %v5064
  %v5352 = vadd.f32 %v4604, %v5069
  %v5353 = vadd.f32 %v4605, %v5072
  %v5354 = vadd.f32 %v4606, %v5077
  %v5355 = vadd.f32 %v4607, %v5080
  %v5356 = vadd.f32 %v4608, %v5085
  %v5357 = vadd.f32 %v4609, %v5088
  %v5358 = vadd.f32 %v4610, %v5093
  %v5359 = vadd.f32 %v4611, %v5096
  %v5360 = vadd.f32 %v4612, %v5101
  %v5361 = vadd.f32 %v4613, %v5104
  %v5362 = vadd.f32 %v4614, %v5109
  %v5363 = vadd.f32 %v4615, %v5112
  %v5364 = vadd.f32 %v4616, %v5117
  %v5365 = vadd.f32 %v4617, %v5120
  %v5366 = vadd.f32 %v4618, %v5125
  %v5367 = vadd.f32 %v4619, %v5128
  %v5368 = vadd.f32 %v4620, %v5133
  %v5369 = vadd.f32 %v4621, %v5136
  %v5370 = vadd.f32 %v4622, %v5141
  %v5371 = vadd.f32 %v4623, %v5144
  %v5372 = vadd.f32 %v4624, %v5149
  %v5373 = vadd.f32 %v4625, %v5152
  %v5374 = vadd.f32 %v4626, %v5157
  %v5375 = vadd.f32 %v4627, %v5160
  %v5376 = vadd.f32 %v4628, %v5165
  %v5377 = vadd.f32 %v4629, %v5168
  %v5378 = vadd.f32 %v4630, %v5173
  %v5379 = vadd.f32 %v4631, %v5176
  %v5380 = vadd.f32 %v4632, %v5181
  %v5381 = vadd.f32 %v4633, %v5184
  %v5382 = vadd.f32 %v4634, %v5189
  %v5383 = vadd.f32 %v4635, %v5192
  %v5384 = vadd.f32 %v4636, %v5197
  %v5385 = vadd.f32 %v4637, %v5200
  %v5386 = vadd.f32 %v4638, %v5205
  %v5387 = vadd.f32 %v4639, %v5208
  %v5388 = vadd.f32 %v4640, %v5213
  %v5389 = vadd.f32 %v4641, %v5216
  %v5390 = vadd.f32 %v4642, %v5221
  %v5391 = vadd.f32 %v4643, %v5224
  %v5392 = vadd.f32 %v4644, %v5229
  %v5393 = vadd.f32 %v4645, %v5232
  %v5394 = vadd.f32 %v4646, %v5237
  %v5395 = vadd.f32 %v4647, %v5240
  %v5396 = vadd.f32 %v4648, %v5245
  %v5397 = vadd.f32 %v4649, %v5248
  %v5398 = vadd.f32 %v4650, %v5253
  %v5399 = vadd.f32 %v4651, %v5256
  %v5400 = vadd.f32 %v4652, %v5261
  %v5401 = vadd.f32 %v4653, %v5264
  %v5402 = vadd.f32 %v4654, %v5269
  %v5403 = vadd.f32 %v4655, %v5272
  %v5404 = vadd.f32 %v4656, %v5277
  %v5405 = vadd.f32 %v4657, %v5280
  %v5406 = vadd.f32 %v4658, %v5285
  %v5407 = vadd.f32 %v4659, %v5288
  %v5408 = vadd.f32 %v4660, %v5293
  %v5409 = vadd.f32 %v4661, %v5296
  %v5410 = vadd.f32 %v4662, %v5301
  %v5411 = vadd.f32 %v4663, %v5304
  %v5412 = vadd.f32 %v4664, %v5309
  %v5413 = vadd.f32 %v4665, %v5312
  %v5414 = vadd.f32 %v4666, %v5317
  %v5415 = vadd.f32 %v4667, %v5320
  %v5416 = vadd.f32 %v4668, %v5325
  %v5417 = vadd.f32 %v4669, %v5328
  %v5418 = vadd.f32 %v4670, %v5333
  %v5419 = vld [vmem:[%s1 + $0xc] sm:$0x3]
  %vm5420 = vcmask 1044480
  %v5421 = vrot.slane %v328, 3
  %v5422 = vrot.slane %v329, 3
  %v5423 = vsel %vm5420, %v5421, %v5422
  %v5424 = vrot.slane %v330, 3
  %v5425 = vsel %vm5420, %v5422, %v5424
  %v5426 = vrot.slane %v331, 3
  %v5427 = vsel %vm5420, %v5424, %v5426
  %v5428 = vrot.slane %v332, 3
  %v5429 = vsel %vm5420, %v5426, %v5428
  %v5430 = vrot.slane %v333, 3
  %v5431 = vsel %vm5420, %v5428, %v5430
  %v5432 = vrot.slane %v334, 3
  %v5433 = vsel %vm5420, %v5430, %v5432
  %v5434 = vrot.slane %v335, 3
  %v5435 = vsel %vm5420, %v5432, %v5434
  %v5436 = vrot.slane %v336, 3
  %v5437 = vsel %vm5420, %v5434, %v5436
  %v5438 = vrot.slane %v337, 3
  %v5439 = vsel %vm5420, %v5436, %v5438
  %v5440 = vrot.slane %v338, 3
  %v5441 = vsel %vm5420, %v5438, %v5440
  %v5442 = vrot.slane %v339, 3
  %v5443 = vsel %vm5420, %v5440, %v5442
  %v5444 = vrot.slane %v340, 3
  %v5445 = vsel %vm5420, %v5442, %v5444
  %v5446 = vrot.slane %v341, 3
  %v5447 = vsel %vm5420, %v5444, %v5446
  %v5448 = vrot.slane %v342, 3
  %v5449 = vsel %vm5420, %v5446, %v5448
  %v5450 = vrot.slane %v343, 3
  %v5451 = vsel %vm5420, %v5448, %v5450
  %v5452 = vrot.slane %v344, 3
  %v5453 = vsel %vm5420, %v5450, %v5452
  %v5454 = vrot.slane %v345, 3
  %v5455 = vsel %vm5420, %v5452, %v5454
  %v5456 = vrot.slane %v346, 3
  %v5457 = vsel %vm5420, %v5454, %v5456
  %v5458 = vrot.slane %v347, 3
  %v5459 = vsel %vm5420, %v5456, %v5458
  %v5460 = vrot.slane %v348, 3
  %v5461 = vsel %vm5420, %v5458, %v5460
  %v5462 = vrot.slane %v349, 3
  %v5463 = vsel %vm5420, %v5460, %v5462
  %v5464 = vrot.slane %v350, 3
  %v5465 = vsel %vm5420, %v5462, %v5464
  %v5466 = vrot.slane %v351, 3
  %v5467 = vsel %vm5420, %v5464, %v5466
  %v5468 = vrot.slane %v352, 3
  %v5469 = vsel %vm5420, %v5466, %v5468
  %v5470 = vrot.slane %v353, 3
  %v5471 = vsel %vm5420, %v5468, %v5470
  %v5472 = vrot.slane %v354, 3
  %v5473 = vsel %vm5420, %v5470, %v5472
  %v5474 = vrot.slane %v355, 3
  %v5475 = vsel %vm5420, %v5472, %v5474
  %v5476 = vrot.slane %v356, 3
  %v5477 = vsel %vm5420, %v5474, %v5476
  %v5478 = vrot.slane %v357, 3
  %v5479 = vsel %vm5420, %v5476, %v5478
  %v5480 = vrot.slane %v358, 3
  %v5481 = vsel %vm5420, %v5478, %v5480
  %v5482 = vrot.slane %v359, 3
  %v5483 = vsel %vm5420, %v5480, %v5482
  %v5484 = vrot.slane %v360, 3
  %v5485 = vsel %vm5420, %v5482, %v5484
  %v5486 = vrot.slane %v361, 3
  %v5487 = vsel %vm5420, %v5484, %v5486
  %v5488 = vrot.slane %v362, 3
  %v5489 = vsel %vm5420, %v5486, %v5488
  %v5490 = vrot.slane %v363, 3
  %v5491 = vsel %vm5420, %v5488, %v5490
  %v5492 = vrot.slane %v364, 3
  %v5493 = vsel %vm5420, %v5490, %v5492
  %v5494 = vrot.slane %v365, 3
  %v5495 = vsel %vm5420, %v5492, %v5494
  %v5496 = vrot.slane %v366, 3
  %v5497 = vsel %vm5420, %v5494, %v5496
  %v5498 = vrot.slane %v367, 3
  %v5499 = vsel %vm5420, %v5496, %v5498
  %v5500 = vrot.slane %v368, 3
  %v5501 = vsel %vm5420, %v5498, %v5500
  %v5503 = vsel %vm710, %v5423, 0
  %v5506 = vsel %vm710, %v5425, 0
  %v5509 = vsel %vm710, %v5427, 0
  %v5512 = vsel %vm710, %v5429, 0
  %v5515 = vsel %vm710, %v5431, 0
  %v5518 = vsel %vm710, %v5433, 0
  %v5521 = vsel %vm710, %v5435, 0
  %v5524 = vsel %vm710, %v5437, 0
  %v5527 = vsel %vm710, %v5439, 0
  %v5530 = vsel %vm710, %v5441, 0
  %v5533 = vsel %vm710, %v5443, 0
  %v5536 = vsel %vm710, %v5445, 0
  %v5539 = vsel %vm710, %v5447, 0
  %v5542 = vsel %vm710, %v5449, 0
  %v5545 = vsel %vm710, %v5451, 0
  %v5548 = vsel %vm710, %v5453, 0
  %v5551 = vsel %vm710, %v5455, 0
  %v5554 = vsel %vm710, %v5457, 0
  %v5557 = vsel %vm710, %v5459, 0
  %v5560 = vsel %vm710, %v5461, 0
  %v5563 = vsel %vm710, %v5463, 0
  %v5566 = vsel %vm710, %v5465, 0
  %v5569 = vsel %vm710, %v5467, 0
  %v5572 = vsel %vm710, %v5469, 0
  %v5575 = vsel %vm710, %v5471, 0
  %v5578 = vsel %vm710, %v5473, 0
  %v5581 = vsel %vm710, %v5475, 0
  %v5584 = vsel %vm710, %v5477, 0
  %v5587 = vsel %vm710, %v5479, 0
  %v5590 = vsel %vm710, %v5481, 0
  %v5593 = vsel %vm710, %v5483, 0
  %v5596 = vsel %vm710, %v5485, 0
  %v5599 = vsel %vm710, %v5487, 0
  %v5602 = vsel %vm710, %v5489, 0
  %v5605 = vsel %vm710, %v5491, 0
  %v5608 = vsel %vm710, %v5493, 0
  %v5611 = vsel %vm710, %v5495, 0
  %v5614 = vsel %vm710, %v5497, 0
  %v5617 = vsel %vm710, %v5499, 0
  %v5620 = vsel %vm710, %v5501, 0
  %v5623 = vsel %vm710, %v5500, 0
  %v5626 = vand.u32 %v5419, %v837
  %5628 = vmatprep.subr.bf16.mxu0 0
  %5629 = vmatpush1.bf16.msra.mxu0 %v5626
  %5630 = vmatprep.subr.bf16.mxu0 0
  %5631 = vmatpush1.bf16.msra.mxu0 0
  %5632 = vmatprep.subr.bf16.mxu0 0
  %5633 = vmatpush1.bf16.msra.mxu0 0
  %5634 = vmatprep.subr.bf16.mxu0 0
  %5635 = vmatpush1.bf16.msra.mxu0 0
  %5636 = vmatprep.subr.bf16.mxu0 0
  %5637 = vmatpush1.bf16.msra.mxu0 0
  %5638 = vmatprep.subr.bf16.mxu0 0
  %5639 = vmatpush1.bf16.msra.mxu0 0
  %5640 = vmatprep.subr.bf16.mxu0 0
  %5641 = vmatpush1.bf16.msra.mxu0 0
  %5642 = vmatprep.subr.bf16.mxu0 0
  %5643 = vmatpush1.bf16.msra.mxu0 0
  %5644 = vmatprep.subr.bf16.mxu0 0
  %5645 = vmatpush1.bf16.msra.mxu0 0
  %5646 = vmatprep.subr.bf16.mxu0 0
  %5647 = vmatpush1.bf16.msra.mxu0 0
  %5648 = vmatprep.subr.bf16.mxu0 0
  %5649 = vmatpush1.bf16.msra.mxu0 0
  %5650 = vmatprep.subr.bf16.mxu0 0
  %5651 = vmatpush1.bf16.msra.mxu0 0
  %5652 = vmatprep.subr.bf16.mxu0 0
  %5653 = vmatpush1.bf16.msra.mxu0 0
  %5654 = vmatprep.subr.bf16.mxu0 0
  %5655 = vmatpush1.bf16.msra.mxu0 0
  %5656 = vmatprep.subr.bf16.mxu0 0
  %5657 = vmatpush1.bf16.msra.mxu0 0
  %5658 = vmatprep.subr.bf16.mxu0 0
  %5659 = vmatpush1.bf16.msra.mxu0 0
  %5660 = vmatprep.mubr.bf16.mxu0 0
  %5661 = vmatmul.mubr.bf16.gmra.mrb[0].mxu0 %v5503
  %v5662 = vpop.f32.mrb[0].mxu0
  %v5663 = vadd.f32 0.0, %v5662
  %v5664 = vpop.f32.mrb[0].mxu0
  %v5665 = vpop.f32.mrb[0].mxu0
  %v5666 = vadd.f32 0.0, %v5665
  %v5667 = vpop.f32.mrb[0].mxu0
  %5668 = vmatprep.mubr.bf16.mxu0 0
  %5669 = vmatmul.mubr.bf16.gmra.mrb[0].mxu0 %v5506
  %v5670 = vpop.f32.mrb[0].mxu0
  %v5671 = vadd.f32 0.0, %v5670
  %v5672 = vpop.f32.mrb[0].mxu0
  %v5673 = vpop.f32.mrb[0].mxu0
  %v5674 = vadd.f32 0.0, %v5673
  %v5675 = vpop.f32.mrb[0].mxu0
  %5676 = vmatprep.mubr.bf16.mxu0 0
  %5677 = vmatmul.mubr.bf16.gmra.mrb[0].mxu0 %v5509
  %v5678 = vpop.f32.mrb[0].mxu0
  %v5679 = vadd.f32 0.0, %v5678
  %v5680 = vpop.f32.mrb[0].mxu0
  %v5681 = vpop.f32.mrb[0].mxu0
  %v5682 = vadd.f32 0.0, %v5681
  %v5683 = vpop.f32.mrb[0].mxu0
  %5684 = vmatprep.mubr.bf16.mxu0 0
  %5685 = vmatmul.mubr.bf16.gmra.mrb[0].mxu0 %v5512
  %v5686 = vpop.f32.mrb[0].mxu0
  %v5687 = vadd.f32 0.0, %v5686
  %v5688 = vpop.f32.mrb[0].mxu0
  %v5689 = vpop.f32.mrb[0].mxu0
  %v5690 = vadd.f32 0.0, %v5689
  %v5691 = vpop.f32.mrb[0].mxu0
  %5692 = vmatprep.mubr.bf16.mxu0 0
  %5693 = vmatmul.mubr.bf16.gmra.mrb[0].mxu0 %v5515
  %v5694 = vpop.f32.mrb[0].mxu0
  %v5695 = vadd.f32 0.0, %v5694
  %v5696 = vpop.f32.mrb[0].mxu0
  %v5697 = vpop.f32.mrb[0].mxu0
  %v5698 = vadd.f32 0.0, %v5697
  %v5699 = vpop.f32.mrb[0].mxu0
  %5700 = vmatprep.mubr.bf16.mxu0 0
  %5701 = vmatmul.mubr.bf16.gmra.mrb[0].mxu0 %v5518
  %v5702 = vpop.f32.mrb[0].mxu0
  %v5703 = vadd.f32 0.0, %v5702
  %v5704 = vpop.f32.mrb[0].mxu0
  %v5705 = vpop.f32.mrb[0].mxu0
  %v5706 = vadd.f32 0.0, %v5705
  %v5707 = vpop.f32.mrb[0].mxu0
  %5708 = vmatprep.mubr.bf16.mxu0 0
  %5709 = vmatmul.mubr.bf16.gmra.mrb[0].mxu0 %v5521
  %v5710 = vpop.f32.mrb[0].mxu0
  %v5711 = vadd.f32 0.0, %v5710
  %v5712 = vpop.f32.mrb[0].mxu0
  %v5713 = vpop.f32.mrb[0].mxu0
  %v5714 = vadd.f32 0.0, %v5713
  %v5715 = vpop.f32.mrb[0].mxu0
  %5716 = vmatprep.mubr.bf16.mxu0 0
  %5717 = vmatmul.mubr.bf16.gmra.mrb[0].mxu0 %v5524
  %v5718 = vpop.f32.mrb[0].mxu0
  %v5719 = vadd.f32 0.0, %v5718
  %v5720 = vpop.f32.mrb[0].mxu0
  %v5721 = vpop.f32.mrb[0].mxu0
  %v5722 = vadd.f32 0.0, %v5721
  %v5723 = vpop.f32.mrb[0].mxu0
  %5724 = vmatprep.mubr.bf16.mxu0 0
  %5725 = vmatmul.mubr.bf16.gmra.mrb[0].mxu0 %v5527
  %v5726 = vpop.f32.mrb[0].mxu0
  %v5727 = vadd.f32 0.0, %v5726
  %v5728 = vpop.f32.mrb[0].mxu0
  %v5729 = vpop.f32.mrb[0].mxu0
  %v5730 = vadd.f32 0.0, %v5729
  %v5731 = vpop.f32.mrb[0].mxu0
  %5732 = vmatprep.mubr.bf16.mxu0 0
  %5733 = vmatmul.mubr.bf16.gmra.mrb[0].mxu0 %v5530
  %v5734 = vpop.f32.mrb[0].mxu0
  %v5735 = vadd.f32 0.0, %v5734
  %v5736 = vpop.f32.mrb[0].mxu0
  %v5737 = vpop.f32.mrb[0].mxu0
  %v5738 = vadd.f32 0.0, %v5737
  %v5739 = vpop.f32.mrb[0].mxu0
  %5740 = vmatprep.mubr.bf16.mxu0 0
  %5741 = vmatmul.mubr.bf16.gmra.mrb[0].mxu0 %v5533
  %v5742 = vpop.f32.mrb[0].mxu0
  %v5743 = vadd.f32 0.0, %v5742
  %v5744 = vpop.f32.mrb[0].mxu0
  %v5745 = vpop.f32.mrb[0].mxu0
  %v5746 = vadd.f32 0.0, %v5745
  %v5747 = vpop.f32.mrb[0].mxu0
  %5748 = vmatprep.mubr.bf16.mxu0 0
  %5749 = vmatmul.mubr.bf16.gmra.mrb[0].mxu0 %v5536
  %v5750 = vpop.f32.mrb[0].mxu0
  %v5751 = vadd.f32 0.0, %v5750
  %v5752 = vpop.f32.mrb[0].mxu0
  %v5753 = vpop.f32.mrb[0].mxu0
  %v5754 = vadd.f32 0.0, %v5753
  %v5755 = vpop.f32.mrb[0].mxu0
  %5756 = vmatprep.mubr.bf16.mxu0 0
  %5757 = vmatmul.mubr.bf16.gmra.mrb[0].mxu0 %v5539
  %v5758 = vpop.f32.mrb[0].mxu0
  %v5759 = vadd.f32 0.0, %v5758
  %v5760 = vpop.f32.mrb[0].mxu0
  %v5761 = vpop.f32.mrb[0].mxu0
  %v5762 = vadd.f32 0.0, %v5761
  %v5763 = vpop.f32.mrb[0].mxu0
  %5764 = vmatprep.mubr.bf16.mxu0 0
  %5765 = vmatmul.mubr.bf16.gmra.mrb[0].mxu0 %v5542
  %v5766 = vpop.f32.mrb[0].mxu0
  %v5767 = vadd.f32 0.0, %v5766
  %v5768 = vpop.f32.mrb[0].mxu0
  %v5769 = vpop.f32.mrb[0].mxu0
  %v5770 = vadd.f32 0.0, %v5769
  %v5771 = vpop.f32.mrb[0].mxu0
  %5772 = vmatprep.mubr.bf16.mxu0 0
  %5773 = vmatmul.mubr.bf16.gmra.mrb[0].mxu0 %v5545
  %v5774 = vpop.f32.mrb[0].mxu0
  %v5775 = vadd.f32 0.0, %v5774
  %v5776 = vpop.f32.mrb[0].mxu0
  %v5777 = vpop.f32.mrb[0].mxu0
  %v5778 = vadd.f32 0.0, %v5777
  %v5779 = vpop.f32.mrb[0].mxu0
  %5780 = vmatprep.mubr.bf16.mxu0 0
  %5781 = vmatmul.mubr.bf16.gmra.mrb[0].mxu0 %v5548
  %v5782 = vpop.f32.mrb[0].mxu0
  %v5783 = vadd.f32 0.0, %v5782
  %v5784 = vpop.f32.mrb[0].mxu0
  %v5785 = vpop.f32.mrb[0].mxu0
  %v5786 = vadd.f32 0.0, %v5785
  %v5787 = vpop.f32.mrb[0].mxu0
  %5788 = vmatprep.mubr.bf16.mxu0 0
  %5789 = vmatmul.mubr.bf16.gmra.mrb[0].mxu0 %v5551
  %v5790 = vpop.f32.mrb[0].mxu0
  %v5791 = vadd.f32 0.0, %v5790
  %v5792 = vpop.f32.mrb[0].mxu0
  %v5793 = vpop.f32.mrb[0].mxu0
  %v5794 = vadd.f32 0.0, %v5793
  %v5795 = vpop.f32.mrb[0].mxu0
  %5796 = vmatprep.mubr.bf16.mxu0 0
  %5797 = vmatmul.mubr.bf16.gmra.mrb[0].mxu0 %v5554
  %v5798 = vpop.f32.mrb[0].mxu0
  %v5799 = vadd.f32 0.0, %v5798
  %v5800 = vpop.f32.mrb[0].mxu0
  %v5801 = vpop.f32.mrb[0].mxu0
  %v5802 = vadd.f32 0.0, %v5801
  %v5803 = vpop.f32.mrb[0].mxu0
  %5804 = vmatprep.mubr.bf16.mxu0 0
  %5805 = vmatmul.mubr.bf16.gmra.mrb[0].mxu0 %v5557
  %v5806 = vpop.f32.mrb[0].mxu0
  %v5807 = vadd.f32 0.0, %v5806
  %v5808 = vpop.f32.mrb[0].mxu0
  %v5809 = vpop.f32.mrb[0].mxu0
  %v5810 = vadd.f32 0.0, %v5809
  %v5811 = vpop.f32.mrb[0].mxu0
  %5812 = vmatprep.mubr.bf16.mxu0 0
  %5813 = vmatmul.mubr.bf16.gmra.mrb[0].mxu0 %v5560
  %v5814 = vpop.f32.mrb[0].mxu0
  %v5815 = vadd.f32 0.0, %v5814
  %v5816 = vpop.f32.mrb[0].mxu0
  %v5817 = vpop.f32.mrb[0].mxu0
  %v5818 = vadd.f32 0.0, %v5817
  %v5819 = vpop.f32.mrb[0].mxu0
  %5820 = vmatprep.mubr.bf16.mxu0 0
  %5821 = vmatmul.mubr.bf16.gmra.mrb[0].mxu0 %v5563
  %v5822 = vpop.f32.mrb[0].mxu0
  %v5823 = vadd.f32 0.0, %v5822
  %v5824 = vpop.f32.mrb[0].mxu0
  %v5825 = vpop.f32.mrb[0].mxu0
  %v5826 = vadd.f32 0.0, %v5825
  %v5827 = vpop.f32.mrb[0].mxu0
  %5828 = vmatprep.mubr.bf16.mxu0 0
  %5829 = vmatmul.mubr.bf16.gmra.mrb[0].mxu0 %v5566
  %v5830 = vpop.f32.mrb[0].mxu0
  %v5831 = vadd.f32 0.0, %v5830
  %v5832 = vpop.f32.mrb[0].mxu0
  %v5833 = vpop.f32.mrb[0].mxu0
  %v5834 = vadd.f32 0.0, %v5833
  %v5835 = vpop.f32.mrb[0].mxu0
  %5836 = vmatprep.mubr.bf16.mxu0 0
  %5837 = vmatmul.mubr.bf16.gmra.mrb[0].mxu0 %v5569
  %v5838 = vpop.f32.mrb[0].mxu0
  %v5839 = vadd.f32 0.0, %v5838
  %v5840 = vpop.f32.mrb[0].mxu0
  %v5841 = vpop.f32.mrb[0].mxu0
  %v5842 = vadd.f32 0.0, %v5841
  %v5843 = vpop.f32.mrb[0].mxu0
  %5844 = vmatprep.mubr.bf16.mxu0 0
  %5845 = vmatmul.mubr.bf16.gmra.mrb[0].mxu0 %v5572
  %v5846 = vpop.f32.mrb[0].mxu0
  %v5847 = vadd.f32 0.0, %v5846
  %v5848 = vpop.f32.mrb[0].mxu0
  %v5849 = vpop.f32.mrb[0].mxu0
  %v5850 = vadd.f32 0.0, %v5849
  %v5851 = vpop.f32.mrb[0].mxu0
  %5852 = vmatprep.mubr.bf16.mxu0 0
  %5853 = vmatmul.mubr.bf16.gmra.mrb[0].mxu0 %v5575
  %v5854 = vpop.f32.mrb[0].mxu0
  %v5855 = vadd.f32 0.0, %v5854
  %v5856 = vpop.f32.mrb[0].mxu0
  %v5857 = vpop.f32.mrb[0].mxu0
  %v5858 = vadd.f32 0.0, %v5857
  %v5859 = vpop.f32.mrb[0].mxu0
  %5860 = vmatprep.mubr.bf16.mxu0 0
  %5861 = vmatmul.mubr.bf16.gmra.mrb[0].mxu0 %v5578
  %v5862 = vpop.f32.mrb[0].mxu0
  %v5863 = vadd.f32 0.0, %v5862
  %v5864 = vpop.f32.mrb[0].mxu0
  %v5865 = vpop.f32.mrb[0].mxu0
  %v5866 = vadd.f32 0.0, %v5865
  %v5867 = vpop.f32.mrb[0].mxu0
  %5868 = vmatprep.mubr.bf16.mxu0 0
  %5869 = vmatmul.mubr.bf16.gmra.mrb[0].mxu0 %v5581
  %v5870 = vpop.f32.mrb[0].mxu0
  %v5871 = vadd.f32 0.0, %v5870
  %v5872 = vpop.f32.mrb[0].mxu0
  %v5873 = vpop.f32.mrb[0].mxu0
  %v5874 = vadd.f32 0.0, %v5873
  %v5875 = vpop.f32.mrb[0].mxu0
  %5876 = vmatprep.mubr.bf16.mxu0 0
  %5877 = vmatmul.mubr.bf16.gmra.mrb[0].mxu0 %v5584
  %v5878 = vpop.f32.mrb[0].mxu0
  %v5879 = vadd.f32 0.0, %v5878
  %v5880 = vpop.f32.mrb[0].mxu0
  %v5881 = vpop.f32.mrb[0].mxu0
  %v5882 = vadd.f32 0.0, %v5881
  %v5883 = vpop.f32.mrb[0].mxu0
  %5884 = vmatprep.mubr.bf16.mxu0 0
  %5885 = vmatmul.mubr.bf16.gmra.mrb[0].mxu0 %v5587
  %v5886 = vpop.f32.mrb[0].mxu0
  %v5887 = vadd.f32 0.0, %v5886
  %v5888 = vpop.f32.mrb[0].mxu0
  %v5889 = vpop.f32.mrb[0].mxu0
  %v5890 = vadd.f32 0.0, %v5889
  %v5891 = vpop.f32.mrb[0].mxu0
  %5892 = vmatprep.mubr.bf16.mxu0 0
  %5893 = vmatmul.mubr.bf16.gmra.mrb[0].mxu0 %v5590
  %v5894 = vpop.f32.mrb[0].mxu0
  %v5895 = vadd.f32 0.0, %v5894
  %v5896 = vpop.f32.mrb[0].mxu0
  %v5897 = vpop.f32.mrb[0].mxu0
  %v5898 = vadd.f32 0.0, %v5897
  %v5899 = vpop.f32.mrb[0].mxu0
  %5900 = vmatprep.mubr.bf16.mxu0 0
  %5901 = vmatmul.mubr.bf16.gmra.mrb[0].mxu0 %v5593
  %v5902 = vpop.f32.mrb[0].mxu0
  %v5903 = vadd.f32 0.0, %v5902
  %v5904 = vpop.f32.mrb[0].mxu0
  %v5905 = vpop.f32.mrb[0].mxu0
  %v5906 = vadd.f32 0.0, %v5905
  %v5907 = vpop.f32.mrb[0].mxu0
  %5908 = vmatprep.mubr.bf16.mxu0 0
  %5909 = vmatmul.mubr.bf16.gmra.mrb[0].mxu0 %v5596
  %v5910 = vpop.f32.mrb[0].mxu0
  %v5911 = vadd.f32 0.0, %v5910
  %v5912 = vpop.f32.mrb[0].mxu0
  %v5913 = vpop.f32.mrb[0].mxu0
  %v5914 = vadd.f32 0.0, %v5913
  %v5915 = vpop.f32.mrb[0].mxu0
  %5916 = vmatprep.mubr.bf16.mxu0 0
  %5917 = vmatmul.mubr.bf16.gmra.mrb[0].mxu0 %v5599
  %v5918 = vpop.f32.mrb[0].mxu0
  %v5919 = vadd.f32 0.0, %v5918
  %v5920 = vpop.f32.mrb[0].mxu0
  %v5921 = vpop.f32.mrb[0].mxu0
  %v5922 = vadd.f32 0.0, %v5921
  %v5923 = vpop.f32.mrb[0].mxu0
  %5924 = vmatprep.mubr.bf16.mxu0 0
  %5925 = vmatmul.mubr.bf16.gmra.mrb[0].mxu0 %v5602
  %v5926 = vpop.f32.mrb[0].mxu0
  %v5927 = vadd.f32 0.0, %v5926
  %v5928 = vpop.f32.mrb[0].mxu0
  %v5929 = vpop.f32.mrb[0].mxu0
  %v5930 = vadd.f32 0.0, %v5929
  %v5931 = vpop.f32.mrb[0].mxu0
  %5932 = vmatprep.mubr.bf16.mxu0 0
  %5933 = vmatmul.mubr.bf16.gmra.mrb[0].mxu0 %v5605
  %v5934 = vpop.f32.mrb[0].mxu0
  %v5935 = vadd.f32 0.0, %v5934
  %v5936 = vpop.f32.mrb[0].mxu0
  %v5937 = vpop.f32.mrb[0].mxu0
  %v5938 = vadd.f32 0.0, %v5937
  %v5939 = vpop.f32.mrb[0].mxu0
  %5940 = vmatprep.mubr.bf16.mxu0 0
  %5941 = vmatmul.mubr.bf16.gmra.mrb[0].mxu0 %v5608
  %v5942 = vpop.f32.mrb[0].mxu0
  %v5943 = vadd.f32 0.0, %v5942
  %v5944 = vpop.f32.mrb[0].mxu0
  %v5945 = vpop.f32.mrb[0].mxu0
  %v5946 = vadd.f32 0.0, %v5945
  %v5947 = vpop.f32.mrb[0].mxu0
  %5948 = vmatprep.mubr.bf16.mxu0 0
  %5949 = vmatmul.mubr.bf16.gmra.mrb[0].mxu0 %v5611
  %v5950 = vpop.f32.mrb[0].mxu0
  %v5951 = vadd.f32 0.0, %v5950
  %v5952 = vpop.f32.mrb[0].mxu0
  %v5953 = vpop.f32.mrb[0].mxu0
  %v5954 = vadd.f32 0.0, %v5953
  %v5955 = vpop.f32.mrb[0].mxu0
  %5956 = vmatprep.mubr.bf16.mxu0 0
  %5957 = vmatmul.mubr.bf16.gmra.mrb[0].mxu0 %v5614
  %v5958 = vpop.f32.mrb[0].mxu0
  %v5959 = vadd.f32 0.0, %v5958
  %v5960 = vpop.f32.mrb[0].mxu0
  %v5961 = vpop.f32.mrb[0].mxu0
  %v5962 = vadd.f32 0.0, %v5961
  %v5963 = vpop.f32.mrb[0].mxu0
  %5964 = vmatprep.mubr.bf16.mxu0 0
  %5965 = vmatmul.mubr.bf16.gmra.mrb[0].mxu0 %v5617
  %v5966 = vpop.f32.mrb[0].mxu0
  %v5967 = vadd.f32 0.0, %v5966
  %v5968 = vpop.f32.mrb[0].mxu0
  %v5969 = vpop.f32.mrb[0].mxu0
  %v5970 = vadd.f32 0.0, %v5969
  %v5971 = vpop.f32.mrb[0].mxu0
  %5972 = vmatprep.mubr.bf16.mxu0 0
  %5973 = vmatmul.mubr.bf16.gmra.mrb[0].mxu0 %v5620
  %v5974 = vpop.f32.mrb[0].mxu0
  %v5975 = vadd.f32 0.0, %v5974
  %v5976 = vpop.f32.mrb[0].mxu0
  %v5977 = vpop.f32.mrb[0].mxu0
  %v5978 = vadd.f32 0.0, %v5977
  %v5979 = vpop.f32.mrb[0].mxu0
  %5980 = vmatprep.mubr.bf16.mxu0 0
  %5981 = vmatmul.mubr.bf16.gmra.mrb[0].mxu0 %v5623
  %v5982 = vpop.f32.mrb[0].mxu0
  %v5983 = vadd.f32 0.0, %v5982
  %v5984 = vpop.f32.mrb[0].mxu0
  %v5985 = vpop.f32.mrb[0].mxu0
  %v5986 = vpop.f32.mrb[0].mxu0
  %5987 = vdwg.mxu0
  %v5988 = vadd.f32 %v5338, %v5663
  %v5989 = vadd.f32 %v5339, %v5666
  %v5990 = vadd.f32 %v5340, %v5671
  %v5991 = vadd.f32 %v5341, %v5674
  %v5992 = vadd.f32 %v5342, %v5679
  %v5993 = vadd.f32 %v5343, %v5682
  %v5994 = vadd.f32 %v5344, %v5687
  %v5995 = vadd.f32 %v5345, %v5690
  %v5996 = vadd.f32 %v5346, %v5695
  %v5997 = vadd.f32 %v5347, %v5698
  %v5998 = vadd.f32 %v5348, %v5703
  %v5999 = vadd.f32 %v5349, %v5706
  %v6000 = vadd.f32 %v5350, %v5711
  %v6001 = vadd.f32 %v5351, %v5714
  %v6002 = vadd.f32 %v5352, %v5719
  %v6003 = vadd.f32 %v5353, %v5722
  %v6004 = vadd.f32 %v5354, %v5727
  %v6005 = vadd.f32 %v5355, %v5730
  %v6006 = vadd.f32 %v5356, %v5735
  %v6007 = vadd.f32 %v5357, %v5738
  %v6008 = vadd.f32 %v5358, %v5743
  %v6009 = vadd.f32 %v5359, %v5746
  %v6010 = vadd.f32 %v5360, %v5751
  %v6011 = vadd.f32 %v5361, %v5754
  %v6012 = vadd.f32 %v5362, %v5759
  %v6013 = vadd.f32 %v5363, %v5762
  %v6014 = vadd.f32 %v5364, %v5767
  %v6015 = vadd.f32 %v5365, %v5770
  %v6016 = vadd.f32 %v5366, %v5775
  %v6017 = vadd.f32 %v5367, %v5778
  %v6018 = vadd.f32 %v5368, %v5783
  %v6019 = vadd.f32 %v5369, %v5786
  %v6020 = vadd.f32 %v5370, %v5791
  %v6021 = vadd.f32 %v5371, %v5794
  %v6022 = vadd.f32 %v5372, %v5799
  %v6023 = vadd.f32 %v5373, %v5802
  %v6024 = vadd.f32 %v5374, %v5807
  %v6025 = vadd.f32 %v5375, %v5810
  %v6026 = vadd.f32 %v5376, %v5815
  %v6027 = vadd.f32 %v5377, %v5818
  %v6028 = vadd.f32 %v5378, %v5823
  %v6029 = vadd.f32 %v5379, %v5826
  %v6030 = vadd.f32 %v5380, %v5831
  %v6031 = vadd.f32 %v5381, %v5834
  %v6032 = vadd.f32 %v5382, %v5839
  %v6033 = vadd.f32 %v5383, %v5842
  %v6034 = vadd.f32 %v5384, %v5847
  %v6035 = vadd.f32 %v5385, %v5850
  %v6036 = vadd.f32 %v5386, %v5855
  %v6037 = vadd.f32 %v5387, %v5858
  %v6038 = vadd.f32 %v5388, %v5863
  %v6039 = vadd.f32 %v5389, %v5866
  %v6040 = vadd.f32 %v5390, %v5871
  %v6041 = vadd.f32 %v5391, %v5874
  %v6042 = vadd.f32 %v5392, %v5879
  %v6043 = vadd.f32 %v5393, %v5882
  %v6044 = vadd.f32 %v5394, %v5887
  %v6045 = vadd.f32 %v5395, %v5890
  %v6046 = vadd.f32 %v5396, %v5895
  %v6047 = vadd.f32 %v5397, %v5898
  %v6048 = vadd.f32 %v5398, %v5903
  %v6049 = vadd.f32 %v5399, %v5906
  %v6050 = vadd.f32 %v5400, %v5911
  %v6051 = vadd.f32 %v5401, %v5914
  %v6052 = vadd.f32 %v5402, %v5919
  %v6053 = vadd.f32 %v5403, %v5922
  %v6054 = vadd.f32 %v5404, %v5927
  %v6055 = vadd.f32 %v5405, %v5930
  %v6056 = vadd.f32 %v5406, %v5935
  %v6057 = vadd.f32 %v5407, %v5938
  %v6058 = vadd.f32 %v5408, %v5943
  %v6059 = vadd.f32 %v5409, %v5946
  %v6060 = vadd.f32 %v5410, %v5951
  %v6061 = vadd.f32 %v5411, %v5954
  %v6062 = vadd.f32 %v5412, %v5959
  %v6063 = vadd.f32 %v5413, %v5962
  %v6064 = vadd.f32 %v5414, %v5967
  %v6065 = vadd.f32 %v5415, %v5970
  %v6066 = vadd.f32 %v5416, %v5975
  %v6067 = vadd.f32 %v5417, %v5978
  %v6068 = vadd.f32 %v5418, %v5983
  %v6069 = vld [vmem:[%s2] sm:$0x1]
  %v6071 = vlaneseq
  %v6072 = vshrl.u32 %v6071, 7
  %v6073 = vsub.s32 0, %v6072
  %v6074 = vrot.slane %v6069, %v6073
  %v6076 = vadd.f32 %v5988, %v6074
  %v6077 = vadd.f32 %v5989, %v6074
  %v6078 = vadd.f32 %v5990, %v6074
  %v6079 = vadd.f32 %v5991, %v6074
  %v6080 = vadd.f32 %v5992, %v6074
  %v6081 = vadd.f32 %v5993, %v6074
  %v6082 = vadd.f32 %v5994, %v6074
  %v6083 = vadd.f32 %v5995, %v6074
  %v6084 = vadd.f32 %v5996, %v6074
  %v6085 = vadd.f32 %v5997, %v6074
  %v6086 = vadd.f32 %v5998, %v6074
  %v6087 = vadd.f32 %v5999, %v6074
  %v6088 = vadd.f32 %v6000, %v6074
  %v6089 = vadd.f32 %v6001, %v6074
  %v6090 = vadd.f32 %v6002, %v6074
  %v6091 = vadd.f32 %v6003, %v6074
  %v6092 = vadd.f32 %v6004, %v6074
  %v6093 = vadd.f32 %v6005, %v6074
  %v6094 = vadd.f32 %v6006, %v6074
  %v6095 = vadd.f32 %v6007, %v6074
  %v6096 = vadd.f32 %v6008, %v6074
  %v6097 = vadd.f32 %v6009, %v6074
  %v6098 = vadd.f32 %v6010, %v6074
  %v6099 = vadd.f32 %v6011, %v6074
  %v6100 = vadd.f32 %v6012, %v6074
  %v6101 = vadd.f32 %v6013, %v6074
  %v6102 = vadd.f32 %v6014, %v6074
  %v6103 = vadd.f32 %v6015, %v6074
  %v6104 = vadd.f32 %v6016, %v6074
  %v6105 = vadd.f32 %v6017, %v6074
  %v6106 = vadd.f32 %v6018, %v6074
  %v6107 = vadd.f32 %v6019, %v6074
  %v6108 = vadd.f32 %v6020, %v6074
  %v6109 = vadd.f32 %v6021, %v6074
  %v6110 = vadd.f32 %v6022, %v6074
  %v6111 = vadd.f32 %v6023, %v6074
  %v6112 = vadd.f32 %v6024, %v6074
  %v6113 = vadd.f32 %v6025, %v6074
  %v6114 = vadd.f32 %v6026, %v6074
  %v6115 = vadd.f32 %v6027, %v6074
  %v6116 = vadd.f32 %v6028, %v6074
  %v6117 = vadd.f32 %v6029, %v6074
  %v6118 = vadd.f32 %v6030, %v6074
  %v6119 = vadd.f32 %v6031, %v6074
  %v6120 = vadd.f32 %v6032, %v6074
  %v6121 = vadd.f32 %v6033, %v6074
  %v6122 = vadd.f32 %v6034, %v6074
  %v6123 = vadd.f32 %v6035, %v6074
  %v6124 = vadd.f32 %v6036, %v6074
  %v6125 = vadd.f32 %v6037, %v6074
  %v6126 = vadd.f32 %v6038, %v6074
  %v6127 = vadd.f32 %v6039, %v6074
  %v6128 = vadd.f32 %v6040, %v6074
  %v6129 = vadd.f32 %v6041, %v6074
  %v6130 = vadd.f32 %v6042, %v6074
  %v6131 = vadd.f32 %v6043, %v6074
  %v6132 = vadd.f32 %v6044, %v6074
  %v6133 = vadd.f32 %v6045, %v6074
  %v6134 = vadd.f32 %v6046, %v6074
  %v6135 = vadd.f32 %v6047, %v6074
  %v6136 = vadd.f32 %v6048, %v6074
  %v6137 = vadd.f32 %v6049, %v6074
  %v6138 = vadd.f32 %v6050, %v6074
  %v6139 = vadd.f32 %v6051, %v6074
  %v6140 = vadd.f32 %v6052, %v6074
  %v6141 = vadd.f32 %v6053, %v6074
  %v6142 = vadd.f32 %v6054, %v6074
  %v6143 = vadd.f32 %v6055, %v6074
  %v6144 = vadd.f32 %v6056, %v6074
  %v6145 = vadd.f32 %v6057, %v6074
  %v6146 = vadd.f32 %v6058, %v6074
  %v6147 = vadd.f32 %v6059, %v6074
  %v6148 = vadd.f32 %v6060, %v6074
  %v6149 = vadd.f32 %v6061, %v6074
  %v6150 = vadd.f32 %v6062, %v6074
  %v6151 = vadd.f32 %v6063, %v6074
  %v6152 = vadd.f32 %v6064, %v6074
  %v6153 = vadd.f32 %v6065, %v6074
  %v6154 = vadd.f32 %v6066, %v6074
  %v6155 = vadd.f32 %v6067, %v6074
  %v6156 = vadd.f32 %v6068, %v6074
  %v6157 = vmax.f32 %v6076, 0.0
  %v6158 = vmax.f32 %v6077, 0.0
  %v6159 = vmax.f32 %v6078, 0.0
  %v6160 = vmax.f32 %v6079, 0.0
  %v6161 = vmax.f32 %v6080, 0.0
  %v6162 = vmax.f32 %v6081, 0.0
  %v6163 = vmax.f32 %v6082, 0.0
  %v6164 = vmax.f32 %v6083, 0.0
  %v6165 = vmax.f32 %v6084, 0.0
  %v6166 = vmax.f32 %v6085, 0.0
  %v6167 = vmax.f32 %v6086, 0.0
  %v6168 = vmax.f32 %v6087, 0.0
  %v6169 = vmax.f32 %v6088, 0.0
  %v6170 = vmax.f32 %v6089, 0.0
  %v6171 = vmax.f32 %v6090, 0.0
  %v6172 = vmax.f32 %v6091, 0.0
  %v6173 = vmax.f32 %v6092, 0.0
  %v6174 = vmax.f32 %v6093, 0.0
  %v6175 = vmax.f32 %v6094, 0.0
  %v6176 = vmax.f32 %v6095, 0.0
  %v6177 = vmax.f32 %v6096, 0.0
  %v6178 = vmax.f32 %v6097, 0.0
  %v6179 = vmax.f32 %v6098, 0.0
  %v6180 = vmax.f32 %v6099, 0.0
  %v6181 = vmax.f32 %v6100, 0.0
  %v6182 = vmax.f32 %v6101, 0.0
  %v6183 = vmax.f32 %v6102, 0.0
  %v6184 = vmax.f32 %v6103, 0.0
  %v6185 = vmax.f32 %v6104, 0.0
  %v6186 = vmax.f32 %v6105, 0.0
  %v6187 = vmax.f32 %v6106, 0.0
  %v6188 = vmax.f32 %v6107, 0.0
  %v6189 = vmax.f32 %v6108, 0.0
  %v6190 = vmax.f32 %v6109, 0.0
  %v6191 = vmax.f32 %v6110, 0.0
  %v6192 = vmax.f32 %v6111, 0.0
  %v6193 = vmax.f32 %v6112, 0.0
  %v6194 = vmax.f32 %v6113, 0.0
  %v6195 = vmax.f32 %v6114, 0.0
  %v6196 = vmax.f32 %v6115, 0.0
  %v6197 = vmax.f32 %v6116, 0.0
  %v6198 = vmax.f32 %v6117, 0.0
  %v6199 = vmax.f32 %v6118, 0.0
  %v6200 = vmax.f32 %v6119, 0.0
  %v6201 = vmax.f32 %v6120, 0.0
  %v6202 = vmax.f32 %v6121, 0.0
  %v6203 = vmax.f32 %v6122, 0.0
  %v6204 = vmax.f32 %v6123, 0.0
  %v6205 = vmax.f32 %v6124, 0.0
  %v6206 = vmax.f32 %v6125, 0.0
  %v6207 = vmax.f32 %v6126, 0.0
  %v6208 = vmax.f32 %v6127, 0.0
  %v6209 = vmax.f32 %v6128, 0.0
  %v6210 = vmax.f32 %v6129, 0.0
  %v6211 = vmax.f32 %v6130, 0.0
  %v6212 = vmax.f32 %v6131, 0.0
  %v6213 = vmax.f32 %v6132, 0.0
  %v6214 = vmax.f32 %v6133, 0.0
  %v6215 = vmax.f32 %v6134, 0.0
  %v6216 = vmax.f32 %v6135, 0.0
  %v6217 = vmax.f32 %v6136, 0.0
  %v6218 = vmax.f32 %v6137, 0.0
  %v6219 = vmax.f32 %v6138, 0.0
  %v6220 = vmax.f32 %v6139, 0.0
  %v6221 = vmax.f32 %v6140, 0.0
  %v6222 = vmax.f32 %v6141, 0.0
  %v6223 = vmax.f32 %v6142, 0.0
  %v6224 = vmax.f32 %v6143, 0.0
  %v6225 = vmax.f32 %v6144, 0.0
  %v6226 = vmax.f32 %v6145, 0.0
  %v6227 = vmax.f32 %v6146, 0.0
  %v6228 = vmax.f32 %v6147, 0.0
  %v6229 = vmax.f32 %v6148, 0.0
  %v6230 = vmax.f32 %v6149, 0.0
  %v6231 = vmax.f32 %v6150, 0.0
  %v6232 = vmax.f32 %v6151, 0.0
  %v6233 = vmax.f32 %v6152, 0.0
  %v6234 = vmax.f32 %v6153, 0.0
  %v6235 = vmax.f32 %v6154, 0.0
  %v6236 = vmax.f32 %v6155, 0.0
  %v6237 = vmax.f32 %v6156, 0.0
  %vm6238 = vcmask 261120
  %6239 = vst.msk [vmem:[%s3] sm:$0xff] %vm6238, %v6157
  %6240 = vst.msk [vmem:[%s3 + $0x8] sm:$0xff] %vm6238, %v6158
  %6241 = vst.msk [vmem:[%s3 + $0x10] sm:$0xff] %vm6238, %v6159
  %6242 = vst.msk [vmem:[%s3 + $0x18] sm:$0xff] %vm6238, %v6160
  %6243 = vst.msk [vmem:[%s3 + $0x20] sm:$0xff] %vm6238, %v6161
  %6244 = vst.msk [vmem:[%s3 + $0x28] sm:$0xff] %vm6238, %v6162
  %6245 = vst.msk [vmem:[%s3 + $0x30] sm:$0xff] %vm6238, %v6163
  %6246 = vst.msk [vmem:[%s3 + $0x38] sm:$0xff] %vm6238, %v6164
  %6247 = vst.msk [vmem:[%s3 + $0x40] sm:$0xff] %vm6238, %v6165
  %6248 = vst.msk [vmem:[%s3 + $0x48] sm:$0xff] %vm6238, %v6166
  %6249 = vst.msk [vmem:[%s3 + $0x50] sm:$0xff] %vm6238, %v6167
  %6250 = vst.msk [vmem:[%s3 + $0x58] sm:$0xff] %vm6238, %v6168
  %6251 = vst.msk [vmem:[%s3 + $0x60] sm:$0xff] %vm6238, %v6169
  %6252 = vst.msk [vmem:[%s3 + $0x68] sm:$0xff] %vm6238, %v6170
  %6253 = vst.msk [vmem:[%s3 + $0x70] sm:$0xff] %vm6238, %v6171
  %6254 = vst.msk [vmem:[%s3 + $0x78] sm:$0xff] %vm6238, %v6172
  %6255 = vst.msk [vmem:[%s3 + $0x80] sm:$0xff] %vm6238, %v6173
  %6256 = vst.msk [vmem:[%s3 + $0x88] sm:$0xff] %vm6238, %v6174
  %6257 = vst.msk [vmem:[%s3 + $0x90] sm:$0xff] %vm6238, %v6175
  %6258 = vst.msk [vmem:[%s3 + $0x98] sm:$0xff] %vm6238, %v6176
  %6259 = vst.msk [vmem:[%s3 + $0xa0] sm:$0xff] %vm6238, %v6177
  %6260 = vst.msk [vmem:[%s3 + $0xa8] sm:$0xff] %vm6238, %v6178
  %6261 = vst.msk [vmem:[%s3 + $0xb0] sm:$0xff] %vm6238, %v6179
  %6262 = vst.msk [vmem:[%s3 + $0xb8] sm:$0xff] %vm6238, %v6180
  %6263 = vst.msk [vmem:[%s3 + $0xc0] sm:$0xff] %vm6238, %v6181
  %6264 = vst.msk [vmem:[%s3 + $0xc8] sm:$0xff] %vm6238, %v6182
  %6265 = vst.msk [vmem:[%s3 + $0xd0] sm:$0xff] %vm6238, %v6183
  %6266 = vst.msk [vmem:[%s3 + $0xd8] sm:$0xff] %vm6238, %v6184
  %6267 = vst.msk [vmem:[%s3 + $0xe0] sm:$0xff] %vm6238, %v6185
  %6268 = vst.msk [vmem:[%s3 + $0xe8] sm:$0xff] %vm6238, %v6186
  %6269 = vst.msk [vmem:[%s3 + $0xf0] sm:$0xff] %vm6238, %v6187
  %6270 = vst.msk [vmem:[%s3 + $0xf8] sm:$0xff] %vm6238, %v6188
  %6271 = vst.msk [vmem:[%s3 + $0x100] sm:$0xff] %vm6238, %v6189
  %6272 = vst.msk [vmem:[%s3 + $0x108] sm:$0xff] %vm6238, %v6190
  %6273 = vst.msk [vmem:[%s3 + $0x110] sm:$0xff] %vm6238, %v6191
  %6274 = vst.msk [vmem:[%s3 + $0x118] sm:$0xff] %vm6238, %v6192
  %6275 = vst.msk [vmem:[%s3 + $0x120] sm:$0xff] %vm6238, %v6193
  %6276 = vst.msk [vmem:[%s3 + $0x128] sm:$0xff] %vm6238, %v6194
  %6277 = vst.msk [vmem:[%s3 + $0x130] sm:$0xff] %vm6238, %v6195
  %6278 = vst.msk [vmem:[%s3 + $0x138] sm:$0xff] %vm6238, %v6196
  %6279 = vst.msk [vmem:[%s3 + $0x140] sm:$0xff] %vm6238, %v6197
  %6280 = vst.msk [vmem:[%s3 + $0x148] sm:$0xff] %vm6238, %v6198
  %6281 = vst.msk [vmem:[%s3 + $0x150] sm:$0xff] %vm6238, %v6199
  %6282 = vst.msk [vmem:[%s3 + $0x158] sm:$0xff] %vm6238, %v6200
  %6283 = vst.msk [vmem:[%s3 + $0x160] sm:$0xff] %vm6238, %v6201
  %6284 = vst.msk [vmem:[%s3 + $0x168] sm:$0xff] %vm6238, %v6202
  %6285 = vst.msk [vmem:[%s3 + $0x170] sm:$0xff] %vm6238, %v6203
  %6286 = vst.msk [vmem:[%s3 + $0x178] sm:$0xff] %vm6238, %v6204
  %6287 = vst.msk [vmem:[%s3 + $0x180] sm:$0xff] %vm6238, %v6205
  %6288 = vst.msk [vmem:[%s3 + $0x188] sm:$0xff] %vm6238, %v6206
  %6289 = vst.msk [vmem:[%s3 + $0x190] sm:$0xff] %vm6238, %v6207
  %6290 = vst.msk [vmem:[%s3 + $0x198] sm:$0xff] %vm6238, %v6208
  %6291 = vst.msk [vmem:[%s3 + $0x1a0] sm:$0xff] %vm6238, %v6209
  %6292 = vst.msk [vmem:[%s3 + $0x1a8] sm:$0xff] %vm6238, %v6210
  %6293 = vst.msk [vmem:[%s3 + $0x1b0] sm:$0xff] %vm6238, %v6211
  %6294 = vst.msk [vmem:[%s3 + $0x1b8] sm:$0xff] %vm6238, %v6212
  %6295 = vst.msk [vmem:[%s3 + $0x1c0] sm:$0xff] %vm6238, %v6213
  %6296 = vst.msk [vmem:[%s3 + $0x1c8] sm:$0xff] %vm6238, %v6214
  %6297 = vst.msk [vmem:[%s3 + $0x1d0] sm:$0xff] %vm6238, %v6215
  %6298 = vst.msk [vmem:[%s3 + $0x1d8] sm:$0xff] %vm6238, %v6216
  %6299 = vst.msk [vmem:[%s3 + $0x1e0] sm:$0xff] %vm6238, %v6217
  %6300 = vst.msk [vmem:[%s3 + $0x1e8] sm:$0xff] %vm6238, %v6218
  %6301 = vst.msk [vmem:[%s3 + $0x1f0] sm:$0xff] %vm6238, %v6219
  %6302 = vst.msk [vmem:[%s3 + $0x1f8] sm:$0xff] %vm6238, %v6220
  %6303 = vst.msk [vmem:[%s3 + $0x200] sm:$0xff] %vm6238, %v6221
  %6304 = vst.msk [vmem:[%s3 + $0x208] sm:$0xff] %vm6238, %v6222
  %6305 = vst.msk [vmem:[%s3 + $0x210] sm:$0xff] %vm6238, %v6223
  %6306 = vst.msk [vmem:[%s3 + $0x218] sm:$0xff] %vm6238, %v6224
  %6307 = vst.msk [vmem:[%s3 + $0x220] sm:$0xff] %vm6238, %v6225
  %6308 = vst.msk [vmem:[%s3 + $0x228] sm:$0xff] %vm6238, %v6226
  %6309 = vst.msk [vmem:[%s3 + $0x230] sm:$0xff] %vm6238, %v6227
  %6310 = vst.msk [vmem:[%s3 + $0x238] sm:$0xff] %vm6238, %v6228
  %6311 = vst.msk [vmem:[%s3 + $0x240] sm:$0xff] %vm6238, %v6229
  %6312 = vst.msk [vmem:[%s3 + $0x248] sm:$0xff] %vm6238, %v6230
  %6313 = vst.msk [vmem:[%s3 + $0x250] sm:$0xff] %vm6238, %v6231
  %6314 = vst.msk [vmem:[%s3 + $0x258] sm:$0xff] %vm6238, %v6232
  %6315 = vst.msk [vmem:[%s3 + $0x260] sm:$0xff] %vm6238, %v6233
  %6316 = vst.msk [vmem:[%s3 + $0x268] sm:$0xff] %vm6238, %v6234
  %6317 = vst.msk [vmem:[%s3 + $0x270] sm:$0xff] %vm6238, %v6235
  %6318 = vst.msk [vmem:[%s3 + $0x278] sm:$0xff] %vm6238, %v6236
  %6319 = vst.msk [vmem:[%s3 + $0x280] sm:$0xff] %vm6238, %v6237
  // Predicated region
  $region47: #{skin_classifier_forward.8} parent=0 // pred_check
    _
  $region48: #{skin_classifier_forward.8} parent=0 // pred_check_branch
    %6321 = sbr.rel (0) target = $region50
  $region49: #{skin_classifier_forward.8} parent=0 // pred_region
    _
  $region50: #{skin_classifier_forward.8} parent=0 // pred_fallthru
    _
  // Predicated region
  $region51: #{skin_classifier_forward.8} parent=0 // pred_check
    _
  $region52: #{skin_classifier_forward.8} parent=0 // pred_check_branch
    %6323 = sbr.rel (0) target = $region54
  $region53: #{skin_classifier_forward.8} parent=0 // pred_region
    _
  $region54: #{skin_classifier_forward.8} parent=0 // pred_fallthru
    _
  %6324 = vsyncmov [#allocation3]
  %s6325 = vpop.sfrf %6324
  %p6326 = scmp.eq.s32.totalorder %s6325, 0
  %p6327 = pneg %p6326
  %6329 = shalt.err (%p6327)

// kernel: skin_classifier_forward.14
$region0: #{skin_classifier_forward.14}
  #allocation0 [shape = 'u32[]', space=smem, size = 0x4, offset = 0x4, fixed_abs, tag = 'smem constant byte address 0x4 - core index']
  #allocation1 [shape = 'u32[144,128]{1,0:T(1,128)}', space=vmem, size = 0x12000, scoped, tag = 'internal scratch']
  #allocation2 [shape = 'f32[8,256]{1,0:T(8,128)}', space=vmem, size = 0x2000, scoped, tag = 'scratch operand']
  %s0 = inlined_call_operand.vmem [shape: f32[8,512], index: 0, kind: input, shape index: {}]
  %s1 = inlined_call_operand.vmem [shape: bf16[512,512], index: 1, kind: input, shape index: {}]
  %s2 = inlined_call_operand.vmem [shape: f32[1,512], index: 2, kind: input, shape index: {}]
  %s3 = inlined_call_operand.vmem [shape: f32[8,512], index: 3, kind: output, shape index: {}]
  %s4 = sld [smem:[#allocation0]]
  $region91: #{skin_classifier_forward.14} parent=0
    _
  %s6 = ssub.s32 1, %s4
  %s7 = scalar_select 0, %s6, %s4
  $region1: #{skin_classifier_forward.14} parent=0
    #allocation3 [shape = 'u8[524288]{0}', space=vmem, size = 0x80000, scoped, tag = 'input window, operand 1']
    loop: start=0, step=1, limit=4
    $region2: #{skin_classifier_forward.14} parent=1 // loop_pre_header
      _
    $region3: #{skin_classifier_forward.14} parent=1 // loop_header
      %s9 = sphi 0, %s13
      %p10 = scmp.ge.s32.totalorder %s9, 4
      %s16 = sphi 0, %s35
      %s17 = sphi 0, %s31
      %s18 = sphi 0, %s27
      %s19 = sphi 0, %s16
      %s20 = sphi 0, %s17
      %s21 = sphi 0, %s18
      %s22 = sphi 0, %s19
      %s23 = sphi 0, %s20
      %s24 = sphi 0, %s21
      %s40 = sphi 0, %s42
      %s43 = sphi 0, %s40
      %s44 = sphi 0, %s43
      %s60 = sphi 0, %s44
      %s68 = sphi 0, %s70
      %s71 = sphi 0, %s68
      %s72 = sphi 0, %s71
      %s88 = sphi 0, %s72
      %s94 = sphi 0, %s96
      %s97 = sphi 0, %s94
      %s98 = sphi 0, %s97
      %s114 = sphi 0, %s98
      %s122 = sphi 0, %s124
      %s125 = sphi 0, %s122
      %s126 = sphi 0, %s125
      %s142 = sphi 0, %s126
    $region4: #{skin_classifier_forward.14} parent=1 // loop_header_branch
      %12 = sbr.rel (%p10) target = $region8
    $region5: #{skin_classifier_forward.14} parent=1 // loop_body
      %s14 = ssub.s32 %s9, 1
      %s15 = ssub.s32 %s9, 2
      %s25 = sadd.s32 1, %s18
      %p26 = scmp.ge.s32.totalorder %s25, 1
      %s27 = scalar_select %p26, 0, %s25
      %s28 = sadd.s32 1, %s17
      %s29 = scalar_select %p26, %s28, %s17
      %p30 = scmp.ge.s32.totalorder %s29, 2
      %s31 = scalar_select %p30, 0, %s29
      %s32 = sadd.s32 1, %s16
      %s33 = scalar_select %p30, %s32, %s16
      %p34 = scmp.ge.s32.totalorder %s33, 1
      %s35 = scalar_select %p34, 0, %s33
      %s36 = ssub.s32 %s16, %s35
      %s37 = ssub.s32 %s18, %s27
      %s38 = sor.u32 %s36, %s37
      %p39 = scmp.eq.s32.totalorder %s38, 0
      %s41 = sadd.s32 %s40, 1
      %s42 = scalar_select %p39, %s40, %s41
      %p45 = pneg %p39
      %p46 = scmp.eq.s32.totalorder %s9, 1
      %p47 = por %p45, %p46
      %p48 = scmp.ne.s32.totalorder %s40, %s43
      %p49 = scmp.eq.s32.totalorder %s9, 0
      %p50 = por %p48, %p49
      %p51 = scmp.ne.s32.totalorder %s40, %s43
      %p52 = scmp.eq.s32.totalorder %s14, 1
      %p53 = por %p51, %p52
      %p54 = scmp.ne.s32.totalorder %s43, %s44
      %p55 = scmp.eq.s32.totalorder %s14, 0
      %p56 = por %p54, %p55
      %p57 = scmp.ne.s32.totalorder %s43, %s44
      %p58 = scmp.eq.s32.totalorder %s15, 1
      %p59 = por %p57, %p58
      %p61 = scmp.ne.s32.totalorder %s44, %s60
      %p62 = scmp.eq.s32.totalorder %s15, 0
      %p63 = por %p61, %p62
      %s64 = ssub.s32 %s18, %s27
      %s65 = ssub.s32 %s17, %s31
      %s66 = sor.u32 %s64, %s65
      %p67 = scmp.eq.s32.totalorder %s66, 0
      %s69 = sadd.s32 %s68, 1
      %s70 = scalar_select %p67, %s68, %s69
      %p73 = pneg %p67
      %p74 = scmp.eq.s32.totalorder %s9, 1
      %p75 = por %p73, %p74
      %p76 = scmp.ne.s32.totalorder %s68, %s71
      %p77 = scmp.eq.s32.totalorder %s9, 0
      %p78 = por %p76, %p77
      %p79 = scmp.ne.s32.totalorder %s68, %s71
      %p80 = scmp.eq.s32.totalorder %s14, 1
      %p81 = por %p79, %p80
      %p82 = scmp.ne.s32.totalorder %s71, %s72
      %p83 = scmp.eq.s32.totalorder %s14, 0
      %p84 = por %p82, %p83
      %p85 = scmp.ne.s32.totalorder %s71, %s72
      %p86 = scmp.eq.s32.totalorder %s15, 1
      %p87 = por %p85, %p86
      %p89 = scmp.ne.s32.totalorder %s72, %s88
      %p90 = scmp.eq.s32.totalorder %s15, 0
      %p91 = por %p89, %p90
      %s92 = ssub.s32 %s17, %s31
      %p93 = scmp.eq.s32.totalorder %s92, 0
      %s95 = sadd.s32 %s94, 1
      %s96 = scalar_select %p93, %s94, %s95
      %p99 = pneg %p93
      %p100 = scmp.eq.s32.totalorder %s9, 1
      %p101 = por %p99, %p100
      %p102 = scmp.ne.s32.totalorder %s94, %s97
      %p103 = scmp.eq.s32.totalorder %s9, 0
      %p104 = por %p102, %p103
      %p105 = scmp.ne.s32.totalorder %s94, %s97
      %p106 = scmp.eq.s32.totalorder %s14, 1
      %p107 = por %p105, %p106
      %p108 = scmp.ne.s32.totalorder %s97, %s98
      %p109 = scmp.eq.s32.totalorder %s14, 0
      %p110 = por %p108, %p109
      %p111 = scmp.ne.s32.totalorder %s97, %s98
      %p112 = scmp.eq.s32.totalorder %s15, 1
      %p113 = por %p111, %p112
      %p115 = scmp.ne.s32.totalorder %s98, %s114
      %p116 = scmp.eq.s32.totalorder %s15, 0
      %p117 = por %p115, %p116
      %s118 = ssub.s32 %s16, %s35
      %s119 = ssub.s32 %s17, %s31
      %s120 = sor.u32 %s118, %s119
      %p121 = scmp.eq.s32.totalorder %s120, 0
      %s123 = sadd.s32 %s122, 1
      %s124 = scalar_select %p121, %s122, %s123
      %p127 = pneg %p121
      %p128 = scmp.eq.s32.totalorder %s9, 1
      %p129 = por %p127, %p128
      %p130 = scmp.ne.s32.totalorder %s122, %s125
      %p131 = scmp.eq.s32.totalorder %s9, 0
      %p132 = por %p130, %p131
      %p133 = scmp.ne.s32.totalorder %s122, %s125
      %p134 = scmp.eq.s32.totalorder %s14, 1
      %p135 = por %p133, %p134
      %p136 = scmp.ne.s32.totalorder %s125, %s126
      %p137 = scmp.eq.s32.totalorder %s14, 0
      %p138 = por %p136, %p137
      %p139 = scmp.ne.s32.totalorder %s125, %s126
      %p140 = scmp.eq.s32.totalorder %s15, 1
      %p141 = por %p139, %p140
      %p143 = scmp.ne.s32.totalorder %s126, %s142
      %p144 = scmp.eq.s32.totalorder %s15, 0
      %p145 = por %p143, %p144
      %p146 = scmp.le.s32.totalorder 1, %s9
      %p147 = scmp.lt.s32.totalorder %s9, 3
      %p148 = pnand %p146, %p147
      %p149 = pneg %p148
      // Predicated region
      $region9: #{skin_classifier_forward.14} parent=5 // pred_check
        _
      $region10: #{skin_classifier_forward.14} parent=5 // pred_check_branch
        %151 = sbr.rel (%p148) target = $region12
      $region11: #{skin_classifier_forward.14} parent=5 // pred_region
        %s152 = ssub.s32 %s9, 1
        // Predicated region
        $region13: #{skin_classifier_forward.14} parent=11 // pred_check
          %p153 = pneg %p56
        $region14: #{skin_classifier_forward.14} parent=11 // pred_check_branch
          %155 = sbr.rel (%p153) target = $region16
        $region15: #{skin_classifier_forward.14} parent=11 // pred_region
          %s156 = smul.u32 4, %s21
          %p157 = scmp.lt.s32.totalorder %s19, 0
          %s158 = scalar_select %p157, %s19, 0
          %p159 = scmp.lt.s32.totalorder %s156, 3
          %s160 = scalar_select %p159, %s156, 3
          %s161 = smul.addr %s158, 4
          %s162 = sadd.s32 %s160, %s161
          %s163 = smul.addr %s162, 8
          %s164 = scalar_lea.vmem %s0, %s163
          %s165 = smul.u32 4, %s21
        $region16: #{skin_classifier_forward.14} parent=11 // pred_fallthru
          _
      $region12: #{skin_classifier_forward.14} parent=5 // pred_fallthru
        _
      %p166 = scmp.lt.s32.totalorder %s9, 2
      // Predicated region
      $region17: #{skin_classifier_forward.14} parent=5 // pred_check
        %p167 = pneg %p166
      $region18: #{skin_classifier_forward.14} parent=5 // pred_check_branch
        %169 = sbr.rel (%p167) target = $region20
      $region19: #{skin_classifier_forward.14} parent=5 // pred_region
        // Predicated region
        $region21: #{skin_classifier_forward.14} parent=19 // pred_check
          %p170 = pneg %p78
        $region22: #{skin_classifier_forward.14} parent=19 // pred_check_branch
          %172 = sbr.rel (%p170) target = $region24
        $region23: #{skin_classifier_forward.14} parent=19 // pred_region
          %s173 = sand.u32 %s68, 1
          %s174 = sand.u32 %s68, 1
          %s175 = smul.addr %s174, 512
          %s176 = scalar_lea.vmem [#allocation3], %s175
          %s177 = smul.u32 64, %s18
          %s178 = smul.u32 2, %s17
          %s179 = smul.addr %s177, 4
          %s180 = sadd.s32 %s178, %s179
          %s181 = smul.addr %s180, 4
          %s182 = scalar_lea.vmem %s1, %s181
          // Predicated region
          $region25: #{skin_classifier_forward.14} parent=23 // pred_check
            _
          $region26: #{skin_classifier_forward.14} parent=23 // pred_check_branch
            %184 = sbr.rel (0) target = $region28
          $region27: #{skin_classifier_forward.14} parent=23 // pred_region
            // Predicated region
            $region29: #{skin_classifier_forward.14} parent=27 // pred_check
              _
            $region30: #{skin_classifier_forward.14} parent=27 // pred_check_branch
              %186 = sbr.rel (0) target = $region32
            $region31: #{skin_classifier_forward.14} parent=27 // pred_region
              // Predicated region
              $region44: #{skin_classifier_forward.14} parent=31 // pred_check
                _
              $region45: #{skin_classifier_forward.14} parent=31 // pred_check_branch
                %327 = sbr.rel (0) target = $region47
              $region46: #{skin_classifier_forward.14} parent=31 // pred_region
                loop: start=0, step=1, limit=1
                $region48: #{skin_classifier_forward.14} parent=46 // loop_pre_header
                  _
                $region49: #{skin_classifier_forward.14} parent=46 // loop_header
                  %s329 = sphi 0, %s333
                  %p330 = scmp.ge.s32.totalorder %s329, 1
                  %s334 = sphi %s182, %s182
                  %s335 = sphi %s176, %s176
                $region50: #{skin_classifier_forward.14} parent=46 // loop_header_branch
                  %332 = sbr.rel (%p330) target = $region54
                $region51: #{skin_classifier_forward.14} parent=46 // loop_body
                  %v336 = vld [vmem:[%s334] sm:$0xff]
                  %337 = vst [vmem:[%s335] sm:$0xff] %v336
                  %v338 = vld [vmem:[%s334 + $0x10] sm:$0xff]
                  %339 = vst [vmem:[%s335 + $0x8] sm:$0xff] %v338
                  %v340 = vld [vmem:[%s334 + $0x20] sm:$0xff]
                  %341 = vst [vmem:[%s335 + $0x10] sm:$0xff] %v340
                  %v342 = vld [vmem:[%s334 + $0x30] sm:$0xff]
                  %343 = vst [vmem:[%s335 + $0x18] sm:$0xff] %v342
                  %v344 = vld [vmem:[%s334 + $0x40] sm:$0xff]
                  %345 = vst [vmem:[%s335 + $0x20] sm:$0xff] %v344
                  %v346 = vld [vmem:[%s334 + $0x50] sm:$0xff]
                  %347 = vst [vmem:[%s335 + $0x28] sm:$0xff] %v346
                  %v348 = vld [vmem:[%s334 + $0x60] sm:$0xff]
                  %349 = vst [vmem:[%s335 + $0x30] sm:$0xff] %v348
                  %v350 = vld [vmem:[%s334 + $0x70] sm:$0xff]
                  %351 = vst [vmem:[%s335 + $0x38] sm:$0xff] %v350
                  %v352 = vld [vmem:[%s334 + $0x80] sm:$0xff]
                  %353 = vst [vmem:[%s335 + $0x40] sm:$0xff] %v352
                  %v354 = vld [vmem:[%s334 + $0x90] sm:$0xff]
                  %355 = vst [vmem:[%s335 + $0x48] sm:$0xff] %v354
                  %v356 = vld [vmem:[%s334 + $0xa0] sm:$0xff]
                  %357 = vst [vmem:[%s335 + $0x50] sm:$0xff] %v356
                  %v358 = vld [vmem:[%s334 + $0xb0] sm:$0xff]
                  %359 = vst [vmem:[%s335 + $0x58] sm:$0xff] %v358
                  %v360 = vld [vmem:[%s334 + $0xc0] sm:$0xff]
                  %361 = vst [vmem:[%s335 + $0x60] sm:$0xff] %v360
                  %v362 = vld [vmem:[%s334 + $0xd0] sm:$0xff]
                  %363 = vst [vmem:[%s335 + $0x68] sm:$0xff] %v362
                  %v364 = vld [vmem:[%s334 + $0xe0] sm:$0xff]
                  %365 = vst [vmem:[%s335 + $0x70] sm:$0xff] %v364
                  %v366 = vld [vmem:[%s334 + $0xf0] sm:$0xff]
                  %367 = vst [vmem:[%s335 + $0x78] sm:$0xff] %v366
                  %v368 = vld [vmem:[%s334 + $0x100] sm:$0xff]
                  %369 = vst [vmem:[%s335 + $0x80] sm:$0xff] %v368
                  %v370 = vld [vmem:[%s334 + $0x110] sm:$0xff]
                  %371 = vst [vmem:[%s335 + $0x88] sm:$0xff] %v370
                  %v372 = vld [vmem:[%s334 + $0x120] sm:$0xff]
                  %373 = vst [vmem:[%s335 + $0x90] sm:$0xff] %v372
                  %v374 = vld [vmem:[%s334 + $0x130] sm:$0xff]
                  %375 = vst [vmem:[%s335 + $0x98] sm:$0xff] %v374
                  %v376 = vld [vmem:[%s334 + $0x140] sm:$0xff]
                  %377 = vst [vmem:[%s335 + $0xa0] sm:$0xff] %v376
                  %v378 = vld [vmem:[%s334 + $0x150] sm:$0xff]
                  %379 = vst [vmem:[%s335 + $0xa8] sm:$0xff] %v378
                  %v380 = vld [vmem:[%s334 + $0x160] sm:$0xff]
                  %381 = vst [vmem:[%s335 + $0xb0] sm:$0xff] %v380
                  %v382 = vld [vmem:[%s334 + $0x170] sm:$0xff]
                  %383 = vst [vmem:[%s335 + $0xb8] sm:$0xff] %v382
                  %v384 = vld [vmem:[%s334 + $0x180] sm:$0xff]
                  %385 = vst [vmem:[%s335 + $0xc0] sm:$0xff] %v384
                  %v386 = vld [vmem:[%s334 + $0x190] sm:$0xff]
                  %387 = vst [vmem:[%s335 + $0xc8] sm:$0xff] %v386
                  %v388 = vld [vmem:[%s334 + $0x1a0] sm:$0xff]
                  %389 = vst [vmem:[%s335 + $0xd0] sm:$0xff] %v388
                  %v390 = vld [vmem:[%s334 + $0x1b0] sm:$0xff]
                  %391 = vst [vmem:[%s335 + $0xd8] sm:$0xff] %v390
                  %v392 = vld [vmem:[%s334 + $0x1c0] sm:$0xff]
                  %393 = vst [vmem:[%s335 + $0xe0] sm:$0xff] %v392
                  %v394 = vld [vmem:[%s334 + $0x1d0] sm:$0xff]
                  %395 = vst [vmem:[%s335 + $0xe8] sm:$0xff] %v394
                  %v396 = vld [vmem:[%s334 + $0x1e0] sm:$0xff]
                  %397 = vst [vmem:[%s335 + $0xf0] sm:$0xff] %v396
                  %v398 = vld [vmem:[%s334 + $0x1f0] sm:$0xff]
                  %399 = vst [vmem:[%s335 + $0xf8] sm:$0xff] %v398
                  %v400 = vld [vmem:[%s334 + $0x200] sm:$0xff]
                  %401 = vst [vmem:[%s335 + $0x100] sm:$0xff] %v400
                  %v402 = vld [vmem:[%s334 + $0x210] sm:$0xff]
                  %403 = vst [vmem:[%s335 + $0x108] sm:$0xff] %v402
                  %v404 = vld [vmem:[%s334 + $0x220] sm:$0xff]
                  %405 = vst [vmem:[%s335 + $0x110] sm:$0xff] %v404
                  %v406 = vld [vmem:[%s334 + $0x230] sm:$0xff]
                  %407 = vst [vmem:[%s335 + $0x118] sm:$0xff] %v406
                  %v408 = vld [vmem:[%s334 + $0x240] sm:$0xff]
                  %409 = vst [vmem:[%s335 + $0x120] sm:$0xff] %v408
                  %v410 = vld [vmem:[%s334 + $0x250] sm:$0xff]
                  %411 = vst [vmem:[%s335 + $0x128] sm:$0xff] %v410
                  %v412 = vld [vmem:[%s334 + $0x260] sm:$0xff]
                  %413 = vst [vmem:[%s335 + $0x130] sm:$0xff] %v412
                  %v414 = vld [vmem:[%s334 + $0x270] sm:$0xff]
                  %415 = vst [vmem:[%s335 + $0x138] sm:$0xff] %v414
                  %v416 = vld [vmem:[%s334 + $0x280] sm:$0xff]
                  %417 = vst [vmem:[%s335 + $0x140] sm:$0xff] %v416
                  %v418 = vld [vmem:[%s334 + $0x290] sm:$0xff]
                  %419 = vst [vmem:[%s335 + $0x148] sm:$0xff] %v418
                  %v420 = vld [vmem:[%s334 + $0x2a0] sm:$0xff]
                  %421 = vst [vmem:[%s335 + $0x150] sm:$0xff] %v420
                  %v422 = vld [vmem:[%s334 + $0x2b0] sm:$0xff]
                  %423 = vst [vmem:[%s335 + $0x158] sm:$0xff] %v422
                  %v424 = vld [vmem:[%s334 + $0x2c0] sm:$0xff]
                  %425 = vst [vmem:[%s335 + $0x160] sm:$0xff] %v424
                  %v426 = vld [vmem:[%s334 + $0x2d0] sm:$0xff]
                  %427 = vst [vmem:[%s335 + $0x168] sm:$0xff] %v426
                  %v428 = vld [vmem:[%s334 + $0x2e0] sm:$0xff]
                  %429 = vst [vmem:[%s335 + $0x170] sm:$0xff] %v428
                  %v430 = vld [vmem:[%s334 + $0x2f0] sm:$0xff]
                  %431 = vst [vmem:[%s335 + $0x178] sm:$0xff] %v430
                  %v432 = vld [vmem:[%s334 + $0x300] sm:$0xff]
                  %433 = vst [vmem:[%s335 + $0x180] sm:$0xff] %v432
                  %v434 = vld [vmem:[%s334 + $0x310] sm:$0xff]
                  %435 = vst [vmem:[%s335 + $0x188] sm:$0xff] %v434
                  %v436 = vld [vmem:[%s334 + $0x320] sm:$0xff]
                  %437 = vst [vmem:[%s335 + $0x190] sm:$0xff] %v436
                  %v438 = vld [vmem:[%s334 + $0x330] sm:$0xff]
                  %439 = vst [vmem:[%s335 + $0x198] sm:$0xff] %v438
                  %v440 = vld [vmem:[%s334 + $0x340] sm:$0xff]
                  %441 = vst [vmem:[%s335 + $0x1a0] sm:$0xff] %v440
                  %v442 = vld [vmem:[%s334 + $0x350] sm:$0xff]
                  %443 = vst [vmem:[%s335 + $0x1a8] sm:$0xff] %v442
                  %v444 = vld [vmem:[%s334 + $0x360] sm:$0xff]
                  %445 = vst [vmem:[%s335 + $0x1b0] sm:$0xff] %v444
                  %v446 = vld [vmem:[%s334 + $0x370] sm:$0xff]
                  %447 = vst [vmem:[%s335 + $0x1b8] sm:$0xff] %v446
                  %v448 = vld [vmem:[%s334 + $0x380] sm:$0xff]
                  %449 = vst [vmem:[%s335 + $0x1c0] sm:$0xff] %v448
                  %v450 = vld [vmem:[%s334 + $0x390] sm:$0xff]
                  %451 = vst [vmem:[%s335 + $0x1c8] sm:$0xff] %v450
                  %v452 = vld [vmem:[%s334 + $0x3a0] sm:$0xff]
                  %453 = vst [vmem:[%s335 + $0x1d0] sm:$0xff] %v452
                  %v454 = vld [vmem:[%s334 + $0x3b0] sm:$0xff]
                  %455 = vst [vmem:[%s335 + $0x1d8] sm:$0xff] %v454
                  %v456 = vld [vmem:[%s334 + $0x3c0] sm:$0xff]
                  %457 = vst [vmem:[%s335 + $0x1e0] sm:$0xff] %v456
                  %v458 = vld [vmem:[%s334 + $0x3d0] sm:$0xff]
                  %459 = vst [vmem:[%s335 + $0x1e8] sm:$0xff] %v458
                  %v460 = vld [vmem:[%s334 + $0x3e0] sm:$0xff]
                  %461 = vst [vmem:[%s335 + $0x1f0] sm:$0xff] %v460
                  %v462 = vld [vmem:[%s334 + $0x3f0] sm:$0xff]
                  %463 = vst [vmem:[%s335 + $0x1f8] sm:$0xff] %v462
                $region52: #{skin_classifier_forward.14} parent=46 // loop_footer
                  %s333 = sadd.s32 1, %s329
                $region53: #{skin_classifier_forward.14} parent=46 // loop_footer_branch
                  %328 = sbr.rel target = $region49
                $region54: #{skin_classifier_forward.14} parent=46 // loop_exit
                  _
              $region47: #{skin_classifier_forward.14} parent=31 // pred_fallthru
                _
              // Predicated region
              $region55: #{skin_classifier_forward.14} parent=31 // pred_check
                _
              $region56: #{skin_classifier_forward.14} parent=31 // pred_check_branch
                %465 = sbr.rel target = $region58
              $region57: #{skin_classifier_forward.14} parent=31 // pred_region
                _
              $region58: #{skin_classifier_forward.14} parent=31 // pred_fallthru
                _
            $region32: #{skin_classifier_forward.14} parent=27 // pred_fallthru
              _
            // Predicated region
            $region33: #{skin_classifier_forward.14} parent=27 // pred_check
              _
            $region34: #{skin_classifier_forward.14} parent=27 // pred_check_branch
              %188 = sbr.rel target = $region36
            $region35: #{skin_classifier_forward.14} parent=27 // pred_region
              loop: start=0, step=1, limit=1
              $region37: #{skin_classifier_forward.14} parent=35 // loop_pre_header
                _
              $region38: #{skin_classifier_forward.14} parent=35 // loop_header
                %s191 = sphi 0, %s195
                %p192 = scmp.ge.s32.totalorder %s191, 1
                %s196 = sphi %s182, %s182
                %s197 = sphi %s176, %s176
              $region39: #{skin_classifier_forward.14} parent=35 // loop_header_branch
                %194 = sbr.rel (%p192) target = $region43
              $region40: #{skin_classifier_forward.14} parent=35 // loop_body
                %v198 = vld [vmem:[%s196] sm:$0xff]
                %199 = vst [vmem:[%s197] sm:$0xff] %v198
                %v200 = vld [vmem:[%s196 + $0x10] sm:$0xff]
                %201 = vst [vmem:[%s197 + $0x8] sm:$0xff] %v200
                %v202 = vld [vmem:[%s196 + $0x20] sm:$0xff]
                %203 = vst [vmem:[%s197 + $0x10] sm:$0xff] %v202
                %v204 = vld [vmem:[%s196 + $0x30] sm:$0xff]
                %205 = vst [vmem:[%s197 + $0x18] sm:$0xff] %v204
                %v206 = vld [vmem:[%s196 + $0x40] sm:$0xff]
                %207 = vst [vmem:[%s197 + $0x20] sm:$0xff] %v206
                %v208 = vld [vmem:[%s196 + $0x50] sm:$0xff]
                %209 = vst [vmem:[%s197 + $0x28] sm:$0xff] %v208
                %v210 = vld [vmem:[%s196 + $0x60] sm:$0xff]
                %211 = vst [vmem:[%s197 + $0x30] sm:$0xff] %v210
                %v212 = vld [vmem:[%s196 + $0x70] sm:$0xff]
                %213 = vst [vmem:[%s197 + $0x38] sm:$0xff] %v212
                %v214 = vld [vmem:[%s196 + $0x80] sm:$0xff]
                %215 = vst [vmem:[%s197 + $0x40] sm:$0xff] %v214
                %v216 = vld [vmem:[%s196 + $0x90] sm:$0xff]
                %217 = vst [vmem:[%s197 + $0x48] sm:$0xff] %v216
                %v218 = vld [vmem:[%s196 + $0xa0] sm:$0xff]
                %219 = vst [vmem:[%s197 + $0x50] sm:$0xff] %v218
                %v220 = vld [vmem:[%s196 + $0xb0] sm:$0xff]
                %221 = vst [vmem:[%s197 + $0x58] sm:$0xff] %v220
                %v222 = vld [vmem:[%s196 + $0xc0] sm:$0xff]
                %223 = vst [vmem:[%s197 + $0x60] sm:$0xff] %v222
                %v224 = vld [vmem:[%s196 + $0xd0] sm:$0xff]
                %225 = vst [vmem:[%s197 + $0x68] sm:$0xff] %v224
                %v226 = vld [vmem:[%s196 + $0xe0] sm:$0xff]
                %227 = vst [vmem:[%s197 + $0x70] sm:$0xff] %v226
                %v228 = vld [vmem:[%s196 + $0xf0] sm:$0xff]
                %229 = vst [vmem:[%s197 + $0x78] sm:$0xff] %v228
                %v230 = vld [vmem:[%s196 + $0x100] sm:$0xff]
                %231 = vst [vmem:[%s197 + $0x80] sm:$0xff] %v230
                %v232 = vld [vmem:[%s196 + $0x110] sm:$0xff]
                %233 = vst [vmem:[%s197 + $0x88] sm:$0xff] %v232
                %v234 = vld [vmem:[%s196 + $0x120] sm:$0xff]
                %235 = vst [vmem:[%s197 + $0x90] sm:$0xff] %v234
                %v236 = vld [vmem:[%s196 + $0x130] sm:$0xff]
                %237 = vst [vmem:[%s197 + $0x98] sm:$0xff] %v236
                %v238 = vld [vmem:[%s196 + $0x140] sm:$0xff]
                %239 = vst [vmem:[%s197 + $0xa0] sm:$0xff] %v238
                %v240 = vld [vmem:[%s196 + $0x150] sm:$0xff]
                %241 = vst [vmem:[%s197 + $0xa8] sm:$0xff] %v240
                %v242 = vld [vmem:[%s196 + $0x160] sm:$0xff]
                %243 = vst [vmem:[%s197 + $0xb0] sm:$0xff] %v242
                %v244 = vld [vmem:[%s196 + $0x170] sm:$0xff]
                %245 = vst [vmem:[%s197 + $0xb8] sm:$0xff] %v244
                %v246 = vld [vmem:[%s196 + $0x180] sm:$0xff]
                %247 = vst [vmem:[%s197 + $0xc0] sm:$0xff] %v246
                %v248 = vld [vmem:[%s196 + $0x190] sm:$0xff]
                %249 = vst [vmem:[%s197 + $0xc8] sm:$0xff] %v248
                %v250 = vld [vmem:[%s196 + $0x1a0] sm:$0xff]
                %251 = vst [vmem:[%s197 + $0xd0] sm:$0xff] %v250
                %v252 = vld [vmem:[%s196 + $0x1b0] sm:$0xff]
                %253 = vst [vmem:[%s197 + $0xd8] sm:$0xff] %v252
                %v254 = vld [vmem:[%s196 + $0x1c0] sm:$0xff]
                %255 = vst [vmem:[%s197 + $0xe0] sm:$0xff] %v254
                %v256 = vld [vmem:[%s196 + $0x1d0] sm:$0xff]
                %257 = vst [vmem:[%s197 + $0xe8] sm:$0xff] %v256
                %v258 = vld [vmem:[%s196 + $0x1e0] sm:$0xff]
                %259 = vst [vmem:[%s197 + $0xf0] sm:$0xff] %v258
                %v260 = vld [vmem:[%s196 + $0x1f0] sm:$0xff]
                %261 = vst [vmem:[%s197 + $0xf8] sm:$0xff] %v260
                %v262 = vld [vmem:[%s196 + $0x200] sm:$0xff]
                %263 = vst [vmem:[%s197 + $0x100] sm:$0xff] %v262
                %v264 = vld [vmem:[%s196 + $0x210] sm:$0xff]
                %265 = vst [vmem:[%s197 + $0x108] sm:$0xff] %v264
                %v266 = vld [vmem:[%s196 + $0x220] sm:$0xff]
                %267 = vst [vmem:[%s197 + $0x110] sm:$0xff] %v266
                %v268 = vld [vmem:[%s196 + $0x230] sm:$0xff]
                %269 = vst [vmem:[%s197 + $0x118] sm:$0xff] %v268
                %v270 = vld [vmem:[%s196 + $0x240] sm:$0xff]
                %271 = vst [vmem:[%s197 + $0x120] sm:$0xff] %v270
                %v272 = vld [vmem:[%s196 + $0x250] sm:$0xff]
                %273 = vst [vmem:[%s197 + $0x128] sm:$0xff] %v272
                %v274 = vld [vmem:[%s196 + $0x260] sm:$0xff]
                %275 = vst [vmem:[%s197 + $0x130] sm:$0xff] %v274
                %v276 = vld [vmem:[%s196 + $0x270] sm:$0xff]
                %277 = vst [vmem:[%s197 + $0x138] sm:$0xff] %v276
                %v278 = vld [vmem:[%s196 + $0x280] sm:$0xff]
                %279 = vst [vmem:[%s197 + $0x140] sm:$0xff] %v278
                %v280 = vld [vmem:[%s196 + $0x290] sm:$0xff]
                %281 = vst [vmem:[%s197 + $0x148] sm:$0xff] %v280
                %v282 = vld [vmem:[%s196 + $0x2a0] sm:$0xff]
                %283 = vst [vmem:[%s197 + $0x150] sm:$0xff] %v282
                %v284 = vld [vmem:[%s196 + $0x2b0] sm:$0xff]
                %285 = vst [vmem:[%s197 + $0x158] sm:$0xff] %v284
                %v286 = vld [vmem:[%s196 + $0x2c0] sm:$0xff]
                %287 = vst [vmem:[%s197 + $0x160] sm:$0xff] %v286
                %v288 = vld [vmem:[%s196 + $0x2d0] sm:$0xff]
                %289 = vst [vmem:[%s197 + $0x168] sm:$0xff] %v288
                %v290 = vld [vmem:[%s196 + $0x2e0] sm:$0xff]
                %291 = vst [vmem:[%s197 + $0x170] sm:$0xff] %v290
                %v292 = vld [vmem:[%s196 + $0x2f0] sm:$0xff]
                %293 = vst [vmem:[%s197 + $0x178] sm:$0xff] %v292
                %v294 = vld [vmem:[%s196 + $0x300] sm:$0xff]
                %295 = vst [vmem:[%s197 + $0x180] sm:$0xff] %v294
                %v296 = vld [vmem:[%s196 + $0x310] sm:$0xff]
                %297 = vst [vmem:[%s197 + $0x188] sm:$0xff] %v296
                %v298 = vld [vmem:[%s196 + $0x320] sm:$0xff]
                %299 = vst [vmem:[%s197 + $0x190] sm:$0xff] %v298
                %v300 = vld [vmem:[%s196 + $0x330] sm:$0xff]
                %301 = vst [vmem:[%s197 + $0x198] sm:$0xff] %v300
                %v302 = vld [vmem:[%s196 + $0x340] sm:$0xff]
                %303 = vst [vmem:[%s197 + $0x1a0] sm:$0xff] %v302
                %v304 = vld [vmem:[%s196 + $0x350] sm:$0xff]
                %305 = vst [vmem:[%s197 + $0x1a8] sm:$0xff] %v304
                %v306 = vld [vmem:[%s196 + $0x360] sm:$0xff]
                %307 = vst [vmem:[%s197 + $0x1b0] sm:$0xff] %v306
                %v308 = vld [vmem:[%s196 + $0x370] sm:$0xff]
                %309 = vst [vmem:[%s197 + $0x1b8] sm:$0xff] %v308
                %v310 = vld [vmem:[%s196 + $0x380] sm:$0xff]
                %311 = vst [vmem:[%s197 + $0x1c0] sm:$0xff] %v310
                %v312 = vld [vmem:[%s196 + $0x390] sm:$0xff]
                %313 = vst [vmem:[%s197 + $0x1c8] sm:$0xff] %v312
                %v314 = vld [vmem:[%s196 + $0x3a0] sm:$0xff]
                %315 = vst [vmem:[%s197 + $0x1d0] sm:$0xff] %v314
                %v316 = vld [vmem:[%s196 + $0x3b0] sm:$0xff]
                %317 = vst [vmem:[%s197 + $0x1d8] sm:$0xff] %v316
                %v318 = vld [vmem:[%s196 + $0x3c0] sm:$0xff]
                %319 = vst [vmem:[%s197 + $0x1e0] sm:$0xff] %v318
                %v320 = vld [vmem:[%s196 + $0x3d0] sm:$0xff]
                %321 = vst [vmem:[%s197 + $0x1e8] sm:$0xff] %v320
                %v322 = vld [vmem:[%s196 + $0x3e0] sm:$0xff]
                %323 = vst [vmem:[%s197 + $0x1f0] sm:$0xff] %v322
                %v324 = vld [vmem:[%s196 + $0x3f0] sm:$0xff]
                %325 = vst [vmem:[%s197 + $0x1f8] sm:$0xff] %v324
              $region41: #{skin_classifier_forward.14} parent=35 // loop_footer
                %s195 = sadd.s32 1, %s191
              $region42: #{skin_classifier_forward.14} parent=35 // loop_footer_branch
                %190 = sbr.rel target = $region38
              $region43: #{skin_classifier_forward.14} parent=35 // loop_exit
                _
            $region36: #{skin_classifier_forward.14} parent=27 // pred_fallthru
              _
          $region28: #{skin_classifier_forward.14} parent=23 // pred_fallthru
            _
          %466 = vnop
        $region24: #{skin_classifier_forward.14} parent=19 // pred_fallthru
          _
        // Predicated region
        $region59: #{skin_classifier_forward.14} parent=19 // pred_check
          %p467 = pneg %p104
        $region60: #{skin_classifier_forward.14} parent=19 // pred_check_branch
          %469 = sbr.rel (%p467) target = $region62
        $region61: #{skin_classifier_forward.14} parent=19 // pred_region
          %s470 = smul.u32 2, %s17
          %p471 = scmp.lt.s32.totalorder %s470, 3
          %s472 = scalar_select %p471, %s470, 3
          %s473 = scalar_lea.vmem %s2, %s472
          %s474 = smul.u32 2, %s17
        $region62: #{skin_classifier_forward.14} parent=19 // pred_fallthru
          _
      $region20: #{skin_classifier_forward.14} parent=5 // pred_fallthru
        _
      %p475 = scmp.le.s32.totalorder 1, %s9
      %p476 = scmp.lt.s32.totalorder %s9, 3
      %p477 = pnand %p475, %p476
      %p478 = pneg %p477
      // Predicated region
      $region63: #{skin_classifier_forward.14} parent=5 // pred_check
        _
      $region64: #{skin_classifier_forward.14} parent=5 // pred_check_branch
        %480 = sbr.rel (%p477) target = $region66
      $region65: #{skin_classifier_forward.14} parent=5 // pred_region
        %s481 = ssub.s32 %s9, 1
        %s482 = sand.u32 %s71, 1
        %s483 = sand.u32 %s71, 1
        %s484 = smul.addr %s483, 512
        %s485 = scalar_lea.vmem [#allocation3], %s484
        // Predicated region
        $region67: #{skin_classifier_forward.14} parent=65 // pred_check
          %p486 = pneg %p84
        $region68: #{skin_classifier_forward.14} parent=65 // pred_check_branch
          %488 = sbr.rel (%p486) target = $region70
        $region69: #{skin_classifier_forward.14} parent=65 // pred_region
          _
        $region70: #{skin_classifier_forward.14} parent=65 // pred_fallthru
          _
        %s489 = smul.u32 4, %s21
        %p490 = scmp.lt.s32.totalorder %s19, 0
        %s491 = scalar_select %p490, %s19, 0
        %p492 = scmp.lt.s32.totalorder %s489, 3
        %s493 = scalar_select %p492, %s489, 3
        %s494 = smul.addr %s491, 4
        %s495 = sadd.s32 %s493, %s494
        %s496 = smul.addr %s495, 8
        %s497 = scalar_lea.vmem %s0, %s496
        %p498 = pneg %p56
        %p499 = pneg %p53
        %s500 = sand.u32 %s71, 1
        %s501 = sand.u32 %s71, 1
        %s502 = smul.addr %s501, 512
        %s503 = scalar_lea.vmem [#allocation3], %s502
        %p504 = pneg %p84
        %p505 = pneg %p81
        %s506 = smul.u32 2, %s20
        %p507 = scmp.lt.s32.totalorder %s506, 3
        %s508 = scalar_select %p507, %s506, 3
        %s509 = scalar_lea.vmem %s2, %s508
        %p510 = pneg %p110
        %p511 = pneg %p107
        %p512 = pneg %p138
        %p513 = pneg %p135
        %s514 = smul.u32 2, %s20
        %p515 = scmp.lt.s32.totalorder %s19, 0
        %s516 = scalar_select %p515, %s19, 0
        %p517 = scmp.lt.s32.totalorder %s514, 3
        %s518 = scalar_select %p517, %s514, 3
        %s519 = smul.addr %s516, 4
        %s520 = sadd.s32 %s518, %s519
        %s521 = smul.addr %s520, 8
        %s522 = scalar_lea.vmem %s3, %s521
        %s523 = smul.u32 4, %s21
        %p524 = scmp.lt.s32.totalorder %s19, 0
        %s525 = scalar_select %p524, %s19, 0
        %p526 = scmp.lt.s32.totalorder %s523, 3
        %s527 = scalar_select %p526, %s523, 3
        %s528 = smul.addr %s525, 4
        %s529 = sadd.s32 %s527, %s528
        %s530 = smul.addr %s529, 8
        %s531 = scalar_lea.vmem %s0, %s530
        %s532 = smul.u32 4, %s21
        %s533 = smul.u32 64, %s21
        %s534 = smul.u32 2, %s20
        %s535 = smul.u32 2, %s20
        %p536 = scmp.lt.s32.totalorder %s535, 3
        %s537 = scalar_select %p536, %s535, 3
        %s538 = scalar_lea.vmem %s2, %s537
        %s539 = smul.u32 2, %s20
        %s540 = smul.u32 2, %s20
        %p541 = scmp.lt.s32.totalorder %s19, 0
        %s542 = scalar_select %p541, %s19, 0
        %p543 = scmp.lt.s32.totalorder %s540, 3
        %s544 = scalar_select %p543, %s540, 3
        %s545 = smul.addr %s542, 4
        %s546 = sadd.s32 %s544, %s545
        %s547 = smul.addr %s546, 8
        %s548 = scalar_lea.vmem %s3, %s547
        %s549 = smul.u32 2, %s20
        %p550 = scmp.eq.s32.totalorder %s21, 0
        // Predicated region
        $region71: #{skin_classifier_forward.14} parent=65 // pred_check
          %p551 = pneg %p550
        $region72: #{skin_classifier_forward.14} parent=65 // pred_check_branch
          %553 = sbr.rel (%p551) target = $region74
        $region73: #{skin_classifier_forward.14} parent=65 // pred_region
          %554 = vst [vmem:[#allocation2] sm:$0xff] 0.0
          %555 = vst [vmem:[#allocation2 + $0x8] sm:$0xff] 0.0
        $region74: #{skin_classifier_forward.14} parent=65 // pred_fallthru
          _
        %v556 = vld [vmem:[#allocation2] sm:$0xff]
        %v557 = vld [vmem:[#allocation2 + $0x8] sm:$0xff]
        %v558 = vld [vmem:[%s531] sm:$0xff]
        %v559 = vld [vmem:[%s531 + $0x8] sm:$0xff]
        %v560 = vld [vmem:[%s531 + $0x10] sm:$0xff]
        %v561 = vld [vmem:[%s531 + $0x18] sm:$0xff]
        %v562 = vpack.c.bf16 %v558, %v558
        %v563 = vpack.c.bf16 %v559, %v559
        %v564 = vpack.c.bf16 %v560, %v560
        %v565 = vpack.c.bf16 %v561, %v561
        %v566 = vld [vmem:[%s485] sm:$0xff]
        %v567 = vld [vmem:[%s485 + $0x8] sm:$0xff]
        %v568 = vld [vmem:[%s485 + $0x10] sm:$0xff]
        %v569 = vld [vmem:[%s485 + $0x18] sm:$0xff]
        %v570 = vld [vmem:[%s485 + $0x20] sm:$0xff]
        %v571 = vld [vmem:[%s485 + $0x28] sm:$0xff]
        %v572 = vld [vmem:[%s485 + $0x30] sm:$0xff]
        %v573 = vld [vmem:[%s485 + $0x38] sm:$0xff]
        %v574 = vld [vmem:[%s485 + $0x40] sm:$0xff]
        %v575 = vld [vmem:[%s485 + $0x48] sm:$0xff]
        %v576 = vld [vmem:[%s485 + $0x50] sm:$0xff]
        %v577 = vld [vmem:[%s485 + $0x58] sm:$0xff]
        %v578 = vld [vmem:[%s485 + $0x60] sm:$0xff]
        %v579 = vld [vmem:[%s485 + $0x68] sm:$0xff]
        %v580 = vld [vmem:[%s485 + $0x70] sm:$0xff]
        %v581 = vld [vmem:[%s485 + $0x78] sm:$0xff]
        %v582 = vld [vmem:[%s485 + $0x80] sm:$0xff]
        %v583 = vld [vmem:[%s485 + $0x88] sm:$0xff]
        %v584 = vld [vmem:[%s485 + $0x90] sm:$0xff]
        %v585 = vld [vmem:[%s485 + $0x98] sm:$0xff]
        %v586 = vld [vmem:[%s485 + $0xa0] sm:$0xff]
        %v587 = vld [vmem:[%s485 + $0xa8] sm:$0xff]
        %v588 = vld [vmem:[%s485 + $0xb0] sm:$0xff]
        %v589 = vld [vmem:[%s485 + $0xb8] sm:$0xff]
        %v590 = vld [vmem:[%s485 + $0xc0] sm:$0xff]
        %v591 = vld [vmem:[%s485 + $0xc8] sm:$0xff]
        %v592 = vld [vmem:[%s485 + $0xd0] sm:$0xff]
        %v593 = vld [vmem:[%s485 + $0xd8] sm:$0xff]
        %v594 = vld [vmem:[%s485 + $0xe0] sm:$0xff]
        %v595 = vld [vmem:[%s485 + $0xe8] sm:$0xff]
        %v596 = vld [vmem:[%s485 + $0xf0] sm:$0xff]
        %v597 = vld [vmem:[%s485 + $0xf8] sm:$0xff]
        %v598 = vld [vmem:[%s485 + $0x100] sm:$0xff]
        %v599 = vld [vmem:[%s485 + $0x108] sm:$0xff]
        %v600 = vld [vmem:[%s485 + $0x110] sm:$0xff]
        %v601 = vld [vmem:[%s485 + $0x118] sm:$0xff]
        %v602 = vld [vmem:[%s485 + $0x120] sm:$0xff]
        %v603 = vld [vmem:[%s485 + $0x128] sm:$0xff]
        %v604 = vld [vmem:[%s485 + $0x130] sm:$0xff]
        %v605 = vld [vmem:[%s485 + $0x138] sm:$0xff]
        %v606 = vld [vmem:[%s485 + $0x140] sm:$0xff]
        %v607 = vld [vmem:[%s485 + $0x148] sm:$0xff]
        %v608 = vld [vmem:[%s485 + $0x150] sm:$0xff]
        %v609 = vld [vmem:[%s485 + $0x158] sm:$0xff]
        %v610 = vld [vmem:[%s485 + $0x160] sm:$0xff]
        %v611 = vld [vmem:[%s485 + $0x168] sm:$0xff]
        %v612 = vld [vmem:[%s485 + $0x170] sm:$0xff]
        %v613 = vld [vmem:[%s485 + $0x178] sm:$0xff]
        %v614 = vld [vmem:[%s485 + $0x180] sm:$0xff]
        %v615 = vld [vmem:[%s485 + $0x188] sm:$0xff]
        %v616 = vld [vmem:[%s485 + $0x190] sm:$0xff]
        %v617 = vld [vmem:[%s485 + $0x198] sm:$0xff]
        %v618 = vld [vmem:[%s485 + $0x1a0] sm:$0xff]
        %v619 = vld [vmem:[%s485 + $0x1a8] sm:$0xff]
        %v620 = vld [vmem:[%s485 + $0x1b0] sm:$0xff]
        %v621 = vld [vmem:[%s485 + $0x1b8] sm:$0xff]
        %v622 = vld [vmem:[%s485 + $0x1c0] sm:$0xff]
        %v623 = vld [vmem:[%s485 + $0x1c8] sm:$0xff]
        %v624 = vld [vmem:[%s485 + $0x1d0] sm:$0xff]
        %v625 = vld [vmem:[%s485 + $0x1d8] sm:$0xff]
        %v626 = vld [vmem:[%s485 + $0x1e0] sm:$0xff]
        %v627 = vld [vmem:[%s485 + $0x1e8] sm:$0xff]
        %v628 = vld [vmem:[%s485 + $0x1f0] sm:$0xff]
        %v629 = vld [vmem:[%s485 + $0x1f8] sm:$0xff]
        %v694 = vunpack.c.l.b16 %v566
        %v695 = vunpack.c.h.b16 %v566
        %v696 = vunpack.c.l.b16 %v567
        %v697 = vunpack.c.h.b16 %v567
        %v698 = vunpack.c.l.b16 %v568
        %v699 = vunpack.c.h.b16 %v568
        %v700 = vunpack.c.l.b16 %v569
        %v701 = vunpack.c.h.b16 %v569
        %v702 = vunpack.c.l.b16 %v570
        %v703 = vunpack.c.h.b16 %v570
        %v704 = vunpack.c.l.b16 %v571
        %v705 = vunpack.c.h.b16 %v571
        %v706 = vunpack.c.l.b16 %v572
        %v707 = vunpack.c.h.b16 %v572
        %v708 = vunpack.c.l.b16 %v573
        %v709 = vunpack.c.h.b16 %v573
        %v710 = vunpack.c.l.b16 %v574
        %v711 = vunpack.c.h.b16 %v574
        %v712 = vunpack.c.l.b16 %v575
        %v713 = vunpack.c.h.b16 %v575
        %v714 = vunpack.c.l.b16 %v576
        %v715 = vunpack.c.h.b16 %v576
        %v716 = vunpack.c.l.b16 %v577
        %v717 = vunpack.c.h.b16 %v577
        %v718 = vunpack.c.l.b16 %v578
        %v719 = vunpack.c.h.b16 %v578
        %v720 = vunpack.c.l.b16 %v579
        %v721 = vunpack.c.h.b16 %v579
        %v722 = vunpack.c.l.b16 %v580
        %v723 = vunpack.c.h.b16 %v580
        %v724 = vunpack.c.l.b16 %v581
        %v725 = vunpack.c.h.b16 %v581
        %v726 = vunpack.c.l.b16 %v582
        %v727 = vunpack.c.h.b16 %v582
        %v728 = vunpack.c.l.b16 %v583
        %v729 = vunpack.c.h.b16 %v583
        %v730 = vunpack.c.l.b16 %v584
        %v731 = vunpack.c.h.b16 %v584
        %v732 = vunpack.c.l.b16 %v585
        %v733 = vunpack.c.h.b16 %v585
        %v734 = vunpack.c.l.b16 %v586
        %v735 = vunpack.c.h.b16 %v586
        %v736 = vunpack.c.l.b16 %v587
        %v737 = vunpack.c.h.b16 %v587
        %v738 = vunpack.c.l.b16 %v588
        %v739 = vunpack.c.h.b16 %v588
        %v740 = vunpack.c.l.b16 %v589
        %v741 = vunpack.c.h.b16 %v589
        %v742 = vunpack.c.l.b16 %v590
        %v743 = vunpack.c.h.b16 %v590
        %v744 = vunpack.c.l.b16 %v591
        %v745 = vunpack.c.h.b16 %v591
        %v746 = vunpack.c.l.b16 %v592
        %v747 = vunpack.c.h.b16 %v592
        %v748 = vunpack.c.l.b16 %v593
        %v749 = vunpack.c.h.b16 %v593
        %v750 = vunpack.c.l.b16 %v594
        %v751 = vunpack.c.h.b16 %v594
        %v752 = vunpack.c.l.b16 %v595
        %v753 = vunpack.c.h.b16 %v595
        %v754 = vunpack.c.l.b16 %v596
        %v755 = vunpack.c.h.b16 %v596
        %v756 = vunpack.c.l.b16 %v597
        %v757 = vunpack.c.h.b16 %v597
        %v758 = vunpack.c.l.b16 %v598
        %v759 = vunpack.c.h.b16 %v598
        %v760 = vunpack.c.l.b16 %v599
        %v761 = vunpack.c.h.b16 %v599
        %v762 = vunpack.c.l.b16 %v600
        %v763 = vunpack.c.h.b16 %v600
        %v764 = vunpack.c.l.b16 %v601
        %v765 = vunpack.c.h.b16 %v601
        %v766 = vunpack.c.l.b16 %v602
        %v767 = vunpack.c.h.b16 %v602
        %v768 = vunpack.c.l.b16 %v603
        %v769 = vunpack.c.h.b16 %v603
        %v770 = vunpack.c.l.b16 %v604
        %v771 = vunpack.c.h.b16 %v604
        %v772 = vunpack.c.l.b16 %v605
        %v773 = vunpack.c.h.b16 %v605
        %v774 = vunpack.c.l.b16 %v606
        %v775 = vunpack.c.h.b16 %v606
        %v776 = vunpack.c.l.b16 %v607
        %v777 = vunpack.c.h.b16 %v607
        %v778 = vunpack.c.l.b16 %v608
        %v779 = vunpack.c.h.b16 %v608
        %v780 = vunpack.c.l.b16 %v609
        %v781 = vunpack.c.h.b16 %v609
        %v782 = vunpack.c.l.b16 %v610
        %v783 = vunpack.c.h.b16 %v610
        %v784 = vunpack.c.l.b16 %v611
        %v785 = vunpack.c.h.b16 %v611
        %v786 = vunpack.c.l.b16 %v612
        %v787 = vunpack.c.h.b16 %v612
        %v788 = vunpack.c.l.b16 %v613
        %v789 = vunpack.c.h.b16 %v613
        %v790 = vunpack.c.l.b16 %v614
        %v791 = vunpack.c.h.b16 %v614
        %v792 = vunpack.c.l.b16 %v615
        %v793 = vunpack.c.h.b16 %v615
        %v794 = vunpack.c.l.b16 %v616
        %v795 = vunpack.c.h.b16 %v616
        %v796 = vunpack.c.l.b16 %v617
        %v797 = vunpack.c.h.b16 %v617
        %v798 = vunpack.c.l.b16 %v618
        %v799 = vunpack.c.h.b16 %v618
        %v800 = vunpack.c.l.b16 %v619
        %v801 = vunpack.c.h.b16 %v619
        %v802 = vunpack.c.l.b16 %v620
        %v803 = vunpack.c.h.b16 %v620
        %v804 = vunpack.c.l.b16 %v621
        %v805 = vunpack.c.h.b16 %v621
        %v806 = vunpack.c.l.b16 %v622
        %v807 = vunpack.c.h.b16 %v622
        %v808 = vunpack.c.l.b16 %v623
        %v809 = vunpack.c.h.b16 %v623
        %v810 = vunpack.c.l.b16 %v624
        %v811 = vunpack.c.h.b16 %v624
        %v812 = vunpack.c.l.b16 %v625
        %v813 = vunpack.c.h.b16 %v625
        %v814 = vunpack.c.l.b16 %v626
        %v815 = vunpack.c.h.b16 %v626
        %v816 = vunpack.c.l.b16 %v627
        %v817 = vunpack.c.h.b16 %v627
        %v818 = vunpack.c.l.b16 %v628
        %v819 = vunpack.c.h.b16 %v628
        %v820 = vunpack.c.l.b16 %v629
        %v821 = vunpack.c.h.b16 %v629
        %v822 = vpack.c.b16 %v696, %v694
        %v823 = vpack.c.b16 %v697, %v695
        %v824 = vpack.c.b16 %v700, %v698
        %v825 = vpack.c.b16 %v701, %v699
        %v826 = vpack.c.b16 %v704, %v702
        %v827 = vpack.c.b16 %v705, %v703
        %v828 = vpack.c.b16 %v708, %v706
        %v829 = vpack.c.b16 %v709, %v707
        %v830 = vpack.c.b16 %v712, %v710
        %v831 = vpack.c.b16 %v713, %v711
        %v832 = vpack.c.b16 %v716, %v714
        %v833 = vpack.c.b16 %v717, %v715
        %v834 = vpack.c.b16 %v720, %v718
        %v835 = vpack.c.b16 %v721, %v719
        %v836 = vpack.c.b16 %v724, %v722
        %v837 = vpack.c.b16 %v725, %v723
        %v838 = vpack.c.b16 %v728, %v726
        %v839 = vpack.c.b16 %v729, %v727
        %v840 = vpack.c.b16 %v732, %v730
        %v841 = vpack.c.b16 %v733, %v731
        %v842 = vpack.c.b16 %v736, %v734
        %v843 = vpack.c.b16 %v737, %v735
        %v844 = vpack.c.b16 %v740, %v738
        %v845 = vpack.c.b16 %v741, %v739
        %v846 = vpack.c.b16 %v744, %v742
        %v847 = vpack.c.b16 %v745, %v743
        %v848 = vpack.c.b16 %v748, %v746
        %v849 = vpack.c.b16 %v749, %v747
        %v850 = vpack.c.b16 %v752, %v750
        %v851 = vpack.c.b16 %v753, %v751
        %v852 = vpack.c.b16 %v756, %v754
        %v853 = vpack.c.b16 %v757, %v755
        %v854 = vpack.c.b16 %v760, %v758
        %v855 = vpack.c.b16 %v761, %v759
        %v856 = vpack.c.b16 %v764, %v762
        %v857 = vpack.c.b16 %v765, %v763
        %v858 = vpack.c.b16 %v768, %v766
        %v859 = vpack.c.b16 %v769, %v767
        %v860 = vpack.c.b16 %v772, %v770
        %v861 = vpack.c.b16 %v773, %v771
        %v862 = vpack.c.b16 %v776, %v774
        %v863 = vpack.c.b16 %v777, %v775
        %v864 = vpack.c.b16 %v780, %v778
        %v865 = vpack.c.b16 %v781, %v779
        %v866 = vpack.c.b16 %v784, %v782
        %v867 = vpack.c.b16 %v785, %v783
        %v868 = vpack.c.b16 %v788, %v786
        %v869 = vpack.c.b16 %v789, %v787
        %v870 = vpack.c.b16 %v792, %v790
        %v871 = vpack.c.b16 %v793, %v791
        %v872 = vpack.c.b16 %v796, %v794
        %v873 = vpack.c.b16 %v797, %v795
        %v874 = vpack.c.b16 %v800, %v798
        %v875 = vpack.c.b16 %v801, %v799
        %v876 = vpack.c.b16 %v804, %v802
        %v877 = vpack.c.b16 %v805, %v803
        %v878 = vpack.c.b16 %v808, %v806
        %v879 = vpack.c.b16 %v809, %v807
        %v880 = vpack.c.b16 %v812, %v810
        %v881 = vpack.c.b16 %v813, %v811
        %v882 = vpack.c.b16 %v816, %v814
        %v883 = vpack.c.b16 %v817, %v815
        %v884 = vpack.c.b16 %v820, %v818
        %v885 = vpack.c.b16 %v821, %v819
        %950 = vmatprep.subr.bf16.mxu0 %v823
        %951 = vmatpush1.bf16.msra.mxu0 %v822
        %952 = vmatprep.subr.bf16.mxu0 %v825
        %953 = vmatpush1.bf16.msra.mxu0 %v824
        %954 = vmatprep.subr.bf16.mxu0 %v827
        %955 = vmatpush1.bf16.msra.mxu0 %v826
        %956 = vmatprep.subr.bf16.mxu0 %v829
        %957 = vmatpush1.bf16.msra.mxu0 %v828
        %958 = vmatprep.subr.bf16.mxu0 %v831
        %959 = vmatpush1.bf16.msra.mxu0 %v830
        %960 = vmatprep.subr.bf16.mxu0 %v833
        %961 = vmatpush1.bf16.msra.mxu0 %v832
        %962 = vmatprep.subr.bf16.mxu0 %v835
        %963 = vmatpush1.bf16.msra.mxu0 %v834
        %964 = vmatprep.subr.bf16.mxu0 %v837
        %965 = vmatpush1.bf16.msra.mxu0 %v836
        %966 = vmatprep.subr.bf16.mxu0 %v839
        %967 = vmatpush1.bf16.msra.mxu0 %v838
        %968 = vmatprep.subr.bf16.mxu0 %v841
        %969 = vmatpush1.bf16.msra.mxu0 %v840
        %970 = vmatprep.subr.bf16.mxu0 %v843
        %971 = vmatpush1.bf16.msra.mxu0 %v842
        %972 = vmatprep.subr.bf16.mxu0 %v845
        %973 = vmatpush1.bf16.msra.mxu0 %v844
        %974 = vmatprep.subr.bf16.mxu0 %v847
        %975 = vmatpush1.bf16.msra.mxu0 %v846
        %976 = vmatprep.subr.bf16.mxu0 %v849
        %977 = vmatpush1.bf16.msra.mxu0 %v848
        %978 = vmatprep.subr.bf16.mxu0 %v851
        %979 = vmatpush1.bf16.msra.mxu0 %v850
        %980 = vmatprep.subr.bf16.mxu0 %v853
        %981 = vmatpush1.bf16.msra.mxu0 %v852
        %982 = vmatprep.mubr.bf16.mxu0 %v563
        %983 = vmatmul.mubr.bf16.gmra.mrb[0].mxu0 %v562
        %v984 = vpop.f32.mrb[0].mxu0
        %v985 = vadd.f32 0.0, %v984
        %v986 = vpop.f32.mrb[0].mxu0
        %v987 = vadd.f32 0.0, %v986
        %v988 = vpop.f32.mrb[0].mxu0
        %v989 = vpop.f32.mrb[0].mxu0
        %990 = vdwg.mxu0
        %991 = vmatprep.subr.bf16.mxu0 %v855
        %992 = vmatpush1.bf16.msra.mxu0 %v854
        %993 = vmatprep.subr.bf16.mxu0 %v857
        %994 = vmatpush1.bf16.msra.mxu0 %v856
        %995 = vmatprep.subr.bf16.mxu0 %v859
        %996 = vmatpush1.bf16.msra.mxu0 %v858
        %997 = vmatprep.subr.bf16.mxu0 %v861
        %998 = vmatpush1.bf16.msra.mxu0 %v860
        %999 = vmatprep.subr.bf16.mxu0 %v863
        %1000 = vmatpush1.bf16.msra.mxu0 %v862
        %1001 = vmatprep.subr.bf16.mxu0 %v865
        %1002 = vmatpush1.bf16.msra.mxu0 %v864
        %1003 = vmatprep.subr.bf16.mxu0 %v867
        %1004 = vmatpush1.bf16.msra.mxu0 %v866
        %1005 = vmatprep.subr.bf16.mxu0 %v869
        %1006 = vmatpush1.bf16.msra.mxu0 %v868
        %1007 = vmatprep.subr.bf16.mxu0 %v871
        %1008 = vmatpush1.bf16.msra.mxu0 %v870
        %1009 = vmatprep.subr.bf16.mxu0 %v873
        %1010 = vmatpush1.bf16.msra.mxu0 %v872
        %1011 = vmatprep.subr.bf16.mxu0 %v875
        %1012 = vmatpush1.bf16.msra.mxu0 %v874
        %1013 = vmatprep.subr.bf16.mxu0 %v877
        %1014 = vmatpush1.bf16.msra.mxu0 %v876
        %1015 = vmatprep.subr.bf16.mxu0 %v879
        %1016 = vmatpush1.bf16.msra.mxu0 %v878
        %1017 = vmatprep.subr.bf16.mxu0 %v881
        %1018 = vmatpush1.bf16.msra.mxu0 %v880
        %1019 = vmatprep.subr.bf16.mxu0 %v883
        %1020 = vmatpush1.bf16.msra.mxu0 %v882
        %1021 = vmatprep.subr.bf16.mxu0 %v885
        %1022 = vmatpush1.bf16.msra.mxu0 %v884
        %1023 = vmatprep.mubr.bf16.mxu0 %v565
        %1024 = vmatmul.mubr.bf16.gmra.mrb[0].mxu0 %v564
        %v1025 = vpop.f32.mrb[0].mxu0
        %v1026 = vadd.f32 %v985, %v1025
        %v1027 = vpop.f32.mrb[0].mxu0
        %v1028 = vadd.f32 %v987, %v1027
        %v1029 = vpop.f32.mrb[0].mxu0
        %v1030 = vpop.f32.mrb[0].mxu0
        %1031 = vdwg.mxu0
        %v1032 = vadd.f32 %v556, %v1026
        %v1033 = vadd.f32 %v557, %v1028
        %1034 = vst [vmem:[#allocation2] sm:$0xff] %v1032
        %1035 = vst [vmem:[#allocation2 + $0x8] sm:$0xff] %v1033
        // Predicated region
        $region75: #{skin_classifier_forward.14} parent=65 // pred_check
          %p1036 = pneg %p550
        $region76: #{skin_classifier_forward.14} parent=65 // pred_check_branch
          %1038 = sbr.rel (%p1036) target = $region78
        $region77: #{skin_classifier_forward.14} parent=65 // pred_region
          %v1039 = vld [vmem:[#allocation2] sm:$0xff]
          %v1040 = vld [vmem:[#allocation2 + $0x8] sm:$0xff]
          %v1041 = vld [vmem:[%s538] sm:$0x3]
          %v1043 = vlaneseq
          %v1044 = vshrl.u32 %v1043, 7
          %v1045 = vsub.s32 0, %v1044
          %v1046 = vrot.slane %v1041, %v1045
          %v1047 = vlaneseq
          %v1048 = vshrl.u32 %v1047, 7
          %v1049 = vsub.s32 1, %v1048
          %v1050 = vrot.slane %v1041, %v1049
          %v1053 = vadd.f32 %v1039, %v1046
          %v1054 = vadd.f32 %v1040, %v1050
          %v1055 = vmax.f32 %v1053, 0.0
          %v1056 = vmax.f32 %v1054, 0.0
          %1057 = vst [vmem:[%s548] sm:$0xff] %v1055
          %1058 = vst [vmem:[%s548 + $0x8] sm:$0xff] %v1056
        $region78: #{skin_classifier_forward.14} parent=65 // pred_fallthru
          _
        %s1059 = smul.u32 2, %s20
        %p1060 = scmp.lt.s32.totalorder %s19, 0
        %s1061 = scalar_select %p1060, %s19, 0
        %p1062 = scmp.lt.s32.totalorder %s1059, 3
        %s1063 = scalar_select %p1062, %s1059, 3
        %s1064 = smul.addr %s1061, 4
        %s1065 = sadd.s32 %s1063, %s1064
        %s1066 = smul.addr %s1065, 8
        %s1067 = scalar_lea.vmem %s3, %s1066
        // Predicated region
        $region79: #{skin_classifier_forward.14} parent=65 // pred_check
          %p1068 = pneg %p135
        $region80: #{skin_classifier_forward.14} parent=65 // pred_check_branch
          %1070 = sbr.rel (%p1068) target = $region82
        $region81: #{skin_classifier_forward.14} parent=65 // pred_region
          %s1071 = smul.u32 2, %s20
        $region82: #{skin_classifier_forward.14} parent=65 // pred_fallthru
          _
      $region66: #{skin_classifier_forward.14} parent=5 // pred_fallthru
        _
      %p1072 = scmp.le.s32.totalorder 2, %s9
      // Predicated region
      $region83: #{skin_classifier_forward.14} parent=5 // pred_check
        %p1073 = pneg %p1072
      $region84: #{skin_classifier_forward.14} parent=5 // pred_check_branch
        %1075 = sbr.rel (%p1073) target = $region86
      $region85: #{skin_classifier_forward.14} parent=5 // pred_region
        %s1076 = ssub.s32 %s9, 2
        // Predicated region
        $region87: #{skin_classifier_forward.14} parent=85 // pred_check
          %p1077 = pneg %p141
        $region88: #{skin_classifier_forward.14} parent=85 // pred_check_branch
          %1079 = sbr.rel (%p1077) target = $region90
        $region89: #{skin_classifier_forward.14} parent=85 // pred_region
          %s1080 = smul.u32 2, %s23
          %p1081 = scmp.lt.s32.totalorder %s22, 0
          %s1082 = scalar_select %p1081, %s22, 0
          %p1083 = scmp.lt.s32.totalorder %s1080, 3
          %s1084 = scalar_select %p1083, %s1080, 3
          %s1085 = smul.addr %s1082, 4
          %s1086 = sadd.s32 %s1084, %s1085
          %s1087 = smul.addr %s1086, 8
          %s1088 = scalar_lea.vmem %s3, %s1087
        $region90: #{skin_classifier_forward.14} parent=85 // pred_fallthru
          _
      $region86: #{skin_classifier_forward.14} parent=5 // pred_fallthru
        _
    $region6: #{skin_classifier_forward.14} parent=1 // loop_footer
      %s13 = sadd.s32 1, %s9
    $region7: #{skin_classifier_forward.14} parent=1 // loop_footer_branch
      %8 = sbr.rel target = $region3
    $region8: #{skin_classifier_forward.14} parent=1 // loop_exit
      _

// kernel: skin_classifier_forward.15
$region0: #{skin_classifier_forward.15}
  #allocation0 [shape = 'u32[]', space=smem, size = 0x4, offset = 0x4, fixed_abs, tag = 'smem constant byte address 0x4 - core index']
  #allocation1 [shape = 'u32[144,128]{1,0:T(1,128)}', space=vmem, size = 0x12000, scoped, tag = 'internal scratch']
  #allocation2 [shape = 'f32[8,128]{1,0:T(8,128)}', space=vmem, size = 0x1000, scoped, tag = 'scratch operand']
  %s0 = inlined_call_operand.vmem [shape: f32[8,512], index: 0, kind: input, shape index: {}]
  %s1 = inlined_call_operand.vmem [shape: bf16[512,128], index: 1, kind: input, shape index: {}]
  %s2 = inlined_call_operand.vmem [shape: f32[1,128], index: 2, kind: input, shape index: {}]
  %s3 = inlined_call_operand.vmem [shape: f32[8,128], index: 3, kind: output, shape index: {}]
  %s4 = sld [smem:[#allocation0]]
  $region30: #{skin_classifier_forward.15} parent=0
    _
  %s6 = ssub.s32 1, %s4
  %s7 = scalar_select 0, %s6, %s4
  // Predicated region
  $region2: #{skin_classifier_forward.15} parent=0 // pred_check
    _
  $region3: #{skin_classifier_forward.15} parent=0 // pred_check_branch
    %9 = sbr.rel (0) target = $region5
  $region4: #{skin_classifier_forward.15} parent=0 // pred_region
    _
  $region5: #{skin_classifier_forward.15} parent=0 // pred_fallthru
    _
  // Predicated region
  $region6: #{skin_classifier_forward.15} parent=0 // pred_check
    _
  $region7: #{skin_classifier_forward.15} parent=0 // pred_check_branch
    %11 = sbr.rel (0) target = $region9
  $region8: #{skin_classifier_forward.15} parent=0 // pred_region
    _
  $region9: #{skin_classifier_forward.15} parent=0 // pred_fallthru
    _
  // Predicated region
  $region10: #{skin_classifier_forward.15} parent=0 // pred_check
    _
  $region11: #{skin_classifier_forward.15} parent=0 // pred_check_branch
    %13 = sbr.rel (0) target = $region13
  $region12: #{skin_classifier_forward.15} parent=0 // pred_region
    _
  $region13: #{skin_classifier_forward.15} parent=0 // pred_fallthru
    _
  %p15 = scmp.eq.s32.totalorder 0, 0
  // Predicated region
  $region14: #{skin_classifier_forward.15} parent=0 // pred_check
    %p16 = pneg %p15
  $region15: #{skin_classifier_forward.15} parent=0 // pred_check_branch
    %18 = sbr.rel (%p16) target = $region17
  $region16: #{skin_classifier_forward.15} parent=0 // pred_region
    %19 = vst [vmem:[#allocation2] sm:$0xff] 0.0
  $region17: #{skin_classifier_forward.15} parent=0 // pred_fallthru
    _
  %v20 = vld [vmem:[#allocation2] sm:$0xff]
  %v21 = vld [vmem:[%s0] sm:$0xff]
  %v22 = vld [vmem:[%s0 + $0x8] sm:$0xff]
  %v23 = vld [vmem:[%s0 + $0x10] sm:$0xff]
  %v24 = vld [vmem:[%s0 + $0x18] sm:$0xff]
  %v25 = vpack.c.bf16 %v21, %v21
  %v26 = vpack.c.bf16 %v22, %v22
  %v27 = vpack.c.bf16 %v23, %v23
  %v28 = vpack.c.bf16 %v24, %v24
  %v29 = vld [vmem:[%s1] sm:$0xf]
  %v30 = vld [vmem:[%s1 + $0x4] sm:$0xf]
  %v31 = vld [vmem:[%s1 + $0x8] sm:$0xf]
  %v32 = vld [vmem:[%s1 + $0xc] sm:$0xf]
  %v33 = vld [vmem:[%s1 + $0x10] sm:$0xf]
  %v34 = vld [vmem:[%s1 + $0x14] sm:$0xf]
  %v35 = vld [vmem:[%s1 + $0x18] sm:$0xf]
  %v36 = vld [vmem:[%s1 + $0x1c] sm:$0xf]
  %v37 = vld [vmem:[%s1 + $0x20] sm:$0xf]
  %v38 = vld [vmem:[%s1 + $0x24] sm:$0xf]
  %v39 = vld [vmem:[%s1 + $0x28] sm:$0xf]
  %v40 = vld [vmem:[%s1 + $0x2c] sm:$0xf]
  %v41 = vld [vmem:[%s1 + $0x30] sm:$0xf]
  %v42 = vld [vmem:[%s1 + $0x34] sm:$0xf]
  %v43 = vld [vmem:[%s1 + $0x38] sm:$0xf]
  %v44 = vld [vmem:[%s1 + $0x3c] sm:$0xf]
  %v45 = vld [vmem:[%s1 + $0x40] sm:$0xf]
  %v46 = vld [vmem:[%s1 + $0x44] sm:$0xf]
  %v47 = vld [vmem:[%s1 + $0x48] sm:$0xf]
  %v48 = vld [vmem:[%s1 + $0x4c] sm:$0xf]
  %v49 = vld [vmem:[%s1 + $0x50] sm:$0xf]
  %v50 = vld [vmem:[%s1 + $0x54] sm:$0xf]
  %v51 = vld [vmem:[%s1 + $0x58] sm:$0xf]
  %v52 = vld [vmem:[%s1 + $0x5c] sm:$0xf]
  %v53 = vld [vmem:[%s1 + $0x60] sm:$0xf]
  %v54 = vld [vmem:[%s1 + $0x64] sm:$0xf]
  %v55 = vld [vmem:[%s1 + $0x68] sm:$0xf]
  %v56 = vld [vmem:[%s1 + $0x6c] sm:$0xf]
  %v57 = vld [vmem:[%s1 + $0x70] sm:$0xf]
  %v58 = vld [vmem:[%s1 + $0x74] sm:$0xf]
  %v59 = vld [vmem:[%s1 + $0x78] sm:$0xf]
  %v60 = vld [vmem:[%s1 + $0x7c] sm:$0xf]
  %v61 = vld [vmem:[%s1 + $0x80] sm:$0xf]
  %v62 = vld [vmem:[%s1 + $0x84] sm:$0xf]
  %v63 = vld [vmem:[%s1 + $0x88] sm:$0xf]
  %v64 = vld [vmem:[%s1 + $0x8c] sm:$0xf]
  %v65 = vld [vmem:[%s1 + $0x90] sm:$0xf]
  %v66 = vld [vmem:[%s1 + $0x94] sm:$0xf]
  %v67 = vld [vmem:[%s1 + $0x98] sm:$0xf]
  %v68 = vld [vmem:[%s1 + $0x9c] sm:$0xf]
  %v69 = vld [vmem:[%s1 + $0xa0] sm:$0xf]
  %v70 = vld [vmem:[%s1 + $0xa4] sm:$0xf]
  %v71 = vld [vmem:[%s1 + $0xa8] sm:$0xf]
  %v72 = vld [vmem:[%s1 + $0xac] sm:$0xf]
  %v73 = vld [vmem:[%s1 + $0xb0] sm:$0xf]
  %v74 = vld [vmem:[%s1 + $0xb4] sm:$0xf]
  %v75 = vld [vmem:[%s1 + $0xb8] sm:$0xf]
  %v76 = vld [vmem:[%s1 + $0xbc] sm:$0xf]
  %v77 = vld [vmem:[%s1 + $0xc0] sm:$0xf]
  %v78 = vld [vmem:[%s1 + $0xc4] sm:$0xf]
  %v79 = vld [vmem:[%s1 + $0xc8] sm:$0xf]
  %v80 = vld [vmem:[%s1 + $0xcc] sm:$0xf]
  %v81 = vld [vmem:[%s1 + $0xd0] sm:$0xf]
  %v82 = vld [vmem:[%s1 + $0xd4] sm:$0xf]
  %v83 = vld [vmem:[%s1 + $0xd8] sm:$0xf]
  %v84 = vld [vmem:[%s1 + $0xdc] sm:$0xf]
  %v85 = vld [vmem:[%s1 + $0xe0] sm:$0xf]
  %v86 = vld [vmem:[%s1 + $0xe4] sm:$0xf]
  %v87 = vld [vmem:[%s1 + $0xe8] sm:$0xf]
  %v88 = vld [vmem:[%s1 + $0xec] sm:$0xf]
  %v89 = vld [vmem:[%s1 + $0xf0] sm:$0xf]
  %v90 = vld [vmem:[%s1 + $0xf4] sm:$0xf]
  %v91 = vld [vmem:[%s1 + $0xf8] sm:$0xf]
  %v92 = vld [vmem:[%s1 + $0xfc] sm:$0xf]
  %v157 = vunpack.c.l.b16 %v29
  %v158 = vunpack.c.l.b16 %v30
  %v159 = vunpack.c.l.b16 %v31
  %v160 = vunpack.c.l.b16 %v32
  %v161 = vunpack.c.l.b16 %v33
  %v162 = vunpack.c.l.b16 %v34
  %v163 = vunpack.c.l.b16 %v35
  %v164 = vunpack.c.l.b16 %v36
  %v165 = vunpack.c.l.b16 %v37
  %v166 = vunpack.c.l.b16 %v38
  %v167 = vunpack.c.l.b16 %v39
  %v168 = vunpack.c.l.b16 %v40
  %v169 = vunpack.c.l.b16 %v41
  %v170 = vunpack.c.l.b16 %v42
  %v171 = vunpack.c.l.b16 %v43
  %v172 = vunpack.c.l.b16 %v44
  %v173 = vunpack.c.l.b16 %v45
  %v174 = vunpack.c.l.b16 %v46
  %v175 = vunpack.c.l.b16 %v47
  %v176 = vunpack.c.l.b16 %v48
  %v177 = vunpack.c.l.b16 %v49
  %v178 = vunpack.c.l.b16 %v50
  %v179 = vunpack.c.l.b16 %v51
  %v180 = vunpack.c.l.b16 %v52
  %v181 = vunpack.c.l.b16 %v53
  %v182 = vunpack.c.l.b16 %v54
  %v183 = vunpack.c.l.b16 %v55
  %v184 = vunpack.c.l.b16 %v56
  %v185 = vunpack.c.l.b16 %v57
  %v186 = vunpack.c.l.b16 %v58
  %v187 = vunpack.c.l.b16 %v59
  %v188 = vunpack.c.l.b16 %v60
  %v189 = vunpack.c.l.b16 %v61
  %v190 = vunpack.c.l.b16 %v62
  %v191 = vunpack.c.l.b16 %v63
  %v192 = vunpack.c.l.b16 %v64
  %v193 = vunpack.c.l.b16 %v65
  %v194 = vunpack.c.l.b16 %v66
  %v195 = vunpack.c.l.b16 %v67
  %v196 = vunpack.c.l.b16 %v68
  %v197 = vunpack.c.l.b16 %v69
  %v198 = vunpack.c.l.b16 %v70
  %v199 = vunpack.c.l.b16 %v71
  %v200 = vunpack.c.l.b16 %v72
  %v201 = vunpack.c.l.b16 %v73
  %v202 = vunpack.c.l.b16 %v74
  %v203 = vunpack.c.l.b16 %v75
  %v204 = vunpack.c.l.b16 %v76
  %v205 = vunpack.c.l.b16 %v77
  %v206 = vunpack.c.l.b16 %v78
  %v207 = vunpack.c.l.b16 %v79
  %v208 = vunpack.c.l.b16 %v80
  %v209 = vunpack.c.l.b16 %v81
  %v210 = vunpack.c.l.b16 %v82
  %v211 = vunpack.c.l.b16 %v83
  %v212 = vunpack.c.l.b16 %v84
  %v213 = vunpack.c.l.b16 %v85
  %v214 = vunpack.c.l.b16 %v86
  %v215 = vunpack.c.l.b16 %v87
  %v216 = vunpack.c.l.b16 %v88
  %v217 = vunpack.c.l.b16 %v89
  %v218 = vunpack.c.l.b16 %v90
  %v219 = vunpack.c.l.b16 %v91
  %v220 = vunpack.c.l.b16 %v92
  %v221 = vpack.c.b16 %v158, %v157
  %v222 = vpack.c.b16 %v160, %v159
  %v223 = vpack.c.b16 %v162, %v161
  %v224 = vpack.c.b16 %v164, %v163
  %v225 = vpack.c.b16 %v166, %v165
  %v226 = vpack.c.b16 %v168, %v167
  %v227 = vpack.c.b16 %v170, %v169
  %v228 = vpack.c.b16 %v172, %v171
  %v229 = vpack.c.b16 %v174, %v173
  %v230 = vpack.c.b16 %v176, %v175
  %v231 = vpack.c.b16 %v178, %v177
  %v232 = vpack.c.b16 %v180, %v179
  %v233 = vpack.c.b16 %v182, %v181
  %v234 = vpack.c.b16 %v184, %v183
  %v235 = vpack.c.b16 %v186, %v185
  %v236 = vpack.c.b16 %v188, %v187
  %v237 = vpack.c.b16 %v190, %v189
  %v238 = vpack.c.b16 %v192, %v191
  %v239 = vpack.c.b16 %v194, %v193
  %v240 = vpack.c.b16 %v196, %v195
  %v241 = vpack.c.b16 %v198, %v197
  %v242 = vpack.c.b16 %v200, %v199
  %v243 = vpack.c.b16 %v202, %v201
  %v244 = vpack.c.b16 %v204, %v203
  %v245 = vpack.c.b16 %v206, %v205
  %v246 = vpack.c.b16 %v208, %v207
  %v247 = vpack.c.b16 %v210, %v209
  %v248 = vpack.c.b16 %v212, %v211
  %v249 = vpack.c.b16 %v214, %v213
  %v250 = vpack.c.b16 %v216, %v215
  %v251 = vpack.c.b16 %v218, %v217
  %v252 = vpack.c.b16 %v220, %v219
  %285 = vmatprep.subr.bf16.mxu0 0
  %286 = vmatpush1.bf16.msra.mxu0 %v221
  %287 = vmatprep.subr.bf16.mxu0 0
  %288 = vmatpush1.bf16.msra.mxu0 %v222
  %289 = vmatprep.subr.bf16.mxu0 0
  %290 = vmatpush1.bf16.msra.mxu0 %v223
  %291 = vmatprep.subr.bf16.mxu0 0
  %292 = vmatpush1.bf16.msra.mxu0 %v224
  %293 = vmatprep.subr.bf16.mxu0 0
  %294 = vmatpush1.bf16.msra.mxu0 %v225
  %295 = vmatprep.subr.bf16.mxu0 0
  %296 = vmatpush1.bf16.msra.mxu0 %v226
  %297 = vmatprep.subr.bf16.mxu0 0
  %298 = vmatpush1.bf16.msra.mxu0 %v227
  %299 = vmatprep.subr.bf16.mxu0 0
  %300 = vmatpush1.bf16.msra.mxu0 %v228
  %301 = vmatprep.subr.bf16.mxu0 0
  %302 = vmatpush1.bf16.msra.mxu0 %v229
  %303 = vmatprep.subr.bf16.mxu0 0
  %304 = vmatpush1.bf16.msra.mxu0 %v230
  %305 = vmatprep.subr.bf16.mxu0 0
  %306 = vmatpush1.bf16.msra.mxu0 %v231
  %307 = vmatprep.subr.bf16.mxu0 0
  %308 = vmatpush1.bf16.msra.mxu0 %v232
  %309 = vmatprep.subr.bf16.mxu0 0
  %310 = vmatpush1.bf16.msra.mxu0 %v233
  %311 = vmatprep.subr.bf16.mxu0 0
  %312 = vmatpush1.bf16.msra.mxu0 %v234
  %313 = vmatprep.subr.bf16.mxu0 0
  %314 = vmatpush1.bf16.msra.mxu0 %v235
  %315 = vmatprep.subr.bf16.mxu0 0
  %316 = vmatpush1.bf16.msra.mxu0 %v236
  %317 = vmatprep.mubr.bf16.mxu0 %v26
  %318 = vmatmul.mubr.bf16.gmra.mrb[0].mxu0 %v25
  %v319 = vpop.f32.mrb[0].mxu0
  %v320 = vadd.f32 0.0, %v319
  %v321 = vpop.f32.mrb[0].mxu0
  %v322 = vpop.f32.mrb[0].mxu0
  %v323 = vpop.f32.mrb[0].mxu0
  %324 = vdwg.mxu0
  %325 = vmatprep.subr.bf16.mxu0 0
  %326 = vmatpush1.bf16.msra.mxu0 %v237
  %327 = vmatprep.subr.bf16.mxu0 0
  %328 = vmatpush1.bf16.msra.mxu0 %v238
  %329 = vmatprep.subr.bf16.mxu0 0
  %330 = vmatpush1.bf16.msra.mxu0 %v239
  %331 = vmatprep.subr.bf16.mxu0 0
  %332 = vmatpush1.bf16.msra.mxu0 %v240
  %333 = vmatprep.subr.bf16.mxu0 0
  %334 = vmatpush1.bf16.msra.mxu0 %v241
  %335 = vmatprep.subr.bf16.mxu0 0
  %336 = vmatpush1.bf16.msra.mxu0 %v242
  %337 = vmatprep.subr.bf16.mxu0 0
  %338 = vmatpush1.bf16.msra.mxu0 %v243
  %339 = vmatprep.subr.bf16.mxu0 0
  %340 = vmatpush1.bf16.msra.mxu0 %v244
  %341 = vmatprep.subr.bf16.mxu0 0
  %342 = vmatpush1.bf16.msra.mxu0 %v245
  %343 = vmatprep.subr.bf16.mxu0 0
  %344 = vmatpush1.bf16.msra.mxu0 %v246
  %345 = vmatprep.subr.bf16.mxu0 0
  %346 = vmatpush1.bf16.msra.mxu0 %v247
  %347 = vmatprep.subr.bf16.mxu0 0
  %348 = vmatpush1.bf16.msra.mxu0 %v248
  %349 = vmatprep.subr.bf16.mxu0 0
  %350 = vmatpush1.bf16.msra.mxu0 %v249
  %351 = vmatprep.subr.bf16.mxu0 0
  %352 = vmatpush1.bf16.msra.mxu0 %v250
  %353 = vmatprep.subr.bf16.mxu0 0
  %354 = vmatpush1.bf16.msra.mxu0 %v251
  %355 = vmatprep.subr.bf16.mxu0 0
  %356 = vmatpush1.bf16.msra.mxu0 %v252
  %357 = vmatprep.mubr.bf16.mxu0 %v28
  %358 = vmatmul.mubr.bf16.gmra.mrb[0].mxu0 %v27
  %v359 = vpop.f32.mrb[0].mxu0
  %v360 = vadd.f32 %v320, %v359
  %v361 = vpop.f32.mrb[0].mxu0
  %v362 = vpop.f32.mrb[0].mxu0
  %v363 = vpop.f32.mrb[0].mxu0
  %364 = vdwg.mxu0
  %v365 = vadd.f32 %v20, %v360
  %366 = vst [vmem:[#allocation2] sm:$0xff] %v365
  // Predicated region
  $region18: #{skin_classifier_forward.15} parent=0 // pred_check
    %p367 = pneg %p15
  $region19: #{skin_classifier_forward.15} parent=0 // pred_check_branch
    %369 = sbr.rel (%p367) target = $region21
  $region20: #{skin_classifier_forward.15} parent=0 // pred_region
    %v370 = vld [vmem:[#allocation2] sm:$0xff]
    %v371 = vld [vmem:[%s2] sm:$0x1]
    %v373 = vlaneseq
    %v374 = vshrl.u32 %v373, 7
    %v375 = vsub.s32 0, %v374
    %v376 = vrot.slane %v371, %v375
    %v378 = vadd.f32 %v370, %v376
    %379 = vst [vmem:[%s3] sm:$0xff] %v378
  $region21: #{skin_classifier_forward.15} parent=0 // pred_fallthru
    _
  // Predicated region
  $region22: #{skin_classifier_forward.15} parent=0 // pred_check
    _
  $region23: #{skin_classifier_forward.15} parent=0 // pred_check_branch
    %381 = sbr.rel (0) target = $region25
  $region24: #{skin_classifier_forward.15} parent=0 // pred_region
    _
  $region25: #{skin_classifier_forward.15} parent=0 // pred_fallthru
    _
  // Predicated region
  $region26: #{skin_classifier_forward.15} parent=0 // pred_check
    _
  $region27: #{skin_classifier_forward.15} parent=0 // pred_check_branch
    %383 = sbr.rel (0) target = $region29
  $region28: #{skin_classifier_forward.15} parent=0 // pred_region
    _
  $region29: #{skin_classifier_forward.15} parent=0 // pred_fallthru
    _

</llo_original>
